<compile_context>
chip_gen: v5e
topology: v5e:2x2
jax: 0.10.0
libtpu: 0.0.40
codegen_flags: <defaults>
</compile_context>

<pallas_src>
import numpy as np
import jax
import jax.numpy as jnp
from jax.experimental import pallas as pl
from jax.experimental.pallas import tpu as pltpu


# ----------------------------- Pallas kernel --------------------------------

def dqn_fused_kernel(x_ref,
                     m1_ref, w1_ref, b1_ref,
                     n2_ref, w2_ref, b2_ref,
                     n3_ref, w3_ref, b3_ref,
                     p3_ref,
                     f1w_ref, f1b_ref,
                     f2w_ref, f2b_ref,
                     f3w_ref, f3b_ref,
                     o_ref):
    """Entire DQN forward for one image, fully VMEM-resident.

    x_ref : (1, H*W, 3)        bf16 flattened NHWC input
    m?/n? : (9, HWout, HWin)   bf16 shift(+pool) matrices, one per 3x3 tap
    w?    : (9, Cin, Cout)     bf16 conv weights per tap
    b?    : (1, Cout)          f32 conv bias
    p3    : (4, 16)            bf16 final 2x2 avg-pool matrix
    f?w   : fc weights, lane-padded to 128; f1w is (4, 256, 128) in (h*w, c, out)
    o_ref : (1, 1, 128)        f32 padded Q-values (first 3 lanes are real)
    """

    def conv_block(a, n_ref, w_ref, b_ref):
        # a: (HW_in, Cin) bf16 ; n_ref[k]: (HW_out, HW_in) ; w_ref[k]: (Cin, Cout)
        hw_out = n_ref.shape[1]
        cout = w_ref.shape[2]
        acc = jnp.zeros((hw_out, cout), jnp.float32)
        for k in range(9):                      # 9 taps of the 3x3 kernel
            shifted = jnp.dot(n_ref[k], a, preferred_element_type=jnp.float32)
            acc = acc + jnp.dot(shifted.astype(jnp.bfloat16), w_ref[k],
                                preferred_element_type=jnp.float32)
        y = jnp.maximum(acc + b_ref[...], 0.0)  # bias + ReLU in f32
        return y.astype(jnp.bfloat16)

    x = x_ref[0]                                        # (256, 3)
    z = conv_block(x, m1_ref, w1_ref, b1_ref)           # (256, 64)  conv1+relu
    z = conv_block(z, n2_ref, w2_ref, b2_ref)           # (64, 128)  pool1+conv2+relu
    z = conv_block(z, n3_ref, w3_ref, b3_ref)           # (16, 256)  pool2+conv3+relu

    # final 2x2 avg-pool -> (4, 256); rows ordered (h, w), channels on lanes
    a3 = jnp.dot(p3_ref[...], z, preferred_element_type=jnp.float32)
    a3 = a3.astype(jnp.bfloat16)

    # fc1 without any flatten/transpose: fc1 weights are pre-permuted to
    # (spatial_pos, channel, out) so the contraction is 4 small row-dots.
    h = jnp.zeros((1, f1w_ref.shape[2]), jnp.float32)
    for p in range(f1w_ref.shape[0]):
        h = h + jnp.dot(a3[p:p + 1, :], f1w_ref[p],
                        preferred_element_type=jnp.float32)
    h = jnp.maximum(h + f1b_ref[...], 0.0).astype(jnp.bfloat16)

    h = jnp.dot(h, f2w_ref[...], preferred_element_type=jnp.float32) + f2b_ref[...]
    h = jnp.maximum(h, 0.0).astype(jnp.bfloat16)

    h = jnp.dot(h, f3w_ref[...], preferred_element_type=jnp.float32) + f3b_ref[...]
    h = jnp.maximum(h, 0.0)

    o_ref[0] = h.astype(o_ref.dtype)


# ------------------------ one-time constant / weight prep --------------------

def _pool_matrix(H, W):
    """(HO*WO, H*W) matrix implementing AvgPool2d(2, 2) on row-major spatial."""
    HO, WO = H // 2, W // 2
    P = np.zeros((HO * WO, H * W), np.float32)
    for ho in range(HO):
        for wo in range(WO):
            for dh in range(2):
                for dw in range(2):
                    P[ho * WO + wo, (2 * ho + dh) * W + (2 * wo + dw)] = 0.25
    return P


def _shift_matrices(H, W):
    """S[k] (H*W, H*W): out row (y*W+x) selects in row ((y+kh-1)*W+(x+kw-1)),
    zero outside the image; k = kh*3 + kw. Implements the SAME-padded 3x3 taps."""
    S = np.zeros((9, H * W, H * W), np.float32)
    for kh in range(3):
        for kw in range(3):
            k = kh * 3 + kw
            for y in range(H):
                for x in range(W):
                    sy, sx = y + kh - 1, x + kw - 1
                    if 0 <= sy < H and 0 <= sx < W:
                        S[k, y * W + x, sy * W + sx] = 1.0
    return S


def prepare_params(params, H, W):
    """Hoisted out of the forward path: weight layout permutations, FC lane
    padding to 128, bf16 casts, and the constant shift/pool matrices."""
    bf16 = jnp.bfloat16
    H1, W1 = H, W
    H2, W2 = H // 2, W // 2
    H3, W3 = H // 4, W // 4
    HO, WO = H // 8, W // 8

    M1 = _shift_matrices(H1, W1)                                    # (9, 256, 256)
    P1 = _pool_matrix(H1, W1)                                       # (64, 256)
    N2 = np.einsum('kab,bc->kac', _shift_matrices(H2, W2), P1)      # (9, 64, 256)
    P2 = _pool_matrix(H2, W2)                                       # (16, 64)
    N3 = np.einsum('kab,bc->kac', _shift_matrices(H3, W3), P2)      # (9, 16, 64)
    P3 = _pool_matrix(H3, W3)                                       # (4, 16)

    def conv_w(w):                       # torch (O, I, 3, 3) -> (9, I, O)
        w = np.asarray(w, np.float32)
        O, I = w.shape[0], w.shape[1]
        return jnp.asarray(w.transpose(2, 3, 1, 0).reshape(9, I, O), bf16)

    def bias_row(b, pad=None):
        b = np.asarray(b, np.float32)
        if pad is not None:
            bp = np.zeros((pad,), np.float32)
            bp[:b.shape[0]] = b
            b = bp
        return jnp.asarray(b.reshape(1, -1), jnp.float32)

    C3 = params["conv3_w"].shape[0]                                 # 256
    # fc1: torch columns are NCHW-flat (c, h, w); permute to (h*w, c, out) and
    # zero-pad the out dim to 128 -> no flatten/transpose needed at runtime.
    f1 = np.asarray(params["fc1_w"], np.float32)
    f1 = f1.reshape(-1, C3, HO, WO).transpose(2, 3, 1, 0).reshape(HO * WO, C3, -1)
    f1p = np.zeros((HO * WO, C3, 128), np.float32)
    f1p[:, :, :f1.shape[2]] = f1

    f2 = np.asarray(params["fc2_w"], np.float32).T                  # (120, 84)
    f2p = np.zeros((128, 128), np.float32)
    f2p[:f2.shape[0], :f2.shape[1]] = f2

    f3 = np.asarray(params["fc3_w"], np.float32).T                  # (84, 3)
    f3p = np.zeros((128, 128), np.float32)
    f3p[:f3.shape[0], :f3.shape[1]] = f3

    return {
        "m1": jnp.asarray(M1, bf16),
        "w1": conv_w(params["conv1_w"]), "b1": bias_row(params["conv1_b"]),
        "n2": jnp.asarray(N2, bf16),
        "w2": conv_w(params["conv2_w"]), "b2": bias_row(params["conv2_b"]),
        "n3": jnp.asarray(N3, bf16),
        "w3": conv_w(params["conv3_w"]), "b3": bias_row(params["conv3_b"]),
        "p3": jnp.asarray(P3, bf16),
        "f1w": jnp.asarray(f1p, bf16), "f1b": bias_row(params["fc1_b"], pad=128),
        "f2w": jnp.asarray(f2p, bf16), "f2b": bias_row(params["fc2_b"], pad=128),
        "f3w": jnp.asarray(f3p, bf16), "f3b": bias_row(params["fc3_b"], pad=128),
    }


# ------------------------------ forward wrapper ------------------------------

def dqn_forward(x_nchw, prep):
    B, C, H, W = x_nchw.shape
    # NCHW -> flattened NHWC (B, H*W, C), bf16 (tiny per-call layout op)
    x = jnp.transpose(x_nchw, (0, 2, 3, 1)).reshape(B, H * W, C).astype(jnp.bfloat16)

    full = lambda a, nd: pl.BlockSpec(a.shape, (lambda i: (0,) * nd))

    out = pl.pallas_call(
        dqn_fused_kernel,
        out_shape=jax.ShapeDtypeStruct((B, 1, 128), jnp.float32),
        grid=(B,),
        in_specs=[
            pl.BlockSpec((1, H * W, C), lambda i: (i, 0, 0)),
            full(prep["m1"], 3), full(prep["w1"], 3), full(prep["b1"], 2),
            full(prep["n2"], 3), full(prep["w2"], 3), full(prep["b2"], 2),
            full(prep["n3"], 3), full(prep["w3"], 3), full(prep["b3"], 2),
            full(prep["p3"], 2),
            full(prep["f1w"], 3), full(prep["f1b"], 2),
            full(prep["f2w"], 2), full(prep["f2b"], 2),
            full(prep["f3w"], 2), full(prep["f3b"], 2),
        ],
        out_specs=pl.BlockSpec((1, 1, 128), lambda i: (i, 0, 0)),
        compiler_params=pltpu.CompilerParams(
            dimension_semantics=("parallel",)),
    )(x,
      prep["m1"], prep["w1"], prep["b1"],
      prep["n2"], prep["w2"], prep["b2"],
      prep["n3"], prep["w3"], prep["b3"],
      prep["p3"],
      prep["f1w"], prep["f1b"],
      prep["f2w"], prep["f2b"],
      prep["f3w"], prep["f3b"])
    return out[:, 0, :3]        # drop the lane padding -> (B, num_actions)


# -------------------------- params / reference -------------------------------

def init_params(key, H, W):
    flat = 256 * (H // 8) * (W // 8)   # analogue of torch's 256*60*80
    ks = jax.random.split(key, 12)

    def nrm(k, shape, scale):
        return jax.random.normal(k, shape, jnp.float32) * scale

    return {
        "conv1_w": nrm(ks[0], (64, 3, 3, 3), 0.05),
        "conv1_b": nrm(ks[1], (64,), 0.05),
        "conv2_w": nrm(ks[2], (128, 64, 3, 3), 0.02),
        "conv2_b": nrm(ks[3], (128,), 0.02),
        "conv3_w": nrm(ks[4], (256, 128, 3, 3), 0.02),
        "conv3_b": nrm(ks[5], (256,), 0.02),
        "fc1_w": nrm(ks[6], (120, flat), 0.02),
        "fc1_b": nrm(ks[7], (120,), 0.02),
        "fc2_w": nrm(ks[8], (84, 120), 0.05),
        "fc2_b": nrm(ks[9], (84,), 0.05),
        "fc3_w": nrm(ks[10], (3, 84), 0.05),
        "fc3_b": nrm(ks[11], (3,), 0.05),
    }


def ref_forward(x_nchw, params):
    """Pure-JAX f32 reference matching torch semantics."""
    x = jnp.transpose(x_nchw, (0, 2, 3, 1))
    for i in (1, 2, 3):
        w = params[f"conv{i}_w"]          # (O, I, 3, 3)
        b = params[f"conv{i}_b"]
        y = jax.lax.conv_general_dilated(
            x, jnp.transpose(w, (2, 3, 1, 0)),
            window_strides=(1, 1), padding="SAME",
            dimension_numbers=("NHWC", "HWIO", "NHWC"))
        y = jnp.maximum(y + b, 0.0)
        y = jax.lax.reduce_window(y, 0.0, jax.lax.add,
                                  (1, 2, 2, 1), (1, 2, 2, 1), "VALID") * 0.25
        x = y
    B, HO, WO, C = x.shape
    x = jnp.transpose(x, (0, 3, 1, 2)).reshape(B, C * HO * WO)  # torch NCHW flatten
    for i in (1, 2, 3):
        w = params[f"fc{i}_w"]
        b = params[f"fc{i}_b"]
        x = jnp.maximum(x @ w.T + b, 0.0)
    return x


# ---------------------------------- main -------------------------------------

if __name__ == "__main__":
    # TODO(synk): DQN.act() (epsilon-greedy host-side sampling / argmax) is policy
    # control flow, not kernel compute; only forward() is implemented here.
    key = jax.random.PRNGKey(0)
    B, H, W = 2, 16, 16                    # small shapes; 3 pools -> 2x2 spatial
    kx, kp = jax.random.split(key)
    x = jax.random.normal(kx, (B, 3, H, W), jnp.float32)   # NCHW like torch

    params = init_params(kp, H, W)
    prep = prepare_params(params, H, W)    # one-time: hoisted out of hot path

    forward = jax.jit(dqn_forward)
    out = jax.block_until_ready(forward(x, prep))
    assert out.shape == (B, 3), out.shape

    ref = jax.block_until_ready(ref_forward(x, params))
    np.testing.assert_allclose(np.asarray(out), np.asarray(ref),
                               rtol=5e-2, atol=5e-2)

    print("KERNEL_OK")
</pallas_src>

<mosaic_0001>
module attributes {stable_mosaic.version = 11 : i64} {
  func.func @dqn_fused_kernel(%arg0: i32, %arg1: memref<1x256x3xbf16, #tpu.memory_space<vmem>>, %arg2: memref<9x256x256xbf16, #tpu.memory_space<vmem>>, %arg3: memref<9x3x64xbf16, #tpu.memory_space<vmem>>, %arg4: memref<1x64xf32, #tpu.memory_space<vmem>>, %arg5: memref<9x64x256xbf16, #tpu.memory_space<vmem>>, %arg6: memref<9x64x128xbf16, #tpu.memory_space<vmem>>, %arg7: memref<1x128xf32, #tpu.memory_space<vmem>>, %arg8: memref<9x16x64xbf16, #tpu.memory_space<vmem>>, %arg9: memref<9x128x256xbf16, #tpu.memory_space<vmem>>, %arg10: memref<1x256xf32, #tpu.memory_space<vmem>>, %arg11: memref<4x16xbf16, #tpu.memory_space<vmem>>, %arg12: memref<4x256x128xbf16, #tpu.memory_space<vmem>>, %arg13: memref<1x128xf32, #tpu.memory_space<vmem>>, %arg14: memref<128x128xbf16, #tpu.memory_space<vmem>>, %arg15: memref<1x128xf32, #tpu.memory_space<vmem>>, %arg16: memref<128x128xbf16, #tpu.memory_space<vmem>>, %arg17: memref<1x128xf32, #tpu.memory_space<vmem>>, %arg18: memref<1x1x128xf32, #tpu.memory_space<vmem>>) attributes {dimension_semantics = [#tpu.dimension_semantics<parallel>], iteration_bounds = array<i64: 2>, scalar_prefetch = 0 : i64, scratch_operands = 0 : i64, tpu.core_type = #tpu.core_type<tc>, window_params = [{transform_indices = @transform_0, window_bounds = array<i64: 1, 256, 3>}, {pipeline_mode = #tpu.pipeline_mode<synchronous>, transform_indices = @transform_1, window_bounds = array<i64: 9, 256, 256>}, {pipeline_mode = #tpu.pipeline_mode<synchronous>, transform_indices = @transform_2, window_bounds = array<i64: 9, 3, 64>}, {pipeline_mode = #tpu.pipeline_mode<synchronous>, transform_indices = @transform_3, window_bounds = array<i64: 1, 64>}, {pipeline_mode = #tpu.pipeline_mode<synchronous>, transform_indices = @transform_4, window_bounds = array<i64: 9, 64, 256>}, {pipeline_mode = #tpu.pipeline_mode<synchronous>, transform_indices = @transform_5, window_bounds = array<i64: 9, 64, 128>}, {pipeline_mode = #tpu.pipeline_mode<synchronous>, transform_indices = @transform_6, window_bounds = array<i64: 1, 128>}, {pipeline_mode = #tpu.pipeline_mode<synchronous>, transform_indices = @transform_7, window_bounds = array<i64: 9, 16, 64>}, {pipeline_mode = #tpu.pipeline_mode<synchronous>, transform_indices = @transform_8, window_bounds = array<i64: 9, 128, 256>}, {pipeline_mode = #tpu.pipeline_mode<synchronous>, transform_indices = @transform_9, window_bounds = array<i64: 1, 256>}, {pipeline_mode = #tpu.pipeline_mode<synchronous>, transform_indices = @transform_10, window_bounds = array<i64: 4, 16>}, {pipeline_mode = #tpu.pipeline_mode<synchronous>, transform_indices = @transform_11, window_bounds = array<i64: 4, 256, 128>}, {pipeline_mode = #tpu.pipeline_mode<synchronous>, transform_indices = @transform_12, window_bounds = array<i64: 1, 128>}, {pipeline_mode = #tpu.pipeline_mode<synchronous>, transform_indices = @transform_13, window_bounds = array<i64: 128, 128>}, {pipeline_mode = #tpu.pipeline_mode<synchronous>, transform_indices = @transform_14, window_bounds = array<i64: 1, 128>}, {pipeline_mode = #tpu.pipeline_mode<synchronous>, transform_indices = @transform_15, window_bounds = array<i64: 128, 128>}, {pipeline_mode = #tpu.pipeline_mode<synchronous>, transform_indices = @transform_16, window_bounds = array<i64: 1, 128>}, {transform_indices = @transform_17, window_bounds = array<i64: 1, 1, 128>}]} {
    %c0 = arith.constant 0 : index
    %c0_0 = arith.constant 0 : index
    %c0_1 = arith.constant 0 : index
    %0 = vector.load %arg1[%c0, %c0_0, %c0_1] : memref<1x256x3xbf16, #tpu.memory_space<vmem>>, vector<1x256x3xbf16>
    %1 = vector.shape_cast %0 : vector<1x256x3xbf16> to vector<256x3xbf16>
    %cst = arith.constant 0.000000e+00 : f32
    %2 = vector.broadcast %cst : f32 to vector<256x64xf32>
    %c0_2 = arith.constant 0 : index
    %c0_3 = arith.constant 0 : index
    %c0_4 = arith.constant 0 : index
    %3 = vector.load %arg2[%c0_2, %c0_3, %c0_4] : memref<9x256x256xbf16, #tpu.memory_space<vmem>>, vector<1x256x256xbf16>
    %4 = vector.shape_cast %3 : vector<1x256x256xbf16> to vector<256x256xbf16>
    %cst_5 = arith.constant dense<0.000000e+00> : vector<256x3xf32>
    %5 = tpu.matmul %4, %1, %cst_5 {dimension_numbers = #tpu.dot_dimension_numbers<[1], [0], [0], [1], [0, 0, 1, 1], [], []>} : vector<256x256xbf16>, vector<256x3xbf16>, vector<256x3xf32> -> vector<256x3xf32>
    %6 = arith.truncf %5 : vector<256x3xf32> to vector<256x3xbf16>
    %c0_6 = arith.constant 0 : index
    %c0_7 = arith.constant 0 : index
    %c0_8 = arith.constant 0 : index
    %7 = vector.load %arg3[%c0_6, %c0_7, %c0_8] : memref<9x3x64xbf16, #tpu.memory_space<vmem>>, vector<1x3x64xbf16>
    %8 = vector.shape_cast %7 : vector<1x3x64xbf16> to vector<3x64xbf16>
    %cst_9 = arith.constant dense<0.000000e+00> : vector<256x64xf32>
    %9 = tpu.matmul %6, %8, %cst_9 {dimension_numbers = #tpu.dot_dimension_numbers<[1], [0], [0], [1], [0, 0, 1, 1], [], []>} : vector<256x3xbf16>, vector<3x64xbf16>, vector<256x64xf32> -> vector<256x64xf32>
    %10 = arith.addf %2, %9 : vector<256x64xf32>
    %c1 = arith.constant 1 : index
    %c0_10 = arith.constant 0 : index
    %c0_11 = arith.constant 0 : index
    %11 = vector.load %arg2[%c1, %c0_10, %c0_11] : memref<9x256x256xbf16, #tpu.memory_space<vmem>>, vector<1x256x256xbf16>
    %12 = vector.shape_cast %11 : vector<1x256x256xbf16> to vector<256x256xbf16>
    %cst_12 = arith.constant dense<0.000000e+00> : vector<256x3xf32>
    %13 = tpu.matmul %12, %1, %cst_12 {dimension_numbers = #tpu.dot_dimension_numbers<[1], [0], [0], [1], [0, 0, 1, 1], [], []>} : vector<256x256xbf16>, vector<256x3xbf16>, vector<256x3xf32> -> vector<256x3xf32>
    %14 = arith.truncf %13 : vector<256x3xf32> to vector<256x3xbf16>
    %c1_13 = arith.constant 1 : index
    %c0_14 = arith.constant 0 : index
    %c0_15 = arith.constant 0 : index
    %15 = vector.load %arg3[%c1_13, %c0_14, %c0_15] : memref<9x3x64xbf16, #tpu.memory_space<vmem>>, vector<1x3x64xbf16>
    %16 = vector.shape_cast %15 : vector<1x3x64xbf16> to vector<3x64xbf16>
    %cst_16 = arith.constant dense<0.000000e+00> : vector<256x64xf32>
    %17 = tpu.matmul %14, %16, %cst_16 {dimension_numbers = #tpu.dot_dimension_numbers<[1], [0], [0], [1], [0, 0, 1, 1], [], []>} : vector<256x3xbf16>, vector<3x64xbf16>, vector<256x64xf32> -> vector<256x64xf32>
    %18 = arith.addf %10, %17 : vector<256x64xf32>
    %c2 = arith.constant 2 : index
    %c0_17 = arith.constant 0 : index
    %c0_18 = arith.constant 0 : index
    %19 = vector.load %arg2[%c2, %c0_17, %c0_18] : memref<9x256x256xbf16, #tpu.memory_space<vmem>>, vector<1x256x256xbf16>
    %20 = vector.shape_cast %19 : vector<1x256x256xbf16> to vector<256x256xbf16>
    %cst_19 = arith.constant dense<0.000000e+00> : vector<256x3xf32>
    %21 = tpu.matmul %20, %1, %cst_19 {dimension_numbers = #tpu.dot_dimension_numbers<[1], [0], [0], [1], [0, 0, 1, 1], [], []>} : vector<256x256xbf16>, vector<256x3xbf16>, vector<256x3xf32> -> vector<256x3xf32>
    %22 = arith.truncf %21 : vector<256x3xf32> to vector<256x3xbf16>
    %c2_20 = arith.constant 2 : index
    %c0_21 = arith.constant 0 : index
    %c0_22 = arith.constant 0 : index
    %23 = vector.load %arg3[%c2_20, %c0_21, %c0_22] : memref<9x3x64xbf16, #tpu.memory_space<vmem>>, vector<1x3x64xbf16>
    %24 = vector.shape_cast %23 : vector<1x3x64xbf16> to vector<3x64xbf16>
    %cst_23 = arith.constant dense<0.000000e+00> : vector<256x64xf32>
    %25 = tpu.matmul %22, %24, %cst_23 {dimension_numbers = #tpu.dot_dimension_numbers<[1], [0], [0], [1], [0, 0, 1, 1], [], []>} : vector<256x3xbf16>, vector<3x64xbf16>, vector<256x64xf32> -> vector<256x64xf32>
    %26 = arith.addf %18, %25 : vector<256x64xf32>
    %c3 = arith.constant 3 : index
    %c0_24 = arith.constant 0 : index
    %c0_25 = arith.constant 0 : index
    %27 = vector.load %arg2[%c3, %c0_24, %c0_25] : memref<9x256x256xbf16, #tpu.memory_space<vmem>>, vector<1x256x256xbf16>
    %28 = vector.shape_cast %27 : vector<1x256x256xbf16> to vector<256x256xbf16>
    %cst_26 = arith.constant dense<0.000000e+00> : vector<256x3xf32>
    %29 = tpu.matmul %28, %1, %cst_26 {dimension_numbers = #tpu.dot_dimension_numbers<[1], [0], [0], [1], [0, 0, 1, 1], [], []>} : vector<256x256xbf16>, vector<256x3xbf16>, vector<256x3xf32> -> vector<256x3xf32>
    %30 = arith.truncf %29 : vector<256x3xf32> to vector<256x3xbf16>
    %c3_27 = arith.constant 3 : index
    %c0_28 = arith.constant 0 : index
    %c0_29 = arith.constant 0 : index
    %31 = vector.load %arg3[%c3_27, %c0_28, %c0_29] : memref<9x3x64xbf16, #tpu.memory_space<vmem>>, vector<1x3x64xbf16>
    %32 = vector.shape_cast %31 : vector<1x3x64xbf16> to vector<3x64xbf16>
    %cst_30 = arith.constant dense<0.000000e+00> : vector<256x64xf32>
    %33 = tpu.matmul %30, %32, %cst_30 {dimension_numbers = #tpu.dot_dimension_numbers<[1], [0], [0], [1], [0, 0, 1, 1], [], []>} : vector<256x3xbf16>, vector<3x64xbf16>, vector<256x64xf32> -> vector<256x64xf32>
    %34 = arith.addf %26, %33 : vector<256x64xf32>
    %c4 = arith.constant 4 : index
    %c0_31 = arith.constant 0 : index
    %c0_32 = arith.constant 0 : index
    %35 = vector.load %arg2[%c4, %c0_31, %c0_32] : memref<9x256x256xbf16, #tpu.memory_space<vmem>>, vector<1x256x256xbf16>
    %36 = vector.shape_cast %35 : vector<1x256x256xbf16> to vector<256x256xbf16>
    %cst_33 = arith.constant dense<0.000000e+00> : vector<256x3xf32>
    %37 = tpu.matmul %36, %1, %cst_33 {dimension_numbers = #tpu.dot_dimension_numbers<[1], [0], [0], [1], [0, 0, 1, 1], [], []>} : vector<256x256xbf16>, vector<256x3xbf16>, vector<256x3xf32> -> vector<256x3xf32>
    %38 = arith.truncf %37 : vector<256x3xf32> to vector<256x3xbf16>
    %c4_34 = arith.constant 4 : index
    %c0_35 = arith.constant 0 : index
    %c0_36 = arith.constant 0 : index
    %39 = vector.load %arg3[%c4_34, %c0_35, %c0_36] : memref<9x3x64xbf16, #tpu.memory_space<vmem>>, vector<1x3x64xbf16>
    %40 = vector.shape_cast %39 : vector<1x3x64xbf16> to vector<3x64xbf16>
    %cst_37 = arith.constant dense<0.000000e+00> : vector<256x64xf32>
    %41 = tpu.matmul %38, %40, %cst_37 {dimension_numbers = #tpu.dot_dimension_numbers<[1], [0], [0], [1], [0, 0, 1, 1], [], []>} : vector<256x3xbf16>, vector<3x64xbf16>, vector<256x64xf32> -> vector<256x64xf32>
    %42 = arith.addf %34, %41 : vector<256x64xf32>
    %c5 = arith.constant 5 : index
    %c0_38 = arith.constant 0 : index
    %c0_39 = arith.constant 0 : index
    %43 = vector.load %arg2[%c5, %c0_38, %c0_39] : memref<9x256x256xbf16, #tpu.memory_space<vmem>>, vector<1x256x256xbf16>
    %44 = vector.shape_cast %43 : vector<1x256x256xbf16> to vector<256x256xbf16>
    %cst_40 = arith.constant dense<0.000000e+00> : vector<256x3xf32>
    %45 = tpu.matmul %44, %1, %cst_40 {dimension_numbers = #tpu.dot_dimension_numbers<[1], [0], [0], [1], [0, 0, 1, 1], [], []>} : vector<256x256xbf16>, vector<256x3xbf16>, vector<256x3xf32> -> vector<256x3xf32>
    %46 = arith.truncf %45 : vector<256x3xf32> to vector<256x3xbf16>
    %c5_41 = arith.constant 5 : index
    %c0_42 = arith.constant 0 : index
    %c0_43 = arith.constant 0 : index
    %47 = vector.load %arg3[%c5_41, %c0_42, %c0_43] : memref<9x3x64xbf16, #tpu.memory_space<vmem>>, vector<1x3x64xbf16>
    %48 = vector.shape_cast %47 : vector<1x3x64xbf16> to vector<3x64xbf16>
    %cst_44 = arith.constant dense<0.000000e+00> : vector<256x64xf32>
    %49 = tpu.matmul %46, %48, %cst_44 {dimension_numbers = #tpu.dot_dimension_numbers<[1], [0], [0], [1], [0, 0, 1, 1], [], []>} : vector<256x3xbf16>, vector<3x64xbf16>, vector<256x64xf32> -> vector<256x64xf32>
    %50 = arith.addf %42, %49 : vector<256x64xf32>
    %c6 = arith.constant 6 : index
    %c0_45 = arith.constant 0 : index
    %c0_46 = arith.constant 0 : index
    %51 = vector.load %arg2[%c6, %c0_45, %c0_46] : memref<9x256x256xbf16, #tpu.memory_space<vmem>>, vector<1x256x256xbf16>
    %52 = vector.shape_cast %51 : vector<1x256x256xbf16> to vector<256x256xbf16>
    %cst_47 = arith.constant dense<0.000000e+00> : vector<256x3xf32>
    %53 = tpu.matmul %52, %1, %cst_47 {dimension_numbers = #tpu.dot_dimension_numbers<[1], [0], [0], [1], [0, 0, 1, 1], [], []>} : vector<256x256xbf16>, vector<256x3xbf16>, vector<256x3xf32> -> vector<256x3xf32>
    %54 = arith.truncf %53 : vector<256x3xf32> to vector<256x3xbf16>
    %c6_48 = arith.constant 6 : index
    %c0_49 = arith.constant 0 : index
    %c0_50 = arith.constant 0 : index
    %55 = vector.load %arg3[%c6_48, %c0_49, %c0_50] : memref<9x3x64xbf16, #tpu.memory_space<vmem>>, vector<1x3x64xbf16>
    %56 = vector.shape_cast %55 : vector<1x3x64xbf16> to vector<3x64xbf16>
    %cst_51 = arith.constant dense<0.000000e+00> : vector<256x64xf32>
    %57 = tpu.matmul %54, %56, %cst_51 {dimension_numbers = #tpu.dot_dimension_numbers<[1], [0], [0], [1], [0, 0, 1, 1], [], []>} : vector<256x3xbf16>, vector<3x64xbf16>, vector<256x64xf32> -> vector<256x64xf32>
    %58 = arith.addf %50, %57 : vector<256x64xf32>
    %c7 = arith.constant 7 : index
    %c0_52 = arith.constant 0 : index
    %c0_53 = arith.constant 0 : index
    %59 = vector.load %arg2[%c7, %c0_52, %c0_53] : memref<9x256x256xbf16, #tpu.memory_space<vmem>>, vector<1x256x256xbf16>
    %60 = vector.shape_cast %59 : vector<1x256x256xbf16> to vector<256x256xbf16>
    %cst_54 = arith.constant dense<0.000000e+00> : vector<256x3xf32>
    %61 = tpu.matmul %60, %1, %cst_54 {dimension_numbers = #tpu.dot_dimension_numbers<[1], [0], [0], [1], [0, 0, 1, 1], [], []>} : vector<256x256xbf16>, vector<256x3xbf16>, vector<256x3xf32> -> vector<256x3xf32>
    %62 = arith.truncf %61 : vector<256x3xf32> to vector<256x3xbf16>
    %c7_55 = arith.constant 7 : index
    %c0_56 = arith.constant 0 : index
    %c0_57 = arith.constant 0 : index
    %63 = vector.load %arg3[%c7_55, %c0_56, %c0_57] : memref<9x3x64xbf16, #tpu.memory_space<vmem>>, vector<1x3x64xbf16>
    %64 = vector.shape_cast %63 : vector<1x3x64xbf16> to vector<3x64xbf16>
    %cst_58 = arith.constant dense<0.000000e+00> : vector<256x64xf32>
    %65 = tpu.matmul %62, %64, %cst_58 {dimension_numbers = #tpu.dot_dimension_numbers<[1], [0], [0], [1], [0, 0, 1, 1], [], []>} : vector<256x3xbf16>, vector<3x64xbf16>, vector<256x64xf32> -> vector<256x64xf32>
    %66 = arith.addf %58, %65 : vector<256x64xf32>
    %c8 = arith.constant 8 : index
    %c0_59 = arith.constant 0 : index
    %c0_60 = arith.constant 0 : index
    %67 = vector.load %arg2[%c8, %c0_59, %c0_60] : memref<9x256x256xbf16, #tpu.memory_space<vmem>>, vector<1x256x256xbf16>
    %68 = vector.shape_cast %67 : vector<1x256x256xbf16> to vector<256x256xbf16>
    %cst_61 = arith.constant dense<0.000000e+00> : vector<256x3xf32>
    %69 = tpu.matmul %68, %1, %cst_61 {dimension_numbers = #tpu.dot_dimension_numbers<[1], [0], [0], [1], [0, 0, 1, 1], [], []>} : vector<256x256xbf16>, vector<256x3xbf16>, vector<256x3xf32> -> vector<256x3xf32>
    %70 = arith.truncf %69 : vector<256x3xf32> to vector<256x3xbf16>
    %c8_62 = arith.constant 8 : index
    %c0_63 = arith.constant 0 : index
    %c0_64 = arith.constant 0 : index
    %71 = vector.load %arg3[%c8_62, %c0_63, %c0_64] : memref<9x3x64xbf16, #tpu.memory_space<vmem>>, vector<1x3x64xbf16>
    %72 = vector.shape_cast %71 : vector<1x3x64xbf16> to vector<3x64xbf16>
    %cst_65 = arith.constant dense<0.000000e+00> : vector<256x64xf32>
    %73 = tpu.matmul %70, %72, %cst_65 {dimension_numbers = #tpu.dot_dimension_numbers<[1], [0], [0], [1], [0, 0, 1, 1], [], []>} : vector<256x3xbf16>, vector<3x64xbf16>, vector<256x64xf32> -> vector<256x64xf32>
    %74 = arith.addf %66, %73 : vector<256x64xf32>
    %c0_66 = arith.constant 0 : index
    %c0_67 = arith.constant 0 : index
    %75 = vector.load %arg4[%c0_66, %c0_67] : memref<1x64xf32, #tpu.memory_space<vmem>>, vector<1x64xf32>
    %76 = vector.broadcast %75 : vector<1x64xf32> to vector<256x64xf32>
    %77 = arith.addf %74, %76 : vector<256x64xf32>
    %cst_68 = arith.constant 0.000000e+00 : f32
    %78 = vector.broadcast %cst_68 : f32 to vector<256x64xf32>
    %79 = arith.maximumf %77, %78 : vector<256x64xf32>
    %80 = arith.truncf %79 : vector<256x64xf32> to vector<256x64xbf16>
    %cst_69 = arith.constant 0.000000e+00 : f32
    %81 = vector.broadcast %cst_69 : f32 to vector<64x128xf32>
    %c0_70 = arith.constant 0 : index
    %c0_71 = arith.constant 0 : index
    %c0_72 = arith.constant 0 : index
    %82 = vector.load %arg5[%c0_70, %c0_71, %c0_72] : memref<9x64x256xbf16, #tpu.memory_space<vmem>>, vector<1x64x256xbf16>
    %83 = vector.shape_cast %82 : vector<1x64x256xbf16> to vector<64x256xbf16>
    %cst_73 = arith.constant dense<0.000000e+00> : vector<64x64xf32>
    %84 = tpu.matmul %83, %80, %cst_73 {dimension_numbers = #tpu.dot_dimension_numbers<[1], [0], [0], [1], [0, 0, 1, 1], [], []>} : vector<64x256xbf16>, vector<256x64xbf16>, vector<64x64xf32> -> vector<64x64xf32>
    %85 = arith.truncf %84 : vector<64x64xf32> to vector<64x64xbf16>
    %c0_74 = arith.constant 0 : index
    %c0_75 = arith.constant 0 : index
    %c0_76 = arith.constant 0 : index
    %86 = vector.load %arg6[%c0_74, %c0_75, %c0_76] : memref<9x64x128xbf16, #tpu.memory_space<vmem>>, vector<1x64x128xbf16>
    %87 = vector.shape_cast %86 : vector<1x64x128xbf16> to vector<64x128xbf16>
    %cst_77 = arith.constant dense<0.000000e+00> : vector<64x128xf32>
    %88 = tpu.matmul %85, %87, %cst_77 {dimension_numbers = #tpu.dot_dimension_numbers<[1], [0], [0], [1], [0, 0, 1, 1], [], []>} : vector<64x64xbf16>, vector<64x128xbf16>, vector<64x128xf32> -> vector<64x128xf32>
    %89 = arith.addf %81, %88 : vector<64x128xf32>
    %c1_78 = arith.constant 1 : index
    %c0_79 = arith.constant 0 : index
    %c0_80 = arith.constant 0 : index
    %90 = vector.load %arg5[%c1_78, %c0_79, %c0_80] : memref<9x64x256xbf16, #tpu.memory_space<vmem>>, vector<1x64x256xbf16>
    %91 = vector.shape_cast %90 : vector<1x64x256xbf16> to vector<64x256xbf16>
    %cst_81 = arith.constant dense<0.000000e+00> : vector<64x64xf32>
    %92 = tpu.matmul %91, %80, %cst_81 {dimension_numbers = #tpu.dot_dimension_numbers<[1], [0], [0], [1], [0, 0, 1, 1], [], []>} : vector<64x256xbf16>, vector<256x64xbf16>, vector<64x64xf32> -> vector<64x64xf32>
    %93 = arith.truncf %92 : vector<64x64xf32> to vector<64x64xbf16>
    %c1_82 = arith.constant 1 : index
    %c0_83 = arith.constant 0 : index
    %c0_84 = arith.constant 0 : index
    %94 = vector.load %arg6[%c1_82, %c0_83, %c0_84] : memref<9x64x128xbf16, #tpu.memory_space<vmem>>, vector<1x64x128xbf16>
    %95 = vector.shape_cast %94 : vector<1x64x128xbf16> to vector<64x128xbf16>
    %cst_85 = arith.constant dense<0.000000e+00> : vector<64x128xf32>
    %96 = tpu.matmul %93, %95, %cst_85 {dimension_numbers = #tpu.dot_dimension_numbers<[1], [0], [0], [1], [0, 0, 1, 1], [], []>} : vector<64x64xbf16>, vector<64x128xbf16>, vector<64x128xf32> -> vector<64x128xf32>
    %97 = arith.addf %89, %96 : vector<64x128xf32>
    %c2_86 = arith.constant 2 : index
    %c0_87 = arith.constant 0 : index
    %c0_88 = arith.constant 0 : index
    %98 = vector.load %arg5[%c2_86, %c0_87, %c0_88] : memref<9x64x256xbf16, #tpu.memory_space<vmem>>, vector<1x64x256xbf16>
    %99 = vector.shape_cast %98 : vector<1x64x256xbf16> to vector<64x256xbf16>
    %cst_89 = arith.constant dense<0.000000e+00> : vector<64x64xf32>
    %100 = tpu.matmul %99, %80, %cst_89 {dimension_numbers = #tpu.dot_dimension_numbers<[1], [0], [0], [1], [0, 0, 1, 1], [], []>} : vector<64x256xbf16>, vector<256x64xbf16>, vector<64x64xf32> -> vector<64x64xf32>
    %101 = arith.truncf %100 : vector<64x64xf32> to vector<64x64xbf16>
    %c2_90 = arith.constant 2 : index
    %c0_91 = arith.constant 0 : index
    %c0_92 = arith.constant 0 : index
    %102 = vector.load %arg6[%c2_90, %c0_91, %c0_92] : memref<9x64x128xbf16, #tpu.memory_space<vmem>>, vector<1x64x128xbf16>
    %103 = vector.shape_cast %102 : vector<1x64x128xbf16> to vector<64x128xbf16>
    %cst_93 = arith.constant dense<0.000000e+00> : vector<64x128xf32>
    %104 = tpu.matmul %101, %103, %cst_93 {dimension_numbers = #tpu.dot_dimension_numbers<[1], [0], [0], [1], [0, 0, 1, 1], [], []>} : vector<64x64xbf16>, vector<64x128xbf16>, vector<64x128xf32> -> vector<64x128xf32>
    %105 = arith.addf %97, %104 : vector<64x128xf32>
    %c3_94 = arith.constant 3 : index
    %c0_95 = arith.constant 0 : index
    %c0_96 = arith.constant 0 : index
    %106 = vector.load %arg5[%c3_94, %c0_95, %c0_96] : memref<9x64x256xbf16, #tpu.memory_space<vmem>>, vector<1x64x256xbf16>
    %107 = vector.shape_cast %106 : vector<1x64x256xbf16> to vector<64x256xbf16>
    %cst_97 = arith.constant dense<0.000000e+00> : vector<64x64xf32>
    %108 = tpu.matmul %107, %80, %cst_97 {dimension_numbers = #tpu.dot_dimension_numbers<[1], [0], [0], [1], [0, 0, 1, 1], [], []>} : vector<64x256xbf16>, vector<256x64xbf16>, vector<64x64xf32> -> vector<64x64xf32>
    %109 = arith.truncf %108 : vector<64x64xf32> to vector<64x64xbf16>
    %c3_98 = arith.constant 3 : index
    %c0_99 = arith.constant 0 : index
    %c0_100 = arith.constant 0 : index
    %110 = vector.load %arg6[%c3_98, %c0_99, %c0_100] : memref<9x64x128xbf16, #tpu.memory_space<vmem>>, vector<1x64x128xbf16>
    %111 = vector.shape_cast %110 : vector<1x64x128xbf16> to vector<64x128xbf16>
    %cst_101 = arith.constant dense<0.000000e+00> : vector<64x128xf32>
    %112 = tpu.matmul %109, %111, %cst_101 {dimension_numbers = #tpu.dot_dimension_numbers<[1], [0], [0], [1], [0, 0, 1, 1], [], []>} : vector<64x64xbf16>, vector<64x128xbf16>, vector<64x128xf32> -> vector<64x128xf32>
    %113 = arith.addf %105, %112 : vector<64x128xf32>
    %c4_102 = arith.constant 4 : index
    %c0_103 = arith.constant 0 : index
    %c0_104 = arith.constant 0 : index
    %114 = vector.load %arg5[%c4_102, %c0_103, %c0_104] : memref<9x64x256xbf16, #tpu.memory_space<vmem>>, vector<1x64x256xbf16>
    %115 = vector.shape_cast %114 : vector<1x64x256xbf16> to vector<64x256xbf16>
    %cst_105 = arith.constant dense<0.000000e+00> : vector<64x64xf32>
    %116 = tpu.matmul %115, %80, %cst_105 {dimension_numbers = #tpu.dot_dimension_numbers<[1], [0], [0], [1], [0, 0, 1, 1], [], []>} : vector<64x256xbf16>, vector<256x64xbf16>, vector<64x64xf32> -> vector<64x64xf32>
    %117 = arith.truncf %116 : vector<64x64xf32> to vector<64x64xbf16>
    %c4_106 = arith.constant 4 : index
    %c0_107 = arith.constant 0 : index
    %c0_108 = arith.constant 0 : index
    %118 = vector.load %arg6[%c4_106, %c0_107, %c0_108] : memref<9x64x128xbf16, #tpu.memory_space<vmem>>, vector<1x64x128xbf16>
    %119 = vector.shape_cast %118 : vector<1x64x128xbf16> to vector<64x128xbf16>
    %cst_109 = arith.constant dense<0.000000e+00> : vector<64x128xf32>
    %120 = tpu.matmul %117, %119, %cst_109 {dimension_numbers = #tpu.dot_dimension_numbers<[1], [0], [0], [1], [0, 0, 1, 1], [], []>} : vector<64x64xbf16>, vector<64x128xbf16>, vector<64x128xf32> -> vector<64x128xf32>
    %121 = arith.addf %113, %120 : vector<64x128xf32>
    %c5_110 = arith.constant 5 : index
    %c0_111 = arith.constant 0 : index
    %c0_112 = arith.constant 0 : index
    %122 = vector.load %arg5[%c5_110, %c0_111, %c0_112] : memref<9x64x256xbf16, #tpu.memory_space<vmem>>, vector<1x64x256xbf16>
    %123 = vector.shape_cast %122 : vector<1x64x256xbf16> to vector<64x256xbf16>
    %cst_113 = arith.constant dense<0.000000e+00> : vector<64x64xf32>
    %124 = tpu.matmul %123, %80, %cst_113 {dimension_numbers = #tpu.dot_dimension_numbers<[1], [0], [0], [1], [0, 0, 1, 1], [], []>} : vector<64x256xbf16>, vector<256x64xbf16>, vector<64x64xf32> -> vector<64x64xf32>
    %125 = arith.truncf %124 : vector<64x64xf32> to vector<64x64xbf16>
    %c5_114 = arith.constant 5 : index
    %c0_115 = arith.constant 0 : index
    %c0_116 = arith.constant 0 : index
    %126 = vector.load %arg6[%c5_114, %c0_115, %c0_116] : memref<9x64x128xbf16, #tpu.memory_space<vmem>>, vector<1x64x128xbf16>
    %127 = vector.shape_cast %126 : vector<1x64x128xbf16> to vector<64x128xbf16>
    %cst_117 = arith.constant dense<0.000000e+00> : vector<64x128xf32>
    %128 = tpu.matmul %125, %127, %cst_117 {dimension_numbers = #tpu.dot_dimension_numbers<[1], [0], [0], [1], [0, 0, 1, 1], [], []>} : vector<64x64xbf16>, vector<64x128xbf16>, vector<64x128xf32> -> vector<64x128xf32>
    %129 = arith.addf %121, %128 : vector<64x128xf32>
    %c6_118 = arith.constant 6 : index
    %c0_119 = arith.constant 0 : index
    %c0_120 = arith.constant 0 : index
    %130 = vector.load %arg5[%c6_118, %c0_119, %c0_120] : memref<9x64x256xbf16, #tpu.memory_space<vmem>>, vector<1x64x256xbf16>
    %131 = vector.shape_cast %130 : vector<1x64x256xbf16> to vector<64x256xbf16>
    %cst_121 = arith.constant dense<0.000000e+00> : vector<64x64xf32>
    %132 = tpu.matmul %131, %80, %cst_121 {dimension_numbers = #tpu.dot_dimension_numbers<[1], [0], [0], [1], [0, 0, 1, 1], [], []>} : vector<64x256xbf16>, vector<256x64xbf16>, vector<64x64xf32> -> vector<64x64xf32>
    %133 = arith.truncf %132 : vector<64x64xf32> to vector<64x64xbf16>
    %c6_122 = arith.constant 6 : index
    %c0_123 = arith.constant 0 : index
    %c0_124 = arith.constant 0 : index
    %134 = vector.load %arg6[%c6_122, %c0_123, %c0_124] : memref<9x64x128xbf16, #tpu.memory_space<vmem>>, vector<1x64x128xbf16>
    %135 = vector.shape_cast %134 : vector<1x64x128xbf16> to vector<64x128xbf16>
    %cst_125 = arith.constant dense<0.000000e+00> : vector<64x128xf32>
    %136 = tpu.matmul %133, %135, %cst_125 {dimension_numbers = #tpu.dot_dimension_numbers<[1], [0], [0], [1], [0, 0, 1, 1], [], []>} : vector<64x64xbf16>, vector<64x128xbf16>, vector<64x128xf32> -> vector<64x128xf32>
    %137 = arith.addf %129, %136 : vector<64x128xf32>
    %c7_126 = arith.constant 7 : index
    %c0_127 = arith.constant 0 : index
    %c0_128 = arith.constant 0 : index
    %138 = vector.load %arg5[%c7_126, %c0_127, %c0_128] : memref<9x64x256xbf16, #tpu.memory_space<vmem>>, vector<1x64x256xbf16>
    %139 = vector.shape_cast %138 : vector<1x64x256xbf16> to vector<64x256xbf16>
    %cst_129 = arith.constant dense<0.000000e+00> : vector<64x64xf32>
    %140 = tpu.matmul %139, %80, %cst_129 {dimension_numbers = #tpu.dot_dimension_numbers<[1], [0], [0], [1], [0, 0, 1, 1], [], []>} : vector<64x256xbf16>, vector<256x64xbf16>, vector<64x64xf32> -> vector<64x64xf32>
    %141 = arith.truncf %140 : vector<64x64xf32> to vector<64x64xbf16>
    %c7_130 = arith.constant 7 : index
    %c0_131 = arith.constant 0 : index
    %c0_132 = arith.constant 0 : index
    %142 = vector.load %arg6[%c7_130, %c0_131, %c0_132] : memref<9x64x128xbf16, #tpu.memory_space<vmem>>, vector<1x64x128xbf16>
    %143 = vector.shape_cast %142 : vector<1x64x128xbf16> to vector<64x128xbf16>
    %cst_133 = arith.constant dense<0.000000e+00> : vector<64x128xf32>
    %144 = tpu.matmul %141, %143, %cst_133 {dimension_numbers = #tpu.dot_dimension_numbers<[1], [0], [0], [1], [0, 0, 1, 1], [], []>} : vector<64x64xbf16>, vector<64x128xbf16>, vector<64x128xf32> -> vector<64x128xf32>
    %145 = arith.addf %137, %144 : vector<64x128xf32>
    %c8_134 = arith.constant 8 : index
    %c0_135 = arith.constant 0 : index
    %c0_136 = arith.constant 0 : index
    %146 = vector.load %arg5[%c8_134, %c0_135, %c0_136] : memref<9x64x256xbf16, #tpu.memory_space<vmem>>, vector<1x64x256xbf16>
    %147 = vector.shape_cast %146 : vector<1x64x256xbf16> to vector<64x256xbf16>
    %cst_137 = arith.constant dense<0.000000e+00> : vector<64x64xf32>
    %148 = tpu.matmul %147, %80, %cst_137 {dimension_numbers = #tpu.dot_dimension_numbers<[1], [0], [0], [1], [0, 0, 1, 1], [], []>} : vector<64x256xbf16>, vector<256x64xbf16>, vector<64x64xf32> -> vector<64x64xf32>
    %149 = arith.truncf %148 : vector<64x64xf32> to vector<64x64xbf16>
    %c8_138 = arith.constant 8 : index
    %c0_139 = arith.constant 0 : index
    %c0_140 = arith.constant 0 : index
    %150 = vector.load %arg6[%c8_138, %c0_139, %c0_140] : memref<9x64x128xbf16, #tpu.memory_space<vmem>>, vector<1x64x128xbf16>
    %151 = vector.shape_cast %150 : vector<1x64x128xbf16> to vector<64x128xbf16>
    %cst_141 = arith.constant dense<0.000000e+00> : vector<64x128xf32>
    %152 = tpu.matmul %149, %151, %cst_141 {dimension_numbers = #tpu.dot_dimension_numbers<[1], [0], [0], [1], [0, 0, 1, 1], [], []>} : vector<64x64xbf16>, vector<64x128xbf16>, vector<64x128xf32> -> vector<64x128xf32>
    %153 = arith.addf %145, %152 : vector<64x128xf32>
    %c0_142 = arith.constant 0 : index
    %c0_143 = arith.constant 0 : index
    %154 = vector.load %arg7[%c0_142, %c0_143] : memref<1x128xf32, #tpu.memory_space<vmem>>, vector<1x128xf32>
    %155 = vector.broadcast %154 : vector<1x128xf32> to vector<64x128xf32>
    %156 = arith.addf %153, %155 : vector<64x128xf32>
    %cst_144 = arith.constant 0.000000e+00 : f32
    %157 = vector.broadcast %cst_144 : f32 to vector<64x128xf32>
    %158 = arith.maximumf %156, %157 : vector<64x128xf32>
    %159 = arith.truncf %158 : vector<64x128xf32> to vector<64x128xbf16>
    %cst_145 = arith.constant 0.000000e+00 : f32
    %160 = vector.broadcast %cst_145 : f32 to vector<16x256xf32>
    %c0_146 = arith.constant 0 : index
    %c0_147 = arith.constant 0 : index
    %c0_148 = arith.constant 0 : index
    %161 = vector.load %arg8[%c0_146, %c0_147, %c0_148] : memref<9x16x64xbf16, #tpu.memory_space<vmem>>, vector<1x16x64xbf16>
    %162 = vector.shape_cast %161 : vector<1x16x64xbf16> to vector<16x64xbf16>
    %cst_149 = arith.constant dense<0.000000e+00> : vector<16x128xf32>
    %163 = tpu.matmul %162, %159, %cst_149 {dimension_numbers = #tpu.dot_dimension_numbers<[1], [0], [0], [1], [0, 0, 1, 1], [], []>} : vector<16x64xbf16>, vector<64x128xbf16>, vector<16x128xf32> -> vector<16x128xf32>
    %164 = arith.truncf %163 : vector<16x128xf32> to vector<16x128xbf16>
    %c0_150 = arith.constant 0 : index
    %c0_151 = arith.constant 0 : index
    %c0_152 = arith.constant 0 : index
    %165 = vector.load %arg9[%c0_150, %c0_151, %c0_152] : memref<9x128x256xbf16, #tpu.memory_space<vmem>>, vector<1x128x256xbf16>
    %166 = vector.shape_cast %165 : vector<1x128x256xbf16> to vector<128x256xbf16>
    %cst_153 = arith.constant dense<0.000000e+00> : vector<16x256xf32>
    %167 = tpu.matmul %164, %166, %cst_153 {dimension_numbers = #tpu.dot_dimension_numbers<[1], [0], [0], [1], [0, 0, 1, 1], [], []>} : vector<16x128xbf16>, vector<128x256xbf16>, vector<16x256xf32> -> vector<16x256xf32>
    %168 = arith.addf %160, %167 : vector<16x256xf32>
    %c1_154 = arith.constant 1 : index
    %c0_155 = arith.constant 0 : index
    %c0_156 = arith.constant 0 : index
    %169 = vector.load %arg8[%c1_154, %c0_155, %c0_156] : memref<9x16x64xbf16, #tpu.memory_space<vmem>>, vector<1x16x64xbf16>
    %170 = vector.shape_cast %169 : vector<1x16x64xbf16> to vector<16x64xbf16>
    %cst_157 = arith.constant dense<0.000000e+00> : vector<16x128xf32>
    %171 = tpu.matmul %170, %159, %cst_157 {dimension_numbers = #tpu.dot_dimension_numbers<[1], [0], [0], [1], [0, 0, 1, 1], [], []>} : vector<16x64xbf16>, vector<64x128xbf16>, vector<16x128xf32> -> vector<16x128xf32>
    %172 = arith.truncf %171 : vector<16x128xf32> to vector<16x128xbf16>
    %c1_158 = arith.constant 1 : index
    %c0_159 = arith.constant 0 : index
    %c0_160 = arith.constant 0 : index
    %173 = vector.load %arg9[%c1_158, %c0_159, %c0_160] : memref<9x128x256xbf16, #tpu.memory_space<vmem>>, vector<1x128x256xbf16>
    %174 = vector.shape_cast %173 : vector<1x128x256xbf16> to vector<128x256xbf16>
    %cst_161 = arith.constant dense<0.000000e+00> : vector<16x256xf32>
    %175 = tpu.matmul %172, %174, %cst_161 {dimension_numbers = #tpu.dot_dimension_numbers<[1], [0], [0], [1], [0, 0, 1, 1], [], []>} : vector<16x128xbf16>, vector<128x256xbf16>, vector<16x256xf32> -> vector<16x256xf32>
    %176 = arith.addf %168, %175 : vector<16x256xf32>
    %c2_162 = arith.constant 2 : index
    %c0_163 = arith.constant 0 : index
    %c0_164 = arith.constant 0 : index
    %177 = vector.load %arg8[%c2_162, %c0_163, %c0_164] : memref<9x16x64xbf16, #tpu.memory_space<vmem>>, vector<1x16x64xbf16>
    %178 = vector.shape_cast %177 : vector<1x16x64xbf16> to vector<16x64xbf16>
    %cst_165 = arith.constant dense<0.000000e+00> : vector<16x128xf32>
    %179 = tpu.matmul %178, %159, %cst_165 {dimension_numbers = #tpu.dot_dimension_numbers<[1], [0], [0], [1], [0, 0, 1, 1], [], []>} : vector<16x64xbf16>, vector<64x128xbf16>, vector<16x128xf32> -> vector<16x128xf32>
    %180 = arith.truncf %179 : vector<16x128xf32> to vector<16x128xbf16>
    %c2_166 = arith.constant 2 : index
    %c0_167 = arith.constant 0 : index
    %c0_168 = arith.constant 0 : index
    %181 = vector.load %arg9[%c2_166, %c0_167, %c0_168] : memref<9x128x256xbf16, #tpu.memory_space<vmem>>, vector<1x128x256xbf16>
    %182 = vector.shape_cast %181 : vector<1x128x256xbf16> to vector<128x256xbf16>
    %cst_169 = arith.constant dense<0.000000e+00> : vector<16x256xf32>
    %183 = tpu.matmul %180, %182, %cst_169 {dimension_numbers = #tpu.dot_dimension_numbers<[1], [0], [0], [1], [0, 0, 1, 1], [], []>} : vector<16x128xbf16>, vector<128x256xbf16>, vector<16x256xf32> -> vector<16x256xf32>
    %184 = arith.addf %176, %183 : vector<16x256xf32>
    %c3_170 = arith.constant 3 : index
    %c0_171 = arith.constant 0 : index
    %c0_172 = arith.constant 0 : index
    %185 = vector.load %arg8[%c3_170, %c0_171, %c0_172] : memref<9x16x64xbf16, #tpu.memory_space<vmem>>, vector<1x16x64xbf16>
    %186 = vector.shape_cast %185 : vector<1x16x64xbf16> to vector<16x64xbf16>
    %cst_173 = arith.constant dense<0.000000e+00> : vector<16x128xf32>
    %187 = tpu.matmul %186, %159, %cst_173 {dimension_numbers = #tpu.dot_dimension_numbers<[1], [0], [0], [1], [0, 0, 1, 1], [], []>} : vector<16x64xbf16>, vector<64x128xbf16>, vector<16x128xf32> -> vector<16x128xf32>
    %188 = arith.truncf %187 : vector<16x128xf32> to vector<16x128xbf16>
    %c3_174 = arith.constant 3 : index
    %c0_175 = arith.constant 0 : index
    %c0_176 = arith.constant 0 : index
    %189 = vector.load %arg9[%c3_174, %c0_175, %c0_176] : memref<9x128x256xbf16, #tpu.memory_space<vmem>>, vector<1x128x256xbf16>
    %190 = vector.shape_cast %189 : vector<1x128x256xbf16> to vector<128x256xbf16>
    %cst_177 = arith.constant dense<0.000000e+00> : vector<16x256xf32>
    %191 = tpu.matmul %188, %190, %cst_177 {dimension_numbers = #tpu.dot_dimension_numbers<[1], [0], [0], [1], [0, 0, 1, 1], [], []>} : vector<16x128xbf16>, vector<128x256xbf16>, vector<16x256xf32> -> vector<16x256xf32>
    %192 = arith.addf %184, %191 : vector<16x256xf32>
    %c4_178 = arith.constant 4 : index
    %c0_179 = arith.constant 0 : index
    %c0_180 = arith.constant 0 : index
    %193 = vector.load %arg8[%c4_178, %c0_179, %c0_180] : memref<9x16x64xbf16, #tpu.memory_space<vmem>>, vector<1x16x64xbf16>
    %194 = vector.shape_cast %193 : vector<1x16x64xbf16> to vector<16x64xbf16>
    %cst_181 = arith.constant dense<0.000000e+00> : vector<16x128xf32>
    %195 = tpu.matmul %194, %159, %cst_181 {dimension_numbers = #tpu.dot_dimension_numbers<[1], [0], [0], [1], [0, 0, 1, 1], [], []>} : vector<16x64xbf16>, vector<64x128xbf16>, vector<16x128xf32> -> vector<16x128xf32>
    %196 = arith.truncf %195 : vector<16x128xf32> to vector<16x128xbf16>
    %c4_182 = arith.constant 4 : index
    %c0_183 = arith.constant 0 : index
    %c0_184 = arith.constant 0 : index
    %197 = vector.load %arg9[%c4_182, %c0_183, %c0_184] : memref<9x128x256xbf16, #tpu.memory_space<vmem>>, vector<1x128x256xbf16>
    %198 = vector.shape_cast %197 : vector<1x128x256xbf16> to vector<128x256xbf16>
    %cst_185 = arith.constant dense<0.000000e+00> : vector<16x256xf32>
    %199 = tpu.matmul %196, %198, %cst_185 {dimension_numbers = #tpu.dot_dimension_numbers<[1], [0], [0], [1], [0, 0, 1, 1], [], []>} : vector<16x128xbf16>, vector<128x256xbf16>, vector<16x256xf32> -> vector<16x256xf32>
    %200 = arith.addf %192, %199 : vector<16x256xf32>
    %c5_186 = arith.constant 5 : index
    %c0_187 = arith.constant 0 : index
    %c0_188 = arith.constant 0 : index
    %201 = vector.load %arg8[%c5_186, %c0_187, %c0_188] : memref<9x16x64xbf16, #tpu.memory_space<vmem>>, vector<1x16x64xbf16>
    %202 = vector.shape_cast %201 : vector<1x16x64xbf16> to vector<16x64xbf16>
    %cst_189 = arith.constant dense<0.000000e+00> : vector<16x128xf32>
    %203 = tpu.matmul %202, %159, %cst_189 {dimension_numbers = #tpu.dot_dimension_numbers<[1], [0], [0], [1], [0, 0, 1, 1], [], []>} : vector<16x64xbf16>, vector<64x128xbf16>, vector<16x128xf32> -> vector<16x128xf32>
    %204 = arith.truncf %203 : vector<16x128xf32> to vector<16x128xbf16>
    %c5_190 = arith.constant 5 : index
    %c0_191 = arith.constant 0 : index
    %c0_192 = arith.constant 0 : index
    %205 = vector.load %arg9[%c5_190, %c0_191, %c0_192] : memref<9x128x256xbf16, #tpu.memory_space<vmem>>, vector<1x128x256xbf16>
    %206 = vector.shape_cast %205 : vector<1x128x256xbf16> to vector<128x256xbf16>
    %cst_193 = arith.constant dense<0.000000e+00> : vector<16x256xf32>
    %207 = tpu.matmul %204, %206, %cst_193 {dimension_numbers = #tpu.dot_dimension_numbers<[1], [0], [0], [1], [0, 0, 1, 1], [], []>} : vector<16x128xbf16>, vector<128x256xbf16>, vector<16x256xf32> -> vector<16x256xf32>
    %208 = arith.addf %200, %207 : vector<16x256xf32>
    %c6_194 = arith.constant 6 : index
    %c0_195 = arith.constant 0 : index
    %c0_196 = arith.constant 0 : index
    %209 = vector.load %arg8[%c6_194, %c0_195, %c0_196] : memref<9x16x64xbf16, #tpu.memory_space<vmem>>, vector<1x16x64xbf16>
    %210 = vector.shape_cast %209 : vector<1x16x64xbf16> to vector<16x64xbf16>
    %cst_197 = arith.constant dense<0.000000e+00> : vector<16x128xf32>
    %211 = tpu.matmul %210, %159, %cst_197 {dimension_numbers = #tpu.dot_dimension_numbers<[1], [0], [0], [1], [0, 0, 1, 1], [], []>} : vector<16x64xbf16>, vector<64x128xbf16>, vector<16x128xf32> -> vector<16x128xf32>
    %212 = arith.truncf %211 : vector<16x128xf32> to vector<16x128xbf16>
    %c6_198 = arith.constant 6 : index
    %c0_199 = arith.constant 0 : index
    %c0_200 = arith.constant 0 : index
    %213 = vector.load %arg9[%c6_198, %c0_199, %c0_200] : memref<9x128x256xbf16, #tpu.memory_space<vmem>>, vector<1x128x256xbf16>
    %214 = vector.shape_cast %213 : vector<1x128x256xbf16> to vector<128x256xbf16>
    %cst_201 = arith.constant dense<0.000000e+00> : vector<16x256xf32>
    %215 = tpu.matmul %212, %214, %cst_201 {dimension_numbers = #tpu.dot_dimension_numbers<[1], [0], [0], [1], [0, 0, 1, 1], [], []>} : vector<16x128xbf16>, vector<128x256xbf16>, vector<16x256xf32> -> vector<16x256xf32>
    %216 = arith.addf %208, %215 : vector<16x256xf32>
    %c7_202 = arith.constant 7 : index
    %c0_203 = arith.constant 0 : index
    %c0_204 = arith.constant 0 : index
    %217 = vector.load %arg8[%c7_202, %c0_203, %c0_204] : memref<9x16x64xbf16, #tpu.memory_space<vmem>>, vector<1x16x64xbf16>
    %218 = vector.shape_cast %217 : vector<1x16x64xbf16> to vector<16x64xbf16>
    %cst_205 = arith.constant dense<0.000000e+00> : vector<16x128xf32>
    %219 = tpu.matmul %218, %159, %cst_205 {dimension_numbers = #tpu.dot_dimension_numbers<[1], [0], [0], [1], [0, 0, 1, 1], [], []>} : vector<16x64xbf16>, vector<64x128xbf16>, vector<16x128xf32> -> vector<16x128xf32>
    %220 = arith.truncf %219 : vector<16x128xf32> to vector<16x128xbf16>
    %c7_206 = arith.constant 7 : index
    %c0_207 = arith.constant 0 : index
    %c0_208 = arith.constant 0 : index
    %221 = vector.load %arg9[%c7_206, %c0_207, %c0_208] : memref<9x128x256xbf16, #tpu.memory_space<vmem>>, vector<1x128x256xbf16>
    %222 = vector.shape_cast %221 : vector<1x128x256xbf16> to vector<128x256xbf16>
    %cst_209 = arith.constant dense<0.000000e+00> : vector<16x256xf32>
    %223 = tpu.matmul %220, %222, %cst_209 {dimension_numbers = #tpu.dot_dimension_numbers<[1], [0], [0], [1], [0, 0, 1, 1], [], []>} : vector<16x128xbf16>, vector<128x256xbf16>, vector<16x256xf32> -> vector<16x256xf32>
    %224 = arith.addf %216, %223 : vector<16x256xf32>
    %c8_210 = arith.constant 8 : index
    %c0_211 = arith.constant 0 : index
    %c0_212 = arith.constant 0 : index
    %225 = vector.load %arg8[%c8_210, %c0_211, %c0_212] : memref<9x16x64xbf16, #tpu.memory_space<vmem>>, vector<1x16x64xbf16>
    %226 = vector.shape_cast %225 : vector<1x16x64xbf16> to vector<16x64xbf16>
    %cst_213 = arith.constant dense<0.000000e+00> : vector<16x128xf32>
    %227 = tpu.matmul %226, %159, %cst_213 {dimension_numbers = #tpu.dot_dimension_numbers<[1], [0], [0], [1], [0, 0, 1, 1], [], []>} : vector<16x64xbf16>, vector<64x128xbf16>, vector<16x128xf32> -> vector<16x128xf32>
    %228 = arith.truncf %227 : vector<16x128xf32> to vector<16x128xbf16>
    %c8_214 = arith.constant 8 : index
    %c0_215 = arith.constant 0 : index
    %c0_216 = arith.constant 0 : index
    %229 = vector.load %arg9[%c8_214, %c0_215, %c0_216] : memref<9x128x256xbf16, #tpu.memory_space<vmem>>, vector<1x128x256xbf16>
    %230 = vector.shape_cast %229 : vector<1x128x256xbf16> to vector<128x256xbf16>
    %cst_217 = arith.constant dense<0.000000e+00> : vector<16x256xf32>
    %231 = tpu.matmul %228, %230, %cst_217 {dimension_numbers = #tpu.dot_dimension_numbers<[1], [0], [0], [1], [0, 0, 1, 1], [], []>} : vector<16x128xbf16>, vector<128x256xbf16>, vector<16x256xf32> -> vector<16x256xf32>
    %232 = arith.addf %224, %231 : vector<16x256xf32>
    %c0_218 = arith.constant 0 : index
    %c0_219 = arith.constant 0 : index
    %233 = vector.load %arg10[%c0_218, %c0_219] : memref<1x256xf32, #tpu.memory_space<vmem>>, vector<1x256xf32>
    %234 = vector.broadcast %233 : vector<1x256xf32> to vector<16x256xf32>
    %235 = arith.addf %232, %234 : vector<16x256xf32>
    %cst_220 = arith.constant 0.000000e+00 : f32
    %236 = vector.broadcast %cst_220 : f32 to vector<16x256xf32>
    %237 = arith.maximumf %235, %236 : vector<16x256xf32>
    %238 = arith.truncf %237 : vector<16x256xf32> to vector<16x256xbf16>
    %c0_221 = arith.constant 0 : index
    %c0_222 = arith.constant 0 : index
    %239 = vector.load %arg11[%c0_221, %c0_222] : memref<4x16xbf16, #tpu.memory_space<vmem>>, vector<4x16xbf16>
    %cst_223 = arith.constant dense<0.000000e+00> : vector<4x256xf32>
    %240 = tpu.matmul %239, %238, %cst_223 {dimension_numbers = #tpu.dot_dimension_numbers<[1], [0], [0], [1], [0, 0, 1, 1], [], []>} : vector<4x16xbf16>, vector<16x256xbf16>, vector<4x256xf32> -> vector<4x256xf32>
    %241 = arith.truncf %240 : vector<4x256xf32> to vector<4x256xbf16>
    %cst_224 = arith.constant 0.000000e+00 : f32
    %242 = vector.broadcast %cst_224 : f32 to vector<1x128xf32>
    %243 = vector.extract_strided_slice %241 {offsets = [0, 0], sizes = [1, 256], strides = [1, 1]} : vector<4x256xbf16> to vector<1x256xbf16>
    %c0_225 = arith.constant 0 : index
    %c0_226 = arith.constant 0 : index
    %c0_227 = arith.constant 0 : index
    %244 = vector.load %arg12[%c0_225, %c0_226, %c0_227] : memref<4x256x128xbf16, #tpu.memory_space<vmem>>, vector<1x256x128xbf16>
    %245 = vector.shape_cast %244 : vector<1x256x128xbf16> to vector<256x128xbf16>
    %cst_228 = arith.constant dense<0.000000e+00> : vector<1x128xf32>
    %246 = tpu.matmul %243, %245, %cst_228 {dimension_numbers = #tpu.dot_dimension_numbers<[1], [0], [0], [1], [0, 0, 1, 1], [], []>} : vector<1x256xbf16>, vector<256x128xbf16>, vector<1x128xf32> -> vector<1x128xf32>
    %247 = arith.addf %242, %246 : vector<1x128xf32>
    %248 = vector.extract_strided_slice %241 {offsets = [1, 0], sizes = [1, 256], strides = [1, 1]} : vector<4x256xbf16> to vector<1x256xbf16>
    %c1_229 = arith.constant 1 : index
    %c0_230 = arith.constant 0 : index
    %c0_231 = arith.constant 0 : index
    %249 = vector.load %arg12[%c1_229, %c0_230, %c0_231] : memref<4x256x128xbf16, #tpu.memory_space<vmem>>, vector<1x256x128xbf16>
    %250 = vector.shape_cast %249 : vector<1x256x128xbf16> to vector<256x128xbf16>
    %cst_232 = arith.constant dense<0.000000e+00> : vector<1x128xf32>
    %251 = tpu.matmul %248, %250, %cst_232 {dimension_numbers = #tpu.dot_dimension_numbers<[1], [0], [0], [1], [0, 0, 1, 1], [], []>} : vector<1x256xbf16>, vector<256x128xbf16>, vector<1x128xf32> -> vector<1x128xf32>
    %252 = arith.addf %247, %251 : vector<1x128xf32>
    %253 = vector.extract_strided_slice %241 {offsets = [2, 0], sizes = [1, 256], strides = [1, 1]} : vector<4x256xbf16> to vector<1x256xbf16>
    %c2_233 = arith.constant 2 : index
    %c0_234 = arith.constant 0 : index
    %c0_235 = arith.constant 0 : index
    %254 = vector.load %arg12[%c2_233, %c0_234, %c0_235] : memref<4x256x128xbf16, #tpu.memory_space<vmem>>, vector<1x256x128xbf16>
    %255 = vector.shape_cast %254 : vector<1x256x128xbf16> to vector<256x128xbf16>
    %cst_236 = arith.constant dense<0.000000e+00> : vector<1x128xf32>
    %256 = tpu.matmul %253, %255, %cst_236 {dimension_numbers = #tpu.dot_dimension_numbers<[1], [0], [0], [1], [0, 0, 1, 1], [], []>} : vector<1x256xbf16>, vector<256x128xbf16>, vector<1x128xf32> -> vector<1x128xf32>
    %257 = arith.addf %252, %256 : vector<1x128xf32>
    %258 = vector.extract_strided_slice %241 {offsets = [3, 0], sizes = [1, 256], strides = [1, 1]} : vector<4x256xbf16> to vector<1x256xbf16>
    %c3_237 = arith.constant 3 : index
    %c0_238 = arith.constant 0 : index
    %c0_239 = arith.constant 0 : index
    %259 = vector.load %arg12[%c3_237, %c0_238, %c0_239] : memref<4x256x128xbf16, #tpu.memory_space<vmem>>, vector<1x256x128xbf16>
    %260 = vector.shape_cast %259 : vector<1x256x128xbf16> to vector<256x128xbf16>
    %cst_240 = arith.constant dense<0.000000e+00> : vector<1x128xf32>
    %261 = tpu.matmul %258, %260, %cst_240 {dimension_numbers = #tpu.dot_dimension_numbers<[1], [0], [0], [1], [0, 0, 1, 1], [], []>} : vector<1x256xbf16>, vector<256x128xbf16>, vector<1x128xf32> -> vector<1x128xf32>
    %262 = arith.addf %257, %261 : vector<1x128xf32>
    %c0_241 = arith.constant 0 : index
    %c0_242 = arith.constant 0 : index
    %263 = vector.load %arg13[%c0_241, %c0_242] : memref<1x128xf32, #tpu.memory_space<vmem>>, vector<1x128xf32>
    %264 = arith.addf %262, %263 : vector<1x128xf32>
    %cst_243 = arith.constant 0.000000e+00 : f32
    %265 = vector.broadcast %cst_243 : f32 to vector<1x128xf32>
    %266 = arith.maximumf %264, %265 : vector<1x128xf32>
    %267 = arith.truncf %266 : vector<1x128xf32> to vector<1x128xbf16>
    %c0_244 = arith.constant 0 : index
    %c0_245 = arith.constant 0 : index
    %268 = vector.load %arg14[%c0_244, %c0_245] : memref<128x128xbf16, #tpu.memory_space<vmem>>, vector<128x128xbf16>
    %cst_246 = arith.constant dense<0.000000e+00> : vector<1x128xf32>
    %269 = tpu.matmul %267, %268, %cst_246 {dimension_numbers = #tpu.dot_dimension_numbers<[1], [0], [0], [1], [0, 0, 1, 1], [], []>} : vector<1x128xbf16>, vector<128x128xbf16>, vector<1x128xf32> -> vector<1x128xf32>
    %c0_247 = arith.constant 0 : index
    %c0_248 = arith.constant 0 : index
    %270 = vector.load %arg15[%c0_247, %c0_248] : memref<1x128xf32, #tpu.memory_space<vmem>>, vector<1x128xf32>
    %271 = arith.addf %269, %270 : vector<1x128xf32>
    %cst_249 = arith.constant 0.000000e+00 : f32
    %272 = vector.broadcast %cst_249 : f32 to vector<1x128xf32>
    %273 = arith.maximumf %271, %272 : vector<1x128xf32>
    %274 = arith.truncf %273 : vector<1x128xf32> to vector<1x128xbf16>
    %c0_250 = arith.constant 0 : index
    %c0_251 = arith.constant 0 : index
    %275 = vector.load %arg16[%c0_250, %c0_251] : memref<128x128xbf16, #tpu.memory_space<vmem>>, vector<128x128xbf16>
    %cst_252 = arith.constant dense<0.000000e+00> : vector<1x128xf32>
    %276 = tpu.matmul %274, %275, %cst_252 {dimension_numbers = #tpu.dot_dimension_numbers<[1], [0], [0], [1], [0, 0, 1, 1], [], []>} : vector<1x128xbf16>, vector<128x128xbf16>, vector<1x128xf32> -> vector<1x128xf32>
    %c0_253 = arith.constant 0 : index
    %c0_254 = arith.constant 0 : index
    %277 = vector.load %arg17[%c0_253, %c0_254] : memref<1x128xf32, #tpu.memory_space<vmem>>, vector<1x128xf32>
    %278 = arith.addf %276, %277 : vector<1x128xf32>
    %cst_255 = arith.constant 0.000000e+00 : f32
    %279 = vector.broadcast %cst_255 : f32 to vector<1x128xf32>
    %280 = arith.maximumf %278, %279 : vector<1x128xf32>
    %c0_256 = arith.constant 0 : index
    %c0_257 = arith.constant 0 : index
    %c0_258 = arith.constant 0 : index
    %281 = vector.load %arg18[%c0_256, %c0_257, %c0_258] : memref<1x1x128xf32, #tpu.memory_space<vmem>>, vector<1x1x128xf32>
    %282 = vector.shape_cast %281 : vector<1x1x128xf32> to vector<1x128xf32>
    %283 = vector.shape_cast %280 : vector<1x128xf32> to vector<1x1x128xf32>
    tpu.vector_store %arg18[%c0_256, %c0_257, %c0_258], %283 {strides = array<i32>} : memref<1x1x128xf32, #tpu.memory_space<vmem>>, vector<1x1x128xf32>,
    return
  }
  func.func @transform_0(%arg0: i32) -> (i32, i32, i32) {
    %c0_i32 = arith.constant 0 : i32
    %c0_i32_0 = arith.constant 0 : i32
    %c0_i32_1 = arith.constant 0 : i32
    return %arg0, %c0_i32, %c0_i32_0 : i32, i32, i32
  }
  func.func @transform_1(%arg0: i32) -> (i32, i32, i32) {
    %c0_i32 = arith.constant 0 : i32
    %c0_i32_0 = arith.constant 0 : i32
    %c0_i32_1 = arith.constant 0 : i32
    %c0_i32_2 = arith.constant 0 : i32
    return %c0_i32, %c0_i32_0, %c0_i32_1 : i32, i32, i32
  }
  func.func @transform_2(%arg0: i32) -> (i32, i32, i32) {
    %c0_i32 = arith.constant 0 : i32
    %c0_i32_0 = arith.constant 0 : i32
    %c0_i32_1 = arith.constant 0 : i32
    %c0_i32_2 = arith.constant 0 : i32
    return %c0_i32, %c0_i32_0, %c0_i32_1 : i32, i32, i32
  }
  func.func @transform_3(%arg0: i32) -> (i32, i32) {
    %c0_i32 = arith.constant 0 : i32
    %c0_i32_0 = arith.constant 0 : i32
    %c0_i32_1 = arith.constant 0 : i32
    return %c0_i32, %c0_i32_0 : i32, i32
  }
  func.func @transform_4(%arg0: i32) -> (i32, i32, i32) {
    %c0_i32 = arith.constant 0 : i32
    %c0_i32_0 = arith.constant 0 : i32
    %c0_i32_1 = arith.constant 0 : i32
    %c0_i32_2 = arith.constant 0 : i32
    return %c0_i32, %c0_i32_0, %c0_i32_1 : i32, i32, i32
  }
  func.func @transform_5(%arg0: i32) -> (i32, i32, i32) {
    %c0_i32 = arith.constant 0 : i32
    %c0_i32_0 = arith.constant 0 : i32
    %c0_i32_1 = arith.constant 0 : i32
    %c0_i32_2 = arith.constant 0 : i32
    return %c0_i32, %c0_i32_0, %c0_i32_1 : i32, i32, i32
  }
  func.func @transform_6(%arg0: i32) -> (i32, i32) {
    %c0_i32 = arith.constant 0 : i32
    %c0_i32_0 = arith.constant 0 : i32
    %c0_i32_1 = arith.constant 0 : i32
    return %c0_i32, %c0_i32_0 : i32, i32
  }
  func.func @transform_7(%arg0: i32) -> (i32, i32, i32) {
    %c0_i32 = arith.constant 0 : i32
    %c0_i32_0 = arith.constant 0 : i32
    %c0_i32_1 = arith.constant 0 : i32
    %c0_i32_2 = arith.constant 0 : i32
    return %c0_i32, %c0_i32_0, %c0_i32_1 : i32, i32, i32
  }
  func.func @transform_8(%arg0: i32) -> (i32, i32, i32) {
    %c0_i32 = arith.constant 0 : i32
    %c0_i32_0 = arith.constant 0 : i32
    %c0_i32_1 = arith.constant 0 : i32
    %c0_i32_2 = arith.constant 0 : i32
    return %c0_i32, %c0_i32_0, %c0_i32_1 : i32, i32, i32
  }
  func.func @transform_9(%arg0: i32) -> (i32, i32) {
    %c0_i32 = arith.constant 0 : i32
    %c0_i32_0 = arith.constant 0 : i32
    %c0_i32_1 = arith.constant 0 : i32
    return %c0_i32, %c0_i32_0 : i32, i32
  }
  func.func @transform_10(%arg0: i32) -> (i32, i32) {
    %c0_i32 = arith.constant 0 : i32
    %c0_i32_0 = arith.constant 0 : i32
    %c0_i32_1 = arith.constant 0 : i32
    return %c0_i32, %c0_i32_0 : i32, i32
  }
  func.func @transform_11(%arg0: i32) -> (i32, i32, i32) {
    %c0_i32 = arith.constant 0 : i32
    %c0_i32_0 = arith.constant 0 : i32
    %c0_i32_1 = arith.constant 0 : i32
    %c0_i32_2 = arith.constant 0 : i32
    return %c0_i32, %c0_i32_0, %c0_i32_1 : i32, i32, i32
  }
  func.func @transform_12(%arg0: i32) -> (i32, i32) {
    %c0_i32 = arith.constant 0 : i32
    %c0_i32_0 = arith.constant 0 : i32
    %c0_i32_1 = arith.constant 0 : i32
    return %c0_i32, %c0_i32_0 : i32, i32
  }
  func.func @transform_13(%arg0: i32) -> (i32, i32) {
    %c0_i32 = arith.constant 0 : i32
    %c0_i32_0 = arith.constant 0 : i32
    %c0_i32_1 = arith.constant 0 : i32
    return %c0_i32, %c0_i32_0 : i32, i32
  }
  func.func @transform_14(%arg0: i32) -> (i32, i32) {
    %c0_i32 = arith.constant 0 : i32
    %c0_i32_0 = arith.constant 0 : i32
    %c0_i32_1 = arith.constant 0 : i32
    return %c0_i32, %c0_i32_0 : i32, i32
  }
  func.func @transform_15(%arg0: i32) -> (i32, i32) {
    %c0_i32 = arith.constant 0 : i32
    %c0_i32_0 = arith.constant 0 : i32
    %c0_i32_1 = arith.constant 0 : i32
    return %c0_i32, %c0_i32_0 : i32, i32
  }
  func.func @transform_16(%arg0: i32) -> (i32, i32) {
    %c0_i32 = arith.constant 0 : i32
    %c0_i32_0 = arith.constant 0 : i32
    %c0_i32_1 = arith.constant 0 : i32
    return %c0_i32, %c0_i32_0 : i32, i32
  }
  func.func @transform_17(%arg0: i32) -> (i32, i32, i32) {
    %c0_i32 = arith.constant 0 : i32
    %c0_i32_0 = arith.constant 0 : i32
    %c0_i32_1 = arith.constant 0 : i32
    return %arg0, %c0_i32, %c0_i32_0 : i32, i32, i32
  }
}

</mosaic_0001>

<llo_original>
// kernel: dqn_forward.1
$region0: #{dqn_forward.1}
  #allocation0 [shape = 'u32[]', space=smem, size = 0x4, offset = 0x4, fixed_abs, tag = 'smem constant byte address 0x4 - core index']
  #allocation1 [shape = 'u32[72,128]{1,0:T(1,128)}', space=vmem, size = 0x9000, scoped, tag = 'internal scratch']
  %s0 = inlined_call_operand.vmem [shape: bf16[2,256,3], index: 0, kind: input, shape index: {}]
  %s1 = inlined_call_operand.hbm [shape: bf16[9,256,256], index: 1, kind: input, shape index: {}]
  %s2 = inlined_call_operand.hbm [shape: bf16[9,3,64], index: 2, kind: input, shape index: {}]
  %s3 = inlined_call_operand.hbm [shape: f32[1,64], index: 3, kind: input, shape index: {}]
  %s4 = inlined_call_operand.hbm [shape: bf16[9,64,256], index: 4, kind: input, shape index: {}]
  %s5 = inlined_call_operand.hbm [shape: bf16[9,64,128], index: 5, kind: input, shape index: {}]
  %s6 = inlined_call_operand.hbm [shape: f32[1,128], index: 6, kind: input, shape index: {}]
  %s7 = inlined_call_operand.hbm [shape: bf16[9,16,64], index: 7, kind: input, shape index: {}]
  %s8 = inlined_call_operand.hbm [shape: bf16[9,128,256], index: 8, kind: input, shape index: {}]
  %s9 = inlined_call_operand.hbm [shape: f32[1,256], index: 9, kind: input, shape index: {}]
  %s10 = inlined_call_operand.hbm [shape: bf16[4,16], index: 10, kind: input, shape index: {}]
  %s11 = inlined_call_operand.hbm [shape: bf16[4,256,128], index: 11, kind: input, shape index: {}]
  %s12 = inlined_call_operand.hbm [shape: f32[1,128], index: 12, kind: input, shape index: {}]
  %s13 = inlined_call_operand.hbm [shape: bf16[128,128], index: 13, kind: input, shape index: {}]
  %s14 = inlined_call_operand.hbm [shape: f32[1,128], index: 14, kind: input, shape index: {}]
  %s15 = inlined_call_operand.hbm [shape: bf16[128,128], index: 15, kind: input, shape index: {}]
  %s16 = inlined_call_operand.hbm [shape: f32[1,128], index: 16, kind: input, shape index: {}]
  %s17 = inlined_call_operand.hbm [shape: f32[2,1,128], index: 17, kind: output, shape index: {}]
  %s18 = sld [smem:[#allocation0]]
  $region165: #{dqn_forward.1} parent=0
    _
  %s20 = ssub.s32 1, %s18
  %s21 = scalar_select 0, %s20, %s18
  $region1: #{dqn_forward.1} parent=0
    #allocation2 [shape = 'u8[1179648]{0}', space=vmem, size = 0x120000, scoped, tag = 'input window, operand 1, single buffered']
    #allocation3 [shape = 's32[2]{0}', space=sflag, size = 0x8, scoped, tag = 'scoped memory for dqn_forward.1']
    #allocation4 [shape = 's32[2]{0}', space=sflag, size = 0x8, scoped, tag = 'scoped memory for dqn_forward.1']
    #allocation5 [shape = 'u8[9216]{0}', space=vmem, size = 0x2400, scoped, tag = 'input window, operand 2, single buffered']
    #allocation6 [shape = 's32[1]{0}', space=sflag, size = 0x4, scoped, tag = 'scoped memory for dqn_forward.1']
    #allocation7 [shape = 'u8[512]{0}', space=vmem, size = 0x400, scoped, tag = 'input window, operand 3, single buffered']
    #allocation8 [shape = 'u8[294912]{0}', space=vmem, size = 0x48000, scoped, tag = 'input window, operand 4, single buffered']
    #allocation9 [shape = 's32[1]{0}', space=sflag, size = 0x4, scoped, tag = 'scoped memory for dqn_forward.1']
    #allocation10 [shape = 'u8[147456]{0}', space=vmem, size = 0x24000, scoped, tag = 'input window, operand 5, single buffered']
    #allocation11 [shape = 'u8[512]{0}', space=vmem, size = 0x400, scoped, tag = 'input window, operand 6, single buffered']
    #allocation12 [shape = 's32[1]{0}', space=sflag, size = 0x4, scoped, tag = 'scoped memory for dqn_forward.1']
    #allocation13 [shape = 'u8[36864]{0}', space=vmem, size = 0x9000, scoped, tag = 'input window, operand 7, single buffered']
    #allocation14 [shape = 'u8[589824]{0}', space=vmem, size = 0x90000, scoped, tag = 'input window, operand 8, single buffered']
    #allocation15 [shape = 's32[1]{0}', space=sflag, size = 0x4, scoped, tag = 'scoped memory for dqn_forward.1']
    #allocation16 [shape = 'u8[1024]{0}', space=vmem, size = 0x400, scoped, tag = 'input window, operand 9, single buffered']
    #allocation17 [shape = 'u8[1024]{0}', space=vmem, size = 0x400, scoped, tag = 'input window, operand 10, single buffered']
    #allocation18 [shape = 's32[1]{0}', space=sflag, size = 0x4, scoped, tag = 'scoped memory for dqn_forward.1']
    #allocation19 [shape = 'u8[262144]{0}', space=vmem, size = 0x40000, scoped, tag = 'input window, operand 11, single buffered']
    #allocation20 [shape = 'u8[512]{0}', space=vmem, size = 0x400, scoped, tag = 'input window, operand 12, single buffered']
    #allocation21 [shape = 's32[1]{0}', space=sflag, size = 0x4, scoped, tag = 'scoped memory for dqn_forward.1']
    #allocation22 [shape = 'u8[32768]{0}', space=vmem, size = 0x8000, scoped, tag = 'input window, operand 13, single buffered']
    #allocation23 [shape = 'u8[512]{0}', space=vmem, size = 0x400, scoped, tag = 'input window, operand 14, single buffered']
    #allocation24 [shape = 's32[1]{0}', space=sflag, size = 0x4, scoped, tag = 'scoped memory for dqn_forward.1']
    #allocation25 [shape = 'u8[32768]{0}', space=vmem, size = 0x8000, scoped, tag = 'input window, operand 15, single buffered']
    #allocation26 [shape = 'u8[512]{0}', space=vmem, size = 0x400, scoped, tag = 'input window, operand 16, single buffered']
    #allocation27 [shape = 's32[1]{0}', space=sflag, size = 0x4, scoped, tag = 'scoped memory for dqn_forward.1']
    #allocation28 [shape = 'u8[1024]{0}', space=vmem, size = 0x400, scoped, tag = 'output window, operand 0']
    %22 = vsyncpa [#allocation3], 0
    %23 = vsyncpa [#allocation6], 0
    %24 = vsyncpa [#allocation9], 0
    %25 = vsyncpa [#allocation12], 0
    %26 = vsyncpa [#allocation15], 0
    %27 = vsyncpa [#allocation18], 0
    %28 = vsyncpa [#allocation21], 0
    %29 = vsyncpa [#allocation24], 0
    %30 = vsyncpa [#allocation27], 0
    %31 = vsyncpa [#allocation4], 0
    %s32 = scalar_lea.sflag [#allocation4], 1
    %33 = vsyncpa %s32, 0
    loop: start=0, step=1, limit=4
    $region2: #{dqn_forward.1} parent=1 // loop_pre_header
      _
    $region3: #{dqn_forward.1} parent=1 // loop_header
      %s35 = sphi 0, %s39
      %p36 = scmp.ge.s32.totalorder %s35, 4
      %s45 = sphi 0, %s47
      %s48 = sphi 0, %s45
      %s49 = sphi 0, %s48
      %s65 = sphi 0, %s49
      %s69 = sphi 0, %s69
      %s71 = sphi 0, %s69
      %s72 = sphi 0, %s71
      %s86 = sphi 0, %s72
      %s90 = sphi 0, %s90
      %s92 = sphi 0, %s90
      %s93 = sphi 0, %s92
      %s107 = sphi 0, %s93
      %s111 = sphi 0, %s111
      %s113 = sphi 0, %s111
      %s114 = sphi 0, %s113
      %s128 = sphi 0, %s114
      %s132 = sphi 0, %s132
      %s134 = sphi 0, %s132
      %s135 = sphi 0, %s134
      %s149 = sphi 0, %s135
      %s153 = sphi 0, %s153
      %s155 = sphi 0, %s153
      %s156 = sphi 0, %s155
      %s170 = sphi 0, %s156
      %s174 = sphi 0, %s174
      %s176 = sphi 0, %s174
      %s177 = sphi 0, %s176
      %s191 = sphi 0, %s177
      %s195 = sphi 0, %s195
      %s197 = sphi 0, %s195
      %s198 = sphi 0, %s197
      %s212 = sphi 0, %s198
      %s216 = sphi 0, %s216
      %s218 = sphi 0, %s216
      %s219 = sphi 0, %s218
      %s233 = sphi 0, %s219
      %s237 = sphi 0, %s237
      %s239 = sphi 0, %s237
      %s240 = sphi 0, %s239
      %s254 = sphi 0, %s240
      %s258 = sphi 0, %s258
      %s260 = sphi 0, %s258
      %s261 = sphi 0, %s260
      %s275 = sphi 0, %s261
      %s279 = sphi 0, %s279
      %s281 = sphi 0, %s279
      %s282 = sphi 0, %s281
      %s296 = sphi 0, %s282
      %s300 = sphi 0, %s300
      %s302 = sphi 0, %s300
      %s303 = sphi 0, %s302
      %s317 = sphi 0, %s303
      %s321 = sphi 0, %s321
      %s323 = sphi 0, %s321
      %s324 = sphi 0, %s323
      %s338 = sphi 0, %s324
      %s342 = sphi 0, %s342
      %s344 = sphi 0, %s342
      %s345 = sphi 0, %s344
      %s359 = sphi 0, %s345
      %s363 = sphi 0, %s363
      %s365 = sphi 0, %s363
      %s366 = sphi 0, %s365
      %s380 = sphi 0, %s366
      %s384 = sphi 0, %s384
      %s386 = sphi 0, %s384
      %s387 = sphi 0, %s386
      %s401 = sphi 0, %s387
      %s407 = sphi 0, %s409
      %s410 = sphi 0, %s407
      %s411 = sphi 0, %s410
      %s427 = sphi 0, %s411
    $region4: #{dqn_forward.1} parent=1 // loop_header_branch
      %38 = sbr.rel (%p36) target = $region8
    $region5: #{dqn_forward.1} parent=1 // loop_body
      %s40 = ssub.s32 %s35, 1
      %s41 = ssub.s32 %s35, 2
      %s42 = sadd.s32 %s35, 1
      %s43 = ssub.s32 %s35, %s42
      %p44 = scmp.eq.s32.totalorder %s43, 0
      %s46 = sadd.s32 %s45, 1
      %s47 = scalar_select %p44, %s45, %s46
      %p50 = pneg %p44
      %p51 = scmp.eq.s32.totalorder %s35, 1
      %p52 = por %p50, %p51
      %p53 = scmp.ne.s32.totalorder %s45, %s48
      %p54 = scmp.eq.s32.totalorder %s35, 0
      %p55 = por %p53, %p54
      %p56 = scmp.ne.s32.totalorder %s45, %s48
      %p57 = scmp.eq.s32.totalorder %s40, 1
      %p58 = por %p56, %p57
      %p59 = scmp.ne.s32.totalorder %s48, %s49
      %p60 = scmp.eq.s32.totalorder %s40, 0
      %p61 = por %p59, %p60
      %p62 = scmp.ne.s32.totalorder %s48, %s49
      %p63 = scmp.eq.s32.totalorder %s41, 1
      %p64 = por %p62, %p63
      %p66 = scmp.ne.s32.totalorder %s49, %s65
      %p67 = scmp.eq.s32.totalorder %s41, 0
      %p68 = por %p66, %p67
      %s70 = sadd.s32 %s69, 1
      %p73 = scmp.eq.s32.totalorder %s35, 1
      %p74 = scmp.ne.s32.totalorder %s69, %s71
      %p75 = scmp.eq.s32.totalorder %s35, 0
      %p76 = por %p74, %p75
      %p77 = scmp.ne.s32.totalorder %s69, %s71
      %p78 = scmp.eq.s32.totalorder %s40, 1
      %p79 = por %p77, %p78
      %p80 = scmp.ne.s32.totalorder %s71, %s72
      %p81 = scmp.eq.s32.totalorder %s40, 0
      %p82 = por %p80, %p81
      %p83 = scmp.ne.s32.totalorder %s71, %s72
      %p84 = scmp.eq.s32.totalorder %s41, 1
      %p85 = por %p83, %p84
      %p87 = scmp.ne.s32.totalorder %s72, %s86
      %p88 = scmp.eq.s32.totalorder %s41, 0
      %p89 = por %p87, %p88
      %s91 = sadd.s32 %s90, 1
      %p94 = scmp.eq.s32.totalorder %s35, 1
      %p95 = scmp.ne.s32.totalorder %s90, %s92
      %p96 = scmp.eq.s32.totalorder %s35, 0
      %p97 = por %p95, %p96
      %p98 = scmp.ne.s32.totalorder %s90, %s92
      %p99 = scmp.eq.s32.totalorder %s40, 1
      %p100 = por %p98, %p99
      %p101 = scmp.ne.s32.totalorder %s92, %s93
      %p102 = scmp.eq.s32.totalorder %s40, 0
      %p103 = por %p101, %p102
      %p104 = scmp.ne.s32.totalorder %s92, %s93
      %p105 = scmp.eq.s32.totalorder %s41, 1
      %p106 = por %p104, %p105
      %p108 = scmp.ne.s32.totalorder %s93, %s107
      %p109 = scmp.eq.s32.totalorder %s41, 0
      %p110 = por %p108, %p109
      %s112 = sadd.s32 %s111, 1
      %p115 = scmp.eq.s32.totalorder %s35, 1
      %p116 = scmp.ne.s32.totalorder %s111, %s113
      %p117 = scmp.eq.s32.totalorder %s35, 0
      %p118 = por %p116, %p117
      %p119 = scmp.ne.s32.totalorder %s111, %s113
      %p120 = scmp.eq.s32.totalorder %s40, 1
      %p121 = por %p119, %p120
      %p122 = scmp.ne.s32.totalorder %s113, %s114
      %p123 = scmp.eq.s32.totalorder %s40, 0
      %p124 = por %p122, %p123
      %p125 = scmp.ne.s32.totalorder %s113, %s114
      %p126 = scmp.eq.s32.totalorder %s41, 1
      %p127 = por %p125, %p126
      %p129 = scmp.ne.s32.totalorder %s114, %s128
      %p130 = scmp.eq.s32.totalorder %s41, 0
      %p131 = por %p129, %p130
      %s133 = sadd.s32 %s132, 1
      %p136 = scmp.eq.s32.totalorder %s35, 1
      %p137 = scmp.ne.s32.totalorder %s132, %s134
      %p138 = scmp.eq.s32.totalorder %s35, 0
      %p139 = por %p137, %p138
      %p140 = scmp.ne.s32.totalorder %s132, %s134
      %p141 = scmp.eq.s32.totalorder %s40, 1
      %p142 = por %p140, %p141
      %p143 = scmp.ne.s32.totalorder %s134, %s135
      %p144 = scmp.eq.s32.totalorder %s40, 0
      %p145 = por %p143, %p144
      %p146 = scmp.ne.s32.totalorder %s134, %s135
      %p147 = scmp.eq.s32.totalorder %s41, 1
      %p148 = por %p146, %p147
      %p150 = scmp.ne.s32.totalorder %s135, %s149
      %p151 = scmp.eq.s32.totalorder %s41, 0
      %p152 = por %p150, %p151
      %s154 = sadd.s32 %s153, 1
      %p157 = scmp.eq.s32.totalorder %s35, 1
      %p158 = scmp.ne.s32.totalorder %s153, %s155
      %p159 = scmp.eq.s32.totalorder %s35, 0
      %p160 = por %p158, %p159
      %p161 = scmp.ne.s32.totalorder %s153, %s155
      %p162 = scmp.eq.s32.totalorder %s40, 1
      %p163 = por %p161, %p162
      %p164 = scmp.ne.s32.totalorder %s155, %s156
      %p165 = scmp.eq.s32.totalorder %s40, 0
      %p166 = por %p164, %p165
      %p167 = scmp.ne.s32.totalorder %s155, %s156
      %p168 = scmp.eq.s32.totalorder %s41, 1
      %p169 = por %p167, %p168
      %p171 = scmp.ne.s32.totalorder %s156, %s170
      %p172 = scmp.eq.s32.totalorder %s41, 0
      %p173 = por %p171, %p172
      %s175 = sadd.s32 %s174, 1
      %p178 = scmp.eq.s32.totalorder %s35, 1
      %p179 = scmp.ne.s32.totalorder %s174, %s176
      %p180 = scmp.eq.s32.totalorder %s35, 0
      %p181 = por %p179, %p180
      %p182 = scmp.ne.s32.totalorder %s174, %s176
      %p183 = scmp.eq.s32.totalorder %s40, 1
      %p184 = por %p182, %p183
      %p185 = scmp.ne.s32.totalorder %s176, %s177
      %p186 = scmp.eq.s32.totalorder %s40, 0
      %p187 = por %p185, %p186
      %p188 = scmp.ne.s32.totalorder %s176, %s177
      %p189 = scmp.eq.s32.totalorder %s41, 1
      %p190 = por %p188, %p189
      %p192 = scmp.ne.s32.totalorder %s177, %s191
      %p193 = scmp.eq.s32.totalorder %s41, 0
      %p194 = por %p192, %p193
      %s196 = sadd.s32 %s195, 1
      %p199 = scmp.eq.s32.totalorder %s35, 1
      %p200 = scmp.ne.s32.totalorder %s195, %s197
      %p201 = scmp.eq.s32.totalorder %s35, 0
      %p202 = por %p200, %p201
      %p203 = scmp.ne.s32.totalorder %s195, %s197
      %p204 = scmp.eq.s32.totalorder %s40, 1
      %p205 = por %p203, %p204
      %p206 = scmp.ne.s32.totalorder %s197, %s198
      %p207 = scmp.eq.s32.totalorder %s40, 0
      %p208 = por %p206, %p207
      %p209 = scmp.ne.s32.totalorder %s197, %s198
      %p210 = scmp.eq.s32.totalorder %s41, 1
      %p211 = por %p209, %p210
      %p213 = scmp.ne.s32.totalorder %s198, %s212
      %p214 = scmp.eq.s32.totalorder %s41, 0
      %p215 = por %p213, %p214
      %s217 = sadd.s32 %s216, 1
      %p220 = scmp.eq.s32.totalorder %s35, 1
      %p221 = scmp.ne.s32.totalorder %s216, %s218
      %p222 = scmp.eq.s32.totalorder %s35, 0
      %p223 = por %p221, %p222
      %p224 = scmp.ne.s32.totalorder %s216, %s218
      %p225 = scmp.eq.s32.totalorder %s40, 1
      %p226 = por %p224, %p225
      %p227 = scmp.ne.s32.totalorder %s218, %s219
      %p228 = scmp.eq.s32.totalorder %s40, 0
      %p229 = por %p227, %p228
      %p230 = scmp.ne.s32.totalorder %s218, %s219
      %p231 = scmp.eq.s32.totalorder %s41, 1
      %p232 = por %p230, %p231
      %p234 = scmp.ne.s32.totalorder %s219, %s233
      %p235 = scmp.eq.s32.totalorder %s41, 0
      %p236 = por %p234, %p235
      %s238 = sadd.s32 %s237, 1
      %p241 = scmp.eq.s32.totalorder %s35, 1
      %p242 = scmp.ne.s32.totalorder %s237, %s239
      %p243 = scmp.eq.s32.totalorder %s35, 0
      %p244 = por %p242, %p243
      %p245 = scmp.ne.s32.totalorder %s237, %s239
      %p246 = scmp.eq.s32.totalorder %s40, 1
      %p247 = por %p245, %p246
      %p248 = scmp.ne.s32.totalorder %s239, %s240
      %p249 = scmp.eq.s32.totalorder %s40, 0
      %p250 = por %p248, %p249
      %p251 = scmp.ne.s32.totalorder %s239, %s240
      %p252 = scmp.eq.s32.totalorder %s41, 1
      %p253 = por %p251, %p252
      %p255 = scmp.ne.s32.totalorder %s240, %s254
      %p256 = scmp.eq.s32.totalorder %s41, 0
      %p257 = por %p255, %p256
      %s259 = sadd.s32 %s258, 1
      %p262 = scmp.eq.s32.totalorder %s35, 1
      %p263 = scmp.ne.s32.totalorder %s258, %s260
      %p264 = scmp.eq.s32.totalorder %s35, 0
      %p265 = por %p263, %p264
      %p266 = scmp.ne.s32.totalorder %s258, %s260
      %p267 = scmp.eq.s32.totalorder %s40, 1
      %p268 = por %p266, %p267
      %p269 = scmp.ne.s32.totalorder %s260, %s261
      %p270 = scmp.eq.s32.totalorder %s40, 0
      %p271 = por %p269, %p270
      %p272 = scmp.ne.s32.totalorder %s260, %s261
      %p273 = scmp.eq.s32.totalorder %s41, 1
      %p274 = por %p272, %p273
      %p276 = scmp.ne.s32.totalorder %s261, %s275
      %p277 = scmp.eq.s32.totalorder %s41, 0
      %p278 = por %p276, %p277
      %s280 = sadd.s32 %s279, 1
      %p283 = scmp.eq.s32.totalorder %s35, 1
      %p284 = scmp.ne.s32.totalorder %s279, %s281
      %p285 = scmp.eq.s32.totalorder %s35, 0
      %p286 = por %p284, %p285
      %p287 = scmp.ne.s32.totalorder %s279, %s281
      %p288 = scmp.eq.s32.totalorder %s40, 1
      %p289 = por %p287, %p288
      %p290 = scmp.ne.s32.totalorder %s281, %s282
      %p291 = scmp.eq.s32.totalorder %s40, 0
      %p292 = por %p290, %p291
      %p293 = scmp.ne.s32.totalorder %s281, %s282
      %p294 = scmp.eq.s32.totalorder %s41, 1
      %p295 = por %p293, %p294
      %p297 = scmp.ne.s32.totalorder %s282, %s296
      %p298 = scmp.eq.s32.totalorder %s41, 0
      %p299 = por %p297, %p298
      %s301 = sadd.s32 %s300, 1
      %p304 = scmp.eq.s32.totalorder %s35, 1
      %p305 = scmp.ne.s32.totalorder %s300, %s302
      %p306 = scmp.eq.s32.totalorder %s35, 0
      %p307 = por %p305, %p306
      %p308 = scmp.ne.s32.totalorder %s300, %s302
      %p309 = scmp.eq.s32.totalorder %s40, 1
      %p310 = por %p308, %p309
      %p311 = scmp.ne.s32.totalorder %s302, %s303
      %p312 = scmp.eq.s32.totalorder %s40, 0
      %p313 = por %p311, %p312
      %p314 = scmp.ne.s32.totalorder %s302, %s303
      %p315 = scmp.eq.s32.totalorder %s41, 1
      %p316 = por %p314, %p315
      %p318 = scmp.ne.s32.totalorder %s303, %s317
      %p319 = scmp.eq.s32.totalorder %s41, 0
      %p320 = por %p318, %p319
      %s322 = sadd.s32 %s321, 1
      %p325 = scmp.eq.s32.totalorder %s35, 1
      %p326 = scmp.ne.s32.totalorder %s321, %s323
      %p327 = scmp.eq.s32.totalorder %s35, 0
      %p328 = por %p326, %p327
      %p329 = scmp.ne.s32.totalorder %s321, %s323
      %p330 = scmp.eq.s32.totalorder %s40, 1
      %p331 = por %p329, %p330
      %p332 = scmp.ne.s32.totalorder %s323, %s324
      %p333 = scmp.eq.s32.totalorder %s40, 0
      %p334 = por %p332, %p333
      %p335 = scmp.ne.s32.totalorder %s323, %s324
      %p336 = scmp.eq.s32.totalorder %s41, 1
      %p337 = por %p335, %p336
      %p339 = scmp.ne.s32.totalorder %s324, %s338
      %p340 = scmp.eq.s32.totalorder %s41, 0
      %p341 = por %p339, %p340
      %s343 = sadd.s32 %s342, 1
      %p346 = scmp.eq.s32.totalorder %s35, 1
      %p347 = scmp.ne.s32.totalorder %s342, %s344
      %p348 = scmp.eq.s32.totalorder %s35, 0
      %p349 = por %p347, %p348
      %p350 = scmp.ne.s32.totalorder %s342, %s344
      %p351 = scmp.eq.s32.totalorder %s40, 1
      %p352 = por %p350, %p351
      %p353 = scmp.ne.s32.totalorder %s344, %s345
      %p354 = scmp.eq.s32.totalorder %s40, 0
      %p355 = por %p353, %p354
      %p356 = scmp.ne.s32.totalorder %s344, %s345
      %p357 = scmp.eq.s32.totalorder %s41, 1
      %p358 = por %p356, %p357
      %p360 = scmp.ne.s32.totalorder %s345, %s359
      %p361 = scmp.eq.s32.totalorder %s41, 0
      %p362 = por %p360, %p361
      %s364 = sadd.s32 %s363, 1
      %p367 = scmp.eq.s32.totalorder %s35, 1
      %p368 = scmp.ne.s32.totalorder %s363, %s365
      %p369 = scmp.eq.s32.totalorder %s35, 0
      %p370 = por %p368, %p369
      %p371 = scmp.ne.s32.totalorder %s363, %s365
      %p372 = scmp.eq.s32.totalorder %s40, 1
      %p373 = por %p371, %p372
      %p374 = scmp.ne.s32.totalorder %s365, %s366
      %p375 = scmp.eq.s32.totalorder %s40, 0
      %p376 = por %p374, %p375
      %p377 = scmp.ne.s32.totalorder %s365, %s366
      %p378 = scmp.eq.s32.totalorder %s41, 1
      %p379 = por %p377, %p378
      %p381 = scmp.ne.s32.totalorder %s366, %s380
      %p382 = scmp.eq.s32.totalorder %s41, 0
      %p383 = por %p381, %p382
      %s385 = sadd.s32 %s384, 1
      %p388 = scmp.eq.s32.totalorder %s35, 1
      %p389 = scmp.ne.s32.totalorder %s384, %s386
      %p390 = scmp.eq.s32.totalorder %s35, 0
      %p391 = por %p389, %p390
      %p392 = scmp.ne.s32.totalorder %s384, %s386
      %p393 = scmp.eq.s32.totalorder %s40, 1
      %p394 = por %p392, %p393
      %p395 = scmp.ne.s32.totalorder %s386, %s387
      %p396 = scmp.eq.s32.totalorder %s40, 0
      %p397 = por %p395, %p396
      %p398 = scmp.ne.s32.totalorder %s386, %s387
      %p399 = scmp.eq.s32.totalorder %s41, 1
      %p400 = por %p398, %p399
      %p402 = scmp.ne.s32.totalorder %s387, %s401
      %p403 = scmp.eq.s32.totalorder %s41, 0
      %p404 = por %p402, %p403
      %s405 = ssub.s32 %s35, %s42
      %p406 = scmp.eq.s32.totalorder %s405, 0
      %s408 = sadd.s32 %s407, 1
      %s409 = scalar_select %p406, %s407, %s408
      %p412 = pneg %p406
      %p413 = scmp.eq.s32.totalorder %s35, 1
      %p414 = por %p412, %p413
      %p415 = scmp.ne.s32.totalorder %s407, %s410
      %p416 = scmp.eq.s32.totalorder %s35, 0
      %p417 = por %p415, %p416
      %p418 = scmp.ne.s32.totalorder %s407, %s410
      %p419 = scmp.eq.s32.totalorder %s40, 1
      %p420 = por %p418, %p419
      %p421 = scmp.ne.s32.totalorder %s410, %s411
      %p422 = scmp.eq.s32.totalorder %s40, 0
      %p423 = por %p421, %p422
      %p424 = scmp.ne.s32.totalorder %s410, %s411
      %p425 = scmp.eq.s32.totalorder %s41, 1
      %p426 = por %p424, %p425
      %p428 = scmp.ne.s32.totalorder %s411, %s427
      %p429 = scmp.eq.s32.totalorder %s41, 0
      %p430 = por %p428, %p429
      %p431 = scmp.le.s32.totalorder 1, %s35
      %p432 = scmp.lt.s32.totalorder %s35, 3
      %p433 = pnand %p431, %p432
      %p434 = pneg %p433
      // Predicated region
      $region9: #{dqn_forward.1} parent=5 // pred_check
        _
      $region10: #{dqn_forward.1} parent=5 // pred_check_branch
        %436 = sbr.rel (%p433) target = $region12
      $region11: #{dqn_forward.1} parent=5 // pred_region
        %s437 = ssub.s32 %s35, 1
        // Predicated region
        $region13: #{dqn_forward.1} parent=11 // pred_check
          %p438 = pneg %p82
        $region14: #{dqn_forward.1} parent=11 // pred_check_branch
          %440 = sbr.rel (%p438) target = $region16
        $region15: #{dqn_forward.1} parent=11 // pred_region
          %442 = vsyncadd [#allocation3], 0
          %s443 = sshll.u32 %s1, 4
          %s444 = int_to_ptr.hbm [resolvable:$true] %s443
          %s445 = sshll.u32 [#allocation2], 4
          %s446 = int_to_ptr.vmem [resolvable:$true] %s445
          %451 = dma.hbm_to_vmem [thread:$0]  %s444, 36864, %s446, [#allocation3], 128, 128, 8
        $region16: #{dqn_forward.1} parent=11 // pred_fallthru
          _
        // Predicated region
        $region17: #{dqn_forward.1} parent=11 // pred_check
          %p452 = pneg %p103
        $region18: #{dqn_forward.1} parent=11 // pred_check_branch
          %454 = sbr.rel (%p452) target = $region20
        $region19: #{dqn_forward.1} parent=11 // pred_region
          %456 = vsyncadd [#allocation6], 0
          %s457 = sshll.u32 %s2, 4
          %s458 = int_to_ptr.hbm [resolvable:$true] %s457
          %s459 = sshll.u32 [#allocation5], 4
          %s460 = int_to_ptr.vmem [resolvable:$true] %s459
          %465 = dma.hbm_to_vmem [thread:$0]  %s458, 288, %s460, [#allocation6], 32, 32, 2
        $region20: #{dqn_forward.1} parent=11 // pred_fallthru
          _
        // Predicated region
        $region21: #{dqn_forward.1} parent=11 // pred_check
          %p466 = pneg %p124
        $region22: #{dqn_forward.1} parent=11 // pred_check_branch
          %468 = sbr.rel (%p466) target = $region24
        $region23: #{dqn_forward.1} parent=11 // pred_region
          %470 = vsyncadd [#allocation6], 0
          %s472 = sshll.u32 %s3, 4
          %s473 = int_to_ptr.hbm [resolvable:$true] %s472
          %s474 = sshll.u32 [#allocation7], 4
          %s475 = int_to_ptr.vmem [resolvable:$true] %s474
          %477 = dma.hbm_to_vmem [thread:$0]  %s473, 16, %s475, [#allocation6]
        $region24: #{dqn_forward.1} parent=11 // pred_fallthru
          _
        // Predicated region
        $region25: #{dqn_forward.1} parent=11 // pred_check
          %p478 = pneg %p145
        $region26: #{dqn_forward.1} parent=11 // pred_check_branch
          %480 = sbr.rel (%p478) target = $region28
        $region27: #{dqn_forward.1} parent=11 // pred_region
          %482 = vsyncadd [#allocation9], 0
          %s483 = sshll.u32 %s4, 4
          %s484 = int_to_ptr.hbm [resolvable:$true] %s483
          %s485 = sshll.u32 [#allocation8], 4
          %s486 = int_to_ptr.vmem [resolvable:$true] %s485
          %491 = dma.hbm_to_vmem [thread:$0]  %s484, 9216, %s486, [#allocation9], 128, 128, 8
        $region28: #{dqn_forward.1} parent=11 // pred_fallthru
          _
        // Predicated region
        $region29: #{dqn_forward.1} parent=11 // pred_check
          %p492 = pneg %p166
        $region30: #{dqn_forward.1} parent=11 // pred_check_branch
          %494 = sbr.rel (%p492) target = $region32
        $region31: #{dqn_forward.1} parent=11 // pred_region
          %496 = vsyncadd [#allocation9], 0
          %s497 = sshll.u32 %s5, 4
          %s498 = int_to_ptr.hbm [resolvable:$true] %s497
          %s499 = sshll.u32 [#allocation10], 4
          %s500 = int_to_ptr.vmem [resolvable:$true] %s499
          %505 = dma.hbm_to_vmem [thread:$0]  %s498, 4608, %s500, [#allocation9], 64, 64, 4
        $region32: #{dqn_forward.1} parent=11 // pred_fallthru
          _
        // Predicated region
        $region33: #{dqn_forward.1} parent=11 // pred_check
          %p506 = pneg %p187
        $region34: #{dqn_forward.1} parent=11 // pred_check_branch
          %508 = sbr.rel (%p506) target = $region36
        $region35: #{dqn_forward.1} parent=11 // pred_region
          %510 = vsyncadd [#allocation12], 0
          %s512 = sshll.u32 %s6, 4
          %s513 = int_to_ptr.hbm [resolvable:$true] %s512
          %s514 = sshll.u32 [#allocation11], 4
          %s515 = int_to_ptr.vmem [resolvable:$true] %s514
          %517 = dma.hbm_to_vmem [thread:$0]  %s513, 16, %s515, [#allocation12]
        $region36: #{dqn_forward.1} parent=11 // pred_fallthru
          _
        // Predicated region
        $region37: #{dqn_forward.1} parent=11 // pred_check
          %p518 = pneg %p208
        $region38: #{dqn_forward.1} parent=11 // pred_check_branch
          %520 = sbr.rel (%p518) target = $region40
        $region39: #{dqn_forward.1} parent=11 // pred_region
          %522 = vsyncadd [#allocation12], 0
          %s523 = sshll.u32 %s7, 4
          %s524 = int_to_ptr.hbm [resolvable:$true] %s523
          %s525 = sshll.u32 [#allocation13], 4
          %s526 = int_to_ptr.vmem [resolvable:$true] %s525
          %531 = dma.hbm_to_vmem [thread:$0]  %s524, 1152, %s526, [#allocation12], 64, 64, 4
        $region40: #{dqn_forward.1} parent=11 // pred_fallthru
          _
        // Predicated region
        $region41: #{dqn_forward.1} parent=11 // pred_check
          %p532 = pneg %p229
        $region42: #{dqn_forward.1} parent=11 // pred_check_branch
          %534 = sbr.rel (%p532) target = $region44
        $region43: #{dqn_forward.1} parent=11 // pred_region
          %536 = vsyncadd [#allocation15], 0
          %s537 = sshll.u32 %s8, 4
          %s538 = int_to_ptr.hbm [resolvable:$true] %s537
          %s539 = sshll.u32 [#allocation14], 4
          %s540 = int_to_ptr.vmem [resolvable:$true] %s539
          %545 = dma.hbm_to_vmem [thread:$0]  %s538, 18432, %s540, [#allocation15], 128, 128, 8
        $region44: #{dqn_forward.1} parent=11 // pred_fallthru
          _
        // Predicated region
        $region45: #{dqn_forward.1} parent=11 // pred_check
          %p546 = pneg %p250
        $region46: #{dqn_forward.1} parent=11 // pred_check_branch
          %548 = sbr.rel (%p546) target = $region48
        $region47: #{dqn_forward.1} parent=11 // pred_region
          %550 = vsyncadd [#allocation15], 0
          %s552 = sshll.u32 %s9, 4
          %s553 = int_to_ptr.hbm [resolvable:$true] %s552
          %s554 = sshll.u32 [#allocation16], 4
          %s555 = int_to_ptr.vmem [resolvable:$true] %s554
          %557 = dma.hbm_to_vmem [thread:$0]  %s553, 32, %s555, [#allocation15]
        $region48: #{dqn_forward.1} parent=11 // pred_fallthru
          _
        // Predicated region
        $region49: #{dqn_forward.1} parent=11 // pred_check
          %p558 = pneg %p271
        $region50: #{dqn_forward.1} parent=11 // pred_check_branch
          %560 = sbr.rel (%p558) target = $region52
        $region51: #{dqn_forward.1} parent=11 // pred_region
          %562 = vsyncadd [#allocation18], 0
          %s564 = sshll.u32 %s10, 4
          %s565 = int_to_ptr.hbm [resolvable:$true] %s564
          %s566 = sshll.u32 [#allocation17], 4
          %s567 = int_to_ptr.vmem [resolvable:$true] %s566
          %569 = dma.hbm_to_vmem [thread:$0]  %s565, 32, %s567, [#allocation18]
        $region52: #{dqn_forward.1} parent=11 // pred_fallthru
          _
        // Predicated region
        $region53: #{dqn_forward.1} parent=11 // pred_check
          %p570 = pneg %p292
        $region54: #{dqn_forward.1} parent=11 // pred_check_branch
          %572 = sbr.rel (%p570) target = $region56
        $region55: #{dqn_forward.1} parent=11 // pred_region
          %574 = vsyncadd [#allocation18], 0
          %s575 = sshll.u32 %s11, 4
          %s576 = int_to_ptr.hbm [resolvable:$true] %s575
          %s577 = sshll.u32 [#allocation19], 4
          %s578 = int_to_ptr.vmem [resolvable:$true] %s577
          %583 = dma.hbm_to_vmem [thread:$0]  %s576, 8192, %s578, [#allocation18], 64, 64, 4
        $region56: #{dqn_forward.1} parent=11 // pred_fallthru
          _
        // Predicated region
        $region57: #{dqn_forward.1} parent=11 // pred_check
          %p584 = pneg %p313
        $region58: #{dqn_forward.1} parent=11 // pred_check_branch
          %586 = sbr.rel (%p584) target = $region60
        $region59: #{dqn_forward.1} parent=11 // pred_region
          %588 = vsyncadd [#allocation21], 0
          %s590 = sshll.u32 %s12, 4
          %s591 = int_to_ptr.hbm [resolvable:$true] %s590
          %s592 = sshll.u32 [#allocation20], 4
          %s593 = int_to_ptr.vmem [resolvable:$true] %s592
          %595 = dma.hbm_to_vmem [thread:$0]  %s591, 16, %s593, [#allocation21]
        $region60: #{dqn_forward.1} parent=11 // pred_fallthru
          _
        // Predicated region
        $region61: #{dqn_forward.1} parent=11 // pred_check
          %p596 = pneg %p334
        $region62: #{dqn_forward.1} parent=11 // pred_check_branch
          %598 = sbr.rel (%p596) target = $region64
        $region63: #{dqn_forward.1} parent=11 // pred_region
          %600 = vsyncadd [#allocation21], 0
          %s601 = sshll.u32 %s13, 4
          %s602 = int_to_ptr.hbm [resolvable:$true] %s601
          %s603 = sshll.u32 [#allocation22], 4
          %s604 = int_to_ptr.vmem [resolvable:$true] %s603
          %609 = dma.hbm_to_vmem [thread:$0]  %s602, 1024, %s604, [#allocation21], 64, 64, 4
        $region64: #{dqn_forward.1} parent=11 // pred_fallthru
          _
        // Predicated region
        $region65: #{dqn_forward.1} parent=11 // pred_check
          %p610 = pneg %p355
        $region66: #{dqn_forward.1} parent=11 // pred_check_branch
          %612 = sbr.rel (%p610) target = $region68
        $region67: #{dqn_forward.1} parent=11 // pred_region
          %614 = vsyncadd [#allocation24], 0
          %s616 = sshll.u32 %s14, 4
          %s617 = int_to_ptr.hbm [resolvable:$true] %s616
          %s618 = sshll.u32 [#allocation23], 4
          %s619 = int_to_ptr.vmem [resolvable:$true] %s618
          %621 = dma.hbm_to_vmem [thread:$0]  %s617, 16, %s619, [#allocation24]
        $region68: #{dqn_forward.1} parent=11 // pred_fallthru
          _
        // Predicated region
        $region69: #{dqn_forward.1} parent=11 // pred_check
          %p622 = pneg %p376
        $region70: #{dqn_forward.1} parent=11 // pred_check_branch
          %624 = sbr.rel (%p622) target = $region72
        $region71: #{dqn_forward.1} parent=11 // pred_region
          %626 = vsyncadd [#allocation24], 0
          %s627 = sshll.u32 %s15, 4
          %s628 = int_to_ptr.hbm [resolvable:$true] %s627
          %s629 = sshll.u32 [#allocation25], 4
          %s630 = int_to_ptr.vmem [resolvable:$true] %s629
          %635 = dma.hbm_to_vmem [thread:$0]  %s628, 1024, %s630, [#allocation24], 64, 64, 4
        $region72: #{dqn_forward.1} parent=11 // pred_fallthru
          _
        // Predicated region
        $region73: #{dqn_forward.1} parent=11 // pred_check
          %p636 = pneg %p397
        $region74: #{dqn_forward.1} parent=11 // pred_check_branch
          %638 = sbr.rel (%p636) target = $region76
        $region75: #{dqn_forward.1} parent=11 // pred_region
          %640 = vsyncadd [#allocation27], 0
          %s642 = sshll.u32 %s16, 4
          %s643 = int_to_ptr.hbm [resolvable:$true] %s642
          %s644 = sshll.u32 [#allocation26], 4
          %s645 = int_to_ptr.vmem [resolvable:$true] %s644
          %647 = dma.hbm_to_vmem [thread:$0]  %s643, 16, %s645, [#allocation27]
        $region76: #{dqn_forward.1} parent=11 // pred_fallthru
          _
      $region12: #{dqn_forward.1} parent=5 // pred_fallthru
        _
      %p648 = scmp.lt.s32.totalorder %s35, 2
      // Predicated region
      $region77: #{dqn_forward.1} parent=5 // pred_check
        %p649 = pneg %p648
      $region78: #{dqn_forward.1} parent=5 // pred_check_branch
        %651 = sbr.rel (%p649) target = $region80
      $region79: #{dqn_forward.1} parent=5 // pred_region
        // Predicated region
        $region81: #{dqn_forward.1} parent=79 // pred_check
          %p652 = pneg %p55
        $region82: #{dqn_forward.1} parent=79 // pred_check_branch
          %654 = sbr.rel (%p652) target = $region84
        $region83: #{dqn_forward.1} parent=79 // pred_region
          %p655 = scmp.lt.s32.totalorder %s35, 1
          %s656 = scalar_select %p655, %s35, 1
          %s657 = smul.addr %s656, 32
          %s658 = smul.addr %s657, 4
          %s659 = scalar_lea.vmem %s0, %s658
        $region84: #{dqn_forward.1} parent=79 // pred_fallthru
          _
      $region80: #{dqn_forward.1} parent=5 // pred_fallthru
        _
      %p660 = scmp.le.s32.totalorder 1, %s35
      %p661 = scmp.lt.s32.totalorder %s35, 3
      %p662 = pnand %p660, %p661
      %p663 = pneg %p662
      // Predicated region
      $region85: #{dqn_forward.1} parent=5 // pred_check
        _
      $region86: #{dqn_forward.1} parent=5 // pred_check_branch
        %665 = sbr.rel (%p662) target = $region88
      $region87: #{dqn_forward.1} parent=5 // pred_region
        %s666 = ssub.s32 %s35, 1
        // Predicated region
        $region89: #{dqn_forward.1} parent=87 // pred_check
          %p667 = pneg %p82
        $region90: #{dqn_forward.1} parent=87 // pred_check_branch
          %669 = sbr.rel (%p667) target = $region92
        $region91: #{dqn_forward.1} parent=87 // pred_region
          %671 = dma.done [#allocation3], 36864
        $region92: #{dqn_forward.1} parent=87 // pred_fallthru
          _
        // Predicated region
        $region93: #{dqn_forward.1} parent=87 // pred_check
          %p672 = pneg %p103
        $region94: #{dqn_forward.1} parent=87 // pred_check_branch
          %674 = sbr.rel (%p672) target = $region96
        $region95: #{dqn_forward.1} parent=87 // pred_region
          %676 = dma.done [#allocation6], 288
        $region96: #{dqn_forward.1} parent=87 // pred_fallthru
          _
        // Predicated region
        $region97: #{dqn_forward.1} parent=87 // pred_check
          %p677 = pneg %p124
        $region98: #{dqn_forward.1} parent=87 // pred_check_branch
          %679 = sbr.rel (%p677) target = $region100
        $region99: #{dqn_forward.1} parent=87 // pred_region
          %681 = dma.done [#allocation6], 16
        $region100: #{dqn_forward.1} parent=87 // pred_fallthru
          _
        // Predicated region
        $region101: #{dqn_forward.1} parent=87 // pred_check
          %p682 = pneg %p145
        $region102: #{dqn_forward.1} parent=87 // pred_check_branch
          %684 = sbr.rel (%p682) target = $region104
        $region103: #{dqn_forward.1} parent=87 // pred_region
          %686 = dma.done [#allocation9], 9216
        $region104: #{dqn_forward.1} parent=87 // pred_fallthru
          _
        // Predicated region
        $region105: #{dqn_forward.1} parent=87 // pred_check
          %p687 = pneg %p166
        $region106: #{dqn_forward.1} parent=87 // pred_check_branch
          %689 = sbr.rel (%p687) target = $region108
        $region107: #{dqn_forward.1} parent=87 // pred_region
          %691 = dma.done [#allocation9], 4608
        $region108: #{dqn_forward.1} parent=87 // pred_fallthru
          _
        // Predicated region
        $region109: #{dqn_forward.1} parent=87 // pred_check
          %p692 = pneg %p187
        $region110: #{dqn_forward.1} parent=87 // pred_check_branch
          %694 = sbr.rel (%p692) target = $region112
        $region111: #{dqn_forward.1} parent=87 // pred_region
          %696 = dma.done [#allocation12], 16
        $region112: #{dqn_forward.1} parent=87 // pred_fallthru
          _
        // Predicated region
        $region113: #{dqn_forward.1} parent=87 // pred_check
          %p697 = pneg %p208
        $region114: #{dqn_forward.1} parent=87 // pred_check_branch
          %699 = sbr.rel (%p697) target = $region116
        $region115: #{dqn_forward.1} parent=87 // pred_region
          %701 = dma.done [#allocation12], 1152
        $region116: #{dqn_forward.1} parent=87 // pred_fallthru
          _
        // Predicated region
        $region117: #{dqn_forward.1} parent=87 // pred_check
          %p702 = pneg %p229
        $region118: #{dqn_forward.1} parent=87 // pred_check_branch
          %704 = sbr.rel (%p702) target = $region120
        $region119: #{dqn_forward.1} parent=87 // pred_region
          %706 = dma.done [#allocation15], 18432
        $region120: #{dqn_forward.1} parent=87 // pred_fallthru
          _
        // Predicated region
        $region121: #{dqn_forward.1} parent=87 // pred_check
          %p707 = pneg %p250
        $region122: #{dqn_forward.1} parent=87 // pred_check_branch
          %709 = sbr.rel (%p707) target = $region124
        $region123: #{dqn_forward.1} parent=87 // pred_region
          %711 = dma.done [#allocation15], 32
        $region124: #{dqn_forward.1} parent=87 // pred_fallthru
          _
        // Predicated region
        $region125: #{dqn_forward.1} parent=87 // pred_check
          %p712 = pneg %p271
        $region126: #{dqn_forward.1} parent=87 // pred_check_branch
          %714 = sbr.rel (%p712) target = $region128
        $region127: #{dqn_forward.1} parent=87 // pred_region
          %716 = dma.done [#allocation18], 32
        $region128: #{dqn_forward.1} parent=87 // pred_fallthru
          _
        // Predicated region
        $region129: #{dqn_forward.1} parent=87 // pred_check
          %p717 = pneg %p292
        $region130: #{dqn_forward.1} parent=87 // pred_check_branch
          %719 = sbr.rel (%p717) target = $region132
        $region131: #{dqn_forward.1} parent=87 // pred_region
          %721 = dma.done [#allocation18], 8192
        $region132: #{dqn_forward.1} parent=87 // pred_fallthru
          _
        // Predicated region
        $region133: #{dqn_forward.1} parent=87 // pred_check
          %p722 = pneg %p313
        $region134: #{dqn_forward.1} parent=87 // pred_check_branch
          %724 = sbr.rel (%p722) target = $region136
        $region135: #{dqn_forward.1} parent=87 // pred_region
          %726 = dma.done [#allocation21], 16
        $region136: #{dqn_forward.1} parent=87 // pred_fallthru
          _
        // Predicated region
        $region137: #{dqn_forward.1} parent=87 // pred_check
          %p727 = pneg %p334
        $region138: #{dqn_forward.1} parent=87 // pred_check_branch
          %729 = sbr.rel (%p727) target = $region140
        $region139: #{dqn_forward.1} parent=87 // pred_region
          %731 = dma.done [#allocation21], 1024
        $region140: #{dqn_forward.1} parent=87 // pred_fallthru
          _
        // Predicated region
        $region141: #{dqn_forward.1} parent=87 // pred_check
          %p732 = pneg %p355
        $region142: #{dqn_forward.1} parent=87 // pred_check_branch
          %734 = sbr.rel (%p732) target = $region144
        $region143: #{dqn_forward.1} parent=87 // pred_region
          %736 = dma.done [#allocation24], 16
        $region144: #{dqn_forward.1} parent=87 // pred_fallthru
          _
        // Predicated region
        $region145: #{dqn_forward.1} parent=87 // pred_check
          %p737 = pneg %p376
        $region146: #{dqn_forward.1} parent=87 // pred_check_branch
          %739 = sbr.rel (%p737) target = $region148
        $region147: #{dqn_forward.1} parent=87 // pred_region
          %741 = dma.done [#allocation24], 1024
        $region148: #{dqn_forward.1} parent=87 // pred_fallthru
          _
        // Predicated region
        $region149: #{dqn_forward.1} parent=87 // pred_check
          %p742 = pneg %p397
        $region150: #{dqn_forward.1} parent=87 // pred_check_branch
          %744 = sbr.rel (%p742) target = $region152
        $region151: #{dqn_forward.1} parent=87 // pred_region
          %746 = dma.done [#allocation27], 16
        $region152: #{dqn_forward.1} parent=87 // pred_fallthru
          _
        %p747 = scmp.lt.s32.totalorder %s40, 1
        %s748 = scalar_select %p747, %s40, 1
        %s749 = smul.addr %s748, 32
        %s750 = smul.addr %s749, 4
        %s751 = scalar_lea.vmem %s0, %s750
        %p752 = pneg %p61
        %p753 = pneg %p58
        %p754 = pneg %p82
        %p755 = pneg %p79
        %p756 = pneg %p103
        %p757 = pneg %p100
        %p758 = pneg %p124
        %p759 = pneg %p121
        %p760 = pneg %p145
        %p761 = pneg %p142
        %p762 = pneg %p166
        %p763 = pneg %p163
        %p764 = pneg %p187
        %p765 = pneg %p184
        %p766 = pneg %p208
        %p767 = pneg %p205
        %p768 = pneg %p229
        %p769 = pneg %p226
        %p770 = pneg %p250
        %p771 = pneg %p247
        %p772 = pneg %p271
        %p773 = pneg %p268
        %p774 = pneg %p292
        %p775 = pneg %p289
        %p776 = pneg %p313
        %p777 = pneg %p310
        %p778 = pneg %p334
        %p779 = pneg %p331
        %p780 = pneg %p355
        %p781 = pneg %p352
        %p782 = pneg %p376
        %p783 = pneg %p373
        %p784 = pneg %p397
        %p785 = pneg %p394
        %p786 = pneg %p423
        %p787 = pneg %p420
        %s788 = sand.u32 %s410, 1
        %s789 = scalar_lea.sflag [#allocation4], %s788
        %s790 = sand.u32 %s410, 1
        %s791 = scalar_lea.vmem [#allocation28], %s790
        %p792 = scmp.lt.s32.totalorder %s40, 1
        %s793 = scalar_select %p792, %s40, 1
        %s794 = smul.addr %s793, 32
        %s795 = smul.addr %s794, 4
        %s796 = scalar_lea.vmem %s0, %s795
        %v798 = vld [vmem:[%s796] sm:$0xf]
        %v799 = vld [vmem:[%s796 + $0x4] sm:$0xf]
        %v800 = vld [vmem:[%s796 + $0x8] sm:$0xf]
        %v801 = vld [vmem:[%s796 + $0xc] sm:$0xf]
        %v802 = vld [vmem:[%s796 + $0x10] sm:$0xf]
        %v803 = vld [vmem:[%s796 + $0x14] sm:$0xf]
        %v804 = vld [vmem:[%s796 + $0x18] sm:$0xf]
        %v805 = vld [vmem:[%s796 + $0x1c] sm:$0xf]
        %v806 = vld [vmem:[%s796 + $0x20] sm:$0xf]
        %v807 = vld [vmem:[%s796 + $0x24] sm:$0xf]
        %v808 = vld [vmem:[%s796 + $0x28] sm:$0xf]
        %v809 = vld [vmem:[%s796 + $0x2c] sm:$0xf]
        %v810 = vld [vmem:[%s796 + $0x30] sm:$0xf]
        %v811 = vld [vmem:[%s796 + $0x34] sm:$0xf]
        %v812 = vld [vmem:[%s796 + $0x38] sm:$0xf]
        %v813 = vld [vmem:[%s796 + $0x3c] sm:$0xf]
        %v814 = vld [vmem:[%s796 + $0x40] sm:$0xf]
        %v815 = vld [vmem:[%s796 + $0x44] sm:$0xf]
        %v816 = vld [vmem:[%s796 + $0x48] sm:$0xf]
        %v817 = vld [vmem:[%s796 + $0x4c] sm:$0xf]
        %v818 = vld [vmem:[%s796 + $0x50] sm:$0xf]
        %v819 = vld [vmem:[%s796 + $0x54] sm:$0xf]
        %v820 = vld [vmem:[%s796 + $0x58] sm:$0xf]
        %v821 = vld [vmem:[%s796 + $0x5c] sm:$0xf]
        %v822 = vld [vmem:[%s796 + $0x60] sm:$0xf]
        %v823 = vld [vmem:[%s796 + $0x64] sm:$0xf]
        %v824 = vld [vmem:[%s796 + $0x68] sm:$0xf]
        %v825 = vld [vmem:[%s796 + $0x6c] sm:$0xf]
        %v826 = vld [vmem:[%s796 + $0x70] sm:$0xf]
        %v827 = vld [vmem:[%s796 + $0x74] sm:$0xf]
        %v828 = vld [vmem:[%s796 + $0x78] sm:$0xf]
        %v829 = vld [vmem:[%s796 + $0x7c] sm:$0xf]
        %v830 = vld [vmem:[#allocation2] sm:$0xff]
        %v831 = vld [vmem:[#allocation2 + $0x8] sm:$0xff]
        %v832 = vld [vmem:[#allocation2 + $0x10] sm:$0xff]
        %v833 = vld [vmem:[#allocation2 + $0x18] sm:$0xff]
        %v834 = vld [vmem:[#allocation2 + $0x20] sm:$0xff]
        %v835 = vld [vmem:[#allocation2 + $0x28] sm:$0xff]
        %v836 = vld [vmem:[#allocation2 + $0x30] sm:$0xff]
        %v837 = vld [vmem:[#allocation2 + $0x38] sm:$0xff]
        %v838 = vld [vmem:[#allocation2 + $0x40] sm:$0xff]
        %v839 = vld [vmem:[#allocation2 + $0x48] sm:$0xff]
        %v840 = vld [vmem:[#allocation2 + $0x50] sm:$0xff]
        %v841 = vld [vmem:[#allocation2 + $0x58] sm:$0xff]
        %v842 = vld [vmem:[#allocation2 + $0x60] sm:$0xff]
        %v843 = vld [vmem:[#allocation2 + $0x68] sm:$0xff]
        %v844 = vld [vmem:[#allocation2 + $0x70] sm:$0xff]
        %v845 = vld [vmem:[#allocation2 + $0x78] sm:$0xff]
        %v846 = vld [vmem:[#allocation2 + $0x80] sm:$0xff]
        %v847 = vld [vmem:[#allocation2 + $0x88] sm:$0xff]
        %v848 = vld [vmem:[#allocation2 + $0x90] sm:$0xff]
        %v849 = vld [vmem:[#allocation2 + $0x98] sm:$0xff]
        %v850 = vld [vmem:[#allocation2 + $0xa0] sm:$0xff]
        %v851 = vld [vmem:[#allocation2 + $0xa8] sm:$0xff]
        %v852 = vld [vmem:[#allocation2 + $0xb0] sm:$0xff]
        %v853 = vld [vmem:[#allocation2 + $0xb8] sm:$0xff]
        %v854 = vld [vmem:[#allocation2 + $0xc0] sm:$0xff]
        %v855 = vld [vmem:[#allocation2 + $0xc8] sm:$0xff]
        %v856 = vld [vmem:[#allocation2 + $0xd0] sm:$0xff]
        %v857 = vld [vmem:[#allocation2 + $0xd8] sm:$0xff]
        %v858 = vld [vmem:[#allocation2 + $0xe0] sm:$0xff]
        %v859 = vld [vmem:[#allocation2 + $0xe8] sm:$0xff]
        %v860 = vld [vmem:[#allocation2 + $0xf0] sm:$0xff]
        %v861 = vld [vmem:[#allocation2 + $0xf8] sm:$0xff]
        %v894 = vunpack.c.l.b16 %v830
        %v895 = vunpack.c.h.b16 %v830
        %v896 = vunpack.c.l.b16 %v831
        %v897 = vunpack.c.h.b16 %v831
        %v898 = vunpack.c.l.b16 %v832
        %v899 = vunpack.c.h.b16 %v832
        %v900 = vunpack.c.l.b16 %v833
        %v901 = vunpack.c.h.b16 %v833
        %v902 = vunpack.c.l.b16 %v834
        %v903 = vunpack.c.h.b16 %v834
        %v904 = vunpack.c.l.b16 %v835
        %v905 = vunpack.c.h.b16 %v835
        %v906 = vunpack.c.l.b16 %v836
        %v907 = vunpack.c.h.b16 %v836
        %v908 = vunpack.c.l.b16 %v837
        %v909 = vunpack.c.h.b16 %v837
        %v910 = vunpack.c.l.b16 %v838
        %v911 = vunpack.c.h.b16 %v838
        %v912 = vunpack.c.l.b16 %v839
        %v913 = vunpack.c.h.b16 %v839
        %v914 = vunpack.c.l.b16 %v840
        %v915 = vunpack.c.h.b16 %v840
        %v916 = vunpack.c.l.b16 %v841
        %v917 = vunpack.c.h.b16 %v841
        %v918 = vunpack.c.l.b16 %v842
        %v919 = vunpack.c.h.b16 %v842
        %v920 = vunpack.c.l.b16 %v843
        %v921 = vunpack.c.h.b16 %v843
        %v922 = vunpack.c.l.b16 %v844
        %v923 = vunpack.c.h.b16 %v844
        %v924 = vunpack.c.l.b16 %v845
        %v925 = vunpack.c.h.b16 %v845
        %v926 = vunpack.c.l.b16 %v846
        %v927 = vunpack.c.h.b16 %v846
        %v928 = vunpack.c.l.b16 %v847
        %v929 = vunpack.c.h.b16 %v847
        %v930 = vunpack.c.l.b16 %v848
        %v931 = vunpack.c.h.b16 %v848
        %v932 = vunpack.c.l.b16 %v849
        %v933 = vunpack.c.h.b16 %v849
        %v934 = vunpack.c.l.b16 %v850
        %v935 = vunpack.c.h.b16 %v850
        %v936 = vunpack.c.l.b16 %v851
        %v937 = vunpack.c.h.b16 %v851
        %v938 = vunpack.c.l.b16 %v852
        %v939 = vunpack.c.h.b16 %v852
        %v940 = vunpack.c.l.b16 %v853
        %v941 = vunpack.c.h.b16 %v853
        %v942 = vunpack.c.l.b16 %v854
        %v943 = vunpack.c.h.b16 %v854
        %v944 = vunpack.c.l.b16 %v855
        %v945 = vunpack.c.h.b16 %v855
        %v946 = vunpack.c.l.b16 %v856
        %v947 = vunpack.c.h.b16 %v856
        %v948 = vunpack.c.l.b16 %v857
        %v949 = vunpack.c.h.b16 %v857
        %v950 = vunpack.c.l.b16 %v858
        %v951 = vunpack.c.h.b16 %v858
        %v952 = vunpack.c.l.b16 %v859
        %v953 = vunpack.c.h.b16 %v859
        %v954 = vunpack.c.l.b16 %v860
        %v955 = vunpack.c.h.b16 %v860
        %v956 = vunpack.c.l.b16 %v861
        %v957 = vunpack.c.h.b16 %v861
        %v958 = vpack.c.b16 %v896, %v894
        %v959 = vpack.c.b16 %v897, %v895
        %v960 = vpack.c.b16 %v900, %v898
        %v961 = vpack.c.b16 %v901, %v899
        %v962 = vpack.c.b16 %v904, %v902
        %v963 = vpack.c.b16 %v905, %v903
        %v964 = vpack.c.b16 %v908, %v906
        %v965 = vpack.c.b16 %v909, %v907
        %v966 = vpack.c.b16 %v912, %v910
        %v967 = vpack.c.b16 %v913, %v911
        %v968 = vpack.c.b16 %v916, %v914
        %v969 = vpack.c.b16 %v917, %v915
        %v970 = vpack.c.b16 %v920, %v918
        %v971 = vpack.c.b16 %v921, %v919
        %v972 = vpack.c.b16 %v924, %v922
        %v973 = vpack.c.b16 %v925, %v923
        %v974 = vpack.c.b16 %v928, %v926
        %v975 = vpack.c.b16 %v929, %v927
        %v976 = vpack.c.b16 %v932, %v930
        %v977 = vpack.c.b16 %v933, %v931
        %v978 = vpack.c.b16 %v936, %v934
        %v979 = vpack.c.b16 %v937, %v935
        %v980 = vpack.c.b16 %v940, %v938
        %v981 = vpack.c.b16 %v941, %v939
        %v982 = vpack.c.b16 %v944, %v942
        %v983 = vpack.c.b16 %v945, %v943
        %v984 = vpack.c.b16 %v948, %v946
        %v985 = vpack.c.b16 %v949, %v947
        %v986 = vpack.c.b16 %v952, %v950
        %v987 = vpack.c.b16 %v953, %v951
        %v988 = vpack.c.b16 %v956, %v954
        %v989 = vpack.c.b16 %v957, %v955
        %v1054 = vunpack.c.l.b16 %v798
        %v1055 = vunpack.c.l.b16 %v799
        %v1056 = vunpack.c.l.b16 %v800
        %v1057 = vunpack.c.l.b16 %v801
        %v1058 = vunpack.c.l.b16 %v802
        %v1059 = vunpack.c.l.b16 %v803
        %v1060 = vunpack.c.l.b16 %v804
        %v1061 = vunpack.c.l.b16 %v805
        %v1062 = vunpack.c.l.b16 %v806
        %v1063 = vunpack.c.l.b16 %v807
        %v1064 = vunpack.c.l.b16 %v808
        %v1065 = vunpack.c.l.b16 %v809
        %v1066 = vunpack.c.l.b16 %v810
        %v1067 = vunpack.c.l.b16 %v811
        %v1068 = vunpack.c.l.b16 %v812
        %v1069 = vunpack.c.l.b16 %v813
        %v1070 = vunpack.c.l.b16 %v814
        %v1071 = vunpack.c.l.b16 %v815
        %v1072 = vunpack.c.l.b16 %v816
        %v1073 = vunpack.c.l.b16 %v817
        %v1074 = vunpack.c.l.b16 %v818
        %v1075 = vunpack.c.l.b16 %v819
        %v1076 = vunpack.c.l.b16 %v820
        %v1077 = vunpack.c.l.b16 %v821
        %v1078 = vunpack.c.l.b16 %v822
        %v1079 = vunpack.c.l.b16 %v823
        %v1080 = vunpack.c.l.b16 %v824
        %v1081 = vunpack.c.l.b16 %v825
        %v1082 = vunpack.c.l.b16 %v826
        %v1083 = vunpack.c.l.b16 %v827
        %v1084 = vunpack.c.l.b16 %v828
        %v1085 = vunpack.c.l.b16 %v829
        %v1086 = vpack.c.b16 %v1055, %v1054
        %v1087 = vpack.c.b16 %v1057, %v1056
        %v1088 = vpack.c.b16 %v1059, %v1058
        %v1089 = vpack.c.b16 %v1061, %v1060
        %v1090 = vpack.c.b16 %v1063, %v1062
        %v1091 = vpack.c.b16 %v1065, %v1064
        %v1092 = vpack.c.b16 %v1067, %v1066
        %v1093 = vpack.c.b16 %v1069, %v1068
        %v1094 = vpack.c.b16 %v1071, %v1070
        %v1095 = vpack.c.b16 %v1073, %v1072
        %v1096 = vpack.c.b16 %v1075, %v1074
        %v1097 = vpack.c.b16 %v1077, %v1076
        %v1098 = vpack.c.b16 %v1079, %v1078
        %v1099 = vpack.c.b16 %v1081, %v1080
        %v1100 = vpack.c.b16 %v1083, %v1082
        %v1101 = vpack.c.b16 %v1085, %v1084
        %1118 = vmatpush.bf16.msra.mxu0 %v1093
        %1119 = vmatpush.bf16.msra.mxu0 %v1092
        %1120 = vmatpush.bf16.msra.mxu0 %v1091
        %1121 = vmatpush.bf16.msra.mxu0 %v1090
        %1122 = vmatpush.bf16.msra.mxu0 %v1089
        %1123 = vmatpush.bf16.msra.mxu0 %v1088
        %1124 = vmatpush.bf16.msra.mxu0 %v1087
        %1125 = vmatpush.bf16.msra.mxu0 %v1086
        %1126 = vmatmul.bf16.gmra.mxu0 %v958
        %v1127 = vpop.f32.mrf.mxu0
        %v1128 = vadd.f32 0.0, %v1127
        %v1129 = vpop.f32.mrf.mxu0
        %v1130 = vadd.f32 0.0, %v1129
        %1131 = vmatmul.bf16.gmra.mxu0 %v960
        %v1132 = vpop.f32.mrf.mxu0
        %v1133 = vadd.f32 0.0, %v1132
        %v1134 = vpop.f32.mrf.mxu0
        %v1135 = vadd.f32 0.0, %v1134
        %1136 = vmatmul.bf16.gmra.mxu0 %v962
        %v1137 = vpop.f32.mrf.mxu0
        %v1138 = vadd.f32 0.0, %v1137
        %v1139 = vpop.f32.mrf.mxu0
        %v1140 = vadd.f32 0.0, %v1139
        %1141 = vmatmul.bf16.gmra.mxu0 %v964
        %v1142 = vpop.f32.mrf.mxu0
        %v1143 = vadd.f32 0.0, %v1142
        %v1144 = vpop.f32.mrf.mxu0
        %v1145 = vadd.f32 0.0, %v1144
        %1146 = vmatmul.bf16.gmra.mxu0 %v966
        %v1147 = vpop.f32.mrf.mxu0
        %v1148 = vadd.f32 0.0, %v1147
        %v1149 = vpop.f32.mrf.mxu0
        %v1150 = vadd.f32 0.0, %v1149
        %1151 = vmatmul.bf16.gmra.mxu0 %v968
        %v1152 = vpop.f32.mrf.mxu0
        %v1153 = vadd.f32 0.0, %v1152
        %v1154 = vpop.f32.mrf.mxu0
        %v1155 = vadd.f32 0.0, %v1154
        %1156 = vmatmul.bf16.gmra.mxu0 %v970
        %v1157 = vpop.f32.mrf.mxu0
        %v1158 = vadd.f32 0.0, %v1157
        %v1159 = vpop.f32.mrf.mxu0
        %v1160 = vadd.f32 0.0, %v1159
        %1161 = vmatmul.bf16.gmra.mxu0 %v972
        %v1162 = vpop.f32.mrf.mxu0
        %v1163 = vadd.f32 0.0, %v1162
        %v1164 = vpop.f32.mrf.mxu0
        %v1165 = vadd.f32 0.0, %v1164
        %1166 = vmatmul.bf16.gmra.mxu0 %v974
        %v1167 = vpop.f32.mrf.mxu0
        %v1168 = vadd.f32 0.0, %v1167
        %v1169 = vpop.f32.mrf.mxu0
        %v1170 = vadd.f32 0.0, %v1169
        %1171 = vmatmul.bf16.gmra.mxu0 %v976
        %v1172 = vpop.f32.mrf.mxu0
        %v1173 = vadd.f32 0.0, %v1172
        %v1174 = vpop.f32.mrf.mxu0
        %v1175 = vadd.f32 0.0, %v1174
        %1176 = vmatmul.bf16.gmra.mxu0 %v978
        %v1177 = vpop.f32.mrf.mxu0
        %v1178 = vadd.f32 0.0, %v1177
        %v1179 = vpop.f32.mrf.mxu0
        %v1180 = vadd.f32 0.0, %v1179
        %1181 = vmatmul.bf16.gmra.mxu0 %v980
        %v1182 = vpop.f32.mrf.mxu0
        %v1183 = vadd.f32 0.0, %v1182
        %v1184 = vpop.f32.mrf.mxu0
        %v1185 = vadd.f32 0.0, %v1184
        %1186 = vmatmul.bf16.gmra.mxu0 %v982
        %v1187 = vpop.f32.mrf.mxu0
        %v1188 = vadd.f32 0.0, %v1187
        %v1189 = vpop.f32.mrf.mxu0
        %v1190 = vadd.f32 0.0, %v1189
        %1191 = vmatmul.bf16.gmra.mxu0 %v984
        %v1192 = vpop.f32.mrf.mxu0
        %v1193 = vadd.f32 0.0, %v1192
        %v1194 = vpop.f32.mrf.mxu0
        %v1195 = vadd.f32 0.0, %v1194
        %1196 = vmatmul.bf16.gmra.mxu0 %v986
        %v1197 = vpop.f32.mrf.mxu0
        %v1198 = vadd.f32 0.0, %v1197
        %v1199 = vpop.f32.mrf.mxu0
        %v1200 = vadd.f32 0.0, %v1199
        %1201 = vmatmul.bf16.gmra.mxu0 %v988
        %v1202 = vpop.f32.mrf.mxu0
        %v1203 = vadd.f32 0.0, %v1202
        %v1204 = vpop.f32.mrf.mxu0
        %v1205 = vadd.f32 0.0, %v1204
        %1206 = vdwg.mxu0
        %1207 = vmatpush.bf16.msra.mxu0 %v1101
        %1208 = vmatpush.bf16.msra.mxu0 %v1100
        %1209 = vmatpush.bf16.msra.mxu0 %v1099
        %1210 = vmatpush.bf16.msra.mxu0 %v1098
        %1211 = vmatpush.bf16.msra.mxu0 %v1097
        %1212 = vmatpush.bf16.msra.mxu0 %v1096
        %1213 = vmatpush.bf16.msra.mxu0 %v1095
        %1214 = vmatpush.bf16.msra.mxu0 %v1094
        %1215 = vmatmul.bf16.gmra.mxu0 %v959
        %v1216 = vpop.f32.mrf.mxu0
        %v1217 = vadd.f32 %v1128, %v1216
        %v1218 = vpop.f32.mrf.mxu0
        %v1219 = vadd.f32 %v1130, %v1218
        %1220 = vmatmul.bf16.gmra.mxu0 %v961
        %v1221 = vpop.f32.mrf.mxu0
        %v1222 = vadd.f32 %v1133, %v1221
        %v1223 = vpop.f32.mrf.mxu0
        %v1224 = vadd.f32 %v1135, %v1223
        %1225 = vmatmul.bf16.gmra.mxu0 %v963
        %v1226 = vpop.f32.mrf.mxu0
        %v1227 = vadd.f32 %v1138, %v1226
        %v1228 = vpop.f32.mrf.mxu0
        %v1229 = vadd.f32 %v1140, %v1228
        %1230 = vmatmul.bf16.gmra.mxu0 %v965
        %v1231 = vpop.f32.mrf.mxu0
        %v1232 = vadd.f32 %v1143, %v1231
        %v1233 = vpop.f32.mrf.mxu0
        %v1234 = vadd.f32 %v1145, %v1233
        %1235 = vmatmul.bf16.gmra.mxu0 %v967
        %v1236 = vpop.f32.mrf.mxu0
        %v1237 = vadd.f32 %v1148, %v1236
        %v1238 = vpop.f32.mrf.mxu0
        %v1239 = vadd.f32 %v1150, %v1238
        %1240 = vmatmul.bf16.gmra.mxu0 %v969
        %v1241 = vpop.f32.mrf.mxu0
        %v1242 = vadd.f32 %v1153, %v1241
        %v1243 = vpop.f32.mrf.mxu0
        %v1244 = vadd.f32 %v1155, %v1243
        %1245 = vmatmul.bf16.gmra.mxu0 %v971
        %v1246 = vpop.f32.mrf.mxu0
        %v1247 = vadd.f32 %v1158, %v1246
        %v1248 = vpop.f32.mrf.mxu0
        %v1249 = vadd.f32 %v1160, %v1248
        %1250 = vmatmul.bf16.gmra.mxu0 %v973
        %v1251 = vpop.f32.mrf.mxu0
        %v1252 = vadd.f32 %v1163, %v1251
        %v1253 = vpop.f32.mrf.mxu0
        %v1254 = vadd.f32 %v1165, %v1253
        %1255 = vmatmul.bf16.gmra.mxu0 %v975
        %v1256 = vpop.f32.mrf.mxu0
        %v1257 = vadd.f32 %v1168, %v1256
        %v1258 = vpop.f32.mrf.mxu0
        %v1259 = vadd.f32 %v1170, %v1258
        %1260 = vmatmul.bf16.gmra.mxu0 %v977
        %v1261 = vpop.f32.mrf.mxu0
        %v1262 = vadd.f32 %v1173, %v1261
        %v1263 = vpop.f32.mrf.mxu0
        %v1264 = vadd.f32 %v1175, %v1263
        %1265 = vmatmul.bf16.gmra.mxu0 %v979
        %v1266 = vpop.f32.mrf.mxu0
        %v1267 = vadd.f32 %v1178, %v1266
        %v1268 = vpop.f32.mrf.mxu0
        %v1269 = vadd.f32 %v1180, %v1268
        %1270 = vmatmul.bf16.gmra.mxu0 %v981
        %v1271 = vpop.f32.mrf.mxu0
        %v1272 = vadd.f32 %v1183, %v1271
        %v1273 = vpop.f32.mrf.mxu0
        %v1274 = vadd.f32 %v1185, %v1273
        %1275 = vmatmul.bf16.gmra.mxu0 %v983
        %v1276 = vpop.f32.mrf.mxu0
        %v1277 = vadd.f32 %v1188, %v1276
        %v1278 = vpop.f32.mrf.mxu0
        %v1279 = vadd.f32 %v1190, %v1278
        %1280 = vmatmul.bf16.gmra.mxu0 %v985
        %v1281 = vpop.f32.mrf.mxu0
        %v1282 = vadd.f32 %v1193, %v1281
        %v1283 = vpop.f32.mrf.mxu0
        %v1284 = vadd.f32 %v1195, %v1283
        %1285 = vmatmul.bf16.gmra.mxu0 %v987
        %v1286 = vpop.f32.mrf.mxu0
        %v1287 = vadd.f32 %v1198, %v1286
        %v1288 = vpop.f32.mrf.mxu0
        %v1289 = vadd.f32 %v1200, %v1288
        %1290 = vmatmul.bf16.gmra.mxu0 %v989
        %v1291 = vpop.f32.mrf.mxu0
        %v1292 = vadd.f32 %v1203, %v1291
        %v1293 = vpop.f32.mrf.mxu0
        %v1294 = vadd.f32 %v1205, %v1293
        %1295 = vdwg.mxu0
        %v1296 = vpack.c.bf16 %v1219, %v1217
        %v1297 = vpack.c.bf16 %v1224, %v1222
        %v1298 = vpack.c.bf16 %v1229, %v1227
        %v1299 = vpack.c.bf16 %v1234, %v1232
        %v1300 = vpack.c.bf16 %v1239, %v1237
        %v1301 = vpack.c.bf16 %v1244, %v1242
        %v1302 = vpack.c.bf16 %v1249, %v1247
        %v1303 = vpack.c.bf16 %v1254, %v1252
        %v1304 = vpack.c.bf16 %v1259, %v1257
        %v1305 = vpack.c.bf16 %v1264, %v1262
        %v1306 = vpack.c.bf16 %v1269, %v1267
        %v1307 = vpack.c.bf16 %v1274, %v1272
        %v1308 = vpack.c.bf16 %v1279, %v1277
        %v1309 = vpack.c.bf16 %v1284, %v1282
        %v1310 = vpack.c.bf16 %v1289, %v1287
        %v1311 = vpack.c.bf16 %v1294, %v1292
        %v1312 = vld [vmem:[#allocation5] sm:$0x3]
        %s1313 = scalar_lea.vmem [#allocation2], 256
        %v1314 = vld [vmem:[%s1313] sm:$0xff]
        %v1315 = vld [vmem:[%s1313 + $0x8] sm:$0xff]
        %v1316 = vld [vmem:[%s1313 + $0x10] sm:$0xff]
        %v1317 = vld [vmem:[%s1313 + $0x18] sm:$0xff]
        %v1318 = vld [vmem:[%s1313 + $0x20] sm:$0xff]
        %v1319 = vld [vmem:[%s1313 + $0x28] sm:$0xff]
        %v1320 = vld [vmem:[%s1313 + $0x30] sm:$0xff]
        %v1321 = vld [vmem:[%s1313 + $0x38] sm:$0xff]
        %v1322 = vld [vmem:[%s1313 + $0x40] sm:$0xff]
        %v1323 = vld [vmem:[%s1313 + $0x48] sm:$0xff]
        %v1324 = vld [vmem:[%s1313 + $0x50] sm:$0xff]
        %v1325 = vld [vmem:[%s1313 + $0x58] sm:$0xff]
        %v1326 = vld [vmem:[%s1313 + $0x60] sm:$0xff]
        %v1327 = vld [vmem:[%s1313 + $0x68] sm:$0xff]
        %v1328 = vld [vmem:[%s1313 + $0x70] sm:$0xff]
        %v1329 = vld [vmem:[%s1313 + $0x78] sm:$0xff]
        %v1330 = vld [vmem:[%s1313 + $0x80] sm:$0xff]
        %v1331 = vld [vmem:[%s1313 + $0x88] sm:$0xff]
        %v1332 = vld [vmem:[%s1313 + $0x90] sm:$0xff]
        %v1333 = vld [vmem:[%s1313 + $0x98] sm:$0xff]
        %v1334 = vld [vmem:[%s1313 + $0xa0] sm:$0xff]
        %v1335 = vld [vmem:[%s1313 + $0xa8] sm:$0xff]
        %v1336 = vld [vmem:[%s1313 + $0xb0] sm:$0xff]
        %v1337 = vld [vmem:[%s1313 + $0xb8] sm:$0xff]
        %v1338 = vld [vmem:[%s1313 + $0xc0] sm:$0xff]
        %v1339 = vld [vmem:[%s1313 + $0xc8] sm:$0xff]
        %v1340 = vld [vmem:[%s1313 + $0xd0] sm:$0xff]
        %v1341 = vld [vmem:[%s1313 + $0xd8] sm:$0xff]
        %v1342 = vld [vmem:[%s1313 + $0xe0] sm:$0xff]
        %v1343 = vld [vmem:[%s1313 + $0xe8] sm:$0xff]
        %v1344 = vld [vmem:[%s1313 + $0xf0] sm:$0xff]
        %v1345 = vld [vmem:[%s1313 + $0xf8] sm:$0xff]
        %v1378 = vunpack.c.l.b16 %v1314
        %v1379 = vunpack.c.h.b16 %v1314
        %v1380 = vunpack.c.l.b16 %v1315
        %v1381 = vunpack.c.h.b16 %v1315
        %v1382 = vunpack.c.l.b16 %v1316
        %v1383 = vunpack.c.h.b16 %v1316
        %v1384 = vunpack.c.l.b16 %v1317
        %v1385 = vunpack.c.h.b16 %v1317
        %v1386 = vunpack.c.l.b16 %v1318
        %v1387 = vunpack.c.h.b16 %v1318
        %v1388 = vunpack.c.l.b16 %v1319
        %v1389 = vunpack.c.h.b16 %v1319
        %v1390 = vunpack.c.l.b16 %v1320
        %v1391 = vunpack.c.h.b16 %v1320
        %v1392 = vunpack.c.l.b16 %v1321
        %v1393 = vunpack.c.h.b16 %v1321
        %v1394 = vunpack.c.l.b16 %v1322
        %v1395 = vunpack.c.h.b16 %v1322
        %v1396 = vunpack.c.l.b16 %v1323
        %v1397 = vunpack.c.h.b16 %v1323
        %v1398 = vunpack.c.l.b16 %v1324
        %v1399 = vunpack.c.h.b16 %v1324
        %v1400 = vunpack.c.l.b16 %v1325
        %v1401 = vunpack.c.h.b16 %v1325
        %v1402 = vunpack.c.l.b16 %v1326
        %v1403 = vunpack.c.h.b16 %v1326
        %v1404 = vunpack.c.l.b16 %v1327
        %v1405 = vunpack.c.h.b16 %v1327
        %v1406 = vunpack.c.l.b16 %v1328
        %v1407 = vunpack.c.h.b16 %v1328
        %v1408 = vunpack.c.l.b16 %v1329
        %v1409 = vunpack.c.h.b16 %v1329
        %v1410 = vunpack.c.l.b16 %v1330
        %v1411 = vunpack.c.h.b16 %v1330
        %v1412 = vunpack.c.l.b16 %v1331
        %v1413 = vunpack.c.h.b16 %v1331
        %v1414 = vunpack.c.l.b16 %v1332
        %v1415 = vunpack.c.h.b16 %v1332
        %v1416 = vunpack.c.l.b16 %v1333
        %v1417 = vunpack.c.h.b16 %v1333
        %v1418 = vunpack.c.l.b16 %v1334
        %v1419 = vunpack.c.h.b16 %v1334
        %v1420 = vunpack.c.l.b16 %v1335
        %v1421 = vunpack.c.h.b16 %v1335
        %v1422 = vunpack.c.l.b16 %v1336
        %v1423 = vunpack.c.h.b16 %v1336
        %v1424 = vunpack.c.l.b16 %v1337
        %v1425 = vunpack.c.h.b16 %v1337
        %v1426 = vunpack.c.l.b16 %v1338
        %v1427 = vunpack.c.h.b16 %v1338
        %v1428 = vunpack.c.l.b16 %v1339
        %v1429 = vunpack.c.h.b16 %v1339
        %v1430 = vunpack.c.l.b16 %v1340
        %v1431 = vunpack.c.h.b16 %v1340
        %v1432 = vunpack.c.l.b16 %v1341
        %v1433 = vunpack.c.h.b16 %v1341
        %v1434 = vunpack.c.l.b16 %v1342
        %v1435 = vunpack.c.h.b16 %v1342
        %v1436 = vunpack.c.l.b16 %v1343
        %v1437 = vunpack.c.h.b16 %v1343
        %v1438 = vunpack.c.l.b16 %v1344
        %v1439 = vunpack.c.h.b16 %v1344
        %v1440 = vunpack.c.l.b16 %v1345
        %v1441 = vunpack.c.h.b16 %v1345
        %v1442 = vpack.c.b16 %v1380, %v1378
        %v1443 = vpack.c.b16 %v1381, %v1379
        %v1444 = vpack.c.b16 %v1384, %v1382
        %v1445 = vpack.c.b16 %v1385, %v1383
        %v1446 = vpack.c.b16 %v1388, %v1386
        %v1447 = vpack.c.b16 %v1389, %v1387
        %v1448 = vpack.c.b16 %v1392, %v1390
        %v1449 = vpack.c.b16 %v1393, %v1391
        %v1450 = vpack.c.b16 %v1396, %v1394
        %v1451 = vpack.c.b16 %v1397, %v1395
        %v1452 = vpack.c.b16 %v1400, %v1398
        %v1453 = vpack.c.b16 %v1401, %v1399
        %v1454 = vpack.c.b16 %v1404, %v1402
        %v1455 = vpack.c.b16 %v1405, %v1403
        %v1456 = vpack.c.b16 %v1408, %v1406
        %v1457 = vpack.c.b16 %v1409, %v1407
        %v1458 = vpack.c.b16 %v1412, %v1410
        %v1459 = vpack.c.b16 %v1413, %v1411
        %v1460 = vpack.c.b16 %v1416, %v1414
        %v1461 = vpack.c.b16 %v1417, %v1415
        %v1462 = vpack.c.b16 %v1420, %v1418
        %v1463 = vpack.c.b16 %v1421, %v1419
        %v1464 = vpack.c.b16 %v1424, %v1422
        %v1465 = vpack.c.b16 %v1425, %v1423
        %v1466 = vpack.c.b16 %v1428, %v1426
        %v1467 = vpack.c.b16 %v1429, %v1427
        %v1468 = vpack.c.b16 %v1432, %v1430
        %v1469 = vpack.c.b16 %v1433, %v1431
        %v1470 = vpack.c.b16 %v1436, %v1434
        %v1471 = vpack.c.b16 %v1437, %v1435
        %v1472 = vpack.c.b16 %v1440, %v1438
        %v1473 = vpack.c.b16 %v1441, %v1439
        %1506 = vmatpush.bf16.msra.mxu0 %v1093
        %1507 = vmatpush.bf16.msra.mxu0 %v1092
        %1508 = vmatpush.bf16.msra.mxu0 %v1091
        %1509 = vmatpush.bf16.msra.mxu0 %v1090
        %1510 = vmatpush.bf16.msra.mxu0 %v1089
        %1511 = vmatpush.bf16.msra.mxu0 %v1088
        %1512 = vmatpush.bf16.msra.mxu0 %v1087
        %1513 = vmatpush.bf16.msra.mxu0 %v1086
        %1514 = vmatmul.bf16.gmra.mxu0 %v1442
        %v1515 = vpop.f32.mrf.mxu0
        %v1516 = vadd.f32 0.0, %v1515
        %v1517 = vpop.f32.mrf.mxu0
        %v1518 = vadd.f32 0.0, %v1517
        %1519 = vmatmul.bf16.gmra.mxu0 %v1444
        %v1520 = vpop.f32.mrf.mxu0
        %v1521 = vadd.f32 0.0, %v1520
        %v1522 = vpop.f32.mrf.mxu0
        %v1523 = vadd.f32 0.0, %v1522
        %1524 = vmatmul.bf16.gmra.mxu0 %v1446
        %v1525 = vpop.f32.mrf.mxu0
        %v1526 = vadd.f32 0.0, %v1525
        %v1527 = vpop.f32.mrf.mxu0
        %v1528 = vadd.f32 0.0, %v1527
        %1529 = vmatmul.bf16.gmra.mxu0 %v1448
        %v1530 = vpop.f32.mrf.mxu0
        %v1531 = vadd.f32 0.0, %v1530
        %v1532 = vpop.f32.mrf.mxu0
        %v1533 = vadd.f32 0.0, %v1532
        %1534 = vmatmul.bf16.gmra.mxu0 %v1450
        %v1535 = vpop.f32.mrf.mxu0
        %v1536 = vadd.f32 0.0, %v1535
        %v1537 = vpop.f32.mrf.mxu0
        %v1538 = vadd.f32 0.0, %v1537
        %1539 = vmatmul.bf16.gmra.mxu0 %v1452
        %v1540 = vpop.f32.mrf.mxu0
        %v1541 = vadd.f32 0.0, %v1540
        %v1542 = vpop.f32.mrf.mxu0
        %v1543 = vadd.f32 0.0, %v1542
        %1544 = vmatmul.bf16.gmra.mxu0 %v1454
        %v1545 = vpop.f32.mrf.mxu0
        %v1546 = vadd.f32 0.0, %v1545
        %v1547 = vpop.f32.mrf.mxu0
        %v1548 = vadd.f32 0.0, %v1547
        %1549 = vmatmul.bf16.gmra.mxu0 %v1456
        %v1550 = vpop.f32.mrf.mxu0
        %v1551 = vadd.f32 0.0, %v1550
        %v1552 = vpop.f32.mrf.mxu0
        %v1553 = vadd.f32 0.0, %v1552
        %1554 = vmatmul.bf16.gmra.mxu0 %v1458
        %v1555 = vpop.f32.mrf.mxu0
        %v1556 = vadd.f32 0.0, %v1555
        %v1557 = vpop.f32.mrf.mxu0
        %v1558 = vadd.f32 0.0, %v1557
        %1559 = vmatmul.bf16.gmra.mxu0 %v1460
        %v1560 = vpop.f32.mrf.mxu0
        %v1561 = vadd.f32 0.0, %v1560
        %v1562 = vpop.f32.mrf.mxu0
        %v1563 = vadd.f32 0.0, %v1562
        %1564 = vmatmul.bf16.gmra.mxu0 %v1462
        %v1565 = vpop.f32.mrf.mxu0
        %v1566 = vadd.f32 0.0, %v1565
        %v1567 = vpop.f32.mrf.mxu0
        %v1568 = vadd.f32 0.0, %v1567
        %1569 = vmatmul.bf16.gmra.mxu0 %v1464
        %v1570 = vpop.f32.mrf.mxu0
        %v1571 = vadd.f32 0.0, %v1570
        %v1572 = vpop.f32.mrf.mxu0
        %v1573 = vadd.f32 0.0, %v1572
        %1574 = vmatmul.bf16.gmra.mxu0 %v1466
        %v1575 = vpop.f32.mrf.mxu0
        %v1576 = vadd.f32 0.0, %v1575
        %v1577 = vpop.f32.mrf.mxu0
        %v1578 = vadd.f32 0.0, %v1577
        %1579 = vmatmul.bf16.gmra.mxu0 %v1468
        %v1580 = vpop.f32.mrf.mxu0
        %v1581 = vadd.f32 0.0, %v1580
        %v1582 = vpop.f32.mrf.mxu0
        %v1583 = vadd.f32 0.0, %v1582
        %1584 = vmatmul.bf16.gmra.mxu0 %v1470
        %v1585 = vpop.f32.mrf.mxu0
        %v1586 = vadd.f32 0.0, %v1585
        %v1587 = vpop.f32.mrf.mxu0
        %v1588 = vadd.f32 0.0, %v1587
        %1589 = vmatmul.bf16.gmra.mxu0 %v1472
        %v1590 = vpop.f32.mrf.mxu0
        %v1591 = vadd.f32 0.0, %v1590
        %v1592 = vpop.f32.mrf.mxu0
        %v1593 = vadd.f32 0.0, %v1592
        %1594 = vdwg.mxu0
        %1595 = vmatpush.bf16.msra.mxu0 %v1101
        %1596 = vmatpush.bf16.msra.mxu0 %v1100
        %1597 = vmatpush.bf16.msra.mxu0 %v1099
        %1598 = vmatpush.bf16.msra.mxu0 %v1098
        %1599 = vmatpush.bf16.msra.mxu0 %v1097
        %1600 = vmatpush.bf16.msra.mxu0 %v1096
        %1601 = vmatpush.bf16.msra.mxu0 %v1095
        %1602 = vmatpush.bf16.msra.mxu0 %v1094
        %1603 = vmatmul.bf16.gmra.mxu0 %v1443
        %v1604 = vpop.f32.mrf.mxu0
        %v1605 = vadd.f32 %v1516, %v1604
        %v1606 = vpop.f32.mrf.mxu0
        %v1607 = vadd.f32 %v1518, %v1606
        %1608 = vmatmul.bf16.gmra.mxu0 %v1445
        %v1609 = vpop.f32.mrf.mxu0
        %v1610 = vadd.f32 %v1521, %v1609
        %v1611 = vpop.f32.mrf.mxu0
        %v1612 = vadd.f32 %v1523, %v1611
        %1613 = vmatmul.bf16.gmra.mxu0 %v1447
        %v1614 = vpop.f32.mrf.mxu0
        %v1615 = vadd.f32 %v1526, %v1614
        %v1616 = vpop.f32.mrf.mxu0
        %v1617 = vadd.f32 %v1528, %v1616
        %1618 = vmatmul.bf16.gmra.mxu0 %v1449
        %v1619 = vpop.f32.mrf.mxu0
        %v1620 = vadd.f32 %v1531, %v1619
        %v1621 = vpop.f32.mrf.mxu0
        %v1622 = vadd.f32 %v1533, %v1621
        %1623 = vmatmul.bf16.gmra.mxu0 %v1451
        %v1624 = vpop.f32.mrf.mxu0
        %v1625 = vadd.f32 %v1536, %v1624
        %v1626 = vpop.f32.mrf.mxu0
        %v1627 = vadd.f32 %v1538, %v1626
        %1628 = vmatmul.bf16.gmra.mxu0 %v1453
        %v1629 = vpop.f32.mrf.mxu0
        %v1630 = vadd.f32 %v1541, %v1629
        %v1631 = vpop.f32.mrf.mxu0
        %v1632 = vadd.f32 %v1543, %v1631
        %1633 = vmatmul.bf16.gmra.mxu0 %v1455
        %v1634 = vpop.f32.mrf.mxu0
        %v1635 = vadd.f32 %v1546, %v1634
        %v1636 = vpop.f32.mrf.mxu0
        %v1637 = vadd.f32 %v1548, %v1636
        %1638 = vmatmul.bf16.gmra.mxu0 %v1457
        %v1639 = vpop.f32.mrf.mxu0
        %v1640 = vadd.f32 %v1551, %v1639
        %v1641 = vpop.f32.mrf.mxu0
        %v1642 = vadd.f32 %v1553, %v1641
        %1643 = vmatmul.bf16.gmra.mxu0 %v1459
        %v1644 = vpop.f32.mrf.mxu0
        %v1645 = vadd.f32 %v1556, %v1644
        %v1646 = vpop.f32.mrf.mxu0
        %v1647 = vadd.f32 %v1558, %v1646
        %1648 = vmatmul.bf16.gmra.mxu0 %v1461
        %v1649 = vpop.f32.mrf.mxu0
        %v1650 = vadd.f32 %v1561, %v1649
        %v1651 = vpop.f32.mrf.mxu0
        %v1652 = vadd.f32 %v1563, %v1651
        %1653 = vmatmul.bf16.gmra.mxu0 %v1463
        %v1654 = vpop.f32.mrf.mxu0
        %v1655 = vadd.f32 %v1566, %v1654
        %v1656 = vpop.f32.mrf.mxu0
        %v1657 = vadd.f32 %v1568, %v1656
        %1658 = vmatmul.bf16.gmra.mxu0 %v1465
        %v1659 = vpop.f32.mrf.mxu0
        %v1660 = vadd.f32 %v1571, %v1659
        %v1661 = vpop.f32.mrf.mxu0
        %v1662 = vadd.f32 %v1573, %v1661
        %1663 = vmatmul.bf16.gmra.mxu0 %v1467
        %v1664 = vpop.f32.mrf.mxu0
        %v1665 = vadd.f32 %v1576, %v1664
        %v1666 = vpop.f32.mrf.mxu0
        %v1667 = vadd.f32 %v1578, %v1666
        %1668 = vmatmul.bf16.gmra.mxu0 %v1469
        %v1669 = vpop.f32.mrf.mxu0
        %v1670 = vadd.f32 %v1581, %v1669
        %v1671 = vpop.f32.mrf.mxu0
        %v1672 = vadd.f32 %v1583, %v1671
        %1673 = vmatmul.bf16.gmra.mxu0 %v1471
        %v1674 = vpop.f32.mrf.mxu0
        %v1675 = vadd.f32 %v1586, %v1674
        %v1676 = vpop.f32.mrf.mxu0
        %v1677 = vadd.f32 %v1588, %v1676
        %1678 = vmatmul.bf16.gmra.mxu0 %v1473
        %v1679 = vpop.f32.mrf.mxu0
        %v1680 = vadd.f32 %v1591, %v1679
        %v1681 = vpop.f32.mrf.mxu0
        %v1682 = vadd.f32 %v1593, %v1681
        %1683 = vdwg.mxu0
        %v1684 = vpack.c.bf16 %v1607, %v1605
        %v1685 = vpack.c.bf16 %v1612, %v1610
        %v1686 = vpack.c.bf16 %v1617, %v1615
        %v1687 = vpack.c.bf16 %v1622, %v1620
        %v1688 = vpack.c.bf16 %v1627, %v1625
        %v1689 = vpack.c.bf16 %v1632, %v1630
        %v1690 = vpack.c.bf16 %v1637, %v1635
        %v1691 = vpack.c.bf16 %v1642, %v1640
        %v1692 = vpack.c.bf16 %v1647, %v1645
        %v1693 = vpack.c.bf16 %v1652, %v1650
        %v1694 = vpack.c.bf16 %v1657, %v1655
        %v1695 = vpack.c.bf16 %v1662, %v1660
        %v1696 = vpack.c.bf16 %v1667, %v1665
        %v1697 = vpack.c.bf16 %v1672, %v1670
        %v1698 = vpack.c.bf16 %v1677, %v1675
        %v1699 = vpack.c.bf16 %v1682, %v1680
        %s1700 = scalar_lea.vmem [#allocation5], 2
        %v1701 = vld [vmem:[%s1700] sm:$0x3]
        %vm1702 = vcmask 23552
        %v1704 = vsel %vm1702, %v1684, 0
        %v1707 = vsel %vm1702, %v1685, 0
        %v1710 = vsel %vm1702, %v1686, 0
        %v1713 = vsel %vm1702, %v1687, 0
        %v1716 = vsel %vm1702, %v1688, 0
        %v1719 = vsel %vm1702, %v1689, 0
        %v1722 = vsel %vm1702, %v1690, 0
        %v1725 = vsel %vm1702, %v1691, 0
        %v1728 = vsel %vm1702, %v1692, 0
        %v1731 = vsel %vm1702, %v1693, 0
        %v1734 = vsel %vm1702, %v1694, 0
        %v1737 = vsel %vm1702, %v1695, 0
        %v1740 = vsel %vm1702, %v1696, 0
        %v1743 = vsel %vm1702, %v1697, 0
        %v1746 = vsel %vm1702, %v1698, 0
        %v1749 = vsel %vm1702, %v1699, 0
        %vm1751 = vcmask 1040384
        %vm1752 = vcmask 1041408
        %v1753 = vsel %vm1751, 4294967295, 65535
        %v1754 = vsel %vm1752, %v1753, 0
        %v1756 = vand.u32 %v1701, %v1754
        %1758 = vmatpush.bf16.msra.mxu0 0
        %1759 = vmatpush.bf16.msra.mxu0 0
        %1760 = vmatpush.bf16.msra.mxu0 0
        %1761 = vmatpush.bf16.msra.mxu0 0
        %1762 = vmatpush.bf16.msra.mxu0 0
        %1763 = vmatpush.bf16.msra.mxu0 0
        %1764 = vmatpush.bf16.msra.mxu0 0
        %1765 = vmatpush.bf16.msra.mxu0 %v1756
        %1766 = vmatmul.bf16.gmra.mxu0 %v1704
        %v1767 = vpop.f32.mrf.mxu0
        %v1768 = vadd.f32 0.0, %v1767
        %v1769 = vpop.f32.mrf.mxu0
        %v1770 = vadd.f32 0.0, %v1769
        %1771 = vmatmul.bf16.gmra.mxu0 %v1707
        %v1772 = vpop.f32.mrf.mxu0
        %v1773 = vadd.f32 0.0, %v1772
        %v1774 = vpop.f32.mrf.mxu0
        %v1775 = vadd.f32 0.0, %v1774
        %1776 = vmatmul.bf16.gmra.mxu0 %v1710
        %v1777 = vpop.f32.mrf.mxu0
        %v1778 = vadd.f32 0.0, %v1777
        %v1779 = vpop.f32.mrf.mxu0
        %v1780 = vadd.f32 0.0, %v1779
        %1781 = vmatmul.bf16.gmra.mxu0 %v1713
        %v1782 = vpop.f32.mrf.mxu0
        %v1783 = vadd.f32 0.0, %v1782
        %v1784 = vpop.f32.mrf.mxu0
        %v1785 = vadd.f32 0.0, %v1784
        %1786 = vmatmul.bf16.gmra.mxu0 %v1716
        %v1787 = vpop.f32.mrf.mxu0
        %v1788 = vadd.f32 0.0, %v1787
        %v1789 = vpop.f32.mrf.mxu0
        %v1790 = vadd.f32 0.0, %v1789
        %1791 = vmatmul.bf16.gmra.mxu0 %v1719
        %v1792 = vpop.f32.mrf.mxu0
        %v1793 = vadd.f32 0.0, %v1792
        %v1794 = vpop.f32.mrf.mxu0
        %v1795 = vadd.f32 0.0, %v1794
        %1796 = vmatmul.bf16.gmra.mxu0 %v1722
        %v1797 = vpop.f32.mrf.mxu0
        %v1798 = vadd.f32 0.0, %v1797
        %v1799 = vpop.f32.mrf.mxu0
        %v1800 = vadd.f32 0.0, %v1799
        %1801 = vmatmul.bf16.gmra.mxu0 %v1725
        %v1802 = vpop.f32.mrf.mxu0
        %v1803 = vadd.f32 0.0, %v1802
        %v1804 = vpop.f32.mrf.mxu0
        %v1805 = vadd.f32 0.0, %v1804
        %1806 = vmatmul.bf16.gmra.mxu0 %v1728
        %v1807 = vpop.f32.mrf.mxu0
        %v1808 = vadd.f32 0.0, %v1807
        %v1809 = vpop.f32.mrf.mxu0
        %v1810 = vadd.f32 0.0, %v1809
        %1811 = vmatmul.bf16.gmra.mxu0 %v1731
        %v1812 = vpop.f32.mrf.mxu0
        %v1813 = vadd.f32 0.0, %v1812
        %v1814 = vpop.f32.mrf.mxu0
        %v1815 = vadd.f32 0.0, %v1814
        %1816 = vmatmul.bf16.gmra.mxu0 %v1734
        %v1817 = vpop.f32.mrf.mxu0
        %v1818 = vadd.f32 0.0, %v1817
        %v1819 = vpop.f32.mrf.mxu0
        %v1820 = vadd.f32 0.0, %v1819
        %1821 = vmatmul.bf16.gmra.mxu0 %v1737
        %v1822 = vpop.f32.mrf.mxu0
        %v1823 = vadd.f32 0.0, %v1822
        %v1824 = vpop.f32.mrf.mxu0
        %v1825 = vadd.f32 0.0, %v1824
        %1826 = vmatmul.bf16.gmra.mxu0 %v1740
        %v1827 = vpop.f32.mrf.mxu0
        %v1828 = vadd.f32 0.0, %v1827
        %v1829 = vpop.f32.mrf.mxu0
        %v1830 = vadd.f32 0.0, %v1829
        %1831 = vmatmul.bf16.gmra.mxu0 %v1743
        %v1832 = vpop.f32.mrf.mxu0
        %v1833 = vadd.f32 0.0, %v1832
        %v1834 = vpop.f32.mrf.mxu0
        %v1835 = vadd.f32 0.0, %v1834
        %1836 = vmatmul.bf16.gmra.mxu0 %v1746
        %v1837 = vpop.f32.mrf.mxu0
        %v1838 = vadd.f32 0.0, %v1837
        %v1839 = vpop.f32.mrf.mxu0
        %v1840 = vadd.f32 0.0, %v1839
        %1841 = vmatmul.bf16.gmra.mxu0 %v1749
        %v1842 = vpop.f32.mrf.mxu0
        %v1843 = vadd.f32 0.0, %v1842
        %v1844 = vpop.f32.mrf.mxu0
        %v1845 = vadd.f32 0.0, %v1844
        %1846 = vdwg.mxu0
        %v1848 = vsel %vm1702, %v1296, 0
        %v1851 = vsel %vm1702, %v1297, 0
        %v1854 = vsel %vm1702, %v1298, 0
        %v1857 = vsel %vm1702, %v1299, 0
        %v1860 = vsel %vm1702, %v1300, 0
        %v1863 = vsel %vm1702, %v1301, 0
        %v1866 = vsel %vm1702, %v1302, 0
        %v1869 = vsel %vm1702, %v1303, 0
        %v1872 = vsel %vm1702, %v1304, 0
        %v1875 = vsel %vm1702, %v1305, 0
        %v1878 = vsel %vm1702, %v1306, 0
        %v1881 = vsel %vm1702, %v1307, 0
        %v1884 = vsel %vm1702, %v1308, 0
        %v1887 = vsel %vm1702, %v1309, 0
        %v1890 = vsel %vm1702, %v1310, 0
        %v1893 = vsel %vm1702, %v1311, 0
        %v1896 = vand.u32 %v1312, %v1754
        %1898 = vmatpush.bf16.msra.mxu0 0
        %1899 = vmatpush.bf16.msra.mxu0 0
        %1900 = vmatpush.bf16.msra.mxu0 0
        %1901 = vmatpush.bf16.msra.mxu0 0
        %1902 = vmatpush.bf16.msra.mxu0 0
        %1903 = vmatpush.bf16.msra.mxu0 0
        %1904 = vmatpush.bf16.msra.mxu0 0
        %1905 = vmatpush.bf16.msra.mxu0 %v1896
        %1906 = vmatmul.bf16.gmra.mxu0 %v1848
        %v1907 = vpop.f32.mrf.mxu0
        %v1908 = vadd.f32 %v1768, %v1907
        %v1909 = vpop.f32.mrf.mxu0
        %v1910 = vadd.f32 %v1770, %v1909
        %1911 = vmatmul.bf16.gmra.mxu0 %v1851
        %v1912 = vpop.f32.mrf.mxu0
        %v1913 = vadd.f32 %v1773, %v1912
        %v1914 = vpop.f32.mrf.mxu0
        %v1915 = vadd.f32 %v1775, %v1914
        %1916 = vmatmul.bf16.gmra.mxu0 %v1854
        %v1917 = vpop.f32.mrf.mxu0
        %v1918 = vadd.f32 %v1778, %v1917
        %v1919 = vpop.f32.mrf.mxu0
        %v1920 = vadd.f32 %v1780, %v1919
        %1921 = vmatmul.bf16.gmra.mxu0 %v1857
        %v1922 = vpop.f32.mrf.mxu0
        %v1923 = vadd.f32 %v1783, %v1922
        %v1924 = vpop.f32.mrf.mxu0
        %v1925 = vadd.f32 %v1785, %v1924
        %1926 = vmatmul.bf16.gmra.mxu0 %v1860
        %v1927 = vpop.f32.mrf.mxu0
        %v1928 = vadd.f32 %v1788, %v1927
        %v1929 = vpop.f32.mrf.mxu0
        %v1930 = vadd.f32 %v1790, %v1929
        %1931 = vmatmul.bf16.gmra.mxu0 %v1863
        %v1932 = vpop.f32.mrf.mxu0
        %v1933 = vadd.f32 %v1793, %v1932
        %v1934 = vpop.f32.mrf.mxu0
        %v1935 = vadd.f32 %v1795, %v1934
        %1936 = vmatmul.bf16.gmra.mxu0 %v1866
        %v1937 = vpop.f32.mrf.mxu0
        %v1938 = vadd.f32 %v1798, %v1937
        %v1939 = vpop.f32.mrf.mxu0
        %v1940 = vadd.f32 %v1800, %v1939
        %1941 = vmatmul.bf16.gmra.mxu0 %v1869
        %v1942 = vpop.f32.mrf.mxu0
        %v1943 = vadd.f32 %v1803, %v1942
        %v1944 = vpop.f32.mrf.mxu0
        %v1945 = vadd.f32 %v1805, %v1944
        %1946 = vmatmul.bf16.gmra.mxu0 %v1872
        %v1947 = vpop.f32.mrf.mxu0
        %v1948 = vadd.f32 %v1808, %v1947
        %v1949 = vpop.f32.mrf.mxu0
        %v1950 = vadd.f32 %v1810, %v1949
        %1951 = vmatmul.bf16.gmra.mxu0 %v1875
        %v1952 = vpop.f32.mrf.mxu0
        %v1953 = vadd.f32 %v1813, %v1952
        %v1954 = vpop.f32.mrf.mxu0
        %v1955 = vadd.f32 %v1815, %v1954
        %1956 = vmatmul.bf16.gmra.mxu0 %v1878
        %v1957 = vpop.f32.mrf.mxu0
        %v1958 = vadd.f32 %v1818, %v1957
        %v1959 = vpop.f32.mrf.mxu0
        %v1960 = vadd.f32 %v1820, %v1959
        %1961 = vmatmul.bf16.gmra.mxu0 %v1881
        %v1962 = vpop.f32.mrf.mxu0
        %v1963 = vadd.f32 %v1823, %v1962
        %v1964 = vpop.f32.mrf.mxu0
        %v1965 = vadd.f32 %v1825, %v1964
        %1966 = vmatmul.bf16.gmra.mxu0 %v1884
        %v1967 = vpop.f32.mrf.mxu0
        %v1968 = vadd.f32 %v1828, %v1967
        %v1969 = vpop.f32.mrf.mxu0
        %v1970 = vadd.f32 %v1830, %v1969
        %1971 = vmatmul.bf16.gmra.mxu0 %v1887
        %v1972 = vpop.f32.mrf.mxu0
        %v1973 = vadd.f32 %v1833, %v1972
        %v1974 = vpop.f32.mrf.mxu0
        %v1975 = vadd.f32 %v1835, %v1974
        %1976 = vmatmul.bf16.gmra.mxu0 %v1890
        %v1977 = vpop.f32.mrf.mxu0
        %v1978 = vadd.f32 %v1838, %v1977
        %v1979 = vpop.f32.mrf.mxu0
        %v1980 = vadd.f32 %v1840, %v1979
        %1981 = vmatmul.bf16.gmra.mxu0 %v1893
        %v1982 = vpop.f32.mrf.mxu0
        %v1983 = vadd.f32 %v1843, %v1982
        %v1984 = vpop.f32.mrf.mxu0
        %v1985 = vadd.f32 %v1845, %v1984
        %1986 = vdwg.mxu0
        %s1987 = scalar_lea.vmem [#allocation2], 512
        %v1988 = vld [vmem:[%s1987] sm:$0xff]
        %v1989 = vld [vmem:[%s1987 + $0x8] sm:$0xff]
        %v1990 = vld [vmem:[%s1987 + $0x10] sm:$0xff]
        %v1991 = vld [vmem:[%s1987 + $0x18] sm:$0xff]
        %v1992 = vld [vmem:[%s1987 + $0x20] sm:$0xff]
        %v1993 = vld [vmem:[%s1987 + $0x28] sm:$0xff]
        %v1994 = vld [vmem:[%s1987 + $0x30] sm:$0xff]
        %v1995 = vld [vmem:[%s1987 + $0x38] sm:$0xff]
        %v1996 = vld [vmem:[%s1987 + $0x40] sm:$0xff]
        %v1997 = vld [vmem:[%s1987 + $0x48] sm:$0xff]
        %v1998 = vld [vmem:[%s1987 + $0x50] sm:$0xff]
        %v1999 = vld [vmem:[%s1987 + $0x58] sm:$0xff]
        %v2000 = vld [vmem:[%s1987 + $0x60] sm:$0xff]
        %v2001 = vld [vmem:[%s1987 + $0x68] sm:$0xff]
        %v2002 = vld [vmem:[%s1987 + $0x70] sm:$0xff]
        %v2003 = vld [vmem:[%s1987 + $0x78] sm:$0xff]
        %v2004 = vld [vmem:[%s1987 + $0x80] sm:$0xff]
        %v2005 = vld [vmem:[%s1987 + $0x88] sm:$0xff]
        %v2006 = vld [vmem:[%s1987 + $0x90] sm:$0xff]
        %v2007 = vld [vmem:[%s1987 + $0x98] sm:$0xff]
        %v2008 = vld [vmem:[%s1987 + $0xa0] sm:$0xff]
        %v2009 = vld [vmem:[%s1987 + $0xa8] sm:$0xff]
        %v2010 = vld [vmem:[%s1987 + $0xb0] sm:$0xff]
        %v2011 = vld [vmem:[%s1987 + $0xb8] sm:$0xff]
        %v2012 = vld [vmem:[%s1987 + $0xc0] sm:$0xff]
        %v2013 = vld [vmem:[%s1987 + $0xc8] sm:$0xff]
        %v2014 = vld [vmem:[%s1987 + $0xd0] sm:$0xff]
        %v2015 = vld [vmem:[%s1987 + $0xd8] sm:$0xff]
        %v2016 = vld [vmem:[%s1987 + $0xe0] sm:$0xff]
        %v2017 = vld [vmem:[%s1987 + $0xe8] sm:$0xff]
        %v2018 = vld [vmem:[%s1987 + $0xf0] sm:$0xff]
        %v2019 = vld [vmem:[%s1987 + $0xf8] sm:$0xff]
        %v2052 = vunpack.c.l.b16 %v1988
        %v2053 = vunpack.c.h.b16 %v1988
        %v2054 = vunpack.c.l.b16 %v1989
        %v2055 = vunpack.c.h.b16 %v1989
        %v2056 = vunpack.c.l.b16 %v1990
        %v2057 = vunpack.c.h.b16 %v1990
        %v2058 = vunpack.c.l.b16 %v1991
        %v2059 = vunpack.c.h.b16 %v1991
        %v2060 = vunpack.c.l.b16 %v1992
        %v2061 = vunpack.c.h.b16 %v1992
        %v2062 = vunpack.c.l.b16 %v1993
        %v2063 = vunpack.c.h.b16 %v1993
        %v2064 = vunpack.c.l.b16 %v1994
        %v2065 = vunpack.c.h.b16 %v1994
        %v2066 = vunpack.c.l.b16 %v1995
        %v2067 = vunpack.c.h.b16 %v1995
        %v2068 = vunpack.c.l.b16 %v1996
        %v2069 = vunpack.c.h.b16 %v1996
        %v2070 = vunpack.c.l.b16 %v1997
        %v2071 = vunpack.c.h.b16 %v1997
        %v2072 = vunpack.c.l.b16 %v1998
        %v2073 = vunpack.c.h.b16 %v1998
        %v2074 = vunpack.c.l.b16 %v1999
        %v2075 = vunpack.c.h.b16 %v1999
        %v2076 = vunpack.c.l.b16 %v2000
        %v2077 = vunpack.c.h.b16 %v2000
        %v2078 = vunpack.c.l.b16 %v2001
        %v2079 = vunpack.c.h.b16 %v2001
        %v2080 = vunpack.c.l.b16 %v2002
        %v2081 = vunpack.c.h.b16 %v2002
        %v2082 = vunpack.c.l.b16 %v2003
        %v2083 = vunpack.c.h.b16 %v2003
        %v2084 = vunpack.c.l.b16 %v2004
        %v2085 = vunpack.c.h.b16 %v2004
        %v2086 = vunpack.c.l.b16 %v2005
        %v2087 = vunpack.c.h.b16 %v2005
        %v2088 = vunpack.c.l.b16 %v2006
        %v2089 = vunpack.c.h.b16 %v2006
        %v2090 = vunpack.c.l.b16 %v2007
        %v2091 = vunpack.c.h.b16 %v2007
        %v2092 = vunpack.c.l.b16 %v2008
        %v2093 = vunpack.c.h.b16 %v2008
        %v2094 = vunpack.c.l.b16 %v2009
        %v2095 = vunpack.c.h.b16 %v2009
        %v2096 = vunpack.c.l.b16 %v2010
        %v2097 = vunpack.c.h.b16 %v2010
        %v2098 = vunpack.c.l.b16 %v2011
        %v2099 = vunpack.c.h.b16 %v2011
        %v2100 = vunpack.c.l.b16 %v2012
        %v2101 = vunpack.c.h.b16 %v2012
        %v2102 = vunpack.c.l.b16 %v2013
        %v2103 = vunpack.c.h.b16 %v2013
        %v2104 = vunpack.c.l.b16 %v2014
        %v2105 = vunpack.c.h.b16 %v2014
        %v2106 = vunpack.c.l.b16 %v2015
        %v2107 = vunpack.c.h.b16 %v2015
        %v2108 = vunpack.c.l.b16 %v2016
        %v2109 = vunpack.c.h.b16 %v2016
        %v2110 = vunpack.c.l.b16 %v2017
        %v2111 = vunpack.c.h.b16 %v2017
        %v2112 = vunpack.c.l.b16 %v2018
        %v2113 = vunpack.c.h.b16 %v2018
        %v2114 = vunpack.c.l.b16 %v2019
        %v2115 = vunpack.c.h.b16 %v2019
        %v2116 = vpack.c.b16 %v2054, %v2052
        %v2117 = vpack.c.b16 %v2055, %v2053
        %v2118 = vpack.c.b16 %v2058, %v2056
        %v2119 = vpack.c.b16 %v2059, %v2057
        %v2120 = vpack.c.b16 %v2062, %v2060
        %v2121 = vpack.c.b16 %v2063, %v2061
        %v2122 = vpack.c.b16 %v2066, %v2064
        %v2123 = vpack.c.b16 %v2067, %v2065
        %v2124 = vpack.c.b16 %v2070, %v2068
        %v2125 = vpack.c.b16 %v2071, %v2069
        %v2126 = vpack.c.b16 %v2074, %v2072
        %v2127 = vpack.c.b16 %v2075, %v2073
        %v2128 = vpack.c.b16 %v2078, %v2076
        %v2129 = vpack.c.b16 %v2079, %v2077
        %v2130 = vpack.c.b16 %v2082, %v2080
        %v2131 = vpack.c.b16 %v2083, %v2081
        %v2132 = vpack.c.b16 %v2086, %v2084
        %v2133 = vpack.c.b16 %v2087, %v2085
        %v2134 = vpack.c.b16 %v2090, %v2088
        %v2135 = vpack.c.b16 %v2091, %v2089
        %v2136 = vpack.c.b16 %v2094, %v2092
        %v2137 = vpack.c.b16 %v2095, %v2093
        %v2138 = vpack.c.b16 %v2098, %v2096
        %v2139 = vpack.c.b16 %v2099, %v2097
        %v2140 = vpack.c.b16 %v2102, %v2100
        %v2141 = vpack.c.b16 %v2103, %v2101
        %v2142 = vpack.c.b16 %v2106, %v2104
        %v2143 = vpack.c.b16 %v2107, %v2105
        %v2144 = vpack.c.b16 %v2110, %v2108
        %v2145 = vpack.c.b16 %v2111, %v2109
        %v2146 = vpack.c.b16 %v2114, %v2112
        %v2147 = vpack.c.b16 %v2115, %v2113
        %2180 = vmatpush.bf16.msra.mxu0 %v1093
        %2181 = vmatpush.bf16.msra.mxu0 %v1092
        %2182 = vmatpush.bf16.msra.mxu0 %v1091
        %2183 = vmatpush.bf16.msra.mxu0 %v1090
        %2184 = vmatpush.bf16.msra.mxu0 %v1089
        %2185 = vmatpush.bf16.msra.mxu0 %v1088
        %2186 = vmatpush.bf16.msra.mxu0 %v1087
        %2187 = vmatpush.bf16.msra.mxu0 %v1086
        %2188 = vmatmul.bf16.gmra.mxu0 %v2116
        %v2189 = vpop.f32.mrf.mxu0
        %v2190 = vadd.f32 0.0, %v2189
        %v2191 = vpop.f32.mrf.mxu0
        %v2192 = vadd.f32 0.0, %v2191
        %2193 = vmatmul.bf16.gmra.mxu0 %v2118
        %v2194 = vpop.f32.mrf.mxu0
        %v2195 = vadd.f32 0.0, %v2194
        %v2196 = vpop.f32.mrf.mxu0
        %v2197 = vadd.f32 0.0, %v2196
        %2198 = vmatmul.bf16.gmra.mxu0 %v2120
        %v2199 = vpop.f32.mrf.mxu0
        %v2200 = vadd.f32 0.0, %v2199
        %v2201 = vpop.f32.mrf.mxu0
        %v2202 = vadd.f32 0.0, %v2201
        %2203 = vmatmul.bf16.gmra.mxu0 %v2122
        %v2204 = vpop.f32.mrf.mxu0
        %v2205 = vadd.f32 0.0, %v2204
        %v2206 = vpop.f32.mrf.mxu0
        %v2207 = vadd.f32 0.0, %v2206
        %2208 = vmatmul.bf16.gmra.mxu0 %v2124
        %v2209 = vpop.f32.mrf.mxu0
        %v2210 = vadd.f32 0.0, %v2209
        %v2211 = vpop.f32.mrf.mxu0
        %v2212 = vadd.f32 0.0, %v2211
        %2213 = vmatmul.bf16.gmra.mxu0 %v2126
        %v2214 = vpop.f32.mrf.mxu0
        %v2215 = vadd.f32 0.0, %v2214
        %v2216 = vpop.f32.mrf.mxu0
        %v2217 = vadd.f32 0.0, %v2216
        %2218 = vmatmul.bf16.gmra.mxu0 %v2128
        %v2219 = vpop.f32.mrf.mxu0
        %v2220 = vadd.f32 0.0, %v2219
        %v2221 = vpop.f32.mrf.mxu0
        %v2222 = vadd.f32 0.0, %v2221
        %2223 = vmatmul.bf16.gmra.mxu0 %v2130
        %v2224 = vpop.f32.mrf.mxu0
        %v2225 = vadd.f32 0.0, %v2224
        %v2226 = vpop.f32.mrf.mxu0
        %v2227 = vadd.f32 0.0, %v2226
        %2228 = vmatmul.bf16.gmra.mxu0 %v2132
        %v2229 = vpop.f32.mrf.mxu0
        %v2230 = vadd.f32 0.0, %v2229
        %v2231 = vpop.f32.mrf.mxu0
        %v2232 = vadd.f32 0.0, %v2231
        %2233 = vmatmul.bf16.gmra.mxu0 %v2134
        %v2234 = vpop.f32.mrf.mxu0
        %v2235 = vadd.f32 0.0, %v2234
        %v2236 = vpop.f32.mrf.mxu0
        %v2237 = vadd.f32 0.0, %v2236
        %2238 = vmatmul.bf16.gmra.mxu0 %v2136
        %v2239 = vpop.f32.mrf.mxu0
        %v2240 = vadd.f32 0.0, %v2239
        %v2241 = vpop.f32.mrf.mxu0
        %v2242 = vadd.f32 0.0, %v2241
        %2243 = vmatmul.bf16.gmra.mxu0 %v2138
        %v2244 = vpop.f32.mrf.mxu0
        %v2245 = vadd.f32 0.0, %v2244
        %v2246 = vpop.f32.mrf.mxu0
        %v2247 = vadd.f32 0.0, %v2246
        %2248 = vmatmul.bf16.gmra.mxu0 %v2140
        %v2249 = vpop.f32.mrf.mxu0
        %v2250 = vadd.f32 0.0, %v2249
        %v2251 = vpop.f32.mrf.mxu0
        %v2252 = vadd.f32 0.0, %v2251
        %2253 = vmatmul.bf16.gmra.mxu0 %v2142
        %v2254 = vpop.f32.mrf.mxu0
        %v2255 = vadd.f32 0.0, %v2254
        %v2256 = vpop.f32.mrf.mxu0
        %v2257 = vadd.f32 0.0, %v2256
        %2258 = vmatmul.bf16.gmra.mxu0 %v2144
        %v2259 = vpop.f32.mrf.mxu0
        %v2260 = vadd.f32 0.0, %v2259
        %v2261 = vpop.f32.mrf.mxu0
        %v2262 = vadd.f32 0.0, %v2261
        %2263 = vmatmul.bf16.gmra.mxu0 %v2146
        %v2264 = vpop.f32.mrf.mxu0
        %v2265 = vadd.f32 0.0, %v2264
        %v2266 = vpop.f32.mrf.mxu0
        %v2267 = vadd.f32 0.0, %v2266
        %2268 = vdwg.mxu0
        %2269 = vmatpush.bf16.msra.mxu0 %v1101
        %2270 = vmatpush.bf16.msra.mxu0 %v1100
        %2271 = vmatpush.bf16.msra.mxu0 %v1099
        %2272 = vmatpush.bf16.msra.mxu0 %v1098
        %2273 = vmatpush.bf16.msra.mxu0 %v1097
        %2274 = vmatpush.bf16.msra.mxu0 %v1096
        %2275 = vmatpush.bf16.msra.mxu0 %v1095
        %2276 = vmatpush.bf16.msra.mxu0 %v1094
        %2277 = vmatmul.bf16.gmra.mxu0 %v2117
        %v2278 = vpop.f32.mrf.mxu0
        %v2279 = vadd.f32 %v2190, %v2278
        %v2280 = vpop.f32.mrf.mxu0
        %v2281 = vadd.f32 %v2192, %v2280
        %2282 = vmatmul.bf16.gmra.mxu0 %v2119
        %v2283 = vpop.f32.mrf.mxu0
        %v2284 = vadd.f32 %v2195, %v2283
        %v2285 = vpop.f32.mrf.mxu0
        %v2286 = vadd.f32 %v2197, %v2285
        %2287 = vmatmul.bf16.gmra.mxu0 %v2121
        %v2288 = vpop.f32.mrf.mxu0
        %v2289 = vadd.f32 %v2200, %v2288
        %v2290 = vpop.f32.mrf.mxu0
        %v2291 = vadd.f32 %v2202, %v2290
        %2292 = vmatmul.bf16.gmra.mxu0 %v2123
        %v2293 = vpop.f32.mrf.mxu0
        %v2294 = vadd.f32 %v2205, %v2293
        %v2295 = vpop.f32.mrf.mxu0
        %v2296 = vadd.f32 %v2207, %v2295
        %2297 = vmatmul.bf16.gmra.mxu0 %v2125
        %v2298 = vpop.f32.mrf.mxu0
        %v2299 = vadd.f32 %v2210, %v2298
        %v2300 = vpop.f32.mrf.mxu0
        %v2301 = vadd.f32 %v2212, %v2300
        %2302 = vmatmul.bf16.gmra.mxu0 %v2127
        %v2303 = vpop.f32.mrf.mxu0
        %v2304 = vadd.f32 %v2215, %v2303
        %v2305 = vpop.f32.mrf.mxu0
        %v2306 = vadd.f32 %v2217, %v2305
        %2307 = vmatmul.bf16.gmra.mxu0 %v2129
        %v2308 = vpop.f32.mrf.mxu0
        %v2309 = vadd.f32 %v2220, %v2308
        %v2310 = vpop.f32.mrf.mxu0
        %v2311 = vadd.f32 %v2222, %v2310
        %2312 = vmatmul.bf16.gmra.mxu0 %v2131
        %v2313 = vpop.f32.mrf.mxu0
        %v2314 = vadd.f32 %v2225, %v2313
        %v2315 = vpop.f32.mrf.mxu0
        %v2316 = vadd.f32 %v2227, %v2315
        %2317 = vmatmul.bf16.gmra.mxu0 %v2133
        %v2318 = vpop.f32.mrf.mxu0
        %v2319 = vadd.f32 %v2230, %v2318
        %v2320 = vpop.f32.mrf.mxu0
        %v2321 = vadd.f32 %v2232, %v2320
        %2322 = vmatmul.bf16.gmra.mxu0 %v2135
        %v2323 = vpop.f32.mrf.mxu0
        %v2324 = vadd.f32 %v2235, %v2323
        %v2325 = vpop.f32.mrf.mxu0
        %v2326 = vadd.f32 %v2237, %v2325
        %2327 = vmatmul.bf16.gmra.mxu0 %v2137
        %v2328 = vpop.f32.mrf.mxu0
        %v2329 = vadd.f32 %v2240, %v2328
        %v2330 = vpop.f32.mrf.mxu0
        %v2331 = vadd.f32 %v2242, %v2330
        %2332 = vmatmul.bf16.gmra.mxu0 %v2139
        %v2333 = vpop.f32.mrf.mxu0
        %v2334 = vadd.f32 %v2245, %v2333
        %v2335 = vpop.f32.mrf.mxu0
        %v2336 = vadd.f32 %v2247, %v2335
        %2337 = vmatmul.bf16.gmra.mxu0 %v2141
        %v2338 = vpop.f32.mrf.mxu0
        %v2339 = vadd.f32 %v2250, %v2338
        %v2340 = vpop.f32.mrf.mxu0
        %v2341 = vadd.f32 %v2252, %v2340
        %2342 = vmatmul.bf16.gmra.mxu0 %v2143
        %v2343 = vpop.f32.mrf.mxu0
        %v2344 = vadd.f32 %v2255, %v2343
        %v2345 = vpop.f32.mrf.mxu0
        %v2346 = vadd.f32 %v2257, %v2345
        %2347 = vmatmul.bf16.gmra.mxu0 %v2145
        %v2348 = vpop.f32.mrf.mxu0
        %v2349 = vadd.f32 %v2260, %v2348
        %v2350 = vpop.f32.mrf.mxu0
        %v2351 = vadd.f32 %v2262, %v2350
        %2352 = vmatmul.bf16.gmra.mxu0 %v2147
        %v2353 = vpop.f32.mrf.mxu0
        %v2354 = vadd.f32 %v2265, %v2353
        %v2355 = vpop.f32.mrf.mxu0
        %v2356 = vadd.f32 %v2267, %v2355
        %2357 = vdwg.mxu0
        %v2358 = vpack.c.bf16 %v2281, %v2279
        %v2359 = vpack.c.bf16 %v2286, %v2284
        %v2360 = vpack.c.bf16 %v2291, %v2289
        %v2361 = vpack.c.bf16 %v2296, %v2294
        %v2362 = vpack.c.bf16 %v2301, %v2299
        %v2363 = vpack.c.bf16 %v2306, %v2304
        %v2364 = vpack.c.bf16 %v2311, %v2309
        %v2365 = vpack.c.bf16 %v2316, %v2314
        %v2366 = vpack.c.bf16 %v2321, %v2319
        %v2367 = vpack.c.bf16 %v2326, %v2324
        %v2368 = vpack.c.bf16 %v2331, %v2329
        %v2369 = vpack.c.bf16 %v2336, %v2334
        %v2370 = vpack.c.bf16 %v2341, %v2339
        %v2371 = vpack.c.bf16 %v2346, %v2344
        %v2372 = vpack.c.bf16 %v2351, %v2349
        %v2373 = vpack.c.bf16 %v2356, %v2354
        %s2374 = scalar_lea.vmem [#allocation5], 4
        %v2375 = vld [vmem:[%s2374] sm:$0x3]
        %v2377 = vsel %vm1702, %v2358, 0
        %v2380 = vsel %vm1702, %v2359, 0
        %v2383 = vsel %vm1702, %v2360, 0
        %v2386 = vsel %vm1702, %v2361, 0
        %v2389 = vsel %vm1702, %v2362, 0
        %v2392 = vsel %vm1702, %v2363, 0
        %v2395 = vsel %vm1702, %v2364, 0
        %v2398 = vsel %vm1702, %v2365, 0
        %v2401 = vsel %vm1702, %v2366, 0
        %v2404 = vsel %vm1702, %v2367, 0
        %v2407 = vsel %vm1702, %v2368, 0
        %v2410 = vsel %vm1702, %v2369, 0
        %v2413 = vsel %vm1702, %v2370, 0
        %v2416 = vsel %vm1702, %v2371, 0
        %v2419 = vsel %vm1702, %v2372, 0
        %v2422 = vsel %vm1702, %v2373, 0
        %v2425 = vand.u32 %v2375, %v1754
        %2427 = vmatpush.bf16.msra.mxu0 0
        %2428 = vmatpush.bf16.msra.mxu0 0
        %2429 = vmatpush.bf16.msra.mxu0 0
        %2430 = vmatpush.bf16.msra.mxu0 0
        %2431 = vmatpush.bf16.msra.mxu0 0
        %2432 = vmatpush.bf16.msra.mxu0 0
        %2433 = vmatpush.bf16.msra.mxu0 0
        %2434 = vmatpush.bf16.msra.mxu0 %v2425
        %2435 = vmatmul.bf16.gmra.mxu0 %v2377
        %v2436 = vpop.f32.mrf.mxu0
        %v2437 = vadd.f32 0.0, %v2436
        %v2438 = vpop.f32.mrf.mxu0
        %v2439 = vadd.f32 0.0, %v2438
        %2440 = vmatmul.bf16.gmra.mxu0 %v2380
        %v2441 = vpop.f32.mrf.mxu0
        %v2442 = vadd.f32 0.0, %v2441
        %v2443 = vpop.f32.mrf.mxu0
        %v2444 = vadd.f32 0.0, %v2443
        %2445 = vmatmul.bf16.gmra.mxu0 %v2383
        %v2446 = vpop.f32.mrf.mxu0
        %v2447 = vadd.f32 0.0, %v2446
        %v2448 = vpop.f32.mrf.mxu0
        %v2449 = vadd.f32 0.0, %v2448
        %2450 = vmatmul.bf16.gmra.mxu0 %v2386
        %v2451 = vpop.f32.mrf.mxu0
        %v2452 = vadd.f32 0.0, %v2451
        %v2453 = vpop.f32.mrf.mxu0
        %v2454 = vadd.f32 0.0, %v2453
        %2455 = vmatmul.bf16.gmra.mxu0 %v2389
        %v2456 = vpop.f32.mrf.mxu0
        %v2457 = vadd.f32 0.0, %v2456
        %v2458 = vpop.f32.mrf.mxu0
        %v2459 = vadd.f32 0.0, %v2458
        %2460 = vmatmul.bf16.gmra.mxu0 %v2392
        %v2461 = vpop.f32.mrf.mxu0
        %v2462 = vadd.f32 0.0, %v2461
        %v2463 = vpop.f32.mrf.mxu0
        %v2464 = vadd.f32 0.0, %v2463
        %2465 = vmatmul.bf16.gmra.mxu0 %v2395
        %v2466 = vpop.f32.mrf.mxu0
        %v2467 = vadd.f32 0.0, %v2466
        %v2468 = vpop.f32.mrf.mxu0
        %v2469 = vadd.f32 0.0, %v2468
        %2470 = vmatmul.bf16.gmra.mxu0 %v2398
        %v2471 = vpop.f32.mrf.mxu0
        %v2472 = vadd.f32 0.0, %v2471
        %v2473 = vpop.f32.mrf.mxu0
        %v2474 = vadd.f32 0.0, %v2473
        %2475 = vmatmul.bf16.gmra.mxu0 %v2401
        %v2476 = vpop.f32.mrf.mxu0
        %v2477 = vadd.f32 0.0, %v2476
        %v2478 = vpop.f32.mrf.mxu0
        %v2479 = vadd.f32 0.0, %v2478
        %2480 = vmatmul.bf16.gmra.mxu0 %v2404
        %v2481 = vpop.f32.mrf.mxu0
        %v2482 = vadd.f32 0.0, %v2481
        %v2483 = vpop.f32.mrf.mxu0
        %v2484 = vadd.f32 0.0, %v2483
        %2485 = vmatmul.bf16.gmra.mxu0 %v2407
        %v2486 = vpop.f32.mrf.mxu0
        %v2487 = vadd.f32 0.0, %v2486
        %v2488 = vpop.f32.mrf.mxu0
        %v2489 = vadd.f32 0.0, %v2488
        %2490 = vmatmul.bf16.gmra.mxu0 %v2410
        %v2491 = vpop.f32.mrf.mxu0
        %v2492 = vadd.f32 0.0, %v2491
        %v2493 = vpop.f32.mrf.mxu0
        %v2494 = vadd.f32 0.0, %v2493
        %2495 = vmatmul.bf16.gmra.mxu0 %v2413
        %v2496 = vpop.f32.mrf.mxu0
        %v2497 = vadd.f32 0.0, %v2496
        %v2498 = vpop.f32.mrf.mxu0
        %v2499 = vadd.f32 0.0, %v2498
        %2500 = vmatmul.bf16.gmra.mxu0 %v2416
        %v2501 = vpop.f32.mrf.mxu0
        %v2502 = vadd.f32 0.0, %v2501
        %v2503 = vpop.f32.mrf.mxu0
        %v2504 = vadd.f32 0.0, %v2503
        %2505 = vmatmul.bf16.gmra.mxu0 %v2419
        %v2506 = vpop.f32.mrf.mxu0
        %v2507 = vadd.f32 0.0, %v2506
        %v2508 = vpop.f32.mrf.mxu0
        %v2509 = vadd.f32 0.0, %v2508
        %2510 = vmatmul.bf16.gmra.mxu0 %v2422
        %v2511 = vpop.f32.mrf.mxu0
        %v2512 = vadd.f32 0.0, %v2511
        %v2513 = vpop.f32.mrf.mxu0
        %v2514 = vadd.f32 0.0, %v2513
        %2515 = vdwg.mxu0
        %v2516 = vadd.f32 %v1908, %v2437
        %v2517 = vadd.f32 %v1910, %v2439
        %v2518 = vadd.f32 %v1913, %v2442
        %v2519 = vadd.f32 %v1915, %v2444
        %v2520 = vadd.f32 %v1918, %v2447
        %v2521 = vadd.f32 %v1920, %v2449
        %v2522 = vadd.f32 %v1923, %v2452
        %v2523 = vadd.f32 %v1925, %v2454
        %v2524 = vadd.f32 %v1928, %v2457
        %v2525 = vadd.f32 %v1930, %v2459
        %v2526 = vadd.f32 %v1933, %v2462
        %v2527 = vadd.f32 %v1935, %v2464
        %v2528 = vadd.f32 %v1938, %v2467
        %v2529 = vadd.f32 %v1940, %v2469
        %v2530 = vadd.f32 %v1943, %v2472
        %v2531 = vadd.f32 %v1945, %v2474
        %v2532 = vadd.f32 %v1948, %v2477
        %v2533 = vadd.f32 %v1950, %v2479
        %v2534 = vadd.f32 %v1953, %v2482
        %v2535 = vadd.f32 %v1955, %v2484
        %v2536 = vadd.f32 %v1958, %v2487
        %v2537 = vadd.f32 %v1960, %v2489
        %v2538 = vadd.f32 %v1963, %v2492
        %v2539 = vadd.f32 %v1965, %v2494
        %v2540 = vadd.f32 %v1968, %v2497
        %v2541 = vadd.f32 %v1970, %v2499
        %v2542 = vadd.f32 %v1973, %v2502
        %v2543 = vadd.f32 %v1975, %v2504
        %v2544 = vadd.f32 %v1978, %v2507
        %v2545 = vadd.f32 %v1980, %v2509
        %v2546 = vadd.f32 %v1983, %v2512
        %v2547 = vadd.f32 %v1985, %v2514
        %s2548 = scalar_lea.vmem [#allocation2], 768
        %v2549 = vld [vmem:[%s2548] sm:$0xff]
        %v2550 = vld [vmem:[%s2548 + $0x8] sm:$0xff]
        %v2551 = vld [vmem:[%s2548 + $0x10] sm:$0xff]
        %v2552 = vld [vmem:[%s2548 + $0x18] sm:$0xff]
        %v2553 = vld [vmem:[%s2548 + $0x20] sm:$0xff]
        %v2554 = vld [vmem:[%s2548 + $0x28] sm:$0xff]
        %v2555 = vld [vmem:[%s2548 + $0x30] sm:$0xff]
        %v2556 = vld [vmem:[%s2548 + $0x38] sm:$0xff]
        %v2557 = vld [vmem:[%s2548 + $0x40] sm:$0xff]
        %v2558 = vld [vmem:[%s2548 + $0x48] sm:$0xff]
        %v2559 = vld [vmem:[%s2548 + $0x50] sm:$0xff]
        %v2560 = vld [vmem:[%s2548 + $0x58] sm:$0xff]
        %v2561 = vld [vmem:[%s2548 + $0x60] sm:$0xff]
        %v2562 = vld [vmem:[%s2548 + $0x68] sm:$0xff]
        %v2563 = vld [vmem:[%s2548 + $0x70] sm:$0xff]
        %v2564 = vld [vmem:[%s2548 + $0x78] sm:$0xff]
        %v2565 = vld [vmem:[%s2548 + $0x80] sm:$0xff]
        %v2566 = vld [vmem:[%s2548 + $0x88] sm:$0xff]
        %v2567 = vld [vmem:[%s2548 + $0x90] sm:$0xff]
        %v2568 = vld [vmem:[%s2548 + $0x98] sm:$0xff]
        %v2569 = vld [vmem:[%s2548 + $0xa0] sm:$0xff]
        %v2570 = vld [vmem:[%s2548 + $0xa8] sm:$0xff]
        %v2571 = vld [vmem:[%s2548 + $0xb0] sm:$0xff]
        %v2572 = vld [vmem:[%s2548 + $0xb8] sm:$0xff]
        %v2573 = vld [vmem:[%s2548 + $0xc0] sm:$0xff]
        %v2574 = vld [vmem:[%s2548 + $0xc8] sm:$0xff]
        %v2575 = vld [vmem:[%s2548 + $0xd0] sm:$0xff]
        %v2576 = vld [vmem:[%s2548 + $0xd8] sm:$0xff]
        %v2577 = vld [vmem:[%s2548 + $0xe0] sm:$0xff]
        %v2578 = vld [vmem:[%s2548 + $0xe8] sm:$0xff]
        %v2579 = vld [vmem:[%s2548 + $0xf0] sm:$0xff]
        %v2580 = vld [vmem:[%s2548 + $0xf8] sm:$0xff]
        %v2613 = vunpack.c.l.b16 %v2549
        %v2614 = vunpack.c.h.b16 %v2549
        %v2615 = vunpack.c.l.b16 %v2550
        %v2616 = vunpack.c.h.b16 %v2550
        %v2617 = vunpack.c.l.b16 %v2551
        %v2618 = vunpack.c.h.b16 %v2551
        %v2619 = vunpack.c.l.b16 %v2552
        %v2620 = vunpack.c.h.b16 %v2552
        %v2621 = vunpack.c.l.b16 %v2553
        %v2622 = vunpack.c.h.b16 %v2553
        %v2623 = vunpack.c.l.b16 %v2554
        %v2624 = vunpack.c.h.b16 %v2554
        %v2625 = vunpack.c.l.b16 %v2555
        %v2626 = vunpack.c.h.b16 %v2555
        %v2627 = vunpack.c.l.b16 %v2556
        %v2628 = vunpack.c.h.b16 %v2556
        %v2629 = vunpack.c.l.b16 %v2557
        %v2630 = vunpack.c.h.b16 %v2557
        %v2631 = vunpack.c.l.b16 %v2558
        %v2632 = vunpack.c.h.b16 %v2558
        %v2633 = vunpack.c.l.b16 %v2559
        %v2634 = vunpack.c.h.b16 %v2559
        %v2635 = vunpack.c.l.b16 %v2560
        %v2636 = vunpack.c.h.b16 %v2560
        %v2637 = vunpack.c.l.b16 %v2561
        %v2638 = vunpack.c.h.b16 %v2561
        %v2639 = vunpack.c.l.b16 %v2562
        %v2640 = vunpack.c.h.b16 %v2562
        %v2641 = vunpack.c.l.b16 %v2563
        %v2642 = vunpack.c.h.b16 %v2563
        %v2643 = vunpack.c.l.b16 %v2564
        %v2644 = vunpack.c.h.b16 %v2564
        %v2645 = vunpack.c.l.b16 %v2565
        %v2646 = vunpack.c.h.b16 %v2565
        %v2647 = vunpack.c.l.b16 %v2566
        %v2648 = vunpack.c.h.b16 %v2566
        %v2649 = vunpack.c.l.b16 %v2567
        %v2650 = vunpack.c.h.b16 %v2567
        %v2651 = vunpack.c.l.b16 %v2568
        %v2652 = vunpack.c.h.b16 %v2568
        %v2653 = vunpack.c.l.b16 %v2569
        %v2654 = vunpack.c.h.b16 %v2569
        %v2655 = vunpack.c.l.b16 %v2570
        %v2656 = vunpack.c.h.b16 %v2570
        %v2657 = vunpack.c.l.b16 %v2571
        %v2658 = vunpack.c.h.b16 %v2571
        %v2659 = vunpack.c.l.b16 %v2572
        %v2660 = vunpack.c.h.b16 %v2572
        %v2661 = vunpack.c.l.b16 %v2573
        %v2662 = vunpack.c.h.b16 %v2573
        %v2663 = vunpack.c.l.b16 %v2574
        %v2664 = vunpack.c.h.b16 %v2574
        %v2665 = vunpack.c.l.b16 %v2575
        %v2666 = vunpack.c.h.b16 %v2575
        %v2667 = vunpack.c.l.b16 %v2576
        %v2668 = vunpack.c.h.b16 %v2576
        %v2669 = vunpack.c.l.b16 %v2577
        %v2670 = vunpack.c.h.b16 %v2577
        %v2671 = vunpack.c.l.b16 %v2578
        %v2672 = vunpack.c.h.b16 %v2578
        %v2673 = vunpack.c.l.b16 %v2579
        %v2674 = vunpack.c.h.b16 %v2579
        %v2675 = vunpack.c.l.b16 %v2580
        %v2676 = vunpack.c.h.b16 %v2580
        %v2677 = vpack.c.b16 %v2615, %v2613
        %v2678 = vpack.c.b16 %v2616, %v2614
        %v2679 = vpack.c.b16 %v2619, %v2617
        %v2680 = vpack.c.b16 %v2620, %v2618
        %v2681 = vpack.c.b16 %v2623, %v2621
        %v2682 = vpack.c.b16 %v2624, %v2622
        %v2683 = vpack.c.b16 %v2627, %v2625
        %v2684 = vpack.c.b16 %v2628, %v2626
        %v2685 = vpack.c.b16 %v2631, %v2629
        %v2686 = vpack.c.b16 %v2632, %v2630
        %v2687 = vpack.c.b16 %v2635, %v2633
        %v2688 = vpack.c.b16 %v2636, %v2634
        %v2689 = vpack.c.b16 %v2639, %v2637
        %v2690 = vpack.c.b16 %v2640, %v2638
        %v2691 = vpack.c.b16 %v2643, %v2641
        %v2692 = vpack.c.b16 %v2644, %v2642
        %v2693 = vpack.c.b16 %v2647, %v2645
        %v2694 = vpack.c.b16 %v2648, %v2646
        %v2695 = vpack.c.b16 %v2651, %v2649
        %v2696 = vpack.c.b16 %v2652, %v2650
        %v2697 = vpack.c.b16 %v2655, %v2653
        %v2698 = vpack.c.b16 %v2656, %v2654
        %v2699 = vpack.c.b16 %v2659, %v2657
        %v2700 = vpack.c.b16 %v2660, %v2658
        %v2701 = vpack.c.b16 %v2663, %v2661
        %v2702 = vpack.c.b16 %v2664, %v2662
        %v2703 = vpack.c.b16 %v2667, %v2665
        %v2704 = vpack.c.b16 %v2668, %v2666
        %v2705 = vpack.c.b16 %v2671, %v2669
        %v2706 = vpack.c.b16 %v2672, %v2670
        %v2707 = vpack.c.b16 %v2675, %v2673
        %v2708 = vpack.c.b16 %v2676, %v2674
        %2741 = vmatpush.bf16.msra.mxu0 %v1093
        %2742 = vmatpush.bf16.msra.mxu0 %v1092
        %2743 = vmatpush.bf16.msra.mxu0 %v1091
        %2744 = vmatpush.bf16.msra.mxu0 %v1090
        %2745 = vmatpush.bf16.msra.mxu0 %v1089
        %2746 = vmatpush.bf16.msra.mxu0 %v1088
        %2747 = vmatpush.bf16.msra.mxu0 %v1087
        %2748 = vmatpush.bf16.msra.mxu0 %v1086
        %2749 = vmatmul.bf16.gmra.mxu0 %v2677
        %v2750 = vpop.f32.mrf.mxu0
        %v2751 = vadd.f32 0.0, %v2750
        %v2752 = vpop.f32.mrf.mxu0
        %v2753 = vadd.f32 0.0, %v2752
        %2754 = vmatmul.bf16.gmra.mxu0 %v2679
        %v2755 = vpop.f32.mrf.mxu0
        %v2756 = vadd.f32 0.0, %v2755
        %v2757 = vpop.f32.mrf.mxu0
        %v2758 = vadd.f32 0.0, %v2757
        %2759 = vmatmul.bf16.gmra.mxu0 %v2681
        %v2760 = vpop.f32.mrf.mxu0
        %v2761 = vadd.f32 0.0, %v2760
        %v2762 = vpop.f32.mrf.mxu0
        %v2763 = vadd.f32 0.0, %v2762
        %2764 = vmatmul.bf16.gmra.mxu0 %v2683
        %v2765 = vpop.f32.mrf.mxu0
        %v2766 = vadd.f32 0.0, %v2765
        %v2767 = vpop.f32.mrf.mxu0
        %v2768 = vadd.f32 0.0, %v2767
        %2769 = vmatmul.bf16.gmra.mxu0 %v2685
        %v2770 = vpop.f32.mrf.mxu0
        %v2771 = vadd.f32 0.0, %v2770
        %v2772 = vpop.f32.mrf.mxu0
        %v2773 = vadd.f32 0.0, %v2772
        %2774 = vmatmul.bf16.gmra.mxu0 %v2687
        %v2775 = vpop.f32.mrf.mxu0
        %v2776 = vadd.f32 0.0, %v2775
        %v2777 = vpop.f32.mrf.mxu0
        %v2778 = vadd.f32 0.0, %v2777
        %2779 = vmatmul.bf16.gmra.mxu0 %v2689
        %v2780 = vpop.f32.mrf.mxu0
        %v2781 = vadd.f32 0.0, %v2780
        %v2782 = vpop.f32.mrf.mxu0
        %v2783 = vadd.f32 0.0, %v2782
        %2784 = vmatmul.bf16.gmra.mxu0 %v2691
        %v2785 = vpop.f32.mrf.mxu0
        %v2786 = vadd.f32 0.0, %v2785
        %v2787 = vpop.f32.mrf.mxu0
        %v2788 = vadd.f32 0.0, %v2787
        %2789 = vmatmul.bf16.gmra.mxu0 %v2693
        %v2790 = vpop.f32.mrf.mxu0
        %v2791 = vadd.f32 0.0, %v2790
        %v2792 = vpop.f32.mrf.mxu0
        %v2793 = vadd.f32 0.0, %v2792
        %2794 = vmatmul.bf16.gmra.mxu0 %v2695
        %v2795 = vpop.f32.mrf.mxu0
        %v2796 = vadd.f32 0.0, %v2795
        %v2797 = vpop.f32.mrf.mxu0
        %v2798 = vadd.f32 0.0, %v2797
        %2799 = vmatmul.bf16.gmra.mxu0 %v2697
        %v2800 = vpop.f32.mrf.mxu0
        %v2801 = vadd.f32 0.0, %v2800
        %v2802 = vpop.f32.mrf.mxu0
        %v2803 = vadd.f32 0.0, %v2802
        %2804 = vmatmul.bf16.gmra.mxu0 %v2699
        %v2805 = vpop.f32.mrf.mxu0
        %v2806 = vadd.f32 0.0, %v2805
        %v2807 = vpop.f32.mrf.mxu0
        %v2808 = vadd.f32 0.0, %v2807
        %2809 = vmatmul.bf16.gmra.mxu0 %v2701
        %v2810 = vpop.f32.mrf.mxu0
        %v2811 = vadd.f32 0.0, %v2810
        %v2812 = vpop.f32.mrf.mxu0
        %v2813 = vadd.f32 0.0, %v2812
        %2814 = vmatmul.bf16.gmra.mxu0 %v2703
        %v2815 = vpop.f32.mrf.mxu0
        %v2816 = vadd.f32 0.0, %v2815
        %v2817 = vpop.f32.mrf.mxu0
        %v2818 = vadd.f32 0.0, %v2817
        %2819 = vmatmul.bf16.gmra.mxu0 %v2705
        %v2820 = vpop.f32.mrf.mxu0
        %v2821 = vadd.f32 0.0, %v2820
        %v2822 = vpop.f32.mrf.mxu0
        %v2823 = vadd.f32 0.0, %v2822
        %2824 = vmatmul.bf16.gmra.mxu0 %v2707
        %v2825 = vpop.f32.mrf.mxu0
        %v2826 = vadd.f32 0.0, %v2825
        %v2827 = vpop.f32.mrf.mxu0
        %v2828 = vadd.f32 0.0, %v2827
        %2829 = vdwg.mxu0
        %2830 = vmatpush.bf16.msra.mxu0 %v1101
        %2831 = vmatpush.bf16.msra.mxu0 %v1100
        %2832 = vmatpush.bf16.msra.mxu0 %v1099
        %2833 = vmatpush.bf16.msra.mxu0 %v1098
        %2834 = vmatpush.bf16.msra.mxu0 %v1097
        %2835 = vmatpush.bf16.msra.mxu0 %v1096
        %2836 = vmatpush.bf16.msra.mxu0 %v1095
        %2837 = vmatpush.bf16.msra.mxu0 %v1094
        %2838 = vmatmul.bf16.gmra.mxu0 %v2678
        %v2839 = vpop.f32.mrf.mxu0
        %v2840 = vadd.f32 %v2751, %v2839
        %v2841 = vpop.f32.mrf.mxu0
        %v2842 = vadd.f32 %v2753, %v2841
        %2843 = vmatmul.bf16.gmra.mxu0 %v2680
        %v2844 = vpop.f32.mrf.mxu0
        %v2845 = vadd.f32 %v2756, %v2844
        %v2846 = vpop.f32.mrf.mxu0
        %v2847 = vadd.f32 %v2758, %v2846
        %2848 = vmatmul.bf16.gmra.mxu0 %v2682
        %v2849 = vpop.f32.mrf.mxu0
        %v2850 = vadd.f32 %v2761, %v2849
        %v2851 = vpop.f32.mrf.mxu0
        %v2852 = vadd.f32 %v2763, %v2851
        %2853 = vmatmul.bf16.gmra.mxu0 %v2684
        %v2854 = vpop.f32.mrf.mxu0
        %v2855 = vadd.f32 %v2766, %v2854
        %v2856 = vpop.f32.mrf.mxu0
        %v2857 = vadd.f32 %v2768, %v2856
        %2858 = vmatmul.bf16.gmra.mxu0 %v2686
        %v2859 = vpop.f32.mrf.mxu0
        %v2860 = vadd.f32 %v2771, %v2859
        %v2861 = vpop.f32.mrf.mxu0
        %v2862 = vadd.f32 %v2773, %v2861
        %2863 = vmatmul.bf16.gmra.mxu0 %v2688
        %v2864 = vpop.f32.mrf.mxu0
        %v2865 = vadd.f32 %v2776, %v2864
        %v2866 = vpop.f32.mrf.mxu0
        %v2867 = vadd.f32 %v2778, %v2866
        %2868 = vmatmul.bf16.gmra.mxu0 %v2690
        %v2869 = vpop.f32.mrf.mxu0
        %v2870 = vadd.f32 %v2781, %v2869
        %v2871 = vpop.f32.mrf.mxu0
        %v2872 = vadd.f32 %v2783, %v2871
        %2873 = vmatmul.bf16.gmra.mxu0 %v2692
        %v2874 = vpop.f32.mrf.mxu0
        %v2875 = vadd.f32 %v2786, %v2874
        %v2876 = vpop.f32.mrf.mxu0
        %v2877 = vadd.f32 %v2788, %v2876
        %2878 = vmatmul.bf16.gmra.mxu0 %v2694
        %v2879 = vpop.f32.mrf.mxu0
        %v2880 = vadd.f32 %v2791, %v2879
        %v2881 = vpop.f32.mrf.mxu0
        %v2882 = vadd.f32 %v2793, %v2881
        %2883 = vmatmul.bf16.gmra.mxu0 %v2696
        %v2884 = vpop.f32.mrf.mxu0
        %v2885 = vadd.f32 %v2796, %v2884
        %v2886 = vpop.f32.mrf.mxu0
        %v2887 = vadd.f32 %v2798, %v2886
        %2888 = vmatmul.bf16.gmra.mxu0 %v2698
        %v2889 = vpop.f32.mrf.mxu0
        %v2890 = vadd.f32 %v2801, %v2889
        %v2891 = vpop.f32.mrf.mxu0
        %v2892 = vadd.f32 %v2803, %v2891
        %2893 = vmatmul.bf16.gmra.mxu0 %v2700
        %v2894 = vpop.f32.mrf.mxu0
        %v2895 = vadd.f32 %v2806, %v2894
        %v2896 = vpop.f32.mrf.mxu0
        %v2897 = vadd.f32 %v2808, %v2896
        %2898 = vmatmul.bf16.gmra.mxu0 %v2702
        %v2899 = vpop.f32.mrf.mxu0
        %v2900 = vadd.f32 %v2811, %v2899
        %v2901 = vpop.f32.mrf.mxu0
        %v2902 = vadd.f32 %v2813, %v2901
        %2903 = vmatmul.bf16.gmra.mxu0 %v2704
        %v2904 = vpop.f32.mrf.mxu0
        %v2905 = vadd.f32 %v2816, %v2904
        %v2906 = vpop.f32.mrf.mxu0
        %v2907 = vadd.f32 %v2818, %v2906
        %2908 = vmatmul.bf16.gmra.mxu0 %v2706
        %v2909 = vpop.f32.mrf.mxu0
        %v2910 = vadd.f32 %v2821, %v2909
        %v2911 = vpop.f32.mrf.mxu0
        %v2912 = vadd.f32 %v2823, %v2911
        %2913 = vmatmul.bf16.gmra.mxu0 %v2708
        %v2914 = vpop.f32.mrf.mxu0
        %v2915 = vadd.f32 %v2826, %v2914
        %v2916 = vpop.f32.mrf.mxu0
        %v2917 = vadd.f32 %v2828, %v2916
        %2918 = vdwg.mxu0
        %v2919 = vpack.c.bf16 %v2842, %v2840
        %v2920 = vpack.c.bf16 %v2847, %v2845
        %v2921 = vpack.c.bf16 %v2852, %v2850
        %v2922 = vpack.c.bf16 %v2857, %v2855
        %v2923 = vpack.c.bf16 %v2862, %v2860
        %v2924 = vpack.c.bf16 %v2867, %v2865
        %v2925 = vpack.c.bf16 %v2872, %v2870
        %v2926 = vpack.c.bf16 %v2877, %v2875
        %v2927 = vpack.c.bf16 %v2882, %v2880
        %v2928 = vpack.c.bf16 %v2887, %v2885
        %v2929 = vpack.c.bf16 %v2892, %v2890
        %v2930 = vpack.c.bf16 %v2897, %v2895
        %v2931 = vpack.c.bf16 %v2902, %v2900
        %v2932 = vpack.c.bf16 %v2907, %v2905
        %v2933 = vpack.c.bf16 %v2912, %v2910
        %v2934 = vpack.c.bf16 %v2917, %v2915
        %s2935 = scalar_lea.vmem [#allocation5], 6
        %v2936 = vld [vmem:[%s2935] sm:$0x3]
        %v2938 = vsel %vm1702, %v2919, 0
        %v2941 = vsel %vm1702, %v2920, 0
        %v2944 = vsel %vm1702, %v2921, 0
        %v2947 = vsel %vm1702, %v2922, 0
        %v2950 = vsel %vm1702, %v2923, 0
        %v2953 = vsel %vm1702, %v2924, 0
        %v2956 = vsel %vm1702, %v2925, 0
        %v2959 = vsel %vm1702, %v2926, 0
        %v2962 = vsel %vm1702, %v2927, 0
        %v2965 = vsel %vm1702, %v2928, 0
        %v2968 = vsel %vm1702, %v2929, 0
        %v2971 = vsel %vm1702, %v2930, 0
        %v2974 = vsel %vm1702, %v2931, 0
        %v2977 = vsel %vm1702, %v2932, 0
        %v2980 = vsel %vm1702, %v2933, 0
        %v2983 = vsel %vm1702, %v2934, 0
        %v2986 = vand.u32 %v2936, %v1754
        %2988 = vmatpush.bf16.msra.mxu0 0
        %2989 = vmatpush.bf16.msra.mxu0 0
        %2990 = vmatpush.bf16.msra.mxu0 0
        %2991 = vmatpush.bf16.msra.mxu0 0
        %2992 = vmatpush.bf16.msra.mxu0 0
        %2993 = vmatpush.bf16.msra.mxu0 0
        %2994 = vmatpush.bf16.msra.mxu0 0
        %2995 = vmatpush.bf16.msra.mxu0 %v2986
        %2996 = vmatmul.bf16.gmra.mxu0 %v2938
        %v2997 = vpop.f32.mrf.mxu0
        %v2998 = vadd.f32 0.0, %v2997
        %v2999 = vpop.f32.mrf.mxu0
        %v3000 = vadd.f32 0.0, %v2999
        %3001 = vmatmul.bf16.gmra.mxu0 %v2941
        %v3002 = vpop.f32.mrf.mxu0
        %v3003 = vadd.f32 0.0, %v3002
        %v3004 = vpop.f32.mrf.mxu0
        %v3005 = vadd.f32 0.0, %v3004
        %3006 = vmatmul.bf16.gmra.mxu0 %v2944
        %v3007 = vpop.f32.mrf.mxu0
        %v3008 = vadd.f32 0.0, %v3007
        %v3009 = vpop.f32.mrf.mxu0
        %v3010 = vadd.f32 0.0, %v3009
        %3011 = vmatmul.bf16.gmra.mxu0 %v2947
        %v3012 = vpop.f32.mrf.mxu0
        %v3013 = vadd.f32 0.0, %v3012
        %v3014 = vpop.f32.mrf.mxu0
        %v3015 = vadd.f32 0.0, %v3014
        %3016 = vmatmul.bf16.gmra.mxu0 %v2950
        %v3017 = vpop.f32.mrf.mxu0
        %v3018 = vadd.f32 0.0, %v3017
        %v3019 = vpop.f32.mrf.mxu0
        %v3020 = vadd.f32 0.0, %v3019
        %3021 = vmatmul.bf16.gmra.mxu0 %v2953
        %v3022 = vpop.f32.mrf.mxu0
        %v3023 = vadd.f32 0.0, %v3022
        %v3024 = vpop.f32.mrf.mxu0
        %v3025 = vadd.f32 0.0, %v3024
        %3026 = vmatmul.bf16.gmra.mxu0 %v2956
        %v3027 = vpop.f32.mrf.mxu0
        %v3028 = vadd.f32 0.0, %v3027
        %v3029 = vpop.f32.mrf.mxu0
        %v3030 = vadd.f32 0.0, %v3029
        %3031 = vmatmul.bf16.gmra.mxu0 %v2959
        %v3032 = vpop.f32.mrf.mxu0
        %v3033 = vadd.f32 0.0, %v3032
        %v3034 = vpop.f32.mrf.mxu0
        %v3035 = vadd.f32 0.0, %v3034
        %3036 = vmatmul.bf16.gmra.mxu0 %v2962
        %v3037 = vpop.f32.mrf.mxu0
        %v3038 = vadd.f32 0.0, %v3037
        %v3039 = vpop.f32.mrf.mxu0
        %v3040 = vadd.f32 0.0, %v3039
        %3041 = vmatmul.bf16.gmra.mxu0 %v2965
        %v3042 = vpop.f32.mrf.mxu0
        %v3043 = vadd.f32 0.0, %v3042
        %v3044 = vpop.f32.mrf.mxu0
        %v3045 = vadd.f32 0.0, %v3044
        %3046 = vmatmul.bf16.gmra.mxu0 %v2968
        %v3047 = vpop.f32.mrf.mxu0
        %v3048 = vadd.f32 0.0, %v3047
        %v3049 = vpop.f32.mrf.mxu0
        %v3050 = vadd.f32 0.0, %v3049
        %3051 = vmatmul.bf16.gmra.mxu0 %v2971
        %v3052 = vpop.f32.mrf.mxu0
        %v3053 = vadd.f32 0.0, %v3052
        %v3054 = vpop.f32.mrf.mxu0
        %v3055 = vadd.f32 0.0, %v3054
        %3056 = vmatmul.bf16.gmra.mxu0 %v2974
        %v3057 = vpop.f32.mrf.mxu0
        %v3058 = vadd.f32 0.0, %v3057
        %v3059 = vpop.f32.mrf.mxu0
        %v3060 = vadd.f32 0.0, %v3059
        %3061 = vmatmul.bf16.gmra.mxu0 %v2977
        %v3062 = vpop.f32.mrf.mxu0
        %v3063 = vadd.f32 0.0, %v3062
        %v3064 = vpop.f32.mrf.mxu0
        %v3065 = vadd.f32 0.0, %v3064
        %3066 = vmatmul.bf16.gmra.mxu0 %v2980
        %v3067 = vpop.f32.mrf.mxu0
        %v3068 = vadd.f32 0.0, %v3067
        %v3069 = vpop.f32.mrf.mxu0
        %v3070 = vadd.f32 0.0, %v3069
        %3071 = vmatmul.bf16.gmra.mxu0 %v2983
        %v3072 = vpop.f32.mrf.mxu0
        %v3073 = vadd.f32 0.0, %v3072
        %v3074 = vpop.f32.mrf.mxu0
        %v3075 = vadd.f32 0.0, %v3074
        %3076 = vdwg.mxu0
        %v3077 = vadd.f32 %v2516, %v2998
        %v3078 = vadd.f32 %v2517, %v3000
        %v3079 = vadd.f32 %v2518, %v3003
        %v3080 = vadd.f32 %v2519, %v3005
        %v3081 = vadd.f32 %v2520, %v3008
        %v3082 = vadd.f32 %v2521, %v3010
        %v3083 = vadd.f32 %v2522, %v3013
        %v3084 = vadd.f32 %v2523, %v3015
        %v3085 = vadd.f32 %v2524, %v3018
        %v3086 = vadd.f32 %v2525, %v3020
        %v3087 = vadd.f32 %v2526, %v3023
        %v3088 = vadd.f32 %v2527, %v3025
        %v3089 = vadd.f32 %v2528, %v3028
        %v3090 = vadd.f32 %v2529, %v3030
        %v3091 = vadd.f32 %v2530, %v3033
        %v3092 = vadd.f32 %v2531, %v3035
        %v3093 = vadd.f32 %v2532, %v3038
        %v3094 = vadd.f32 %v2533, %v3040
        %v3095 = vadd.f32 %v2534, %v3043
        %v3096 = vadd.f32 %v2535, %v3045
        %v3097 = vadd.f32 %v2536, %v3048
        %v3098 = vadd.f32 %v2537, %v3050
        %v3099 = vadd.f32 %v2538, %v3053
        %v3100 = vadd.f32 %v2539, %v3055
        %v3101 = vadd.f32 %v2540, %v3058
        %v3102 = vadd.f32 %v2541, %v3060
        %v3103 = vadd.f32 %v2542, %v3063
        %v3104 = vadd.f32 %v2543, %v3065
        %v3105 = vadd.f32 %v2544, %v3068
        %v3106 = vadd.f32 %v2545, %v3070
        %v3107 = vadd.f32 %v2546, %v3073
        %v3108 = vadd.f32 %v2547, %v3075
        %s3109 = scalar_lea.vmem [#allocation2], 1024
        %v3110 = vld [vmem:[%s3109] sm:$0xff]
        %v3111 = vld [vmem:[%s3109 + $0x8] sm:$0xff]
        %v3112 = vld [vmem:[%s3109 + $0x10] sm:$0xff]
        %v3113 = vld [vmem:[%s3109 + $0x18] sm:$0xff]
        %v3114 = vld [vmem:[%s3109 + $0x20] sm:$0xff]
        %v3115 = vld [vmem:[%s3109 + $0x28] sm:$0xff]
        %v3116 = vld [vmem:[%s3109 + $0x30] sm:$0xff]
        %v3117 = vld [vmem:[%s3109 + $0x38] sm:$0xff]
        %v3118 = vld [vmem:[%s3109 + $0x40] sm:$0xff]
        %v3119 = vld [vmem:[%s3109 + $0x48] sm:$0xff]
        %v3120 = vld [vmem:[%s3109 + $0x50] sm:$0xff]
        %v3121 = vld [vmem:[%s3109 + $0x58] sm:$0xff]
        %v3122 = vld [vmem:[%s3109 + $0x60] sm:$0xff]
        %v3123 = vld [vmem:[%s3109 + $0x68] sm:$0xff]
        %v3124 = vld [vmem:[%s3109 + $0x70] sm:$0xff]
        %v3125 = vld [vmem:[%s3109 + $0x78] sm:$0xff]
        %v3126 = vld [vmem:[%s3109 + $0x80] sm:$0xff]
        %v3127 = vld [vmem:[%s3109 + $0x88] sm:$0xff]
        %v3128 = vld [vmem:[%s3109 + $0x90] sm:$0xff]
        %v3129 = vld [vmem:[%s3109 + $0x98] sm:$0xff]
        %v3130 = vld [vmem:[%s3109 + $0xa0] sm:$0xff]
        %v3131 = vld [vmem:[%s3109 + $0xa8] sm:$0xff]
        %v3132 = vld [vmem:[%s3109 + $0xb0] sm:$0xff]
        %v3133 = vld [vmem:[%s3109 + $0xb8] sm:$0xff]
        %v3134 = vld [vmem:[%s3109 + $0xc0] sm:$0xff]
        %v3135 = vld [vmem:[%s3109 + $0xc8] sm:$0xff]
        %v3136 = vld [vmem:[%s3109 + $0xd0] sm:$0xff]
        %v3137 = vld [vmem:[%s3109 + $0xd8] sm:$0xff]
        %v3138 = vld [vmem:[%s3109 + $0xe0] sm:$0xff]
        %v3139 = vld [vmem:[%s3109 + $0xe8] sm:$0xff]
        %v3140 = vld [vmem:[%s3109 + $0xf0] sm:$0xff]
        %v3141 = vld [vmem:[%s3109 + $0xf8] sm:$0xff]
        %v3174 = vunpack.c.l.b16 %v3110
        %v3175 = vunpack.c.h.b16 %v3110
        %v3176 = vunpack.c.l.b16 %v3111
        %v3177 = vunpack.c.h.b16 %v3111
        %v3178 = vunpack.c.l.b16 %v3112
        %v3179 = vunpack.c.h.b16 %v3112
        %v3180 = vunpack.c.l.b16 %v3113
        %v3181 = vunpack.c.h.b16 %v3113
        %v3182 = vunpack.c.l.b16 %v3114
        %v3183 = vunpack.c.h.b16 %v3114
        %v3184 = vunpack.c.l.b16 %v3115
        %v3185 = vunpack.c.h.b16 %v3115
        %v3186 = vunpack.c.l.b16 %v3116
        %v3187 = vunpack.c.h.b16 %v3116
        %v3188 = vunpack.c.l.b16 %v3117
        %v3189 = vunpack.c.h.b16 %v3117
        %v3190 = vunpack.c.l.b16 %v3118
        %v3191 = vunpack.c.h.b16 %v3118
        %v3192 = vunpack.c.l.b16 %v3119
        %v3193 = vunpack.c.h.b16 %v3119
        %v3194 = vunpack.c.l.b16 %v3120
        %v3195 = vunpack.c.h.b16 %v3120
        %v3196 = vunpack.c.l.b16 %v3121
        %v3197 = vunpack.c.h.b16 %v3121
        %v3198 = vunpack.c.l.b16 %v3122
        %v3199 = vunpack.c.h.b16 %v3122
        %v3200 = vunpack.c.l.b16 %v3123
        %v3201 = vunpack.c.h.b16 %v3123
        %v3202 = vunpack.c.l.b16 %v3124
        %v3203 = vunpack.c.h.b16 %v3124
        %v3204 = vunpack.c.l.b16 %v3125
        %v3205 = vunpack.c.h.b16 %v3125
        %v3206 = vunpack.c.l.b16 %v3126
        %v3207 = vunpack.c.h.b16 %v3126
        %v3208 = vunpack.c.l.b16 %v3127
        %v3209 = vunpack.c.h.b16 %v3127
        %v3210 = vunpack.c.l.b16 %v3128
        %v3211 = vunpack.c.h.b16 %v3128
        %v3212 = vunpack.c.l.b16 %v3129
        %v3213 = vunpack.c.h.b16 %v3129
        %v3214 = vunpack.c.l.b16 %v3130
        %v3215 = vunpack.c.h.b16 %v3130
        %v3216 = vunpack.c.l.b16 %v3131
        %v3217 = vunpack.c.h.b16 %v3131
        %v3218 = vunpack.c.l.b16 %v3132
        %v3219 = vunpack.c.h.b16 %v3132
        %v3220 = vunpack.c.l.b16 %v3133
        %v3221 = vunpack.c.h.b16 %v3133
        %v3222 = vunpack.c.l.b16 %v3134
        %v3223 = vunpack.c.h.b16 %v3134
        %v3224 = vunpack.c.l.b16 %v3135
        %v3225 = vunpack.c.h.b16 %v3135
        %v3226 = vunpack.c.l.b16 %v3136
        %v3227 = vunpack.c.h.b16 %v3136
        %v3228 = vunpack.c.l.b16 %v3137
        %v3229 = vunpack.c.h.b16 %v3137
        %v3230 = vunpack.c.l.b16 %v3138
        %v3231 = vunpack.c.h.b16 %v3138
        %v3232 = vunpack.c.l.b16 %v3139
        %v3233 = vunpack.c.h.b16 %v3139
        %v3234 = vunpack.c.l.b16 %v3140
        %v3235 = vunpack.c.h.b16 %v3140
        %v3236 = vunpack.c.l.b16 %v3141
        %v3237 = vunpack.c.h.b16 %v3141
        %v3238 = vpack.c.b16 %v3176, %v3174
        %v3239 = vpack.c.b16 %v3177, %v3175
        %v3240 = vpack.c.b16 %v3180, %v3178
        %v3241 = vpack.c.b16 %v3181, %v3179
        %v3242 = vpack.c.b16 %v3184, %v3182
        %v3243 = vpack.c.b16 %v3185, %v3183
        %v3244 = vpack.c.b16 %v3188, %v3186
        %v3245 = vpack.c.b16 %v3189, %v3187
        %v3246 = vpack.c.b16 %v3192, %v3190
        %v3247 = vpack.c.b16 %v3193, %v3191
        %v3248 = vpack.c.b16 %v3196, %v3194
        %v3249 = vpack.c.b16 %v3197, %v3195
        %v3250 = vpack.c.b16 %v3200, %v3198
        %v3251 = vpack.c.b16 %v3201, %v3199
        %v3252 = vpack.c.b16 %v3204, %v3202
        %v3253 = vpack.c.b16 %v3205, %v3203
        %v3254 = vpack.c.b16 %v3208, %v3206
        %v3255 = vpack.c.b16 %v3209, %v3207
        %v3256 = vpack.c.b16 %v3212, %v3210
        %v3257 = vpack.c.b16 %v3213, %v3211
        %v3258 = vpack.c.b16 %v3216, %v3214
        %v3259 = vpack.c.b16 %v3217, %v3215
        %v3260 = vpack.c.b16 %v3220, %v3218
        %v3261 = vpack.c.b16 %v3221, %v3219
        %v3262 = vpack.c.b16 %v3224, %v3222
        %v3263 = vpack.c.b16 %v3225, %v3223
        %v3264 = vpack.c.b16 %v3228, %v3226
        %v3265 = vpack.c.b16 %v3229, %v3227
        %v3266 = vpack.c.b16 %v3232, %v3230
        %v3267 = vpack.c.b16 %v3233, %v3231
        %v3268 = vpack.c.b16 %v3236, %v3234
        %v3269 = vpack.c.b16 %v3237, %v3235
        %3302 = vmatpush.bf16.msra.mxu0 %v1093
        %3303 = vmatpush.bf16.msra.mxu0 %v1092
        %3304 = vmatpush.bf16.msra.mxu0 %v1091
        %3305 = vmatpush.bf16.msra.mxu0 %v1090
        %3306 = vmatpush.bf16.msra.mxu0 %v1089
        %3307 = vmatpush.bf16.msra.mxu0 %v1088
        %3308 = vmatpush.bf16.msra.mxu0 %v1087
        %3309 = vmatpush.bf16.msra.mxu0 %v1086
        %3310 = vmatmul.bf16.gmra.mxu0 %v3238
        %v3311 = vpop.f32.mrf.mxu0
        %v3312 = vadd.f32 0.0, %v3311
        %v3313 = vpop.f32.mrf.mxu0
        %v3314 = vadd.f32 0.0, %v3313
        %3315 = vmatmul.bf16.gmra.mxu0 %v3240
        %v3316 = vpop.f32.mrf.mxu0
        %v3317 = vadd.f32 0.0, %v3316
        %v3318 = vpop.f32.mrf.mxu0
        %v3319 = vadd.f32 0.0, %v3318
        %3320 = vmatmul.bf16.gmra.mxu0 %v3242
        %v3321 = vpop.f32.mrf.mxu0
        %v3322 = vadd.f32 0.0, %v3321
        %v3323 = vpop.f32.mrf.mxu0
        %v3324 = vadd.f32 0.0, %v3323
        %3325 = vmatmul.bf16.gmra.mxu0 %v3244
        %v3326 = vpop.f32.mrf.mxu0
        %v3327 = vadd.f32 0.0, %v3326
        %v3328 = vpop.f32.mrf.mxu0
        %v3329 = vadd.f32 0.0, %v3328
        %3330 = vmatmul.bf16.gmra.mxu0 %v3246
        %v3331 = vpop.f32.mrf.mxu0
        %v3332 = vadd.f32 0.0, %v3331
        %v3333 = vpop.f32.mrf.mxu0
        %v3334 = vadd.f32 0.0, %v3333
        %3335 = vmatmul.bf16.gmra.mxu0 %v3248
        %v3336 = vpop.f32.mrf.mxu0
        %v3337 = vadd.f32 0.0, %v3336
        %v3338 = vpop.f32.mrf.mxu0
        %v3339 = vadd.f32 0.0, %v3338
        %3340 = vmatmul.bf16.gmra.mxu0 %v3250
        %v3341 = vpop.f32.mrf.mxu0
        %v3342 = vadd.f32 0.0, %v3341
        %v3343 = vpop.f32.mrf.mxu0
        %v3344 = vadd.f32 0.0, %v3343
        %3345 = vmatmul.bf16.gmra.mxu0 %v3252
        %v3346 = vpop.f32.mrf.mxu0
        %v3347 = vadd.f32 0.0, %v3346
        %v3348 = vpop.f32.mrf.mxu0
        %v3349 = vadd.f32 0.0, %v3348
        %3350 = vmatmul.bf16.gmra.mxu0 %v3254
        %v3351 = vpop.f32.mrf.mxu0
        %v3352 = vadd.f32 0.0, %v3351
        %v3353 = vpop.f32.mrf.mxu0
        %v3354 = vadd.f32 0.0, %v3353
        %3355 = vmatmul.bf16.gmra.mxu0 %v3256
        %v3356 = vpop.f32.mrf.mxu0
        %v3357 = vadd.f32 0.0, %v3356
        %v3358 = vpop.f32.mrf.mxu0
        %v3359 = vadd.f32 0.0, %v3358
        %3360 = vmatmul.bf16.gmra.mxu0 %v3258
        %v3361 = vpop.f32.mrf.mxu0
        %v3362 = vadd.f32 0.0, %v3361
        %v3363 = vpop.f32.mrf.mxu0
        %v3364 = vadd.f32 0.0, %v3363
        %3365 = vmatmul.bf16.gmra.mxu0 %v3260
        %v3366 = vpop.f32.mrf.mxu0
        %v3367 = vadd.f32 0.0, %v3366
        %v3368 = vpop.f32.mrf.mxu0
        %v3369 = vadd.f32 0.0, %v3368
        %3370 = vmatmul.bf16.gmra.mxu0 %v3262
        %v3371 = vpop.f32.mrf.mxu0
        %v3372 = vadd.f32 0.0, %v3371
        %v3373 = vpop.f32.mrf.mxu0
        %v3374 = vadd.f32 0.0, %v3373
        %3375 = vmatmul.bf16.gmra.mxu0 %v3264
        %v3376 = vpop.f32.mrf.mxu0
        %v3377 = vadd.f32 0.0, %v3376
        %v3378 = vpop.f32.mrf.mxu0
        %v3379 = vadd.f32 0.0, %v3378
        %3380 = vmatmul.bf16.gmra.mxu0 %v3266
        %v3381 = vpop.f32.mrf.mxu0
        %v3382 = vadd.f32 0.0, %v3381
        %v3383 = vpop.f32.mrf.mxu0
        %v3384 = vadd.f32 0.0, %v3383
        %3385 = vmatmul.bf16.gmra.mxu0 %v3268
        %v3386 = vpop.f32.mrf.mxu0
        %v3387 = vadd.f32 0.0, %v3386
        %v3388 = vpop.f32.mrf.mxu0
        %v3389 = vadd.f32 0.0, %v3388
        %3390 = vdwg.mxu0
        %3391 = vmatpush.bf16.msra.mxu0 %v1101
        %3392 = vmatpush.bf16.msra.mxu0 %v1100
        %3393 = vmatpush.bf16.msra.mxu0 %v1099
        %3394 = vmatpush.bf16.msra.mxu0 %v1098
        %3395 = vmatpush.bf16.msra.mxu0 %v1097
        %3396 = vmatpush.bf16.msra.mxu0 %v1096
        %3397 = vmatpush.bf16.msra.mxu0 %v1095
        %3398 = vmatpush.bf16.msra.mxu0 %v1094
        %3399 = vmatmul.bf16.gmra.mxu0 %v3239
        %v3400 = vpop.f32.mrf.mxu0
        %v3401 = vadd.f32 %v3312, %v3400
        %v3402 = vpop.f32.mrf.mxu0
        %v3403 = vadd.f32 %v3314, %v3402
        %3404 = vmatmul.bf16.gmra.mxu0 %v3241
        %v3405 = vpop.f32.mrf.mxu0
        %v3406 = vadd.f32 %v3317, %v3405
        %v3407 = vpop.f32.mrf.mxu0
        %v3408 = vadd.f32 %v3319, %v3407
        %3409 = vmatmul.bf16.gmra.mxu0 %v3243
        %v3410 = vpop.f32.mrf.mxu0
        %v3411 = vadd.f32 %v3322, %v3410
        %v3412 = vpop.f32.mrf.mxu0
        %v3413 = vadd.f32 %v3324, %v3412
        %3414 = vmatmul.bf16.gmra.mxu0 %v3245
        %v3415 = vpop.f32.mrf.mxu0
        %v3416 = vadd.f32 %v3327, %v3415
        %v3417 = vpop.f32.mrf.mxu0
        %v3418 = vadd.f32 %v3329, %v3417
        %3419 = vmatmul.bf16.gmra.mxu0 %v3247
        %v3420 = vpop.f32.mrf.mxu0
        %v3421 = vadd.f32 %v3332, %v3420
        %v3422 = vpop.f32.mrf.mxu0
        %v3423 = vadd.f32 %v3334, %v3422
        %3424 = vmatmul.bf16.gmra.mxu0 %v3249
        %v3425 = vpop.f32.mrf.mxu0
        %v3426 = vadd.f32 %v3337, %v3425
        %v3427 = vpop.f32.mrf.mxu0
        %v3428 = vadd.f32 %v3339, %v3427
        %3429 = vmatmul.bf16.gmra.mxu0 %v3251
        %v3430 = vpop.f32.mrf.mxu0
        %v3431 = vadd.f32 %v3342, %v3430
        %v3432 = vpop.f32.mrf.mxu0
        %v3433 = vadd.f32 %v3344, %v3432
        %3434 = vmatmul.bf16.gmra.mxu0 %v3253
        %v3435 = vpop.f32.mrf.mxu0
        %v3436 = vadd.f32 %v3347, %v3435
        %v3437 = vpop.f32.mrf.mxu0
        %v3438 = vadd.f32 %v3349, %v3437
        %3439 = vmatmul.bf16.gmra.mxu0 %v3255
        %v3440 = vpop.f32.mrf.mxu0
        %v3441 = vadd.f32 %v3352, %v3440
        %v3442 = vpop.f32.mrf.mxu0
        %v3443 = vadd.f32 %v3354, %v3442
        %3444 = vmatmul.bf16.gmra.mxu0 %v3257
        %v3445 = vpop.f32.mrf.mxu0
        %v3446 = vadd.f32 %v3357, %v3445
        %v3447 = vpop.f32.mrf.mxu0
        %v3448 = vadd.f32 %v3359, %v3447
        %3449 = vmatmul.bf16.gmra.mxu0 %v3259
        %v3450 = vpop.f32.mrf.mxu0
        %v3451 = vadd.f32 %v3362, %v3450
        %v3452 = vpop.f32.mrf.mxu0
        %v3453 = vadd.f32 %v3364, %v3452
        %3454 = vmatmul.bf16.gmra.mxu0 %v3261
        %v3455 = vpop.f32.mrf.mxu0
        %v3456 = vadd.f32 %v3367, %v3455
        %v3457 = vpop.f32.mrf.mxu0
        %v3458 = vadd.f32 %v3369, %v3457
        %3459 = vmatmul.bf16.gmra.mxu0 %v3263
        %v3460 = vpop.f32.mrf.mxu0
        %v3461 = vadd.f32 %v3372, %v3460
        %v3462 = vpop.f32.mrf.mxu0
        %v3463 = vadd.f32 %v3374, %v3462
        %3464 = vmatmul.bf16.gmra.mxu0 %v3265
        %v3465 = vpop.f32.mrf.mxu0
        %v3466 = vadd.f32 %v3377, %v3465
        %v3467 = vpop.f32.mrf.mxu0
        %v3468 = vadd.f32 %v3379, %v3467
        %3469 = vmatmul.bf16.gmra.mxu0 %v3267
        %v3470 = vpop.f32.mrf.mxu0
        %v3471 = vadd.f32 %v3382, %v3470
        %v3472 = vpop.f32.mrf.mxu0
        %v3473 = vadd.f32 %v3384, %v3472
        %3474 = vmatmul.bf16.gmra.mxu0 %v3269
        %v3475 = vpop.f32.mrf.mxu0
        %v3476 = vadd.f32 %v3387, %v3475
        %v3477 = vpop.f32.mrf.mxu0
        %v3478 = vadd.f32 %v3389, %v3477
        %3479 = vdwg.mxu0
        %v3480 = vpack.c.bf16 %v3403, %v3401
        %v3481 = vpack.c.bf16 %v3408, %v3406
        %v3482 = vpack.c.bf16 %v3413, %v3411
        %v3483 = vpack.c.bf16 %v3418, %v3416
        %v3484 = vpack.c.bf16 %v3423, %v3421
        %v3485 = vpack.c.bf16 %v3428, %v3426
        %v3486 = vpack.c.bf16 %v3433, %v3431
        %v3487 = vpack.c.bf16 %v3438, %v3436
        %v3488 = vpack.c.bf16 %v3443, %v3441
        %v3489 = vpack.c.bf16 %v3448, %v3446
        %v3490 = vpack.c.bf16 %v3453, %v3451
        %v3491 = vpack.c.bf16 %v3458, %v3456
        %v3492 = vpack.c.bf16 %v3463, %v3461
        %v3493 = vpack.c.bf16 %v3468, %v3466
        %v3494 = vpack.c.bf16 %v3473, %v3471
        %v3495 = vpack.c.bf16 %v3478, %v3476
        %s3496 = scalar_lea.vmem [#allocation5], 8
        %v3497 = vld [vmem:[%s3496] sm:$0x3]
        %v3499 = vsel %vm1702, %v3480, 0
        %v3502 = vsel %vm1702, %v3481, 0
        %v3505 = vsel %vm1702, %v3482, 0
        %v3508 = vsel %vm1702, %v3483, 0
        %v3511 = vsel %vm1702, %v3484, 0
        %v3514 = vsel %vm1702, %v3485, 0
        %v3517 = vsel %vm1702, %v3486, 0
        %v3520 = vsel %vm1702, %v3487, 0
        %v3523 = vsel %vm1702, %v3488, 0
        %v3526 = vsel %vm1702, %v3489, 0
        %v3529 = vsel %vm1702, %v3490, 0
        %v3532 = vsel %vm1702, %v3491, 0
        %v3535 = vsel %vm1702, %v3492, 0
        %v3538 = vsel %vm1702, %v3493, 0
        %v3541 = vsel %vm1702, %v3494, 0
        %v3544 = vsel %vm1702, %v3495, 0
        %v3547 = vand.u32 %v3497, %v1754
        %3549 = vmatpush.bf16.msra.mxu0 0
        %3550 = vmatpush.bf16.msra.mxu0 0
        %3551 = vmatpush.bf16.msra.mxu0 0
        %3552 = vmatpush.bf16.msra.mxu0 0
        %3553 = vmatpush.bf16.msra.mxu0 0
        %3554 = vmatpush.bf16.msra.mxu0 0
        %3555 = vmatpush.bf16.msra.mxu0 0
        %3556 = vmatpush.bf16.msra.mxu0 %v3547
        %3557 = vmatmul.bf16.gmra.mxu0 %v3499
        %v3558 = vpop.f32.mrf.mxu0
        %v3559 = vadd.f32 0.0, %v3558
        %v3560 = vpop.f32.mrf.mxu0
        %v3561 = vadd.f32 0.0, %v3560
        %3562 = vmatmul.bf16.gmra.mxu0 %v3502
        %v3563 = vpop.f32.mrf.mxu0
        %v3564 = vadd.f32 0.0, %v3563
        %v3565 = vpop.f32.mrf.mxu0
        %v3566 = vadd.f32 0.0, %v3565
        %3567 = vmatmul.bf16.gmra.mxu0 %v3505
        %v3568 = vpop.f32.mrf.mxu0
        %v3569 = vadd.f32 0.0, %v3568
        %v3570 = vpop.f32.mrf.mxu0
        %v3571 = vadd.f32 0.0, %v3570
        %3572 = vmatmul.bf16.gmra.mxu0 %v3508
        %v3573 = vpop.f32.mrf.mxu0
        %v3574 = vadd.f32 0.0, %v3573
        %v3575 = vpop.f32.mrf.mxu0
        %v3576 = vadd.f32 0.0, %v3575
        %3577 = vmatmul.bf16.gmra.mxu0 %v3511
        %v3578 = vpop.f32.mrf.mxu0
        %v3579 = vadd.f32 0.0, %v3578
        %v3580 = vpop.f32.mrf.mxu0
        %v3581 = vadd.f32 0.0, %v3580
        %3582 = vmatmul.bf16.gmra.mxu0 %v3514
        %v3583 = vpop.f32.mrf.mxu0
        %v3584 = vadd.f32 0.0, %v3583
        %v3585 = vpop.f32.mrf.mxu0
        %v3586 = vadd.f32 0.0, %v3585
        %3587 = vmatmul.bf16.gmra.mxu0 %v3517
        %v3588 = vpop.f32.mrf.mxu0
        %v3589 = vadd.f32 0.0, %v3588
        %v3590 = vpop.f32.mrf.mxu0
        %v3591 = vadd.f32 0.0, %v3590
        %3592 = vmatmul.bf16.gmra.mxu0 %v3520
        %v3593 = vpop.f32.mrf.mxu0
        %v3594 = vadd.f32 0.0, %v3593
        %v3595 = vpop.f32.mrf.mxu0
        %v3596 = vadd.f32 0.0, %v3595
        %3597 = vmatmul.bf16.gmra.mxu0 %v3523
        %v3598 = vpop.f32.mrf.mxu0
        %v3599 = vadd.f32 0.0, %v3598
        %v3600 = vpop.f32.mrf.mxu0
        %v3601 = vadd.f32 0.0, %v3600
        %3602 = vmatmul.bf16.gmra.mxu0 %v3526
        %v3603 = vpop.f32.mrf.mxu0
        %v3604 = vadd.f32 0.0, %v3603
        %v3605 = vpop.f32.mrf.mxu0
        %v3606 = vadd.f32 0.0, %v3605
        %3607 = vmatmul.bf16.gmra.mxu0 %v3529
        %v3608 = vpop.f32.mrf.mxu0
        %v3609 = vadd.f32 0.0, %v3608
        %v3610 = vpop.f32.mrf.mxu0
        %v3611 = vadd.f32 0.0, %v3610
        %3612 = vmatmul.bf16.gmra.mxu0 %v3532
        %v3613 = vpop.f32.mrf.mxu0
        %v3614 = vadd.f32 0.0, %v3613
        %v3615 = vpop.f32.mrf.mxu0
        %v3616 = vadd.f32 0.0, %v3615
        %3617 = vmatmul.bf16.gmra.mxu0 %v3535
        %v3618 = vpop.f32.mrf.mxu0
        %v3619 = vadd.f32 0.0, %v3618
        %v3620 = vpop.f32.mrf.mxu0
        %v3621 = vadd.f32 0.0, %v3620
        %3622 = vmatmul.bf16.gmra.mxu0 %v3538
        %v3623 = vpop.f32.mrf.mxu0
        %v3624 = vadd.f32 0.0, %v3623
        %v3625 = vpop.f32.mrf.mxu0
        %v3626 = vadd.f32 0.0, %v3625
        %3627 = vmatmul.bf16.gmra.mxu0 %v3541
        %v3628 = vpop.f32.mrf.mxu0
        %v3629 = vadd.f32 0.0, %v3628
        %v3630 = vpop.f32.mrf.mxu0
        %v3631 = vadd.f32 0.0, %v3630
        %3632 = vmatmul.bf16.gmra.mxu0 %v3544
        %v3633 = vpop.f32.mrf.mxu0
        %v3634 = vadd.f32 0.0, %v3633
        %v3635 = vpop.f32.mrf.mxu0
        %v3636 = vadd.f32 0.0, %v3635
        %3637 = vdwg.mxu0
        %v3638 = vadd.f32 %v3077, %v3559
        %v3639 = vadd.f32 %v3078, %v3561
        %v3640 = vadd.f32 %v3079, %v3564
        %v3641 = vadd.f32 %v3080, %v3566
        %v3642 = vadd.f32 %v3081, %v3569
        %v3643 = vadd.f32 %v3082, %v3571
        %v3644 = vadd.f32 %v3083, %v3574
        %v3645 = vadd.f32 %v3084, %v3576
        %v3646 = vadd.f32 %v3085, %v3579
        %v3647 = vadd.f32 %v3086, %v3581
        %v3648 = vadd.f32 %v3087, %v3584
        %v3649 = vadd.f32 %v3088, %v3586
        %v3650 = vadd.f32 %v3089, %v3589
        %v3651 = vadd.f32 %v3090, %v3591
        %v3652 = vadd.f32 %v3091, %v3594
        %v3653 = vadd.f32 %v3092, %v3596
        %v3654 = vadd.f32 %v3093, %v3599
        %v3655 = vadd.f32 %v3094, %v3601
        %v3656 = vadd.f32 %v3095, %v3604
        %v3657 = vadd.f32 %v3096, %v3606
        %v3658 = vadd.f32 %v3097, %v3609
        %v3659 = vadd.f32 %v3098, %v3611
        %v3660 = vadd.f32 %v3099, %v3614
        %v3661 = vadd.f32 %v3100, %v3616
        %v3662 = vadd.f32 %v3101, %v3619
        %v3663 = vadd.f32 %v3102, %v3621
        %v3664 = vadd.f32 %v3103, %v3624
        %v3665 = vadd.f32 %v3104, %v3626
        %v3666 = vadd.f32 %v3105, %v3629
        %v3667 = vadd.f32 %v3106, %v3631
        %v3668 = vadd.f32 %v3107, %v3634
        %v3669 = vadd.f32 %v3108, %v3636
        %s3670 = scalar_lea.vmem [#allocation2], 1280
        %v3671 = vld [vmem:[%s3670] sm:$0xff]
        %v3672 = vld [vmem:[%s3670 + $0x8] sm:$0xff]
        %v3673 = vld [vmem:[%s3670 + $0x10] sm:$0xff]
        %v3674 = vld [vmem:[%s3670 + $0x18] sm:$0xff]
        %v3675 = vld [vmem:[%s3670 + $0x20] sm:$0xff]
        %v3676 = vld [vmem:[%s3670 + $0x28] sm:$0xff]
        %v3677 = vld [vmem:[%s3670 + $0x30] sm:$0xff]
        %v3678 = vld [vmem:[%s3670 + $0x38] sm:$0xff]
        %v3679 = vld [vmem:[%s3670 + $0x40] sm:$0xff]
        %v3680 = vld [vmem:[%s3670 + $0x48] sm:$0xff]
        %v3681 = vld [vmem:[%s3670 + $0x50] sm:$0xff]
        %v3682 = vld [vmem:[%s3670 + $0x58] sm:$0xff]
        %v3683 = vld [vmem:[%s3670 + $0x60] sm:$0xff]
        %v3684 = vld [vmem:[%s3670 + $0x68] sm:$0xff]
        %v3685 = vld [vmem:[%s3670 + $0x70] sm:$0xff]
        %v3686 = vld [vmem:[%s3670 + $0x78] sm:$0xff]
        %v3687 = vld [vmem:[%s3670 + $0x80] sm:$0xff]
        %v3688 = vld [vmem:[%s3670 + $0x88] sm:$0xff]
        %v3689 = vld [vmem:[%s3670 + $0x90] sm:$0xff]
        %v3690 = vld [vmem:[%s3670 + $0x98] sm:$0xff]
        %v3691 = vld [vmem:[%s3670 + $0xa0] sm:$0xff]
        %v3692 = vld [vmem:[%s3670 + $0xa8] sm:$0xff]
        %v3693 = vld [vmem:[%s3670 + $0xb0] sm:$0xff]
        %v3694 = vld [vmem:[%s3670 + $0xb8] sm:$0xff]
        %v3695 = vld [vmem:[%s3670 + $0xc0] sm:$0xff]
        %v3696 = vld [vmem:[%s3670 + $0xc8] sm:$0xff]
        %v3697 = vld [vmem:[%s3670 + $0xd0] sm:$0xff]
        %v3698 = vld [vmem:[%s3670 + $0xd8] sm:$0xff]
        %v3699 = vld [vmem:[%s3670 + $0xe0] sm:$0xff]
        %v3700 = vld [vmem:[%s3670 + $0xe8] sm:$0xff]
        %v3701 = vld [vmem:[%s3670 + $0xf0] sm:$0xff]
        %v3702 = vld [vmem:[%s3670 + $0xf8] sm:$0xff]
        %v3735 = vunpack.c.l.b16 %v3671
        %v3736 = vunpack.c.h.b16 %v3671
        %v3737 = vunpack.c.l.b16 %v3672
        %v3738 = vunpack.c.h.b16 %v3672
        %v3739 = vunpack.c.l.b16 %v3673
        %v3740 = vunpack.c.h.b16 %v3673
        %v3741 = vunpack.c.l.b16 %v3674
        %v3742 = vunpack.c.h.b16 %v3674
        %v3743 = vunpack.c.l.b16 %v3675
        %v3744 = vunpack.c.h.b16 %v3675
        %v3745 = vunpack.c.l.b16 %v3676
        %v3746 = vunpack.c.h.b16 %v3676
        %v3747 = vunpack.c.l.b16 %v3677
        %v3748 = vunpack.c.h.b16 %v3677
        %v3749 = vunpack.c.l.b16 %v3678
        %v3750 = vunpack.c.h.b16 %v3678
        %v3751 = vunpack.c.l.b16 %v3679
        %v3752 = vunpack.c.h.b16 %v3679
        %v3753 = vunpack.c.l.b16 %v3680
        %v3754 = vunpack.c.h.b16 %v3680
        %v3755 = vunpack.c.l.b16 %v3681
        %v3756 = vunpack.c.h.b16 %v3681
        %v3757 = vunpack.c.l.b16 %v3682
        %v3758 = vunpack.c.h.b16 %v3682
        %v3759 = vunpack.c.l.b16 %v3683
        %v3760 = vunpack.c.h.b16 %v3683
        %v3761 = vunpack.c.l.b16 %v3684
        %v3762 = vunpack.c.h.b16 %v3684
        %v3763 = vunpack.c.l.b16 %v3685
        %v3764 = vunpack.c.h.b16 %v3685
        %v3765 = vunpack.c.l.b16 %v3686
        %v3766 = vunpack.c.h.b16 %v3686
        %v3767 = vunpack.c.l.b16 %v3687
        %v3768 = vunpack.c.h.b16 %v3687
        %v3769 = vunpack.c.l.b16 %v3688
        %v3770 = vunpack.c.h.b16 %v3688
        %v3771 = vunpack.c.l.b16 %v3689
        %v3772 = vunpack.c.h.b16 %v3689
        %v3773 = vunpack.c.l.b16 %v3690
        %v3774 = vunpack.c.h.b16 %v3690
        %v3775 = vunpack.c.l.b16 %v3691
        %v3776 = vunpack.c.h.b16 %v3691
        %v3777 = vunpack.c.l.b16 %v3692
        %v3778 = vunpack.c.h.b16 %v3692
        %v3779 = vunpack.c.l.b16 %v3693
        %v3780 = vunpack.c.h.b16 %v3693
        %v3781 = vunpack.c.l.b16 %v3694
        %v3782 = vunpack.c.h.b16 %v3694
        %v3783 = vunpack.c.l.b16 %v3695
        %v3784 = vunpack.c.h.b16 %v3695
        %v3785 = vunpack.c.l.b16 %v3696
        %v3786 = vunpack.c.h.b16 %v3696
        %v3787 = vunpack.c.l.b16 %v3697
        %v3788 = vunpack.c.h.b16 %v3697
        %v3789 = vunpack.c.l.b16 %v3698
        %v3790 = vunpack.c.h.b16 %v3698
        %v3791 = vunpack.c.l.b16 %v3699
        %v3792 = vunpack.c.h.b16 %v3699
        %v3793 = vunpack.c.l.b16 %v3700
        %v3794 = vunpack.c.h.b16 %v3700
        %v3795 = vunpack.c.l.b16 %v3701
        %v3796 = vunpack.c.h.b16 %v3701
        %v3797 = vunpack.c.l.b16 %v3702
        %v3798 = vunpack.c.h.b16 %v3702
        %v3799 = vpack.c.b16 %v3737, %v3735
        %v3800 = vpack.c.b16 %v3738, %v3736
        %v3801 = vpack.c.b16 %v3741, %v3739
        %v3802 = vpack.c.b16 %v3742, %v3740
        %v3803 = vpack.c.b16 %v3745, %v3743
        %v3804 = vpack.c.b16 %v3746, %v3744
        %v3805 = vpack.c.b16 %v3749, %v3747
        %v3806 = vpack.c.b16 %v3750, %v3748
        %v3807 = vpack.c.b16 %v3753, %v3751
        %v3808 = vpack.c.b16 %v3754, %v3752
        %v3809 = vpack.c.b16 %v3757, %v3755
        %v3810 = vpack.c.b16 %v3758, %v3756
        %v3811 = vpack.c.b16 %v3761, %v3759
        %v3812 = vpack.c.b16 %v3762, %v3760
        %v3813 = vpack.c.b16 %v3765, %v3763
        %v3814 = vpack.c.b16 %v3766, %v3764
        %v3815 = vpack.c.b16 %v3769, %v3767
        %v3816 = vpack.c.b16 %v3770, %v3768
        %v3817 = vpack.c.b16 %v3773, %v3771
        %v3818 = vpack.c.b16 %v3774, %v3772
        %v3819 = vpack.c.b16 %v3777, %v3775
        %v3820 = vpack.c.b16 %v3778, %v3776
        %v3821 = vpack.c.b16 %v3781, %v3779
        %v3822 = vpack.c.b16 %v3782, %v3780
        %v3823 = vpack.c.b16 %v3785, %v3783
        %v3824 = vpack.c.b16 %v3786, %v3784
        %v3825 = vpack.c.b16 %v3789, %v3787
        %v3826 = vpack.c.b16 %v3790, %v3788
        %v3827 = vpack.c.b16 %v3793, %v3791
        %v3828 = vpack.c.b16 %v3794, %v3792
        %v3829 = vpack.c.b16 %v3797, %v3795
        %v3830 = vpack.c.b16 %v3798, %v3796
        %3863 = vmatpush.bf16.msra.mxu0 %v1093
        %3864 = vmatpush.bf16.msra.mxu0 %v1092
        %3865 = vmatpush.bf16.msra.mxu0 %v1091
        %3866 = vmatpush.bf16.msra.mxu0 %v1090
        %3867 = vmatpush.bf16.msra.mxu0 %v1089
        %3868 = vmatpush.bf16.msra.mxu0 %v1088
        %3869 = vmatpush.bf16.msra.mxu0 %v1087
        %3870 = vmatpush.bf16.msra.mxu0 %v1086
        %3871 = vmatmul.bf16.gmra.mxu0 %v3799
        %v3872 = vpop.f32.mrf.mxu0
        %v3873 = vadd.f32 0.0, %v3872
        %v3874 = vpop.f32.mrf.mxu0
        %v3875 = vadd.f32 0.0, %v3874
        %3876 = vmatmul.bf16.gmra.mxu0 %v3801
        %v3877 = vpop.f32.mrf.mxu0
        %v3878 = vadd.f32 0.0, %v3877
        %v3879 = vpop.f32.mrf.mxu0
        %v3880 = vadd.f32 0.0, %v3879
        %3881 = vmatmul.bf16.gmra.mxu0 %v3803
        %v3882 = vpop.f32.mrf.mxu0
        %v3883 = vadd.f32 0.0, %v3882
        %v3884 = vpop.f32.mrf.mxu0
        %v3885 = vadd.f32 0.0, %v3884
        %3886 = vmatmul.bf16.gmra.mxu0 %v3805
        %v3887 = vpop.f32.mrf.mxu0
        %v3888 = vadd.f32 0.0, %v3887
        %v3889 = vpop.f32.mrf.mxu0
        %v3890 = vadd.f32 0.0, %v3889
        %3891 = vmatmul.bf16.gmra.mxu0 %v3807
        %v3892 = vpop.f32.mrf.mxu0
        %v3893 = vadd.f32 0.0, %v3892
        %v3894 = vpop.f32.mrf.mxu0
        %v3895 = vadd.f32 0.0, %v3894
        %3896 = vmatmul.bf16.gmra.mxu0 %v3809
        %v3897 = vpop.f32.mrf.mxu0
        %v3898 = vadd.f32 0.0, %v3897
        %v3899 = vpop.f32.mrf.mxu0
        %v3900 = vadd.f32 0.0, %v3899
        %3901 = vmatmul.bf16.gmra.mxu0 %v3811
        %v3902 = vpop.f32.mrf.mxu0
        %v3903 = vadd.f32 0.0, %v3902
        %v3904 = vpop.f32.mrf.mxu0
        %v3905 = vadd.f32 0.0, %v3904
        %3906 = vmatmul.bf16.gmra.mxu0 %v3813
        %v3907 = vpop.f32.mrf.mxu0
        %v3908 = vadd.f32 0.0, %v3907
        %v3909 = vpop.f32.mrf.mxu0
        %v3910 = vadd.f32 0.0, %v3909
        %3911 = vmatmul.bf16.gmra.mxu0 %v3815
        %v3912 = vpop.f32.mrf.mxu0
        %v3913 = vadd.f32 0.0, %v3912
        %v3914 = vpop.f32.mrf.mxu0
        %v3915 = vadd.f32 0.0, %v3914
        %3916 = vmatmul.bf16.gmra.mxu0 %v3817
        %v3917 = vpop.f32.mrf.mxu0
        %v3918 = vadd.f32 0.0, %v3917
        %v3919 = vpop.f32.mrf.mxu0
        %v3920 = vadd.f32 0.0, %v3919
        %3921 = vmatmul.bf16.gmra.mxu0 %v3819
        %v3922 = vpop.f32.mrf.mxu0
        %v3923 = vadd.f32 0.0, %v3922
        %v3924 = vpop.f32.mrf.mxu0
        %v3925 = vadd.f32 0.0, %v3924
        %3926 = vmatmul.bf16.gmra.mxu0 %v3821
        %v3927 = vpop.f32.mrf.mxu0
        %v3928 = vadd.f32 0.0, %v3927
        %v3929 = vpop.f32.mrf.mxu0
        %v3930 = vadd.f32 0.0, %v3929
        %3931 = vmatmul.bf16.gmra.mxu0 %v3823
        %v3932 = vpop.f32.mrf.mxu0
        %v3933 = vadd.f32 0.0, %v3932
        %v3934 = vpop.f32.mrf.mxu0
        %v3935 = vadd.f32 0.0, %v3934
        %3936 = vmatmul.bf16.gmra.mxu0 %v3825
        %v3937 = vpop.f32.mrf.mxu0
        %v3938 = vadd.f32 0.0, %v3937
        %v3939 = vpop.f32.mrf.mxu0
        %v3940 = vadd.f32 0.0, %v3939
        %3941 = vmatmul.bf16.gmra.mxu0 %v3827
        %v3942 = vpop.f32.mrf.mxu0
        %v3943 = vadd.f32 0.0, %v3942
        %v3944 = vpop.f32.mrf.mxu0
        %v3945 = vadd.f32 0.0, %v3944
        %3946 = vmatmul.bf16.gmra.mxu0 %v3829
        %v3947 = vpop.f32.mrf.mxu0
        %v3948 = vadd.f32 0.0, %v3947
        %v3949 = vpop.f32.mrf.mxu0
        %v3950 = vadd.f32 0.0, %v3949
        %3951 = vdwg.mxu0
        %3952 = vmatpush.bf16.msra.mxu0 %v1101
        %3953 = vmatpush.bf16.msra.mxu0 %v1100
        %3954 = vmatpush.bf16.msra.mxu0 %v1099
        %3955 = vmatpush.bf16.msra.mxu0 %v1098
        %3956 = vmatpush.bf16.msra.mxu0 %v1097
        %3957 = vmatpush.bf16.msra.mxu0 %v1096
        %3958 = vmatpush.bf16.msra.mxu0 %v1095
        %3959 = vmatpush.bf16.msra.mxu0 %v1094
        %3960 = vmatmul.bf16.gmra.mxu0 %v3800
        %v3961 = vpop.f32.mrf.mxu0
        %v3962 = vadd.f32 %v3873, %v3961
        %v3963 = vpop.f32.mrf.mxu0
        %v3964 = vadd.f32 %v3875, %v3963
        %3965 = vmatmul.bf16.gmra.mxu0 %v3802
        %v3966 = vpop.f32.mrf.mxu0
        %v3967 = vadd.f32 %v3878, %v3966
        %v3968 = vpop.f32.mrf.mxu0
        %v3969 = vadd.f32 %v3880, %v3968
        %3970 = vmatmul.bf16.gmra.mxu0 %v3804
        %v3971 = vpop.f32.mrf.mxu0
        %v3972 = vadd.f32 %v3883, %v3971
        %v3973 = vpop.f32.mrf.mxu0
        %v3974 = vadd.f32 %v3885, %v3973
        %3975 = vmatmul.bf16.gmra.mxu0 %v3806
        %v3976 = vpop.f32.mrf.mxu0
        %v3977 = vadd.f32 %v3888, %v3976
        %v3978 = vpop.f32.mrf.mxu0
        %v3979 = vadd.f32 %v3890, %v3978
        %3980 = vmatmul.bf16.gmra.mxu0 %v3808
        %v3981 = vpop.f32.mrf.mxu0
        %v3982 = vadd.f32 %v3893, %v3981
        %v3983 = vpop.f32.mrf.mxu0
        %v3984 = vadd.f32 %v3895, %v3983
        %3985 = vmatmul.bf16.gmra.mxu0 %v3810
        %v3986 = vpop.f32.mrf.mxu0
        %v3987 = vadd.f32 %v3898, %v3986
        %v3988 = vpop.f32.mrf.mxu0
        %v3989 = vadd.f32 %v3900, %v3988
        %3990 = vmatmul.bf16.gmra.mxu0 %v3812
        %v3991 = vpop.f32.mrf.mxu0
        %v3992 = vadd.f32 %v3903, %v3991
        %v3993 = vpop.f32.mrf.mxu0
        %v3994 = vadd.f32 %v3905, %v3993
        %3995 = vmatmul.bf16.gmra.mxu0 %v3814
        %v3996 = vpop.f32.mrf.mxu0
        %v3997 = vadd.f32 %v3908, %v3996
        %v3998 = vpop.f32.mrf.mxu0
        %v3999 = vadd.f32 %v3910, %v3998
        %4000 = vmatmul.bf16.gmra.mxu0 %v3816
        %v4001 = vpop.f32.mrf.mxu0
        %v4002 = vadd.f32 %v3913, %v4001
        %v4003 = vpop.f32.mrf.mxu0
        %v4004 = vadd.f32 %v3915, %v4003
        %4005 = vmatmul.bf16.gmra.mxu0 %v3818
        %v4006 = vpop.f32.mrf.mxu0
        %v4007 = vadd.f32 %v3918, %v4006
        %v4008 = vpop.f32.mrf.mxu0
        %v4009 = vadd.f32 %v3920, %v4008
        %4010 = vmatmul.bf16.gmra.mxu0 %v3820
        %v4011 = vpop.f32.mrf.mxu0
        %v4012 = vadd.f32 %v3923, %v4011
        %v4013 = vpop.f32.mrf.mxu0
        %v4014 = vadd.f32 %v3925, %v4013
        %4015 = vmatmul.bf16.gmra.mxu0 %v3822
        %v4016 = vpop.f32.mrf.mxu0
        %v4017 = vadd.f32 %v3928, %v4016
        %v4018 = vpop.f32.mrf.mxu0
        %v4019 = vadd.f32 %v3930, %v4018
        %4020 = vmatmul.bf16.gmra.mxu0 %v3824
        %v4021 = vpop.f32.mrf.mxu0
        %v4022 = vadd.f32 %v3933, %v4021
        %v4023 = vpop.f32.mrf.mxu0
        %v4024 = vadd.f32 %v3935, %v4023
        %4025 = vmatmul.bf16.gmra.mxu0 %v3826
        %v4026 = vpop.f32.mrf.mxu0
        %v4027 = vadd.f32 %v3938, %v4026
        %v4028 = vpop.f32.mrf.mxu0
        %v4029 = vadd.f32 %v3940, %v4028
        %4030 = vmatmul.bf16.gmra.mxu0 %v3828
        %v4031 = vpop.f32.mrf.mxu0
        %v4032 = vadd.f32 %v3943, %v4031
        %v4033 = vpop.f32.mrf.mxu0
        %v4034 = vadd.f32 %v3945, %v4033
        %4035 = vmatmul.bf16.gmra.mxu0 %v3830
        %v4036 = vpop.f32.mrf.mxu0
        %v4037 = vadd.f32 %v3948, %v4036
        %v4038 = vpop.f32.mrf.mxu0
        %v4039 = vadd.f32 %v3950, %v4038
        %4040 = vdwg.mxu0
        %v4041 = vpack.c.bf16 %v3964, %v3962
        %v4042 = vpack.c.bf16 %v3969, %v3967
        %v4043 = vpack.c.bf16 %v3974, %v3972
        %v4044 = vpack.c.bf16 %v3979, %v3977
        %v4045 = vpack.c.bf16 %v3984, %v3982
        %v4046 = vpack.c.bf16 %v3989, %v3987
        %v4047 = vpack.c.bf16 %v3994, %v3992
        %v4048 = vpack.c.bf16 %v3999, %v3997
        %v4049 = vpack.c.bf16 %v4004, %v4002
        %v4050 = vpack.c.bf16 %v4009, %v4007
        %v4051 = vpack.c.bf16 %v4014, %v4012
        %v4052 = vpack.c.bf16 %v4019, %v4017
        %v4053 = vpack.c.bf16 %v4024, %v4022
        %v4054 = vpack.c.bf16 %v4029, %v4027
        %v4055 = vpack.c.bf16 %v4034, %v4032
        %v4056 = vpack.c.bf16 %v4039, %v4037
        %s4057 = scalar_lea.vmem [#allocation5], 10
        %v4058 = vld [vmem:[%s4057] sm:$0x3]
        %v4060 = vsel %vm1702, %v4041, 0
        %v4063 = vsel %vm1702, %v4042, 0
        %v4066 = vsel %vm1702, %v4043, 0
        %v4069 = vsel %vm1702, %v4044, 0
        %v4072 = vsel %vm1702, %v4045, 0
        %v4075 = vsel %vm1702, %v4046, 0
        %v4078 = vsel %vm1702, %v4047, 0
        %v4081 = vsel %vm1702, %v4048, 0
        %v4084 = vsel %vm1702, %v4049, 0
        %v4087 = vsel %vm1702, %v4050, 0
        %v4090 = vsel %vm1702, %v4051, 0
        %v4093 = vsel %vm1702, %v4052, 0
        %v4096 = vsel %vm1702, %v4053, 0
        %v4099 = vsel %vm1702, %v4054, 0
        %v4102 = vsel %vm1702, %v4055, 0
        %v4105 = vsel %vm1702, %v4056, 0
        %v4108 = vand.u32 %v4058, %v1754
        %4110 = vmatpush.bf16.msra.mxu0 0
        %4111 = vmatpush.bf16.msra.mxu0 0
        %4112 = vmatpush.bf16.msra.mxu0 0
        %4113 = vmatpush.bf16.msra.mxu0 0
        %4114 = vmatpush.bf16.msra.mxu0 0
        %4115 = vmatpush.bf16.msra.mxu0 0
        %4116 = vmatpush.bf16.msra.mxu0 0
        %4117 = vmatpush.bf16.msra.mxu0 %v4108
        %4118 = vmatmul.bf16.gmra.mxu0 %v4060
        %v4119 = vpop.f32.mrf.mxu0
        %v4120 = vadd.f32 0.0, %v4119
        %v4121 = vpop.f32.mrf.mxu0
        %v4122 = vadd.f32 0.0, %v4121
        %4123 = vmatmul.bf16.gmra.mxu0 %v4063
        %v4124 = vpop.f32.mrf.mxu0
        %v4125 = vadd.f32 0.0, %v4124
        %v4126 = vpop.f32.mrf.mxu0
        %v4127 = vadd.f32 0.0, %v4126
        %4128 = vmatmul.bf16.gmra.mxu0 %v4066
        %v4129 = vpop.f32.mrf.mxu0
        %v4130 = vadd.f32 0.0, %v4129
        %v4131 = vpop.f32.mrf.mxu0
        %v4132 = vadd.f32 0.0, %v4131
        %4133 = vmatmul.bf16.gmra.mxu0 %v4069
        %v4134 = vpop.f32.mrf.mxu0
        %v4135 = vadd.f32 0.0, %v4134
        %v4136 = vpop.f32.mrf.mxu0
        %v4137 = vadd.f32 0.0, %v4136
        %4138 = vmatmul.bf16.gmra.mxu0 %v4072
        %v4139 = vpop.f32.mrf.mxu0
        %v4140 = vadd.f32 0.0, %v4139
        %v4141 = vpop.f32.mrf.mxu0
        %v4142 = vadd.f32 0.0, %v4141
        %4143 = vmatmul.bf16.gmra.mxu0 %v4075
        %v4144 = vpop.f32.mrf.mxu0
        %v4145 = vadd.f32 0.0, %v4144
        %v4146 = vpop.f32.mrf.mxu0
        %v4147 = vadd.f32 0.0, %v4146
        %4148 = vmatmul.bf16.gmra.mxu0 %v4078
        %v4149 = vpop.f32.mrf.mxu0
        %v4150 = vadd.f32 0.0, %v4149
        %v4151 = vpop.f32.mrf.mxu0
        %v4152 = vadd.f32 0.0, %v4151
        %4153 = vmatmul.bf16.gmra.mxu0 %v4081
        %v4154 = vpop.f32.mrf.mxu0
        %v4155 = vadd.f32 0.0, %v4154
        %v4156 = vpop.f32.mrf.mxu0
        %v4157 = vadd.f32 0.0, %v4156
        %4158 = vmatmul.bf16.gmra.mxu0 %v4084
        %v4159 = vpop.f32.mrf.mxu0
        %v4160 = vadd.f32 0.0, %v4159
        %v4161 = vpop.f32.mrf.mxu0
        %v4162 = vadd.f32 0.0, %v4161
        %4163 = vmatmul.bf16.gmra.mxu0 %v4087
        %v4164 = vpop.f32.mrf.mxu0
        %v4165 = vadd.f32 0.0, %v4164
        %v4166 = vpop.f32.mrf.mxu0
        %v4167 = vadd.f32 0.0, %v4166
        %4168 = vmatmul.bf16.gmra.mxu0 %v4090
        %v4169 = vpop.f32.mrf.mxu0
        %v4170 = vadd.f32 0.0, %v4169
        %v4171 = vpop.f32.mrf.mxu0
        %v4172 = vadd.f32 0.0, %v4171
        %4173 = vmatmul.bf16.gmra.mxu0 %v4093
        %v4174 = vpop.f32.mrf.mxu0
        %v4175 = vadd.f32 0.0, %v4174
        %v4176 = vpop.f32.mrf.mxu0
        %v4177 = vadd.f32 0.0, %v4176
        %4178 = vmatmul.bf16.gmra.mxu0 %v4096
        %v4179 = vpop.f32.mrf.mxu0
        %v4180 = vadd.f32 0.0, %v4179
        %v4181 = vpop.f32.mrf.mxu0
        %v4182 = vadd.f32 0.0, %v4181
        %4183 = vmatmul.bf16.gmra.mxu0 %v4099
        %v4184 = vpop.f32.mrf.mxu0
        %v4185 = vadd.f32 0.0, %v4184
        %v4186 = vpop.f32.mrf.mxu0
        %v4187 = vadd.f32 0.0, %v4186
        %4188 = vmatmul.bf16.gmra.mxu0 %v4102
        %v4189 = vpop.f32.mrf.mxu0
        %v4190 = vadd.f32 0.0, %v4189
        %v4191 = vpop.f32.mrf.mxu0
        %v4192 = vadd.f32 0.0, %v4191
        %4193 = vmatmul.bf16.gmra.mxu0 %v4105
        %v4194 = vpop.f32.mrf.mxu0
        %v4195 = vadd.f32 0.0, %v4194
        %v4196 = vpop.f32.mrf.mxu0
        %v4197 = vadd.f32 0.0, %v4196
        %4198 = vdwg.mxu0
        %v4199 = vadd.f32 %v3638, %v4120
        %v4200 = vadd.f32 %v3639, %v4122
        %v4201 = vadd.f32 %v3640, %v4125
        %v4202 = vadd.f32 %v3641, %v4127
        %v4203 = vadd.f32 %v3642, %v4130
        %v4204 = vadd.f32 %v3643, %v4132
        %v4205 = vadd.f32 %v3644, %v4135
        %v4206 = vadd.f32 %v3645, %v4137
        %v4207 = vadd.f32 %v3646, %v4140
        %v4208 = vadd.f32 %v3647, %v4142
        %v4209 = vadd.f32 %v3648, %v4145
        %v4210 = vadd.f32 %v3649, %v4147
        %v4211 = vadd.f32 %v3650, %v4150
        %v4212 = vadd.f32 %v3651, %v4152
        %v4213 = vadd.f32 %v3652, %v4155
        %v4214 = vadd.f32 %v3653, %v4157
        %v4215 = vadd.f32 %v3654, %v4160
        %v4216 = vadd.f32 %v3655, %v4162
        %v4217 = vadd.f32 %v3656, %v4165
        %v4218 = vadd.f32 %v3657, %v4167
        %v4219 = vadd.f32 %v3658, %v4170
        %v4220 = vadd.f32 %v3659, %v4172
        %v4221 = vadd.f32 %v3660, %v4175
        %v4222 = vadd.f32 %v3661, %v4177
        %v4223 = vadd.f32 %v3662, %v4180
        %v4224 = vadd.f32 %v3663, %v4182
        %v4225 = vadd.f32 %v3664, %v4185
        %v4226 = vadd.f32 %v3665, %v4187
        %v4227 = vadd.f32 %v3666, %v4190
        %v4228 = vadd.f32 %v3667, %v4192
        %v4229 = vadd.f32 %v3668, %v4195
        %v4230 = vadd.f32 %v3669, %v4197
        %s4231 = scalar_lea.vmem [#allocation2], 1536
        %v4232 = vld [vmem:[%s4231] sm:$0xff]
        %v4233 = vld [vmem:[%s4231 + $0x8] sm:$0xff]
        %v4234 = vld [vmem:[%s4231 + $0x10] sm:$0xff]
        %v4235 = vld [vmem:[%s4231 + $0x18] sm:$0xff]
        %v4236 = vld [vmem:[%s4231 + $0x20] sm:$0xff]
        %v4237 = vld [vmem:[%s4231 + $0x28] sm:$0xff]
        %v4238 = vld [vmem:[%s4231 + $0x30] sm:$0xff]
        %v4239 = vld [vmem:[%s4231 + $0x38] sm:$0xff]
        %v4240 = vld [vmem:[%s4231 + $0x40] sm:$0xff]
        %v4241 = vld [vmem:[%s4231 + $0x48] sm:$0xff]
        %v4242 = vld [vmem:[%s4231 + $0x50] sm:$0xff]
        %v4243 = vld [vmem:[%s4231 + $0x58] sm:$0xff]
        %v4244 = vld [vmem:[%s4231 + $0x60] sm:$0xff]
        %v4245 = vld [vmem:[%s4231 + $0x68] sm:$0xff]
        %v4246 = vld [vmem:[%s4231 + $0x70] sm:$0xff]
        %v4247 = vld [vmem:[%s4231 + $0x78] sm:$0xff]
        %v4248 = vld [vmem:[%s4231 + $0x80] sm:$0xff]
        %v4249 = vld [vmem:[%s4231 + $0x88] sm:$0xff]
        %v4250 = vld [vmem:[%s4231 + $0x90] sm:$0xff]
        %v4251 = vld [vmem:[%s4231 + $0x98] sm:$0xff]
        %v4252 = vld [vmem:[%s4231 + $0xa0] sm:$0xff]
        %v4253 = vld [vmem:[%s4231 + $0xa8] sm:$0xff]
        %v4254 = vld [vmem:[%s4231 + $0xb0] sm:$0xff]
        %v4255 = vld [vmem:[%s4231 + $0xb8] sm:$0xff]
        %v4256 = vld [vmem:[%s4231 + $0xc0] sm:$0xff]
        %v4257 = vld [vmem:[%s4231 + $0xc8] sm:$0xff]
        %v4258 = vld [vmem:[%s4231 + $0xd0] sm:$0xff]
        %v4259 = vld [vmem:[%s4231 + $0xd8] sm:$0xff]
        %v4260 = vld [vmem:[%s4231 + $0xe0] sm:$0xff]
        %v4261 = vld [vmem:[%s4231 + $0xe8] sm:$0xff]
        %v4262 = vld [vmem:[%s4231 + $0xf0] sm:$0xff]
        %v4263 = vld [vmem:[%s4231 + $0xf8] sm:$0xff]
        %v4296 = vunpack.c.l.b16 %v4232
        %v4297 = vunpack.c.h.b16 %v4232
        %v4298 = vunpack.c.l.b16 %v4233
        %v4299 = vunpack.c.h.b16 %v4233
        %v4300 = vunpack.c.l.b16 %v4234
        %v4301 = vunpack.c.h.b16 %v4234
        %v4302 = vunpack.c.l.b16 %v4235
        %v4303 = vunpack.c.h.b16 %v4235
        %v4304 = vunpack.c.l.b16 %v4236
        %v4305 = vunpack.c.h.b16 %v4236
        %v4306 = vunpack.c.l.b16 %v4237
        %v4307 = vunpack.c.h.b16 %v4237
        %v4308 = vunpack.c.l.b16 %v4238
        %v4309 = vunpack.c.h.b16 %v4238
        %v4310 = vunpack.c.l.b16 %v4239
        %v4311 = vunpack.c.h.b16 %v4239
        %v4312 = vunpack.c.l.b16 %v4240
        %v4313 = vunpack.c.h.b16 %v4240
        %v4314 = vunpack.c.l.b16 %v4241
        %v4315 = vunpack.c.h.b16 %v4241
        %v4316 = vunpack.c.l.b16 %v4242
        %v4317 = vunpack.c.h.b16 %v4242
        %v4318 = vunpack.c.l.b16 %v4243
        %v4319 = vunpack.c.h.b16 %v4243
        %v4320 = vunpack.c.l.b16 %v4244
        %v4321 = vunpack.c.h.b16 %v4244
        %v4322 = vunpack.c.l.b16 %v4245
        %v4323 = vunpack.c.h.b16 %v4245
        %v4324 = vunpack.c.l.b16 %v4246
        %v4325 = vunpack.c.h.b16 %v4246
        %v4326 = vunpack.c.l.b16 %v4247
        %v4327 = vunpack.c.h.b16 %v4247
        %v4328 = vunpack.c.l.b16 %v4248
        %v4329 = vunpack.c.h.b16 %v4248
        %v4330 = vunpack.c.l.b16 %v4249
        %v4331 = vunpack.c.h.b16 %v4249
        %v4332 = vunpack.c.l.b16 %v4250
        %v4333 = vunpack.c.h.b16 %v4250
        %v4334 = vunpack.c.l.b16 %v4251
        %v4335 = vunpack.c.h.b16 %v4251
        %v4336 = vunpack.c.l.b16 %v4252
        %v4337 = vunpack.c.h.b16 %v4252
        %v4338 = vunpack.c.l.b16 %v4253
        %v4339 = vunpack.c.h.b16 %v4253
        %v4340 = vunpack.c.l.b16 %v4254
        %v4341 = vunpack.c.h.b16 %v4254
        %v4342 = vunpack.c.l.b16 %v4255
        %v4343 = vunpack.c.h.b16 %v4255
        %v4344 = vunpack.c.l.b16 %v4256
        %v4345 = vunpack.c.h.b16 %v4256
        %v4346 = vunpack.c.l.b16 %v4257
        %v4347 = vunpack.c.h.b16 %v4257
        %v4348 = vunpack.c.l.b16 %v4258
        %v4349 = vunpack.c.h.b16 %v4258
        %v4350 = vunpack.c.l.b16 %v4259
        %v4351 = vunpack.c.h.b16 %v4259
        %v4352 = vunpack.c.l.b16 %v4260
        %v4353 = vunpack.c.h.b16 %v4260
        %v4354 = vunpack.c.l.b16 %v4261
        %v4355 = vunpack.c.h.b16 %v4261
        %v4356 = vunpack.c.l.b16 %v4262
        %v4357 = vunpack.c.h.b16 %v4262
        %v4358 = vunpack.c.l.b16 %v4263
        %v4359 = vunpack.c.h.b16 %v4263
        %v4360 = vpack.c.b16 %v4298, %v4296
        %v4361 = vpack.c.b16 %v4299, %v4297
        %v4362 = vpack.c.b16 %v4302, %v4300
        %v4363 = vpack.c.b16 %v4303, %v4301
        %v4364 = vpack.c.b16 %v4306, %v4304
        %v4365 = vpack.c.b16 %v4307, %v4305
        %v4366 = vpack.c.b16 %v4310, %v4308
        %v4367 = vpack.c.b16 %v4311, %v4309
        %v4368 = vpack.c.b16 %v4314, %v4312
        %v4369 = vpack.c.b16 %v4315, %v4313
        %v4370 = vpack.c.b16 %v4318, %v4316
        %v4371 = vpack.c.b16 %v4319, %v4317
        %v4372 = vpack.c.b16 %v4322, %v4320
        %v4373 = vpack.c.b16 %v4323, %v4321
        %v4374 = vpack.c.b16 %v4326, %v4324
        %v4375 = vpack.c.b16 %v4327, %v4325
        %v4376 = vpack.c.b16 %v4330, %v4328
        %v4377 = vpack.c.b16 %v4331, %v4329
        %v4378 = vpack.c.b16 %v4334, %v4332
        %v4379 = vpack.c.b16 %v4335, %v4333
        %v4380 = vpack.c.b16 %v4338, %v4336
        %v4381 = vpack.c.b16 %v4339, %v4337
        %v4382 = vpack.c.b16 %v4342, %v4340
        %v4383 = vpack.c.b16 %v4343, %v4341
        %v4384 = vpack.c.b16 %v4346, %v4344
        %v4385 = vpack.c.b16 %v4347, %v4345
        %v4386 = vpack.c.b16 %v4350, %v4348
        %v4387 = vpack.c.b16 %v4351, %v4349
        %v4388 = vpack.c.b16 %v4354, %v4352
        %v4389 = vpack.c.b16 %v4355, %v4353
        %v4390 = vpack.c.b16 %v4358, %v4356
        %v4391 = vpack.c.b16 %v4359, %v4357
        %4424 = vmatpush.bf16.msra.mxu0 %v1093
        %4425 = vmatpush.bf16.msra.mxu0 %v1092
        %4426 = vmatpush.bf16.msra.mxu0 %v1091
        %4427 = vmatpush.bf16.msra.mxu0 %v1090
        %4428 = vmatpush.bf16.msra.mxu0 %v1089
        %4429 = vmatpush.bf16.msra.mxu0 %v1088
        %4430 = vmatpush.bf16.msra.mxu0 %v1087
        %4431 = vmatpush.bf16.msra.mxu0 %v1086
        %4432 = vmatmul.bf16.gmra.mxu0 %v4360
        %v4433 = vpop.f32.mrf.mxu0
        %v4434 = vadd.f32 0.0, %v4433
        %v4435 = vpop.f32.mrf.mxu0
        %v4436 = vadd.f32 0.0, %v4435
        %4437 = vmatmul.bf16.gmra.mxu0 %v4362
        %v4438 = vpop.f32.mrf.mxu0
        %v4439 = vadd.f32 0.0, %v4438
        %v4440 = vpop.f32.mrf.mxu0
        %v4441 = vadd.f32 0.0, %v4440
        %4442 = vmatmul.bf16.gmra.mxu0 %v4364
        %v4443 = vpop.f32.mrf.mxu0
        %v4444 = vadd.f32 0.0, %v4443
        %v4445 = vpop.f32.mrf.mxu0
        %v4446 = vadd.f32 0.0, %v4445
        %4447 = vmatmul.bf16.gmra.mxu0 %v4366
        %v4448 = vpop.f32.mrf.mxu0
        %v4449 = vadd.f32 0.0, %v4448
        %v4450 = vpop.f32.mrf.mxu0
        %v4451 = vadd.f32 0.0, %v4450
        %4452 = vmatmul.bf16.gmra.mxu0 %v4368
        %v4453 = vpop.f32.mrf.mxu0
        %v4454 = vadd.f32 0.0, %v4453
        %v4455 = vpop.f32.mrf.mxu0
        %v4456 = vadd.f32 0.0, %v4455
        %4457 = vmatmul.bf16.gmra.mxu0 %v4370
        %v4458 = vpop.f32.mrf.mxu0
        %v4459 = vadd.f32 0.0, %v4458
        %v4460 = vpop.f32.mrf.mxu0
        %v4461 = vadd.f32 0.0, %v4460
        %4462 = vmatmul.bf16.gmra.mxu0 %v4372
        %v4463 = vpop.f32.mrf.mxu0
        %v4464 = vadd.f32 0.0, %v4463
        %v4465 = vpop.f32.mrf.mxu0
        %v4466 = vadd.f32 0.0, %v4465
        %4467 = vmatmul.bf16.gmra.mxu0 %v4374
        %v4468 = vpop.f32.mrf.mxu0
        %v4469 = vadd.f32 0.0, %v4468
        %v4470 = vpop.f32.mrf.mxu0
        %v4471 = vadd.f32 0.0, %v4470
        %4472 = vmatmul.bf16.gmra.mxu0 %v4376
        %v4473 = vpop.f32.mrf.mxu0
        %v4474 = vadd.f32 0.0, %v4473
        %v4475 = vpop.f32.mrf.mxu0
        %v4476 = vadd.f32 0.0, %v4475
        %4477 = vmatmul.bf16.gmra.mxu0 %v4378
        %v4478 = vpop.f32.mrf.mxu0
        %v4479 = vadd.f32 0.0, %v4478
        %v4480 = vpop.f32.mrf.mxu0
        %v4481 = vadd.f32 0.0, %v4480
        %4482 = vmatmul.bf16.gmra.mxu0 %v4380
        %v4483 = vpop.f32.mrf.mxu0
        %v4484 = vadd.f32 0.0, %v4483
        %v4485 = vpop.f32.mrf.mxu0
        %v4486 = vadd.f32 0.0, %v4485
        %4487 = vmatmul.bf16.gmra.mxu0 %v4382
        %v4488 = vpop.f32.mrf.mxu0
        %v4489 = vadd.f32 0.0, %v4488
        %v4490 = vpop.f32.mrf.mxu0
        %v4491 = vadd.f32 0.0, %v4490
        %4492 = vmatmul.bf16.gmra.mxu0 %v4384
        %v4493 = vpop.f32.mrf.mxu0
        %v4494 = vadd.f32 0.0, %v4493
        %v4495 = vpop.f32.mrf.mxu0
        %v4496 = vadd.f32 0.0, %v4495
        %4497 = vmatmul.bf16.gmra.mxu0 %v4386
        %v4498 = vpop.f32.mrf.mxu0
        %v4499 = vadd.f32 0.0, %v4498
        %v4500 = vpop.f32.mrf.mxu0
        %v4501 = vadd.f32 0.0, %v4500
        %4502 = vmatmul.bf16.gmra.mxu0 %v4388
        %v4503 = vpop.f32.mrf.mxu0
        %v4504 = vadd.f32 0.0, %v4503
        %v4505 = vpop.f32.mrf.mxu0
        %v4506 = vadd.f32 0.0, %v4505
        %4507 = vmatmul.bf16.gmra.mxu0 %v4390
        %v4508 = vpop.f32.mrf.mxu0
        %v4509 = vadd.f32 0.0, %v4508
        %v4510 = vpop.f32.mrf.mxu0
        %v4511 = vadd.f32 0.0, %v4510
        %4512 = vdwg.mxu0
        %4513 = vmatpush.bf16.msra.mxu0 %v1101
        %4514 = vmatpush.bf16.msra.mxu0 %v1100
        %4515 = vmatpush.bf16.msra.mxu0 %v1099
        %4516 = vmatpush.bf16.msra.mxu0 %v1098
        %4517 = vmatpush.bf16.msra.mxu0 %v1097
        %4518 = vmatpush.bf16.msra.mxu0 %v1096
        %4519 = vmatpush.bf16.msra.mxu0 %v1095
        %4520 = vmatpush.bf16.msra.mxu0 %v1094
        %4521 = vmatmul.bf16.gmra.mxu0 %v4361
        %v4522 = vpop.f32.mrf.mxu0
        %v4523 = vadd.f32 %v4434, %v4522
        %v4524 = vpop.f32.mrf.mxu0
        %v4525 = vadd.f32 %v4436, %v4524
        %4526 = vmatmul.bf16.gmra.mxu0 %v4363
        %v4527 = vpop.f32.mrf.mxu0
        %v4528 = vadd.f32 %v4439, %v4527
        %v4529 = vpop.f32.mrf.mxu0
        %v4530 = vadd.f32 %v4441, %v4529
        %4531 = vmatmul.bf16.gmra.mxu0 %v4365
        %v4532 = vpop.f32.mrf.mxu0
        %v4533 = vadd.f32 %v4444, %v4532
        %v4534 = vpop.f32.mrf.mxu0
        %v4535 = vadd.f32 %v4446, %v4534
        %4536 = vmatmul.bf16.gmra.mxu0 %v4367
        %v4537 = vpop.f32.mrf.mxu0
        %v4538 = vadd.f32 %v4449, %v4537
        %v4539 = vpop.f32.mrf.mxu0
        %v4540 = vadd.f32 %v4451, %v4539
        %4541 = vmatmul.bf16.gmra.mxu0 %v4369
        %v4542 = vpop.f32.mrf.mxu0
        %v4543 = vadd.f32 %v4454, %v4542
        %v4544 = vpop.f32.mrf.mxu0
        %v4545 = vadd.f32 %v4456, %v4544
        %4546 = vmatmul.bf16.gmra.mxu0 %v4371
        %v4547 = vpop.f32.mrf.mxu0
        %v4548 = vadd.f32 %v4459, %v4547
        %v4549 = vpop.f32.mrf.mxu0
        %v4550 = vadd.f32 %v4461, %v4549
        %4551 = vmatmul.bf16.gmra.mxu0 %v4373
        %v4552 = vpop.f32.mrf.mxu0
        %v4553 = vadd.f32 %v4464, %v4552
        %v4554 = vpop.f32.mrf.mxu0
        %v4555 = vadd.f32 %v4466, %v4554
        %4556 = vmatmul.bf16.gmra.mxu0 %v4375
        %v4557 = vpop.f32.mrf.mxu0
        %v4558 = vadd.f32 %v4469, %v4557
        %v4559 = vpop.f32.mrf.mxu0
        %v4560 = vadd.f32 %v4471, %v4559
        %4561 = vmatmul.bf16.gmra.mxu0 %v4377
        %v4562 = vpop.f32.mrf.mxu0
        %v4563 = vadd.f32 %v4474, %v4562
        %v4564 = vpop.f32.mrf.mxu0
        %v4565 = vadd.f32 %v4476, %v4564
        %4566 = vmatmul.bf16.gmra.mxu0 %v4379
        %v4567 = vpop.f32.mrf.mxu0
        %v4568 = vadd.f32 %v4479, %v4567
        %v4569 = vpop.f32.mrf.mxu0
        %v4570 = vadd.f32 %v4481, %v4569
        %4571 = vmatmul.bf16.gmra.mxu0 %v4381
        %v4572 = vpop.f32.mrf.mxu0
        %v4573 = vadd.f32 %v4484, %v4572
        %v4574 = vpop.f32.mrf.mxu0
        %v4575 = vadd.f32 %v4486, %v4574
        %4576 = vmatmul.bf16.gmra.mxu0 %v4383
        %v4577 = vpop.f32.mrf.mxu0
        %v4578 = vadd.f32 %v4489, %v4577
        %v4579 = vpop.f32.mrf.mxu0
        %v4580 = vadd.f32 %v4491, %v4579
        %4581 = vmatmul.bf16.gmra.mxu0 %v4385
        %v4582 = vpop.f32.mrf.mxu0
        %v4583 = vadd.f32 %v4494, %v4582
        %v4584 = vpop.f32.mrf.mxu0
        %v4585 = vadd.f32 %v4496, %v4584
        %4586 = vmatmul.bf16.gmra.mxu0 %v4387
        %v4587 = vpop.f32.mrf.mxu0
        %v4588 = vadd.f32 %v4499, %v4587
        %v4589 = vpop.f32.mrf.mxu0
        %v4590 = vadd.f32 %v4501, %v4589
        %4591 = vmatmul.bf16.gmra.mxu0 %v4389
        %v4592 = vpop.f32.mrf.mxu0
        %v4593 = vadd.f32 %v4504, %v4592
        %v4594 = vpop.f32.mrf.mxu0
        %v4595 = vadd.f32 %v4506, %v4594
        %4596 = vmatmul.bf16.gmra.mxu0 %v4391
        %v4597 = vpop.f32.mrf.mxu0
        %v4598 = vadd.f32 %v4509, %v4597
        %v4599 = vpop.f32.mrf.mxu0
        %v4600 = vadd.f32 %v4511, %v4599
        %4601 = vdwg.mxu0
        %v4602 = vpack.c.bf16 %v4525, %v4523
        %v4603 = vpack.c.bf16 %v4530, %v4528
        %v4604 = vpack.c.bf16 %v4535, %v4533
        %v4605 = vpack.c.bf16 %v4540, %v4538
        %v4606 = vpack.c.bf16 %v4545, %v4543
        %v4607 = vpack.c.bf16 %v4550, %v4548
        %v4608 = vpack.c.bf16 %v4555, %v4553
        %v4609 = vpack.c.bf16 %v4560, %v4558
        %v4610 = vpack.c.bf16 %v4565, %v4563
        %v4611 = vpack.c.bf16 %v4570, %v4568
        %v4612 = vpack.c.bf16 %v4575, %v4573
        %v4613 = vpack.c.bf16 %v4580, %v4578
        %v4614 = vpack.c.bf16 %v4585, %v4583
        %v4615 = vpack.c.bf16 %v4590, %v4588
        %v4616 = vpack.c.bf16 %v4595, %v4593
        %v4617 = vpack.c.bf16 %v4600, %v4598
        %s4618 = scalar_lea.vmem [#allocation5], 12
        %v4619 = vld [vmem:[%s4618] sm:$0x3]
        %v4621 = vsel %vm1702, %v4602, 0
        %v4624 = vsel %vm1702, %v4603, 0
        %v4627 = vsel %vm1702, %v4604, 0
        %v4630 = vsel %vm1702, %v4605, 0
        %v4633 = vsel %vm1702, %v4606, 0
        %v4636 = vsel %vm1702, %v4607, 0
        %v4639 = vsel %vm1702, %v4608, 0
        %v4642 = vsel %vm1702, %v4609, 0
        %v4645 = vsel %vm1702, %v4610, 0
        %v4648 = vsel %vm1702, %v4611, 0
        %v4651 = vsel %vm1702, %v4612, 0
        %v4654 = vsel %vm1702, %v4613, 0
        %v4657 = vsel %vm1702, %v4614, 0
        %v4660 = vsel %vm1702, %v4615, 0
        %v4663 = vsel %vm1702, %v4616, 0
        %v4666 = vsel %vm1702, %v4617, 0
        %v4669 = vand.u32 %v4619, %v1754
        %4671 = vmatpush.bf16.msra.mxu0 0
        %4672 = vmatpush.bf16.msra.mxu0 0
        %4673 = vmatpush.bf16.msra.mxu0 0
        %4674 = vmatpush.bf16.msra.mxu0 0
        %4675 = vmatpush.bf16.msra.mxu0 0
        %4676 = vmatpush.bf16.msra.mxu0 0
        %4677 = vmatpush.bf16.msra.mxu0 0
        %4678 = vmatpush.bf16.msra.mxu0 %v4669
        %4679 = vmatmul.bf16.gmra.mxu0 %v4621
        %v4680 = vpop.f32.mrf.mxu0
        %v4681 = vadd.f32 0.0, %v4680
        %v4682 = vpop.f32.mrf.mxu0
        %v4683 = vadd.f32 0.0, %v4682
        %4684 = vmatmul.bf16.gmra.mxu0 %v4624
        %v4685 = vpop.f32.mrf.mxu0
        %v4686 = vadd.f32 0.0, %v4685
        %v4687 = vpop.f32.mrf.mxu0
        %v4688 = vadd.f32 0.0, %v4687
        %4689 = vmatmul.bf16.gmra.mxu0 %v4627
        %v4690 = vpop.f32.mrf.mxu0
        %v4691 = vadd.f32 0.0, %v4690
        %v4692 = vpop.f32.mrf.mxu0
        %v4693 = vadd.f32 0.0, %v4692
        %4694 = vmatmul.bf16.gmra.mxu0 %v4630
        %v4695 = vpop.f32.mrf.mxu0
        %v4696 = vadd.f32 0.0, %v4695
        %v4697 = vpop.f32.mrf.mxu0
        %v4698 = vadd.f32 0.0, %v4697
        %4699 = vmatmul.bf16.gmra.mxu0 %v4633
        %v4700 = vpop.f32.mrf.mxu0
        %v4701 = vadd.f32 0.0, %v4700
        %v4702 = vpop.f32.mrf.mxu0
        %v4703 = vadd.f32 0.0, %v4702
        %4704 = vmatmul.bf16.gmra.mxu0 %v4636
        %v4705 = vpop.f32.mrf.mxu0
        %v4706 = vadd.f32 0.0, %v4705
        %v4707 = vpop.f32.mrf.mxu0
        %v4708 = vadd.f32 0.0, %v4707
        %4709 = vmatmul.bf16.gmra.mxu0 %v4639
        %v4710 = vpop.f32.mrf.mxu0
        %v4711 = vadd.f32 0.0, %v4710
        %v4712 = vpop.f32.mrf.mxu0
        %v4713 = vadd.f32 0.0, %v4712
        %4714 = vmatmul.bf16.gmra.mxu0 %v4642
        %v4715 = vpop.f32.mrf.mxu0
        %v4716 = vadd.f32 0.0, %v4715
        %v4717 = vpop.f32.mrf.mxu0
        %v4718 = vadd.f32 0.0, %v4717
        %4719 = vmatmul.bf16.gmra.mxu0 %v4645
        %v4720 = vpop.f32.mrf.mxu0
        %v4721 = vadd.f32 0.0, %v4720
        %v4722 = vpop.f32.mrf.mxu0
        %v4723 = vadd.f32 0.0, %v4722
        %4724 = vmatmul.bf16.gmra.mxu0 %v4648
        %v4725 = vpop.f32.mrf.mxu0
        %v4726 = vadd.f32 0.0, %v4725
        %v4727 = vpop.f32.mrf.mxu0
        %v4728 = vadd.f32 0.0, %v4727
        %4729 = vmatmul.bf16.gmra.mxu0 %v4651
        %v4730 = vpop.f32.mrf.mxu0
        %v4731 = vadd.f32 0.0, %v4730
        %v4732 = vpop.f32.mrf.mxu0
        %v4733 = vadd.f32 0.0, %v4732
        %4734 = vmatmul.bf16.gmra.mxu0 %v4654
        %v4735 = vpop.f32.mrf.mxu0
        %v4736 = vadd.f32 0.0, %v4735
        %v4737 = vpop.f32.mrf.mxu0
        %v4738 = vadd.f32 0.0, %v4737
        %4739 = vmatmul.bf16.gmra.mxu0 %v4657
        %v4740 = vpop.f32.mrf.mxu0
        %v4741 = vadd.f32 0.0, %v4740
        %v4742 = vpop.f32.mrf.mxu0
        %v4743 = vadd.f32 0.0, %v4742
        %4744 = vmatmul.bf16.gmra.mxu0 %v4660
        %v4745 = vpop.f32.mrf.mxu0
        %v4746 = vadd.f32 0.0, %v4745
        %v4747 = vpop.f32.mrf.mxu0
        %v4748 = vadd.f32 0.0, %v4747
        %4749 = vmatmul.bf16.gmra.mxu0 %v4663
        %v4750 = vpop.f32.mrf.mxu0
        %v4751 = vadd.f32 0.0, %v4750
        %v4752 = vpop.f32.mrf.mxu0
        %v4753 = vadd.f32 0.0, %v4752
        %4754 = vmatmul.bf16.gmra.mxu0 %v4666
        %v4755 = vpop.f32.mrf.mxu0
        %v4756 = vadd.f32 0.0, %v4755
        %v4757 = vpop.f32.mrf.mxu0
        %v4758 = vadd.f32 0.0, %v4757
        %4759 = vdwg.mxu0
        %v4760 = vadd.f32 %v4199, %v4681
        %v4761 = vadd.f32 %v4200, %v4683
        %v4762 = vadd.f32 %v4201, %v4686
        %v4763 = vadd.f32 %v4202, %v4688
        %v4764 = vadd.f32 %v4203, %v4691
        %v4765 = vadd.f32 %v4204, %v4693
        %v4766 = vadd.f32 %v4205, %v4696
        %v4767 = vadd.f32 %v4206, %v4698
        %v4768 = vadd.f32 %v4207, %v4701
        %v4769 = vadd.f32 %v4208, %v4703
        %v4770 = vadd.f32 %v4209, %v4706
        %v4771 = vadd.f32 %v4210, %v4708
        %v4772 = vadd.f32 %v4211, %v4711
        %v4773 = vadd.f32 %v4212, %v4713
        %v4774 = vadd.f32 %v4213, %v4716
        %v4775 = vadd.f32 %v4214, %v4718
        %v4776 = vadd.f32 %v4215, %v4721
        %v4777 = vadd.f32 %v4216, %v4723
        %v4778 = vadd.f32 %v4217, %v4726
        %v4779 = vadd.f32 %v4218, %v4728
        %v4780 = vadd.f32 %v4219, %v4731
        %v4781 = vadd.f32 %v4220, %v4733
        %v4782 = vadd.f32 %v4221, %v4736
        %v4783 = vadd.f32 %v4222, %v4738
        %v4784 = vadd.f32 %v4223, %v4741
        %v4785 = vadd.f32 %v4224, %v4743
        %v4786 = vadd.f32 %v4225, %v4746
        %v4787 = vadd.f32 %v4226, %v4748
        %v4788 = vadd.f32 %v4227, %v4751
        %v4789 = vadd.f32 %v4228, %v4753
        %v4790 = vadd.f32 %v4229, %v4756
        %v4791 = vadd.f32 %v4230, %v4758
        %s4792 = scalar_lea.vmem [#allocation2], 1792
        %v4793 = vld [vmem:[%s4792] sm:$0xff]
        %v4794 = vld [vmem:[%s4792 + $0x8] sm:$0xff]
        %v4795 = vld [vmem:[%s4792 + $0x10] sm:$0xff]
        %v4796 = vld [vmem:[%s4792 + $0x18] sm:$0xff]
        %v4797 = vld [vmem:[%s4792 + $0x20] sm:$0xff]
        %v4798 = vld [vmem:[%s4792 + $0x28] sm:$0xff]
        %v4799 = vld [vmem:[%s4792 + $0x30] sm:$0xff]
        %v4800 = vld [vmem:[%s4792 + $0x38] sm:$0xff]
        %v4801 = vld [vmem:[%s4792 + $0x40] sm:$0xff]
        %v4802 = vld [vmem:[%s4792 + $0x48] sm:$0xff]
        %v4803 = vld [vmem:[%s4792 + $0x50] sm:$0xff]
        %v4804 = vld [vmem:[%s4792 + $0x58] sm:$0xff]
        %v4805 = vld [vmem:[%s4792 + $0x60] sm:$0xff]
        %v4806 = vld [vmem:[%s4792 + $0x68] sm:$0xff]
        %v4807 = vld [vmem:[%s4792 + $0x70] sm:$0xff]
        %v4808 = vld [vmem:[%s4792 + $0x78] sm:$0xff]
        %v4809 = vld [vmem:[%s4792 + $0x80] sm:$0xff]
        %v4810 = vld [vmem:[%s4792 + $0x88] sm:$0xff]
        %v4811 = vld [vmem:[%s4792 + $0x90] sm:$0xff]
        %v4812 = vld [vmem:[%s4792 + $0x98] sm:$0xff]
        %v4813 = vld [vmem:[%s4792 + $0xa0] sm:$0xff]
        %v4814 = vld [vmem:[%s4792 + $0xa8] sm:$0xff]
        %v4815 = vld [vmem:[%s4792 + $0xb0] sm:$0xff]
        %v4816 = vld [vmem:[%s4792 + $0xb8] sm:$0xff]
        %v4817 = vld [vmem:[%s4792 + $0xc0] sm:$0xff]
        %v4818 = vld [vmem:[%s4792 + $0xc8] sm:$0xff]
        %v4819 = vld [vmem:[%s4792 + $0xd0] sm:$0xff]
        %v4820 = vld [vmem:[%s4792 + $0xd8] sm:$0xff]
        %v4821 = vld [vmem:[%s4792 + $0xe0] sm:$0xff]
        %v4822 = vld [vmem:[%s4792 + $0xe8] sm:$0xff]
        %v4823 = vld [vmem:[%s4792 + $0xf0] sm:$0xff]
        %v4824 = vld [vmem:[%s4792 + $0xf8] sm:$0xff]
        %v4857 = vunpack.c.l.b16 %v4793
        %v4858 = vunpack.c.h.b16 %v4793
        %v4859 = vunpack.c.l.b16 %v4794
        %v4860 = vunpack.c.h.b16 %v4794
        %v4861 = vunpack.c.l.b16 %v4795
        %v4862 = vunpack.c.h.b16 %v4795
        %v4863 = vunpack.c.l.b16 %v4796
        %v4864 = vunpack.c.h.b16 %v4796
        %v4865 = vunpack.c.l.b16 %v4797
        %v4866 = vunpack.c.h.b16 %v4797
        %v4867 = vunpack.c.l.b16 %v4798
        %v4868 = vunpack.c.h.b16 %v4798
        %v4869 = vunpack.c.l.b16 %v4799
        %v4870 = vunpack.c.h.b16 %v4799
        %v4871 = vunpack.c.l.b16 %v4800
        %v4872 = vunpack.c.h.b16 %v4800
        %v4873 = vunpack.c.l.b16 %v4801
        %v4874 = vunpack.c.h.b16 %v4801
        %v4875 = vunpack.c.l.b16 %v4802
        %v4876 = vunpack.c.h.b16 %v4802
        %v4877 = vunpack.c.l.b16 %v4803
        %v4878 = vunpack.c.h.b16 %v4803
        %v4879 = vunpack.c.l.b16 %v4804
        %v4880 = vunpack.c.h.b16 %v4804
        %v4881 = vunpack.c.l.b16 %v4805
        %v4882 = vunpack.c.h.b16 %v4805
        %v4883 = vunpack.c.l.b16 %v4806
        %v4884 = vunpack.c.h.b16 %v4806
        %v4885 = vunpack.c.l.b16 %v4807
        %v4886 = vunpack.c.h.b16 %v4807
        %v4887 = vunpack.c.l.b16 %v4808
        %v4888 = vunpack.c.h.b16 %v4808
        %v4889 = vunpack.c.l.b16 %v4809
        %v4890 = vunpack.c.h.b16 %v4809
        %v4891 = vunpack.c.l.b16 %v4810
        %v4892 = vunpack.c.h.b16 %v4810
        %v4893 = vunpack.c.l.b16 %v4811
        %v4894 = vunpack.c.h.b16 %v4811
        %v4895 = vunpack.c.l.b16 %v4812
        %v4896 = vunpack.c.h.b16 %v4812
        %v4897 = vunpack.c.l.b16 %v4813
        %v4898 = vunpack.c.h.b16 %v4813
        %v4899 = vunpack.c.l.b16 %v4814
        %v4900 = vunpack.c.h.b16 %v4814
        %v4901 = vunpack.c.l.b16 %v4815
        %v4902 = vunpack.c.h.b16 %v4815
        %v4903 = vunpack.c.l.b16 %v4816
        %v4904 = vunpack.c.h.b16 %v4816
        %v4905 = vunpack.c.l.b16 %v4817
        %v4906 = vunpack.c.h.b16 %v4817
        %v4907 = vunpack.c.l.b16 %v4818
        %v4908 = vunpack.c.h.b16 %v4818
        %v4909 = vunpack.c.l.b16 %v4819
        %v4910 = vunpack.c.h.b16 %v4819
        %v4911 = vunpack.c.l.b16 %v4820
        %v4912 = vunpack.c.h.b16 %v4820
        %v4913 = vunpack.c.l.b16 %v4821
        %v4914 = vunpack.c.h.b16 %v4821
        %v4915 = vunpack.c.l.b16 %v4822
        %v4916 = vunpack.c.h.b16 %v4822
        %v4917 = vunpack.c.l.b16 %v4823
        %v4918 = vunpack.c.h.b16 %v4823
        %v4919 = vunpack.c.l.b16 %v4824
        %v4920 = vunpack.c.h.b16 %v4824
        %v4921 = vpack.c.b16 %v4859, %v4857
        %v4922 = vpack.c.b16 %v4860, %v4858
        %v4923 = vpack.c.b16 %v4863, %v4861
        %v4924 = vpack.c.b16 %v4864, %v4862
        %v4925 = vpack.c.b16 %v4867, %v4865
        %v4926 = vpack.c.b16 %v4868, %v4866
        %v4927 = vpack.c.b16 %v4871, %v4869
        %v4928 = vpack.c.b16 %v4872, %v4870
        %v4929 = vpack.c.b16 %v4875, %v4873
        %v4930 = vpack.c.b16 %v4876, %v4874
        %v4931 = vpack.c.b16 %v4879, %v4877
        %v4932 = vpack.c.b16 %v4880, %v4878
        %v4933 = vpack.c.b16 %v4883, %v4881
        %v4934 = vpack.c.b16 %v4884, %v4882
        %v4935 = vpack.c.b16 %v4887, %v4885
        %v4936 = vpack.c.b16 %v4888, %v4886
        %v4937 = vpack.c.b16 %v4891, %v4889
        %v4938 = vpack.c.b16 %v4892, %v4890
        %v4939 = vpack.c.b16 %v4895, %v4893
        %v4940 = vpack.c.b16 %v4896, %v4894
        %v4941 = vpack.c.b16 %v4899, %v4897
        %v4942 = vpack.c.b16 %v4900, %v4898
        %v4943 = vpack.c.b16 %v4903, %v4901
        %v4944 = vpack.c.b16 %v4904, %v4902
        %v4945 = vpack.c.b16 %v4907, %v4905
        %v4946 = vpack.c.b16 %v4908, %v4906
        %v4947 = vpack.c.b16 %v4911, %v4909
        %v4948 = vpack.c.b16 %v4912, %v4910
        %v4949 = vpack.c.b16 %v4915, %v4913
        %v4950 = vpack.c.b16 %v4916, %v4914
        %v4951 = vpack.c.b16 %v4919, %v4917
        %v4952 = vpack.c.b16 %v4920, %v4918
        %4985 = vmatpush.bf16.msra.mxu0 %v1093
        %4986 = vmatpush.bf16.msra.mxu0 %v1092
        %4987 = vmatpush.bf16.msra.mxu0 %v1091
        %4988 = vmatpush.bf16.msra.mxu0 %v1090
        %4989 = vmatpush.bf16.msra.mxu0 %v1089
        %4990 = vmatpush.bf16.msra.mxu0 %v1088
        %4991 = vmatpush.bf16.msra.mxu0 %v1087
        %4992 = vmatpush.bf16.msra.mxu0 %v1086
        %4993 = vmatmul.bf16.gmra.mxu0 %v4921
        %v4994 = vpop.f32.mrf.mxu0
        %v4995 = vadd.f32 0.0, %v4994
        %v4996 = vpop.f32.mrf.mxu0
        %v4997 = vadd.f32 0.0, %v4996
        %4998 = vmatmul.bf16.gmra.mxu0 %v4923
        %v4999 = vpop.f32.mrf.mxu0
        %v5000 = vadd.f32 0.0, %v4999
        %v5001 = vpop.f32.mrf.mxu0
        %v5002 = vadd.f32 0.0, %v5001
        %5003 = vmatmul.bf16.gmra.mxu0 %v4925
        %v5004 = vpop.f32.mrf.mxu0
        %v5005 = vadd.f32 0.0, %v5004
        %v5006 = vpop.f32.mrf.mxu0
        %v5007 = vadd.f32 0.0, %v5006
        %5008 = vmatmul.bf16.gmra.mxu0 %v4927
        %v5009 = vpop.f32.mrf.mxu0
        %v5010 = vadd.f32 0.0, %v5009
        %v5011 = vpop.f32.mrf.mxu0
        %v5012 = vadd.f32 0.0, %v5011
        %5013 = vmatmul.bf16.gmra.mxu0 %v4929
        %v5014 = vpop.f32.mrf.mxu0
        %v5015 = vadd.f32 0.0, %v5014
        %v5016 = vpop.f32.mrf.mxu0
        %v5017 = vadd.f32 0.0, %v5016
        %5018 = vmatmul.bf16.gmra.mxu0 %v4931
        %v5019 = vpop.f32.mrf.mxu0
        %v5020 = vadd.f32 0.0, %v5019
        %v5021 = vpop.f32.mrf.mxu0
        %v5022 = vadd.f32 0.0, %v5021
        %5023 = vmatmul.bf16.gmra.mxu0 %v4933
        %v5024 = vpop.f32.mrf.mxu0
        %v5025 = vadd.f32 0.0, %v5024
        %v5026 = vpop.f32.mrf.mxu0
        %v5027 = vadd.f32 0.0, %v5026
        %5028 = vmatmul.bf16.gmra.mxu0 %v4935
        %v5029 = vpop.f32.mrf.mxu0
        %v5030 = vadd.f32 0.0, %v5029
        %v5031 = vpop.f32.mrf.mxu0
        %v5032 = vadd.f32 0.0, %v5031
        %5033 = vmatmul.bf16.gmra.mxu0 %v4937
        %v5034 = vpop.f32.mrf.mxu0
        %v5035 = vadd.f32 0.0, %v5034
        %v5036 = vpop.f32.mrf.mxu0
        %v5037 = vadd.f32 0.0, %v5036
        %5038 = vmatmul.bf16.gmra.mxu0 %v4939
        %v5039 = vpop.f32.mrf.mxu0
        %v5040 = vadd.f32 0.0, %v5039
        %v5041 = vpop.f32.mrf.mxu0
        %v5042 = vadd.f32 0.0, %v5041
        %5043 = vmatmul.bf16.gmra.mxu0 %v4941
        %v5044 = vpop.f32.mrf.mxu0
        %v5045 = vadd.f32 0.0, %v5044
        %v5046 = vpop.f32.mrf.mxu0
        %v5047 = vadd.f32 0.0, %v5046
        %5048 = vmatmul.bf16.gmra.mxu0 %v4943
        %v5049 = vpop.f32.mrf.mxu0
        %v5050 = vadd.f32 0.0, %v5049
        %v5051 = vpop.f32.mrf.mxu0
        %v5052 = vadd.f32 0.0, %v5051
        %5053 = vmatmul.bf16.gmra.mxu0 %v4945
        %v5054 = vpop.f32.mrf.mxu0
        %v5055 = vadd.f32 0.0, %v5054
        %v5056 = vpop.f32.mrf.mxu0
        %v5057 = vadd.f32 0.0, %v5056
        %5058 = vmatmul.bf16.gmra.mxu0 %v4947
        %v5059 = vpop.f32.mrf.mxu0
        %v5060 = vadd.f32 0.0, %v5059
        %v5061 = vpop.f32.mrf.mxu0
        %v5062 = vadd.f32 0.0, %v5061
        %5063 = vmatmul.bf16.gmra.mxu0 %v4949
        %v5064 = vpop.f32.mrf.mxu0
        %v5065 = vadd.f32 0.0, %v5064
        %v5066 = vpop.f32.mrf.mxu0
        %v5067 = vadd.f32 0.0, %v5066
        %5068 = vmatmul.bf16.gmra.mxu0 %v4951
        %v5069 = vpop.f32.mrf.mxu0
        %v5070 = vadd.f32 0.0, %v5069
        %v5071 = vpop.f32.mrf.mxu0
        %v5072 = vadd.f32 0.0, %v5071
        %5073 = vdwg.mxu0
        %5074 = vmatpush.bf16.msra.mxu0 %v1101
        %5075 = vmatpush.bf16.msra.mxu0 %v1100
        %5076 = vmatpush.bf16.msra.mxu0 %v1099
        %5077 = vmatpush.bf16.msra.mxu0 %v1098
        %5078 = vmatpush.bf16.msra.mxu0 %v1097
        %5079 = vmatpush.bf16.msra.mxu0 %v1096
        %5080 = vmatpush.bf16.msra.mxu0 %v1095
        %5081 = vmatpush.bf16.msra.mxu0 %v1094
        %5082 = vmatmul.bf16.gmra.mxu0 %v4922
        %v5083 = vpop.f32.mrf.mxu0
        %v5084 = vadd.f32 %v4995, %v5083
        %v5085 = vpop.f32.mrf.mxu0
        %v5086 = vadd.f32 %v4997, %v5085
        %5087 = vmatmul.bf16.gmra.mxu0 %v4924
        %v5088 = vpop.f32.mrf.mxu0
        %v5089 = vadd.f32 %v5000, %v5088
        %v5090 = vpop.f32.mrf.mxu0
        %v5091 = vadd.f32 %v5002, %v5090
        %5092 = vmatmul.bf16.gmra.mxu0 %v4926
        %v5093 = vpop.f32.mrf.mxu0
        %v5094 = vadd.f32 %v5005, %v5093
        %v5095 = vpop.f32.mrf.mxu0
        %v5096 = vadd.f32 %v5007, %v5095
        %5097 = vmatmul.bf16.gmra.mxu0 %v4928
        %v5098 = vpop.f32.mrf.mxu0
        %v5099 = vadd.f32 %v5010, %v5098
        %v5100 = vpop.f32.mrf.mxu0
        %v5101 = vadd.f32 %v5012, %v5100
        %5102 = vmatmul.bf16.gmra.mxu0 %v4930
        %v5103 = vpop.f32.mrf.mxu0
        %v5104 = vadd.f32 %v5015, %v5103
        %v5105 = vpop.f32.mrf.mxu0
        %v5106 = vadd.f32 %v5017, %v5105
        %5107 = vmatmul.bf16.gmra.mxu0 %v4932
        %v5108 = vpop.f32.mrf.mxu0
        %v5109 = vadd.f32 %v5020, %v5108
        %v5110 = vpop.f32.mrf.mxu0
        %v5111 = vadd.f32 %v5022, %v5110
        %5112 = vmatmul.bf16.gmra.mxu0 %v4934
        %v5113 = vpop.f32.mrf.mxu0
        %v5114 = vadd.f32 %v5025, %v5113
        %v5115 = vpop.f32.mrf.mxu0
        %v5116 = vadd.f32 %v5027, %v5115
        %5117 = vmatmul.bf16.gmra.mxu0 %v4936
        %v5118 = vpop.f32.mrf.mxu0
        %v5119 = vadd.f32 %v5030, %v5118
        %v5120 = vpop.f32.mrf.mxu0
        %v5121 = vadd.f32 %v5032, %v5120
        %5122 = vmatmul.bf16.gmra.mxu0 %v4938
        %v5123 = vpop.f32.mrf.mxu0
        %v5124 = vadd.f32 %v5035, %v5123
        %v5125 = vpop.f32.mrf.mxu0
        %v5126 = vadd.f32 %v5037, %v5125
        %5127 = vmatmul.bf16.gmra.mxu0 %v4940
        %v5128 = vpop.f32.mrf.mxu0
        %v5129 = vadd.f32 %v5040, %v5128
        %v5130 = vpop.f32.mrf.mxu0
        %v5131 = vadd.f32 %v5042, %v5130
        %5132 = vmatmul.bf16.gmra.mxu0 %v4942
        %v5133 = vpop.f32.mrf.mxu0
        %v5134 = vadd.f32 %v5045, %v5133
        %v5135 = vpop.f32.mrf.mxu0
        %v5136 = vadd.f32 %v5047, %v5135
        %5137 = vmatmul.bf16.gmra.mxu0 %v4944
        %v5138 = vpop.f32.mrf.mxu0
        %v5139 = vadd.f32 %v5050, %v5138
        %v5140 = vpop.f32.mrf.mxu0
        %v5141 = vadd.f32 %v5052, %v5140
        %5142 = vmatmul.bf16.gmra.mxu0 %v4946
        %v5143 = vpop.f32.mrf.mxu0
        %v5144 = vadd.f32 %v5055, %v5143
        %v5145 = vpop.f32.mrf.mxu0
        %v5146 = vadd.f32 %v5057, %v5145
        %5147 = vmatmul.bf16.gmra.mxu0 %v4948
        %v5148 = vpop.f32.mrf.mxu0
        %v5149 = vadd.f32 %v5060, %v5148
        %v5150 = vpop.f32.mrf.mxu0
        %v5151 = vadd.f32 %v5062, %v5150
        %5152 = vmatmul.bf16.gmra.mxu0 %v4950
        %v5153 = vpop.f32.mrf.mxu0
        %v5154 = vadd.f32 %v5065, %v5153
        %v5155 = vpop.f32.mrf.mxu0
        %v5156 = vadd.f32 %v5067, %v5155
        %5157 = vmatmul.bf16.gmra.mxu0 %v4952
        %v5158 = vpop.f32.mrf.mxu0
        %v5159 = vadd.f32 %v5070, %v5158
        %v5160 = vpop.f32.mrf.mxu0
        %v5161 = vadd.f32 %v5072, %v5160
        %5162 = vdwg.mxu0
        %v5163 = vpack.c.bf16 %v5086, %v5084
        %v5164 = vpack.c.bf16 %v5091, %v5089
        %v5165 = vpack.c.bf16 %v5096, %v5094
        %v5166 = vpack.c.bf16 %v5101, %v5099
        %v5167 = vpack.c.bf16 %v5106, %v5104
        %v5168 = vpack.c.bf16 %v5111, %v5109
        %v5169 = vpack.c.bf16 %v5116, %v5114
        %v5170 = vpack.c.bf16 %v5121, %v5119
        %v5171 = vpack.c.bf16 %v5126, %v5124
        %v5172 = vpack.c.bf16 %v5131, %v5129
        %v5173 = vpack.c.bf16 %v5136, %v5134
        %v5174 = vpack.c.bf16 %v5141, %v5139
        %v5175 = vpack.c.bf16 %v5146, %v5144
        %v5176 = vpack.c.bf16 %v5151, %v5149
        %v5177 = vpack.c.bf16 %v5156, %v5154
        %v5178 = vpack.c.bf16 %v5161, %v5159
        %s5179 = scalar_lea.vmem [#allocation5], 14
        %v5180 = vld [vmem:[%s5179] sm:$0x3]
        %v5182 = vsel %vm1702, %v5163, 0
        %v5185 = vsel %vm1702, %v5164, 0
        %v5188 = vsel %vm1702, %v5165, 0
        %v5191 = vsel %vm1702, %v5166, 0
        %v5194 = vsel %vm1702, %v5167, 0
        %v5197 = vsel %vm1702, %v5168, 0
        %v5200 = vsel %vm1702, %v5169, 0
        %v5203 = vsel %vm1702, %v5170, 0
        %v5206 = vsel %vm1702, %v5171, 0
        %v5209 = vsel %vm1702, %v5172, 0
        %v5212 = vsel %vm1702, %v5173, 0
        %v5215 = vsel %vm1702, %v5174, 0
        %v5218 = vsel %vm1702, %v5175, 0
        %v5221 = vsel %vm1702, %v5176, 0
        %v5224 = vsel %vm1702, %v5177, 0
        %v5227 = vsel %vm1702, %v5178, 0
        %v5230 = vand.u32 %v5180, %v1754
        %5232 = vmatpush.bf16.msra.mxu0 0
        %5233 = vmatpush.bf16.msra.mxu0 0
        %5234 = vmatpush.bf16.msra.mxu0 0
        %5235 = vmatpush.bf16.msra.mxu0 0
        %5236 = vmatpush.bf16.msra.mxu0 0
        %5237 = vmatpush.bf16.msra.mxu0 0
        %5238 = vmatpush.bf16.msra.mxu0 0
        %5239 = vmatpush.bf16.msra.mxu0 %v5230
        %5240 = vmatmul.bf16.gmra.mxu0 %v5182
        %v5241 = vpop.f32.mrf.mxu0
        %v5242 = vadd.f32 0.0, %v5241
        %v5243 = vpop.f32.mrf.mxu0
        %v5244 = vadd.f32 0.0, %v5243
        %5245 = vmatmul.bf16.gmra.mxu0 %v5185
        %v5246 = vpop.f32.mrf.mxu0
        %v5247 = vadd.f32 0.0, %v5246
        %v5248 = vpop.f32.mrf.mxu0
        %v5249 = vadd.f32 0.0, %v5248
        %5250 = vmatmul.bf16.gmra.mxu0 %v5188
        %v5251 = vpop.f32.mrf.mxu0
        %v5252 = vadd.f32 0.0, %v5251
        %v5253 = vpop.f32.mrf.mxu0
        %v5254 = vadd.f32 0.0, %v5253
        %5255 = vmatmul.bf16.gmra.mxu0 %v5191
        %v5256 = vpop.f32.mrf.mxu0
        %v5257 = vadd.f32 0.0, %v5256
        %v5258 = vpop.f32.mrf.mxu0
        %v5259 = vadd.f32 0.0, %v5258
        %5260 = vmatmul.bf16.gmra.mxu0 %v5194
        %v5261 = vpop.f32.mrf.mxu0
        %v5262 = vadd.f32 0.0, %v5261
        %v5263 = vpop.f32.mrf.mxu0
        %v5264 = vadd.f32 0.0, %v5263
        %5265 = vmatmul.bf16.gmra.mxu0 %v5197
        %v5266 = vpop.f32.mrf.mxu0
        %v5267 = vadd.f32 0.0, %v5266
        %v5268 = vpop.f32.mrf.mxu0
        %v5269 = vadd.f32 0.0, %v5268
        %5270 = vmatmul.bf16.gmra.mxu0 %v5200
        %v5271 = vpop.f32.mrf.mxu0
        %v5272 = vadd.f32 0.0, %v5271
        %v5273 = vpop.f32.mrf.mxu0
        %v5274 = vadd.f32 0.0, %v5273
        %5275 = vmatmul.bf16.gmra.mxu0 %v5203
        %v5276 = vpop.f32.mrf.mxu0
        %v5277 = vadd.f32 0.0, %v5276
        %v5278 = vpop.f32.mrf.mxu0
        %v5279 = vadd.f32 0.0, %v5278
        %5280 = vmatmul.bf16.gmra.mxu0 %v5206
        %v5281 = vpop.f32.mrf.mxu0
        %v5282 = vadd.f32 0.0, %v5281
        %v5283 = vpop.f32.mrf.mxu0
        %v5284 = vadd.f32 0.0, %v5283
        %5285 = vmatmul.bf16.gmra.mxu0 %v5209
        %v5286 = vpop.f32.mrf.mxu0
        %v5287 = vadd.f32 0.0, %v5286
        %v5288 = vpop.f32.mrf.mxu0
        %v5289 = vadd.f32 0.0, %v5288
        %5290 = vmatmul.bf16.gmra.mxu0 %v5212
        %v5291 = vpop.f32.mrf.mxu0
        %v5292 = vadd.f32 0.0, %v5291
        %v5293 = vpop.f32.mrf.mxu0
        %v5294 = vadd.f32 0.0, %v5293
        %5295 = vmatmul.bf16.gmra.mxu0 %v5215
        %v5296 = vpop.f32.mrf.mxu0
        %v5297 = vadd.f32 0.0, %v5296
        %v5298 = vpop.f32.mrf.mxu0
        %v5299 = vadd.f32 0.0, %v5298
        %5300 = vmatmul.bf16.gmra.mxu0 %v5218
        %v5301 = vpop.f32.mrf.mxu0
        %v5302 = vadd.f32 0.0, %v5301
        %v5303 = vpop.f32.mrf.mxu0
        %v5304 = vadd.f32 0.0, %v5303
        %5305 = vmatmul.bf16.gmra.mxu0 %v5221
        %v5306 = vpop.f32.mrf.mxu0
        %v5307 = vadd.f32 0.0, %v5306
        %v5308 = vpop.f32.mrf.mxu0
        %v5309 = vadd.f32 0.0, %v5308
        %5310 = vmatmul.bf16.gmra.mxu0 %v5224
        %v5311 = vpop.f32.mrf.mxu0
        %v5312 = vadd.f32 0.0, %v5311
        %v5313 = vpop.f32.mrf.mxu0
        %v5314 = vadd.f32 0.0, %v5313
        %5315 = vmatmul.bf16.gmra.mxu0 %v5227
        %v5316 = vpop.f32.mrf.mxu0
        %v5317 = vadd.f32 0.0, %v5316
        %v5318 = vpop.f32.mrf.mxu0
        %v5319 = vadd.f32 0.0, %v5318
        %5320 = vdwg.mxu0
        %v5321 = vadd.f32 %v4760, %v5242
        %v5322 = vadd.f32 %v4761, %v5244
        %v5323 = vadd.f32 %v4762, %v5247
        %v5324 = vadd.f32 %v4763, %v5249
        %v5325 = vadd.f32 %v4764, %v5252
        %v5326 = vadd.f32 %v4765, %v5254
        %v5327 = vadd.f32 %v4766, %v5257
        %v5328 = vadd.f32 %v4767, %v5259
        %v5329 = vadd.f32 %v4768, %v5262
        %v5330 = vadd.f32 %v4769, %v5264
        %v5331 = vadd.f32 %v4770, %v5267
        %v5332 = vadd.f32 %v4771, %v5269
        %v5333 = vadd.f32 %v4772, %v5272
        %v5334 = vadd.f32 %v4773, %v5274
        %v5335 = vadd.f32 %v4774, %v5277
        %v5336 = vadd.f32 %v4775, %v5279
        %v5337 = vadd.f32 %v4776, %v5282
        %v5338 = vadd.f32 %v4777, %v5284
        %v5339 = vadd.f32 %v4778, %v5287
        %v5340 = vadd.f32 %v4779, %v5289
        %v5341 = vadd.f32 %v4780, %v5292
        %v5342 = vadd.f32 %v4781, %v5294
        %v5343 = vadd.f32 %v4782, %v5297
        %v5344 = vadd.f32 %v4783, %v5299
        %v5345 = vadd.f32 %v4784, %v5302
        %v5346 = vadd.f32 %v4785, %v5304
        %v5347 = vadd.f32 %v4786, %v5307
        %v5348 = vadd.f32 %v4787, %v5309
        %v5349 = vadd.f32 %v4788, %v5312
        %v5350 = vadd.f32 %v4789, %v5314
        %v5351 = vadd.f32 %v4790, %v5317
        %v5352 = vadd.f32 %v4791, %v5319
        %s5353 = scalar_lea.vmem [#allocation2], 2048
        %v5354 = vld [vmem:[%s5353] sm:$0xff]
        %v5355 = vld [vmem:[%s5353 + $0x8] sm:$0xff]
        %v5356 = vld [vmem:[%s5353 + $0x10] sm:$0xff]
        %v5357 = vld [vmem:[%s5353 + $0x18] sm:$0xff]
        %v5358 = vld [vmem:[%s5353 + $0x20] sm:$0xff]
        %v5359 = vld [vmem:[%s5353 + $0x28] sm:$0xff]
        %v5360 = vld [vmem:[%s5353 + $0x30] sm:$0xff]
        %v5361 = vld [vmem:[%s5353 + $0x38] sm:$0xff]
        %v5362 = vld [vmem:[%s5353 + $0x40] sm:$0xff]
        %v5363 = vld [vmem:[%s5353 + $0x48] sm:$0xff]
        %v5364 = vld [vmem:[%s5353 + $0x50] sm:$0xff]
        %v5365 = vld [vmem:[%s5353 + $0x58] sm:$0xff]
        %v5366 = vld [vmem:[%s5353 + $0x60] sm:$0xff]
        %v5367 = vld [vmem:[%s5353 + $0x68] sm:$0xff]
        %v5368 = vld [vmem:[%s5353 + $0x70] sm:$0xff]
        %v5369 = vld [vmem:[%s5353 + $0x78] sm:$0xff]
        %v5370 = vld [vmem:[%s5353 + $0x80] sm:$0xff]
        %v5371 = vld [vmem:[%s5353 + $0x88] sm:$0xff]
        %v5372 = vld [vmem:[%s5353 + $0x90] sm:$0xff]
        %v5373 = vld [vmem:[%s5353 + $0x98] sm:$0xff]
        %v5374 = vld [vmem:[%s5353 + $0xa0] sm:$0xff]
        %v5375 = vld [vmem:[%s5353 + $0xa8] sm:$0xff]
        %v5376 = vld [vmem:[%s5353 + $0xb0] sm:$0xff]
        %v5377 = vld [vmem:[%s5353 + $0xb8] sm:$0xff]
        %v5378 = vld [vmem:[%s5353 + $0xc0] sm:$0xff]
        %v5379 = vld [vmem:[%s5353 + $0xc8] sm:$0xff]
        %v5380 = vld [vmem:[%s5353 + $0xd0] sm:$0xff]
        %v5381 = vld [vmem:[%s5353 + $0xd8] sm:$0xff]
        %v5382 = vld [vmem:[%s5353 + $0xe0] sm:$0xff]
        %v5383 = vld [vmem:[%s5353 + $0xe8] sm:$0xff]
        %v5384 = vld [vmem:[%s5353 + $0xf0] sm:$0xff]
        %v5385 = vld [vmem:[%s5353 + $0xf8] sm:$0xff]
        %v5418 = vunpack.c.l.b16 %v5354
        %v5419 = vunpack.c.h.b16 %v5354
        %v5420 = vunpack.c.l.b16 %v5355
        %v5421 = vunpack.c.h.b16 %v5355
        %v5422 = vunpack.c.l.b16 %v5356
        %v5423 = vunpack.c.h.b16 %v5356
        %v5424 = vunpack.c.l.b16 %v5357
        %v5425 = vunpack.c.h.b16 %v5357
        %v5426 = vunpack.c.l.b16 %v5358
        %v5427 = vunpack.c.h.b16 %v5358
        %v5428 = vunpack.c.l.b16 %v5359
        %v5429 = vunpack.c.h.b16 %v5359
        %v5430 = vunpack.c.l.b16 %v5360
        %v5431 = vunpack.c.h.b16 %v5360
        %v5432 = vunpack.c.l.b16 %v5361
        %v5433 = vunpack.c.h.b16 %v5361
        %v5434 = vunpack.c.l.b16 %v5362
        %v5435 = vunpack.c.h.b16 %v5362
        %v5436 = vunpack.c.l.b16 %v5363
        %v5437 = vunpack.c.h.b16 %v5363
        %v5438 = vunpack.c.l.b16 %v5364
        %v5439 = vunpack.c.h.b16 %v5364
        %v5440 = vunpack.c.l.b16 %v5365
        %v5441 = vunpack.c.h.b16 %v5365
        %v5442 = vunpack.c.l.b16 %v5366
        %v5443 = vunpack.c.h.b16 %v5366
        %v5444 = vunpack.c.l.b16 %v5367
        %v5445 = vunpack.c.h.b16 %v5367
        %v5446 = vunpack.c.l.b16 %v5368
        %v5447 = vunpack.c.h.b16 %v5368
        %v5448 = vunpack.c.l.b16 %v5369
        %v5449 = vunpack.c.h.b16 %v5369
        %v5450 = vunpack.c.l.b16 %v5370
        %v5451 = vunpack.c.h.b16 %v5370
        %v5452 = vunpack.c.l.b16 %v5371
        %v5453 = vunpack.c.h.b16 %v5371
        %v5454 = vunpack.c.l.b16 %v5372
        %v5455 = vunpack.c.h.b16 %v5372
        %v5456 = vunpack.c.l.b16 %v5373
        %v5457 = vunpack.c.h.b16 %v5373
        %v5458 = vunpack.c.l.b16 %v5374
        %v5459 = vunpack.c.h.b16 %v5374
        %v5460 = vunpack.c.l.b16 %v5375
        %v5461 = vunpack.c.h.b16 %v5375
        %v5462 = vunpack.c.l.b16 %v5376
        %v5463 = vunpack.c.h.b16 %v5376
        %v5464 = vunpack.c.l.b16 %v5377
        %v5465 = vunpack.c.h.b16 %v5377
        %v5466 = vunpack.c.l.b16 %v5378
        %v5467 = vunpack.c.h.b16 %v5378
        %v5468 = vunpack.c.l.b16 %v5379
        %v5469 = vunpack.c.h.b16 %v5379
        %v5470 = vunpack.c.l.b16 %v5380
        %v5471 = vunpack.c.h.b16 %v5380
        %v5472 = vunpack.c.l.b16 %v5381
        %v5473 = vunpack.c.h.b16 %v5381
        %v5474 = vunpack.c.l.b16 %v5382
        %v5475 = vunpack.c.h.b16 %v5382
        %v5476 = vunpack.c.l.b16 %v5383
        %v5477 = vunpack.c.h.b16 %v5383
        %v5478 = vunpack.c.l.b16 %v5384
        %v5479 = vunpack.c.h.b16 %v5384
        %v5480 = vunpack.c.l.b16 %v5385
        %v5481 = vunpack.c.h.b16 %v5385
        %v5482 = vpack.c.b16 %v5420, %v5418
        %v5483 = vpack.c.b16 %v5421, %v5419
        %v5484 = vpack.c.b16 %v5424, %v5422
        %v5485 = vpack.c.b16 %v5425, %v5423
        %v5486 = vpack.c.b16 %v5428, %v5426
        %v5487 = vpack.c.b16 %v5429, %v5427
        %v5488 = vpack.c.b16 %v5432, %v5430
        %v5489 = vpack.c.b16 %v5433, %v5431
        %v5490 = vpack.c.b16 %v5436, %v5434
        %v5491 = vpack.c.b16 %v5437, %v5435
        %v5492 = vpack.c.b16 %v5440, %v5438
        %v5493 = vpack.c.b16 %v5441, %v5439
        %v5494 = vpack.c.b16 %v5444, %v5442
        %v5495 = vpack.c.b16 %v5445, %v5443
        %v5496 = vpack.c.b16 %v5448, %v5446
        %v5497 = vpack.c.b16 %v5449, %v5447
        %v5498 = vpack.c.b16 %v5452, %v5450
        %v5499 = vpack.c.b16 %v5453, %v5451
        %v5500 = vpack.c.b16 %v5456, %v5454
        %v5501 = vpack.c.b16 %v5457, %v5455
        %v5502 = vpack.c.b16 %v5460, %v5458
        %v5503 = vpack.c.b16 %v5461, %v5459
        %v5504 = vpack.c.b16 %v5464, %v5462
        %v5505 = vpack.c.b16 %v5465, %v5463
        %v5506 = vpack.c.b16 %v5468, %v5466
        %v5507 = vpack.c.b16 %v5469, %v5467
        %v5508 = vpack.c.b16 %v5472, %v5470
        %v5509 = vpack.c.b16 %v5473, %v5471
        %v5510 = vpack.c.b16 %v5476, %v5474
        %v5511 = vpack.c.b16 %v5477, %v5475
        %v5512 = vpack.c.b16 %v5480, %v5478
        %v5513 = vpack.c.b16 %v5481, %v5479
        %5546 = vmatpush.bf16.msra.mxu0 %v1093
        %5547 = vmatpush.bf16.msra.mxu0 %v1092
        %5548 = vmatpush.bf16.msra.mxu0 %v1091
        %5549 = vmatpush.bf16.msra.mxu0 %v1090
        %5550 = vmatpush.bf16.msra.mxu0 %v1089
        %5551 = vmatpush.bf16.msra.mxu0 %v1088
        %5552 = vmatpush.bf16.msra.mxu0 %v1087
        %5553 = vmatpush.bf16.msra.mxu0 %v1086
        %5554 = vmatmul.bf16.gmra.mxu0 %v5482
        %v5555 = vpop.f32.mrf.mxu0
        %v5556 = vadd.f32 0.0, %v5555
        %v5557 = vpop.f32.mrf.mxu0
        %v5558 = vadd.f32 0.0, %v5557
        %5559 = vmatmul.bf16.gmra.mxu0 %v5484
        %v5560 = vpop.f32.mrf.mxu0
        %v5561 = vadd.f32 0.0, %v5560
        %v5562 = vpop.f32.mrf.mxu0
        %v5563 = vadd.f32 0.0, %v5562
        %5564 = vmatmul.bf16.gmra.mxu0 %v5486
        %v5565 = vpop.f32.mrf.mxu0
        %v5566 = vadd.f32 0.0, %v5565
        %v5567 = vpop.f32.mrf.mxu0
        %v5568 = vadd.f32 0.0, %v5567
        %5569 = vmatmul.bf16.gmra.mxu0 %v5488
        %v5570 = vpop.f32.mrf.mxu0
        %v5571 = vadd.f32 0.0, %v5570
        %v5572 = vpop.f32.mrf.mxu0
        %v5573 = vadd.f32 0.0, %v5572
        %5574 = vmatmul.bf16.gmra.mxu0 %v5490
        %v5575 = vpop.f32.mrf.mxu0
        %v5576 = vadd.f32 0.0, %v5575
        %v5577 = vpop.f32.mrf.mxu0
        %v5578 = vadd.f32 0.0, %v5577
        %5579 = vmatmul.bf16.gmra.mxu0 %v5492
        %v5580 = vpop.f32.mrf.mxu0
        %v5581 = vadd.f32 0.0, %v5580
        %v5582 = vpop.f32.mrf.mxu0
        %v5583 = vadd.f32 0.0, %v5582
        %5584 = vmatmul.bf16.gmra.mxu0 %v5494
        %v5585 = vpop.f32.mrf.mxu0
        %v5586 = vadd.f32 0.0, %v5585
        %v5587 = vpop.f32.mrf.mxu0
        %v5588 = vadd.f32 0.0, %v5587
        %5589 = vmatmul.bf16.gmra.mxu0 %v5496
        %v5590 = vpop.f32.mrf.mxu0
        %v5591 = vadd.f32 0.0, %v5590
        %v5592 = vpop.f32.mrf.mxu0
        %v5593 = vadd.f32 0.0, %v5592
        %5594 = vmatmul.bf16.gmra.mxu0 %v5498
        %v5595 = vpop.f32.mrf.mxu0
        %v5596 = vadd.f32 0.0, %v5595
        %v5597 = vpop.f32.mrf.mxu0
        %v5598 = vadd.f32 0.0, %v5597
        %5599 = vmatmul.bf16.gmra.mxu0 %v5500
        %v5600 = vpop.f32.mrf.mxu0
        %v5601 = vadd.f32 0.0, %v5600
        %v5602 = vpop.f32.mrf.mxu0
        %v5603 = vadd.f32 0.0, %v5602
        %5604 = vmatmul.bf16.gmra.mxu0 %v5502
        %v5605 = vpop.f32.mrf.mxu0
        %v5606 = vadd.f32 0.0, %v5605
        %v5607 = vpop.f32.mrf.mxu0
        %v5608 = vadd.f32 0.0, %v5607
        %5609 = vmatmul.bf16.gmra.mxu0 %v5504
        %v5610 = vpop.f32.mrf.mxu0
        %v5611 = vadd.f32 0.0, %v5610
        %v5612 = vpop.f32.mrf.mxu0
        %v5613 = vadd.f32 0.0, %v5612
        %5614 = vmatmul.bf16.gmra.mxu0 %v5506
        %v5615 = vpop.f32.mrf.mxu0
        %v5616 = vadd.f32 0.0, %v5615
        %v5617 = vpop.f32.mrf.mxu0
        %v5618 = vadd.f32 0.0, %v5617
        %5619 = vmatmul.bf16.gmra.mxu0 %v5508
        %v5620 = vpop.f32.mrf.mxu0
        %v5621 = vadd.f32 0.0, %v5620
        %v5622 = vpop.f32.mrf.mxu0
        %v5623 = vadd.f32 0.0, %v5622
        %5624 = vmatmul.bf16.gmra.mxu0 %v5510
        %v5625 = vpop.f32.mrf.mxu0
        %v5626 = vadd.f32 0.0, %v5625
        %v5627 = vpop.f32.mrf.mxu0
        %v5628 = vadd.f32 0.0, %v5627
        %5629 = vmatmul.bf16.gmra.mxu0 %v5512
        %v5630 = vpop.f32.mrf.mxu0
        %v5631 = vadd.f32 0.0, %v5630
        %v5632 = vpop.f32.mrf.mxu0
        %v5633 = vadd.f32 0.0, %v5632
        %5634 = vdwg.mxu0
        %5635 = vmatpush.bf16.msra.mxu0 %v1101
        %5636 = vmatpush.bf16.msra.mxu0 %v1100
        %5637 = vmatpush.bf16.msra.mxu0 %v1099
        %5638 = vmatpush.bf16.msra.mxu0 %v1098
        %5639 = vmatpush.bf16.msra.mxu0 %v1097
        %5640 = vmatpush.bf16.msra.mxu0 %v1096
        %5641 = vmatpush.bf16.msra.mxu0 %v1095
        %5642 = vmatpush.bf16.msra.mxu0 %v1094
        %5643 = vmatmul.bf16.gmra.mxu0 %v5483
        %v5644 = vpop.f32.mrf.mxu0
        %v5645 = vadd.f32 %v5556, %v5644
        %v5646 = vpop.f32.mrf.mxu0
        %v5647 = vadd.f32 %v5558, %v5646
        %5648 = vmatmul.bf16.gmra.mxu0 %v5485
        %v5649 = vpop.f32.mrf.mxu0
        %v5650 = vadd.f32 %v5561, %v5649
        %v5651 = vpop.f32.mrf.mxu0
        %v5652 = vadd.f32 %v5563, %v5651
        %5653 = vmatmul.bf16.gmra.mxu0 %v5487
        %v5654 = vpop.f32.mrf.mxu0
        %v5655 = vadd.f32 %v5566, %v5654
        %v5656 = vpop.f32.mrf.mxu0
        %v5657 = vadd.f32 %v5568, %v5656
        %5658 = vmatmul.bf16.gmra.mxu0 %v5489
        %v5659 = vpop.f32.mrf.mxu0
        %v5660 = vadd.f32 %v5571, %v5659
        %v5661 = vpop.f32.mrf.mxu0
        %v5662 = vadd.f32 %v5573, %v5661
        %5663 = vmatmul.bf16.gmra.mxu0 %v5491
        %v5664 = vpop.f32.mrf.mxu0
        %v5665 = vadd.f32 %v5576, %v5664
        %v5666 = vpop.f32.mrf.mxu0
        %v5667 = vadd.f32 %v5578, %v5666
        %5668 = vmatmul.bf16.gmra.mxu0 %v5493
        %v5669 = vpop.f32.mrf.mxu0
        %v5670 = vadd.f32 %v5581, %v5669
        %v5671 = vpop.f32.mrf.mxu0
        %v5672 = vadd.f32 %v5583, %v5671
        %5673 = vmatmul.bf16.gmra.mxu0 %v5495
        %v5674 = vpop.f32.mrf.mxu0
        %v5675 = vadd.f32 %v5586, %v5674
        %v5676 = vpop.f32.mrf.mxu0
        %v5677 = vadd.f32 %v5588, %v5676
        %5678 = vmatmul.bf16.gmra.mxu0 %v5497
        %v5679 = vpop.f32.mrf.mxu0
        %v5680 = vadd.f32 %v5591, %v5679
        %v5681 = vpop.f32.mrf.mxu0
        %v5682 = vadd.f32 %v5593, %v5681
        %5683 = vmatmul.bf16.gmra.mxu0 %v5499
        %v5684 = vpop.f32.mrf.mxu0
        %v5685 = vadd.f32 %v5596, %v5684
        %v5686 = vpop.f32.mrf.mxu0
        %v5687 = vadd.f32 %v5598, %v5686
        %5688 = vmatmul.bf16.gmra.mxu0 %v5501
        %v5689 = vpop.f32.mrf.mxu0
        %v5690 = vadd.f32 %v5601, %v5689
        %v5691 = vpop.f32.mrf.mxu0
        %v5692 = vadd.f32 %v5603, %v5691
        %5693 = vmatmul.bf16.gmra.mxu0 %v5503
        %v5694 = vpop.f32.mrf.mxu0
        %v5695 = vadd.f32 %v5606, %v5694
        %v5696 = vpop.f32.mrf.mxu0
        %v5697 = vadd.f32 %v5608, %v5696
        %5698 = vmatmul.bf16.gmra.mxu0 %v5505
        %v5699 = vpop.f32.mrf.mxu0
        %v5700 = vadd.f32 %v5611, %v5699
        %v5701 = vpop.f32.mrf.mxu0
        %v5702 = vadd.f32 %v5613, %v5701
        %5703 = vmatmul.bf16.gmra.mxu0 %v5507
        %v5704 = vpop.f32.mrf.mxu0
        %v5705 = vadd.f32 %v5616, %v5704
        %v5706 = vpop.f32.mrf.mxu0
        %v5707 = vadd.f32 %v5618, %v5706
        %5708 = vmatmul.bf16.gmra.mxu0 %v5509
        %v5709 = vpop.f32.mrf.mxu0
        %v5710 = vadd.f32 %v5621, %v5709
        %v5711 = vpop.f32.mrf.mxu0
        %v5712 = vadd.f32 %v5623, %v5711
        %5713 = vmatmul.bf16.gmra.mxu0 %v5511
        %v5714 = vpop.f32.mrf.mxu0
        %v5715 = vadd.f32 %v5626, %v5714
        %v5716 = vpop.f32.mrf.mxu0
        %v5717 = vadd.f32 %v5628, %v5716
        %5718 = vmatmul.bf16.gmra.mxu0 %v5513
        %v5719 = vpop.f32.mrf.mxu0
        %v5720 = vadd.f32 %v5631, %v5719
        %v5721 = vpop.f32.mrf.mxu0
        %v5722 = vadd.f32 %v5633, %v5721
        %5723 = vdwg.mxu0
        %v5724 = vpack.c.bf16 %v5647, %v5645
        %v5725 = vpack.c.bf16 %v5652, %v5650
        %v5726 = vpack.c.bf16 %v5657, %v5655
        %v5727 = vpack.c.bf16 %v5662, %v5660
        %v5728 = vpack.c.bf16 %v5667, %v5665
        %v5729 = vpack.c.bf16 %v5672, %v5670
        %v5730 = vpack.c.bf16 %v5677, %v5675
        %v5731 = vpack.c.bf16 %v5682, %v5680
        %v5732 = vpack.c.bf16 %v5687, %v5685
        %v5733 = vpack.c.bf16 %v5692, %v5690
        %v5734 = vpack.c.bf16 %v5697, %v5695
        %v5735 = vpack.c.bf16 %v5702, %v5700
        %v5736 = vpack.c.bf16 %v5707, %v5705
        %v5737 = vpack.c.bf16 %v5712, %v5710
        %v5738 = vpack.c.bf16 %v5717, %v5715
        %v5739 = vpack.c.bf16 %v5722, %v5720
        %s5740 = scalar_lea.vmem [#allocation5], 16
        %v5741 = vld [vmem:[%s5740] sm:$0x3]
        %v5743 = vsel %vm1702, %v5724, 0
        %v5746 = vsel %vm1702, %v5725, 0
        %v5749 = vsel %vm1702, %v5726, 0
        %v5752 = vsel %vm1702, %v5727, 0
        %v5755 = vsel %vm1702, %v5728, 0
        %v5758 = vsel %vm1702, %v5729, 0
        %v5761 = vsel %vm1702, %v5730, 0
        %v5764 = vsel %vm1702, %v5731, 0
        %v5767 = vsel %vm1702, %v5732, 0
        %v5770 = vsel %vm1702, %v5733, 0
        %v5773 = vsel %vm1702, %v5734, 0
        %v5776 = vsel %vm1702, %v5735, 0
        %v5779 = vsel %vm1702, %v5736, 0
        %v5782 = vsel %vm1702, %v5737, 0
        %v5785 = vsel %vm1702, %v5738, 0
        %v5788 = vsel %vm1702, %v5739, 0
        %v5791 = vand.u32 %v5741, %v1754
        %5793 = vmatpush.bf16.msra.mxu0 0
        %5794 = vmatpush.bf16.msra.mxu0 0
        %5795 = vmatpush.bf16.msra.mxu0 0
        %5796 = vmatpush.bf16.msra.mxu0 0
        %5797 = vmatpush.bf16.msra.mxu0 0
        %5798 = vmatpush.bf16.msra.mxu0 0
        %5799 = vmatpush.bf16.msra.mxu0 0
        %5800 = vmatpush.bf16.msra.mxu0 %v5791
        %5801 = vmatmul.bf16.gmra.mxu0 %v5743
        %v5802 = vpop.f32.mrf.mxu0
        %v5803 = vadd.f32 0.0, %v5802
        %v5804 = vpop.f32.mrf.mxu0
        %v5805 = vadd.f32 0.0, %v5804
        %5806 = vmatmul.bf16.gmra.mxu0 %v5746
        %v5807 = vpop.f32.mrf.mxu0
        %v5808 = vadd.f32 0.0, %v5807
        %v5809 = vpop.f32.mrf.mxu0
        %v5810 = vadd.f32 0.0, %v5809
        %5811 = vmatmul.bf16.gmra.mxu0 %v5749
        %v5812 = vpop.f32.mrf.mxu0
        %v5813 = vadd.f32 0.0, %v5812
        %v5814 = vpop.f32.mrf.mxu0
        %v5815 = vadd.f32 0.0, %v5814
        %5816 = vmatmul.bf16.gmra.mxu0 %v5752
        %v5817 = vpop.f32.mrf.mxu0
        %v5818 = vadd.f32 0.0, %v5817
        %v5819 = vpop.f32.mrf.mxu0
        %v5820 = vadd.f32 0.0, %v5819
        %5821 = vmatmul.bf16.gmra.mxu0 %v5755
        %v5822 = vpop.f32.mrf.mxu0
        %v5823 = vadd.f32 0.0, %v5822
        %v5824 = vpop.f32.mrf.mxu0
        %v5825 = vadd.f32 0.0, %v5824
        %5826 = vmatmul.bf16.gmra.mxu0 %v5758
        %v5827 = vpop.f32.mrf.mxu0
        %v5828 = vadd.f32 0.0, %v5827
        %v5829 = vpop.f32.mrf.mxu0
        %v5830 = vadd.f32 0.0, %v5829
        %5831 = vmatmul.bf16.gmra.mxu0 %v5761
        %v5832 = vpop.f32.mrf.mxu0
        %v5833 = vadd.f32 0.0, %v5832
        %v5834 = vpop.f32.mrf.mxu0
        %v5835 = vadd.f32 0.0, %v5834
        %5836 = vmatmul.bf16.gmra.mxu0 %v5764
        %v5837 = vpop.f32.mrf.mxu0
        %v5838 = vadd.f32 0.0, %v5837
        %v5839 = vpop.f32.mrf.mxu0
        %v5840 = vadd.f32 0.0, %v5839
        %5841 = vmatmul.bf16.gmra.mxu0 %v5767
        %v5842 = vpop.f32.mrf.mxu0
        %v5843 = vadd.f32 0.0, %v5842
        %v5844 = vpop.f32.mrf.mxu0
        %v5845 = vadd.f32 0.0, %v5844
        %5846 = vmatmul.bf16.gmra.mxu0 %v5770
        %v5847 = vpop.f32.mrf.mxu0
        %v5848 = vadd.f32 0.0, %v5847
        %v5849 = vpop.f32.mrf.mxu0
        %v5850 = vadd.f32 0.0, %v5849
        %5851 = vmatmul.bf16.gmra.mxu0 %v5773
        %v5852 = vpop.f32.mrf.mxu0
        %v5853 = vadd.f32 0.0, %v5852
        %v5854 = vpop.f32.mrf.mxu0
        %v5855 = vadd.f32 0.0, %v5854
        %5856 = vmatmul.bf16.gmra.mxu0 %v5776
        %v5857 = vpop.f32.mrf.mxu0
        %v5858 = vadd.f32 0.0, %v5857
        %v5859 = vpop.f32.mrf.mxu0
        %v5860 = vadd.f32 0.0, %v5859
        %5861 = vmatmul.bf16.gmra.mxu0 %v5779
        %v5862 = vpop.f32.mrf.mxu0
        %v5863 = vadd.f32 0.0, %v5862
        %v5864 = vpop.f32.mrf.mxu0
        %v5865 = vadd.f32 0.0, %v5864
        %5866 = vmatmul.bf16.gmra.mxu0 %v5782
        %v5867 = vpop.f32.mrf.mxu0
        %v5868 = vadd.f32 0.0, %v5867
        %v5869 = vpop.f32.mrf.mxu0
        %v5870 = vadd.f32 0.0, %v5869
        %5871 = vmatmul.bf16.gmra.mxu0 %v5785
        %v5872 = vpop.f32.mrf.mxu0
        %v5873 = vadd.f32 0.0, %v5872
        %v5874 = vpop.f32.mrf.mxu0
        %v5875 = vadd.f32 0.0, %v5874
        %5876 = vmatmul.bf16.gmra.mxu0 %v5788
        %v5877 = vpop.f32.mrf.mxu0
        %v5878 = vadd.f32 0.0, %v5877
        %v5879 = vpop.f32.mrf.mxu0
        %v5880 = vadd.f32 0.0, %v5879
        %5881 = vdwg.mxu0
        %v5882 = vadd.f32 %v5321, %v5803
        %v5883 = vadd.f32 %v5322, %v5805
        %v5884 = vadd.f32 %v5323, %v5808
        %v5885 = vadd.f32 %v5324, %v5810
        %v5886 = vadd.f32 %v5325, %v5813
        %v5887 = vadd.f32 %v5326, %v5815
        %v5888 = vadd.f32 %v5327, %v5818
        %v5889 = vadd.f32 %v5328, %v5820
        %v5890 = vadd.f32 %v5329, %v5823
        %v5891 = vadd.f32 %v5330, %v5825
        %v5892 = vadd.f32 %v5331, %v5828
        %v5893 = vadd.f32 %v5332, %v5830
        %v5894 = vadd.f32 %v5333, %v5833
        %v5895 = vadd.f32 %v5334, %v5835
        %v5896 = vadd.f32 %v5335, %v5838
        %v5897 = vadd.f32 %v5336, %v5840
        %v5898 = vadd.f32 %v5337, %v5843
        %v5899 = vadd.f32 %v5338, %v5845
        %v5900 = vadd.f32 %v5339, %v5848
        %v5901 = vadd.f32 %v5340, %v5850
        %v5902 = vadd.f32 %v5341, %v5853
        %v5903 = vadd.f32 %v5342, %v5855
        %v5904 = vadd.f32 %v5343, %v5858
        %v5905 = vadd.f32 %v5344, %v5860
        %v5906 = vadd.f32 %v5345, %v5863
        %v5907 = vadd.f32 %v5346, %v5865
        %v5908 = vadd.f32 %v5347, %v5868
        %v5909 = vadd.f32 %v5348, %v5870
        %v5910 = vadd.f32 %v5349, %v5873
        %v5911 = vadd.f32 %v5350, %v5875
        %v5912 = vadd.f32 %v5351, %v5878
        %v5913 = vadd.f32 %v5352, %v5880
        %v5914 = vld [vmem:[#allocation7] sm:$0x1]
        %v5916 = vperm.slane %v5914, 0
        %v5918 = vadd.f32 %v5882, %v5916
        %v5919 = vadd.f32 %v5883, %v5916
        %v5920 = vadd.f32 %v5884, %v5916
        %v5921 = vadd.f32 %v5885, %v5916
        %v5922 = vadd.f32 %v5886, %v5916
        %v5923 = vadd.f32 %v5887, %v5916
        %v5924 = vadd.f32 %v5888, %v5916
        %v5925 = vadd.f32 %v5889, %v5916
        %v5926 = vadd.f32 %v5890, %v5916
        %v5927 = vadd.f32 %v5891, %v5916
        %v5928 = vadd.f32 %v5892, %v5916
        %v5929 = vadd.f32 %v5893, %v5916
        %v5930 = vadd.f32 %v5894, %v5916
        %v5931 = vadd.f32 %v5895, %v5916
        %v5932 = vadd.f32 %v5896, %v5916
        %v5933 = vadd.f32 %v5897, %v5916
        %v5934 = vadd.f32 %v5898, %v5916
        %v5935 = vadd.f32 %v5899, %v5916
        %v5936 = vadd.f32 %v5900, %v5916
        %v5937 = vadd.f32 %v5901, %v5916
        %v5938 = vadd.f32 %v5902, %v5916
        %v5939 = vadd.f32 %v5903, %v5916
        %v5940 = vadd.f32 %v5904, %v5916
        %v5941 = vadd.f32 %v5905, %v5916
        %v5942 = vadd.f32 %v5906, %v5916
        %v5943 = vadd.f32 %v5907, %v5916
        %v5944 = vadd.f32 %v5908, %v5916
        %v5945 = vadd.f32 %v5909, %v5916
        %v5946 = vadd.f32 %v5910, %v5916
        %v5947 = vadd.f32 %v5911, %v5916
        %v5948 = vadd.f32 %v5912, %v5916
        %v5949 = vadd.f32 %v5913, %v5916
        %v5950 = vmax.f32 %v5918, 0.0
        %v5951 = vmax.f32 %v5919, 0.0
        %v5952 = vmax.f32 %v5920, 0.0
        %v5953 = vmax.f32 %v5921, 0.0
        %v5954 = vmax.f32 %v5922, 0.0
        %v5955 = vmax.f32 %v5923, 0.0
        %v5956 = vmax.f32 %v5924, 0.0
        %v5957 = vmax.f32 %v5925, 0.0
        %v5958 = vmax.f32 %v5926, 0.0
        %v5959 = vmax.f32 %v5927, 0.0
        %v5960 = vmax.f32 %v5928, 0.0
        %v5961 = vmax.f32 %v5929, 0.0
        %v5962 = vmax.f32 %v5930, 0.0
        %v5963 = vmax.f32 %v5931, 0.0
        %v5964 = vmax.f32 %v5932, 0.0
        %v5965 = vmax.f32 %v5933, 0.0
        %v5966 = vmax.f32 %v5934, 0.0
        %v5967 = vmax.f32 %v5935, 0.0
        %v5968 = vmax.f32 %v5936, 0.0
        %v5969 = vmax.f32 %v5937, 0.0
        %v5970 = vmax.f32 %v5938, 0.0
        %v5971 = vmax.f32 %v5939, 0.0
        %v5972 = vmax.f32 %v5940, 0.0
        %v5973 = vmax.f32 %v5941, 0.0
        %v5974 = vmax.f32 %v5942, 0.0
        %v5975 = vmax.f32 %v5943, 0.0
        %v5976 = vmax.f32 %v5944, 0.0
        %v5977 = vmax.f32 %v5945, 0.0
        %v5978 = vmax.f32 %v5946, 0.0
        %v5979 = vmax.f32 %v5947, 0.0
        %v5980 = vmax.f32 %v5948, 0.0
        %v5981 = vmax.f32 %v5949, 0.0
        %v5982 = vpack.c.bf16 %v5951, %v5950
        %v5983 = vpack.c.bf16 %v5953, %v5952
        %v5984 = vpack.c.bf16 %v5955, %v5954
        %v5985 = vpack.c.bf16 %v5957, %v5956
        %v5986 = vpack.c.bf16 %v5959, %v5958
        %v5987 = vpack.c.bf16 %v5961, %v5960
        %v5988 = vpack.c.bf16 %v5963, %v5962
        %v5989 = vpack.c.bf16 %v5965, %v5964
        %v5990 = vpack.c.bf16 %v5967, %v5966
        %v5991 = vpack.c.bf16 %v5969, %v5968
        %v5992 = vpack.c.bf16 %v5971, %v5970
        %v5993 = vpack.c.bf16 %v5973, %v5972
        %v5994 = vpack.c.bf16 %v5975, %v5974
        %v5995 = vpack.c.bf16 %v5977, %v5976
        %v5996 = vpack.c.bf16 %v5979, %v5978
        %v5997 = vpack.c.bf16 %v5981, %v5980
        %v5998 = vld [vmem:[#allocation8] sm:$0xff]
        %v5999 = vld [vmem:[#allocation8 + $0x8] sm:$0xff]
        %v6000 = vld [vmem:[#allocation8 + $0x10] sm:$0xff]
        %v6001 = vld [vmem:[#allocation8 + $0x18] sm:$0xff]
        %v6002 = vld [vmem:[#allocation8 + $0x20] sm:$0xff]
        %v6003 = vld [vmem:[#allocation8 + $0x28] sm:$0xff]
        %v6004 = vld [vmem:[#allocation8 + $0x30] sm:$0xff]
        %v6005 = vld [vmem:[#allocation8 + $0x38] sm:$0xff]
        %v6014 = vunpack.c.l.b16 %v5998
        %v6015 = vunpack.c.h.b16 %v5998
        %v6016 = vunpack.c.l.b16 %v5999
        %v6017 = vunpack.c.h.b16 %v5999
        %v6018 = vunpack.c.l.b16 %v6000
        %v6019 = vunpack.c.h.b16 %v6000
        %v6020 = vunpack.c.l.b16 %v6001
        %v6021 = vunpack.c.h.b16 %v6001
        %v6022 = vunpack.c.l.b16 %v6002
        %v6023 = vunpack.c.h.b16 %v6002
        %v6024 = vunpack.c.l.b16 %v6003
        %v6025 = vunpack.c.h.b16 %v6003
        %v6026 = vunpack.c.l.b16 %v6004
        %v6027 = vunpack.c.h.b16 %v6004
        %v6028 = vunpack.c.l.b16 %v6005
        %v6029 = vunpack.c.h.b16 %v6005
        %v6030 = vpack.c.b16 %v6016, %v6014
        %v6031 = vpack.c.b16 %v6017, %v6015
        %v6032 = vpack.c.b16 %v6020, %v6018
        %v6033 = vpack.c.b16 %v6021, %v6019
        %v6034 = vpack.c.b16 %v6024, %v6022
        %v6035 = vpack.c.b16 %v6025, %v6023
        %v6036 = vpack.c.b16 %v6028, %v6026
        %v6037 = vpack.c.b16 %v6029, %v6027
        %6046 = vmatpush.bf16.msra.mxu0 %v5989
        %6047 = vmatpush.bf16.msra.mxu0 %v5988
        %6048 = vmatpush.bf16.msra.mxu0 %v5987
        %6049 = vmatpush.bf16.msra.mxu0 %v5986
        %6050 = vmatpush.bf16.msra.mxu0 %v5985
        %6051 = vmatpush.bf16.msra.mxu0 %v5984
        %6052 = vmatpush.bf16.msra.mxu0 %v5983
        %6053 = vmatpush.bf16.msra.mxu0 %v5982
        %6054 = vmatmul.bf16.gmra.mxu0 %v6030
        %v6055 = vpop.f32.mrf.mxu0
        %v6056 = vadd.f32 0.0, %v6055
        %v6057 = vpop.f32.mrf.mxu0
        %v6058 = vadd.f32 0.0, %v6057
        %6059 = vmatmul.bf16.gmra.mxu0 %v6032
        %v6060 = vpop.f32.mrf.mxu0
        %v6061 = vadd.f32 0.0, %v6060
        %v6062 = vpop.f32.mrf.mxu0
        %v6063 = vadd.f32 0.0, %v6062
        %6064 = vmatmul.bf16.gmra.mxu0 %v6034
        %v6065 = vpop.f32.mrf.mxu0
        %v6066 = vadd.f32 0.0, %v6065
        %v6067 = vpop.f32.mrf.mxu0
        %v6068 = vadd.f32 0.0, %v6067
        %6069 = vmatmul.bf16.gmra.mxu0 %v6036
        %v6070 = vpop.f32.mrf.mxu0
        %v6071 = vadd.f32 0.0, %v6070
        %v6072 = vpop.f32.mrf.mxu0
        %v6073 = vadd.f32 0.0, %v6072
        %6074 = vdwg.mxu0
        %6075 = vmatpush.bf16.msra.mxu0 %v5997
        %6076 = vmatpush.bf16.msra.mxu0 %v5996
        %6077 = vmatpush.bf16.msra.mxu0 %v5995
        %6078 = vmatpush.bf16.msra.mxu0 %v5994
        %6079 = vmatpush.bf16.msra.mxu0 %v5993
        %6080 = vmatpush.bf16.msra.mxu0 %v5992
        %6081 = vmatpush.bf16.msra.mxu0 %v5991
        %6082 = vmatpush.bf16.msra.mxu0 %v5990
        %6083 = vmatmul.bf16.gmra.mxu0 %v6031
        %v6084 = vpop.f32.mrf.mxu0
        %v6085 = vadd.f32 %v6056, %v6084
        %v6086 = vpop.f32.mrf.mxu0
        %v6087 = vadd.f32 %v6058, %v6086
        %6088 = vmatmul.bf16.gmra.mxu0 %v6033
        %v6089 = vpop.f32.mrf.mxu0
        %v6090 = vadd.f32 %v6061, %v6089
        %v6091 = vpop.f32.mrf.mxu0
        %v6092 = vadd.f32 %v6063, %v6091
        %6093 = vmatmul.bf16.gmra.mxu0 %v6035
        %v6094 = vpop.f32.mrf.mxu0
        %v6095 = vadd.f32 %v6066, %v6094
        %v6096 = vpop.f32.mrf.mxu0
        %v6097 = vadd.f32 %v6068, %v6096
        %6098 = vmatmul.bf16.gmra.mxu0 %v6037
        %v6099 = vpop.f32.mrf.mxu0
        %v6100 = vadd.f32 %v6071, %v6099
        %v6101 = vpop.f32.mrf.mxu0
        %v6102 = vadd.f32 %v6073, %v6101
        %6103 = vdwg.mxu0
        %v6104 = vpack.c.bf16 %v6087, %v6085
        %v6105 = vpack.c.bf16 %v6092, %v6090
        %v6106 = vpack.c.bf16 %v6097, %v6095
        %v6107 = vpack.c.bf16 %v6102, %v6100
        %v6108 = vld [vmem:[#allocation10] sm:$0xf]
        %v6109 = vld [vmem:[#allocation10 + $0x4] sm:$0xf]
        %v6110 = vld [vmem:[#allocation10 + $0x8] sm:$0xf]
        %v6111 = vld [vmem:[#allocation10 + $0xc] sm:$0xf]
        %v6112 = vld [vmem:[#allocation10 + $0x10] sm:$0xf]
        %v6113 = vld [vmem:[#allocation10 + $0x14] sm:$0xf]
        %v6114 = vld [vmem:[#allocation10 + $0x18] sm:$0xf]
        %v6115 = vld [vmem:[#allocation10 + $0x1c] sm:$0xf]
        %s6116 = scalar_lea.vmem [#allocation8], 64
        %v6117 = vld [vmem:[%s6116] sm:$0xff]
        %v6118 = vld [vmem:[%s6116 + $0x8] sm:$0xff]
        %v6119 = vld [vmem:[%s6116 + $0x10] sm:$0xff]
        %v6120 = vld [vmem:[%s6116 + $0x18] sm:$0xff]
        %v6121 = vld [vmem:[%s6116 + $0x20] sm:$0xff]
        %v6122 = vld [vmem:[%s6116 + $0x28] sm:$0xff]
        %v6123 = vld [vmem:[%s6116 + $0x30] sm:$0xff]
        %v6124 = vld [vmem:[%s6116 + $0x38] sm:$0xff]
        %v6133 = vunpack.c.l.b16 %v6117
        %v6134 = vunpack.c.h.b16 %v6117
        %v6135 = vunpack.c.l.b16 %v6118
        %v6136 = vunpack.c.h.b16 %v6118
        %v6137 = vunpack.c.l.b16 %v6119
        %v6138 = vunpack.c.h.b16 %v6119
        %v6139 = vunpack.c.l.b16 %v6120
        %v6140 = vunpack.c.h.b16 %v6120
        %v6141 = vunpack.c.l.b16 %v6121
        %v6142 = vunpack.c.h.b16 %v6121
        %v6143 = vunpack.c.l.b16 %v6122
        %v6144 = vunpack.c.h.b16 %v6122
        %v6145 = vunpack.c.l.b16 %v6123
        %v6146 = vunpack.c.h.b16 %v6123
        %v6147 = vunpack.c.l.b16 %v6124
        %v6148 = vunpack.c.h.b16 %v6124
        %v6149 = vpack.c.b16 %v6135, %v6133
        %v6150 = vpack.c.b16 %v6136, %v6134
        %v6151 = vpack.c.b16 %v6139, %v6137
        %v6152 = vpack.c.b16 %v6140, %v6138
        %v6153 = vpack.c.b16 %v6143, %v6141
        %v6154 = vpack.c.b16 %v6144, %v6142
        %v6155 = vpack.c.b16 %v6147, %v6145
        %v6156 = vpack.c.b16 %v6148, %v6146
        %6165 = vmatpush.bf16.msra.mxu0 %v5989
        %6166 = vmatpush.bf16.msra.mxu0 %v5988
        %6167 = vmatpush.bf16.msra.mxu0 %v5987
        %6168 = vmatpush.bf16.msra.mxu0 %v5986
        %6169 = vmatpush.bf16.msra.mxu0 %v5985
        %6170 = vmatpush.bf16.msra.mxu0 %v5984
        %6171 = vmatpush.bf16.msra.mxu0 %v5983
        %6172 = vmatpush.bf16.msra.mxu0 %v5982
        %6173 = vmatmul.bf16.gmra.mxu0 %v6149
        %v6174 = vpop.f32.mrf.mxu0
        %v6175 = vadd.f32 0.0, %v6174
        %v6176 = vpop.f32.mrf.mxu0
        %v6177 = vadd.f32 0.0, %v6176
        %6178 = vmatmul.bf16.gmra.mxu0 %v6151
        %v6179 = vpop.f32.mrf.mxu0
        %v6180 = vadd.f32 0.0, %v6179
        %v6181 = vpop.f32.mrf.mxu0
        %v6182 = vadd.f32 0.0, %v6181
        %6183 = vmatmul.bf16.gmra.mxu0 %v6153
        %v6184 = vpop.f32.mrf.mxu0
        %v6185 = vadd.f32 0.0, %v6184
        %v6186 = vpop.f32.mrf.mxu0
        %v6187 = vadd.f32 0.0, %v6186
        %6188 = vmatmul.bf16.gmra.mxu0 %v6155
        %v6189 = vpop.f32.mrf.mxu0
        %v6190 = vadd.f32 0.0, %v6189
        %v6191 = vpop.f32.mrf.mxu0
        %v6192 = vadd.f32 0.0, %v6191
        %6193 = vdwg.mxu0
        %6194 = vmatpush.bf16.msra.mxu0 %v5997
        %6195 = vmatpush.bf16.msra.mxu0 %v5996
        %6196 = vmatpush.bf16.msra.mxu0 %v5995
        %6197 = vmatpush.bf16.msra.mxu0 %v5994
        %6198 = vmatpush.bf16.msra.mxu0 %v5993
        %6199 = vmatpush.bf16.msra.mxu0 %v5992
        %6200 = vmatpush.bf16.msra.mxu0 %v5991
        %6201 = vmatpush.bf16.msra.mxu0 %v5990
        %6202 = vmatmul.bf16.gmra.mxu0 %v6150
        %v6203 = vpop.f32.mrf.mxu0
        %v6204 = vadd.f32 %v6175, %v6203
        %v6205 = vpop.f32.mrf.mxu0
        %v6206 = vadd.f32 %v6177, %v6205
        %6207 = vmatmul.bf16.gmra.mxu0 %v6152
        %v6208 = vpop.f32.mrf.mxu0
        %v6209 = vadd.f32 %v6180, %v6208
        %v6210 = vpop.f32.mrf.mxu0
        %v6211 = vadd.f32 %v6182, %v6210
        %6212 = vmatmul.bf16.gmra.mxu0 %v6154
        %v6213 = vpop.f32.mrf.mxu0
        %v6214 = vadd.f32 %v6185, %v6213
        %v6215 = vpop.f32.mrf.mxu0
        %v6216 = vadd.f32 %v6187, %v6215
        %6217 = vmatmul.bf16.gmra.mxu0 %v6156
        %v6218 = vpop.f32.mrf.mxu0
        %v6219 = vadd.f32 %v6190, %v6218
        %v6220 = vpop.f32.mrf.mxu0
        %v6221 = vadd.f32 %v6192, %v6220
        %6222 = vdwg.mxu0
        %v6223 = vpack.c.bf16 %v6206, %v6204
        %v6224 = vpack.c.bf16 %v6211, %v6209
        %v6225 = vpack.c.bf16 %v6216, %v6214
        %v6226 = vpack.c.bf16 %v6221, %v6219
        %s6227 = scalar_lea.vmem [#allocation10], 32
        %v6228 = vld [vmem:[%s6227] sm:$0xf]
        %v6229 = vld [vmem:[%s6227 + $0x4] sm:$0xf]
        %v6230 = vld [vmem:[%s6227 + $0x8] sm:$0xf]
        %v6231 = vld [vmem:[%s6227 + $0xc] sm:$0xf]
        %v6232 = vld [vmem:[%s6227 + $0x10] sm:$0xf]
        %v6233 = vld [vmem:[%s6227 + $0x14] sm:$0xf]
        %v6234 = vld [vmem:[%s6227 + $0x18] sm:$0xf]
        %v6235 = vld [vmem:[%s6227 + $0x1c] sm:$0xf]
        %v6244 = vunpack.c.l.b16 %v6228
        %v6245 = vunpack.c.l.b16 %v6229
        %v6246 = vunpack.c.l.b16 %v6230
        %v6247 = vunpack.c.l.b16 %v6231
        %v6248 = vunpack.c.l.b16 %v6232
        %v6249 = vunpack.c.l.b16 %v6233
        %v6250 = vunpack.c.l.b16 %v6234
        %v6251 = vunpack.c.l.b16 %v6235
        %v6252 = vpack.c.b16 %v6245, %v6244
        %v6253 = vpack.c.b16 %v6247, %v6246
        %v6254 = vpack.c.b16 %v6249, %v6248
        %v6255 = vpack.c.b16 %v6251, %v6250
        %vm6260 = vcmask 523264
        %v6262 = vsel %vm6260, %v6223, 0
        %v6265 = vsel %vm6260, %v6224, 0
        %v6268 = vsel %vm6260, %v6225, 0
        %v6271 = vsel %vm6260, %v6226, 0
        %6273 = vmatpush.bf16.msra.mxu0 0
        %6274 = vmatpush.bf16.msra.mxu0 0
        %6275 = vmatpush.bf16.msra.mxu0 0
        %6276 = vmatpush.bf16.msra.mxu0 0
        %6277 = vmatpush.bf16.msra.mxu0 %v6255
        %6278 = vmatpush.bf16.msra.mxu0 %v6254
        %6279 = vmatpush.bf16.msra.mxu0 %v6253
        %6280 = vmatpush.bf16.msra.mxu0 %v6252
        %6281 = vmatmul.bf16.gmra.mxu0 %v6262
        %v6282 = vpop.f32.mrf.mxu0
        %v6283 = vadd.f32 0.0, %v6282
        %v6284 = vpop.f32.mrf.mxu0
        %v6285 = vadd.f32 0.0, %v6284
        %6286 = vmatmul.bf16.gmra.mxu0 %v6265
        %v6287 = vpop.f32.mrf.mxu0
        %v6288 = vadd.f32 0.0, %v6287
        %v6289 = vpop.f32.mrf.mxu0
        %v6290 = vadd.f32 0.0, %v6289
        %6291 = vmatmul.bf16.gmra.mxu0 %v6268
        %v6292 = vpop.f32.mrf.mxu0
        %v6293 = vadd.f32 0.0, %v6292
        %v6294 = vpop.f32.mrf.mxu0
        %v6295 = vadd.f32 0.0, %v6294
        %6296 = vmatmul.bf16.gmra.mxu0 %v6271
        %v6297 = vpop.f32.mrf.mxu0
        %v6298 = vadd.f32 0.0, %v6297
        %v6299 = vpop.f32.mrf.mxu0
        %v6300 = vadd.f32 0.0, %v6299
        %6301 = vdwg.mxu0
        %v6310 = vunpack.c.l.b16 %v6108
        %v6311 = vunpack.c.l.b16 %v6109
        %v6312 = vunpack.c.l.b16 %v6110
        %v6313 = vunpack.c.l.b16 %v6111
        %v6314 = vunpack.c.l.b16 %v6112
        %v6315 = vunpack.c.l.b16 %v6113
        %v6316 = vunpack.c.l.b16 %v6114
        %v6317 = vunpack.c.l.b16 %v6115
        %v6318 = vpack.c.b16 %v6311, %v6310
        %v6319 = vpack.c.b16 %v6313, %v6312
        %v6320 = vpack.c.b16 %v6315, %v6314
        %v6321 = vpack.c.b16 %v6317, %v6316
        %v6327 = vsel %vm6260, %v6104, 0
        %v6330 = vsel %vm6260, %v6105, 0
        %v6333 = vsel %vm6260, %v6106, 0
        %v6336 = vsel %vm6260, %v6107, 0
        %6338 = vmatpush.bf16.msra.mxu0 0
        %6339 = vmatpush.bf16.msra.mxu0 0
        %6340 = vmatpush.bf16.msra.mxu0 0
        %6341 = vmatpush.bf16.msra.mxu0 0
        %6342 = vmatpush.bf16.msra.mxu0 %v6321
        %6343 = vmatpush.bf16.msra.mxu0 %v6320
        %6344 = vmatpush.bf16.msra.mxu0 %v6319
        %6345 = vmatpush.bf16.msra.mxu0 %v6318
        %6346 = vmatmul.bf16.gmra.mxu0 %v6327
        %v6347 = vpop.f32.mrf.mxu0
        %v6348 = vadd.f32 %v6283, %v6347
        %v6349 = vpop.f32.mrf.mxu0
        %v6350 = vadd.f32 %v6285, %v6349
        %6351 = vmatmul.bf16.gmra.mxu0 %v6330
        %v6352 = vpop.f32.mrf.mxu0
        %v6353 = vadd.f32 %v6288, %v6352
        %v6354 = vpop.f32.mrf.mxu0
        %v6355 = vadd.f32 %v6290, %v6354
        %6356 = vmatmul.bf16.gmra.mxu0 %v6333
        %v6357 = vpop.f32.mrf.mxu0
        %v6358 = vadd.f32 %v6293, %v6357
        %v6359 = vpop.f32.mrf.mxu0
        %v6360 = vadd.f32 %v6295, %v6359
        %6361 = vmatmul.bf16.gmra.mxu0 %v6336
        %v6362 = vpop.f32.mrf.mxu0
        %v6363 = vadd.f32 %v6298, %v6362
        %v6364 = vpop.f32.mrf.mxu0
        %v6365 = vadd.f32 %v6300, %v6364
        %6366 = vdwg.mxu0
        %s6367 = scalar_lea.vmem [#allocation8], 128
        %v6368 = vld [vmem:[%s6367] sm:$0xff]
        %v6369 = vld [vmem:[%s6367 + $0x8] sm:$0xff]
        %v6370 = vld [vmem:[%s6367 + $0x10] sm:$0xff]
        %v6371 = vld [vmem:[%s6367 + $0x18] sm:$0xff]
        %v6372 = vld [vmem:[%s6367 + $0x20] sm:$0xff]
        %v6373 = vld [vmem:[%s6367 + $0x28] sm:$0xff]
        %v6374 = vld [vmem:[%s6367 + $0x30] sm:$0xff]
        %v6375 = vld [vmem:[%s6367 + $0x38] sm:$0xff]
        %v6384 = vunpack.c.l.b16 %v6368
        %v6385 = vunpack.c.h.b16 %v6368
        %v6386 = vunpack.c.l.b16 %v6369
        %v6387 = vunpack.c.h.b16 %v6369
        %v6388 = vunpack.c.l.b16 %v6370
        %v6389 = vunpack.c.h.b16 %v6370
        %v6390 = vunpack.c.l.b16 %v6371
        %v6391 = vunpack.c.h.b16 %v6371
        %v6392 = vunpack.c.l.b16 %v6372
        %v6393 = vunpack.c.h.b16 %v6372
        %v6394 = vunpack.c.l.b16 %v6373
        %v6395 = vunpack.c.h.b16 %v6373
        %v6396 = vunpack.c.l.b16 %v6374
        %v6397 = vunpack.c.h.b16 %v6374
        %v6398 = vunpack.c.l.b16 %v6375
        %v6399 = vunpack.c.h.b16 %v6375
        %v6400 = vpack.c.b16 %v6386, %v6384
        %v6401 = vpack.c.b16 %v6387, %v6385
        %v6402 = vpack.c.b16 %v6390, %v6388
        %v6403 = vpack.c.b16 %v6391, %v6389
        %v6404 = vpack.c.b16 %v6394, %v6392
        %v6405 = vpack.c.b16 %v6395, %v6393
        %v6406 = vpack.c.b16 %v6398, %v6396
        %v6407 = vpack.c.b16 %v6399, %v6397
        %6416 = vmatpush.bf16.msra.mxu0 %v5989
        %6417 = vmatpush.bf16.msra.mxu0 %v5988
        %6418 = vmatpush.bf16.msra.mxu0 %v5987
        %6419 = vmatpush.bf16.msra.mxu0 %v5986
        %6420 = vmatpush.bf16.msra.mxu0 %v5985
        %6421 = vmatpush.bf16.msra.mxu0 %v5984
        %6422 = vmatpush.bf16.msra.mxu0 %v5983
        %6423 = vmatpush.bf16.msra.mxu0 %v5982
        %6424 = vmatmul.bf16.gmra.mxu0 %v6400
        %v6425 = vpop.f32.mrf.mxu0
        %v6426 = vadd.f32 0.0, %v6425
        %v6427 = vpop.f32.mrf.mxu0
        %v6428 = vadd.f32 0.0, %v6427
        %6429 = vmatmul.bf16.gmra.mxu0 %v6402
        %v6430 = vpop.f32.mrf.mxu0
        %v6431 = vadd.f32 0.0, %v6430
        %v6432 = vpop.f32.mrf.mxu0
        %v6433 = vadd.f32 0.0, %v6432
        %6434 = vmatmul.bf16.gmra.mxu0 %v6404
        %v6435 = vpop.f32.mrf.mxu0
        %v6436 = vadd.f32 0.0, %v6435
        %v6437 = vpop.f32.mrf.mxu0
        %v6438 = vadd.f32 0.0, %v6437
        %6439 = vmatmul.bf16.gmra.mxu0 %v6406
        %v6440 = vpop.f32.mrf.mxu0
        %v6441 = vadd.f32 0.0, %v6440
        %v6442 = vpop.f32.mrf.mxu0
        %v6443 = vadd.f32 0.0, %v6442
        %6444 = vdwg.mxu0
        %6445 = vmatpush.bf16.msra.mxu0 %v5997
        %6446 = vmatpush.bf16.msra.mxu0 %v5996
        %6447 = vmatpush.bf16.msra.mxu0 %v5995
        %6448 = vmatpush.bf16.msra.mxu0 %v5994
        %6449 = vmatpush.bf16.msra.mxu0 %v5993
        %6450 = vmatpush.bf16.msra.mxu0 %v5992
        %6451 = vmatpush.bf16.msra.mxu0 %v5991
        %6452 = vmatpush.bf16.msra.mxu0 %v5990
        %6453 = vmatmul.bf16.gmra.mxu0 %v6401
        %v6454 = vpop.f32.mrf.mxu0
        %v6455 = vadd.f32 %v6426, %v6454
        %v6456 = vpop.f32.mrf.mxu0
        %v6457 = vadd.f32 %v6428, %v6456
        %6458 = vmatmul.bf16.gmra.mxu0 %v6403
        %v6459 = vpop.f32.mrf.mxu0
        %v6460 = vadd.f32 %v6431, %v6459
        %v6461 = vpop.f32.mrf.mxu0
        %v6462 = vadd.f32 %v6433, %v6461
        %6463 = vmatmul.bf16.gmra.mxu0 %v6405
        %v6464 = vpop.f32.mrf.mxu0
        %v6465 = vadd.f32 %v6436, %v6464
        %v6466 = vpop.f32.mrf.mxu0
        %v6467 = vadd.f32 %v6438, %v6466
        %6468 = vmatmul.bf16.gmra.mxu0 %v6407
        %v6469 = vpop.f32.mrf.mxu0
        %v6470 = vadd.f32 %v6441, %v6469
        %v6471 = vpop.f32.mrf.mxu0
        %v6472 = vadd.f32 %v6443, %v6471
        %6473 = vdwg.mxu0
        %v6474 = vpack.c.bf16 %v6457, %v6455
        %v6475 = vpack.c.bf16 %v6462, %v6460
        %v6476 = vpack.c.bf16 %v6467, %v6465
        %v6477 = vpack.c.bf16 %v6472, %v6470
        %s6478 = scalar_lea.vmem [#allocation10], 64
        %v6479 = vld [vmem:[%s6478] sm:$0xf]
        %v6480 = vld [vmem:[%s6478 + $0x4] sm:$0xf]
        %v6481 = vld [vmem:[%s6478 + $0x8] sm:$0xf]
        %v6482 = vld [vmem:[%s6478 + $0xc] sm:$0xf]
        %v6483 = vld [vmem:[%s6478 + $0x10] sm:$0xf]
        %v6484 = vld [vmem:[%s6478 + $0x14] sm:$0xf]
        %v6485 = vld [vmem:[%s6478 + $0x18] sm:$0xf]
        %v6486 = vld [vmem:[%s6478 + $0x1c] sm:$0xf]
        %v6495 = vunpack.c.l.b16 %v6479
        %v6496 = vunpack.c.l.b16 %v6480
        %v6497 = vunpack.c.l.b16 %v6481
        %v6498 = vunpack.c.l.b16 %v6482
        %v6499 = vunpack.c.l.b16 %v6483
        %v6500 = vunpack.c.l.b16 %v6484
        %v6501 = vunpack.c.l.b16 %v6485
        %v6502 = vunpack.c.l.b16 %v6486
        %v6503 = vpack.c.b16 %v6496, %v6495
        %v6504 = vpack.c.b16 %v6498, %v6497
        %v6505 = vpack.c.b16 %v6500, %v6499
        %v6506 = vpack.c.b16 %v6502, %v6501
        %v6512 = vsel %vm6260, %v6474, 0
        %v6515 = vsel %vm6260, %v6475, 0
        %v6518 = vsel %vm6260, %v6476, 0
        %v6521 = vsel %vm6260, %v6477, 0
        %6523 = vmatpush.bf16.msra.mxu0 0
        %6524 = vmatpush.bf16.msra.mxu0 0
        %6525 = vmatpush.bf16.msra.mxu0 0
        %6526 = vmatpush.bf16.msra.mxu0 0
        %6527 = vmatpush.bf16.msra.mxu0 %v6506
        %6528 = vmatpush.bf16.msra.mxu0 %v6505
        %6529 = vmatpush.bf16.msra.mxu0 %v6504
        %6530 = vmatpush.bf16.msra.mxu0 %v6503
        %6531 = vmatmul.bf16.gmra.mxu0 %v6512
        %v6532 = vpop.f32.mrf.mxu0
        %v6533 = vadd.f32 0.0, %v6532
        %v6534 = vpop.f32.mrf.mxu0
        %v6535 = vadd.f32 0.0, %v6534
        %6536 = vmatmul.bf16.gmra.mxu0 %v6515
        %v6537 = vpop.f32.mrf.mxu0
        %v6538 = vadd.f32 0.0, %v6537
        %v6539 = vpop.f32.mrf.mxu0
        %v6540 = vadd.f32 0.0, %v6539
        %6541 = vmatmul.bf16.gmra.mxu0 %v6518
        %v6542 = vpop.f32.mrf.mxu0
        %v6543 = vadd.f32 0.0, %v6542
        %v6544 = vpop.f32.mrf.mxu0
        %v6545 = vadd.f32 0.0, %v6544
        %6546 = vmatmul.bf16.gmra.mxu0 %v6521
        %v6547 = vpop.f32.mrf.mxu0
        %v6548 = vadd.f32 0.0, %v6547
        %v6549 = vpop.f32.mrf.mxu0
        %v6550 = vadd.f32 0.0, %v6549
        %6551 = vdwg.mxu0
        %v6552 = vadd.f32 %v6348, %v6533
        %v6553 = vadd.f32 %v6350, %v6535
        %v6554 = vadd.f32 %v6353, %v6538
        %v6555 = vadd.f32 %v6355, %v6540
        %v6556 = vadd.f32 %v6358, %v6543
        %v6557 = vadd.f32 %v6360, %v6545
        %v6558 = vadd.f32 %v6363, %v6548
        %v6559 = vadd.f32 %v6365, %v6550
        %s6560 = scalar_lea.vmem [#allocation8], 192
        %v6561 = vld [vmem:[%s6560] sm:$0xff]
        %v6562 = vld [vmem:[%s6560 + $0x8] sm:$0xff]
        %v6563 = vld [vmem:[%s6560 + $0x10] sm:$0xff]
        %v6564 = vld [vmem:[%s6560 + $0x18] sm:$0xff]
        %v6565 = vld [vmem:[%s6560 + $0x20] sm:$0xff]
        %v6566 = vld [vmem:[%s6560 + $0x28] sm:$0xff]
        %v6567 = vld [vmem:[%s6560 + $0x30] sm:$0xff]
        %v6568 = vld [vmem:[%s6560 + $0x38] sm:$0xff]
        %v6577 = vunpack.c.l.b16 %v6561
        %v6578 = vunpack.c.h.b16 %v6561
        %v6579 = vunpack.c.l.b16 %v6562
        %v6580 = vunpack.c.h.b16 %v6562
        %v6581 = vunpack.c.l.b16 %v6563
        %v6582 = vunpack.c.h.b16 %v6563
        %v6583 = vunpack.c.l.b16 %v6564
        %v6584 = vunpack.c.h.b16 %v6564
        %v6585 = vunpack.c.l.b16 %v6565
        %v6586 = vunpack.c.h.b16 %v6565
        %v6587 = vunpack.c.l.b16 %v6566
        %v6588 = vunpack.c.h.b16 %v6566
        %v6589 = vunpack.c.l.b16 %v6567
        %v6590 = vunpack.c.h.b16 %v6567
        %v6591 = vunpack.c.l.b16 %v6568
        %v6592 = vunpack.c.h.b16 %v6568
        %v6593 = vpack.c.b16 %v6579, %v6577
        %v6594 = vpack.c.b16 %v6580, %v6578
        %v6595 = vpack.c.b16 %v6583, %v6581
        %v6596 = vpack.c.b16 %v6584, %v6582
        %v6597 = vpack.c.b16 %v6587, %v6585
        %v6598 = vpack.c.b16 %v6588, %v6586
        %v6599 = vpack.c.b16 %v6591, %v6589
        %v6600 = vpack.c.b16 %v6592, %v6590
        %6609 = vmatpush.bf16.msra.mxu0 %v5989
        %6610 = vmatpush.bf16.msra.mxu0 %v5988
        %6611 = vmatpush.bf16.msra.mxu0 %v5987
        %6612 = vmatpush.bf16.msra.mxu0 %v5986
        %6613 = vmatpush.bf16.msra.mxu0 %v5985
        %6614 = vmatpush.bf16.msra.mxu0 %v5984
        %6615 = vmatpush.bf16.msra.mxu0 %v5983
        %6616 = vmatpush.bf16.msra.mxu0 %v5982
        %6617 = vmatmul.bf16.gmra.mxu0 %v6593
        %v6618 = vpop.f32.mrf.mxu0
        %v6619 = vadd.f32 0.0, %v6618
        %v6620 = vpop.f32.mrf.mxu0
        %v6621 = vadd.f32 0.0, %v6620
        %6622 = vmatmul.bf16.gmra.mxu0 %v6595
        %v6623 = vpop.f32.mrf.mxu0
        %v6624 = vadd.f32 0.0, %v6623
        %v6625 = vpop.f32.mrf.mxu0
        %v6626 = vadd.f32 0.0, %v6625
        %6627 = vmatmul.bf16.gmra.mxu0 %v6597
        %v6628 = vpop.f32.mrf.mxu0
        %v6629 = vadd.f32 0.0, %v6628
        %v6630 = vpop.f32.mrf.mxu0
        %v6631 = vadd.f32 0.0, %v6630
        %6632 = vmatmul.bf16.gmra.mxu0 %v6599
        %v6633 = vpop.f32.mrf.mxu0
        %v6634 = vadd.f32 0.0, %v6633
        %v6635 = vpop.f32.mrf.mxu0
        %v6636 = vadd.f32 0.0, %v6635
        %6637 = vdwg.mxu0
        %6638 = vmatpush.bf16.msra.mxu0 %v5997
        %6639 = vmatpush.bf16.msra.mxu0 %v5996
        %6640 = vmatpush.bf16.msra.mxu0 %v5995
        %6641 = vmatpush.bf16.msra.mxu0 %v5994
        %6642 = vmatpush.bf16.msra.mxu0 %v5993
        %6643 = vmatpush.bf16.msra.mxu0 %v5992
        %6644 = vmatpush.bf16.msra.mxu0 %v5991
        %6645 = vmatpush.bf16.msra.mxu0 %v5990
        %6646 = vmatmul.bf16.gmra.mxu0 %v6594
        %v6647 = vpop.f32.mrf.mxu0
        %v6648 = vadd.f32 %v6619, %v6647
        %v6649 = vpop.f32.mrf.mxu0
        %v6650 = vadd.f32 %v6621, %v6649
        %6651 = vmatmul.bf16.gmra.mxu0 %v6596
        %v6652 = vpop.f32.mrf.mxu0
        %v6653 = vadd.f32 %v6624, %v6652
        %v6654 = vpop.f32.mrf.mxu0
        %v6655 = vadd.f32 %v6626, %v6654
        %6656 = vmatmul.bf16.gmra.mxu0 %v6598
        %v6657 = vpop.f32.mrf.mxu0
        %v6658 = vadd.f32 %v6629, %v6657
        %v6659 = vpop.f32.mrf.mxu0
        %v6660 = vadd.f32 %v6631, %v6659
        %6661 = vmatmul.bf16.gmra.mxu0 %v6600
        %v6662 = vpop.f32.mrf.mxu0
        %v6663 = vadd.f32 %v6634, %v6662
        %v6664 = vpop.f32.mrf.mxu0
        %v6665 = vadd.f32 %v6636, %v6664
        %6666 = vdwg.mxu0
        %v6667 = vpack.c.bf16 %v6650, %v6648
        %v6668 = vpack.c.bf16 %v6655, %v6653
        %v6669 = vpack.c.bf16 %v6660, %v6658
        %v6670 = vpack.c.bf16 %v6665, %v6663
        %s6671 = scalar_lea.vmem [#allocation10], 96
        %v6672 = vld [vmem:[%s6671] sm:$0xf]
        %v6673 = vld [vmem:[%s6671 + $0x4] sm:$0xf]
        %v6674 = vld [vmem:[%s6671 + $0x8] sm:$0xf]
        %v6675 = vld [vmem:[%s6671 + $0xc] sm:$0xf]
        %v6676 = vld [vmem:[%s6671 + $0x10] sm:$0xf]
        %v6677 = vld [vmem:[%s6671 + $0x14] sm:$0xf]
        %v6678 = vld [vmem:[%s6671 + $0x18] sm:$0xf]
        %v6679 = vld [vmem:[%s6671 + $0x1c] sm:$0xf]
        %v6688 = vunpack.c.l.b16 %v6672
        %v6689 = vunpack.c.l.b16 %v6673
        %v6690 = vunpack.c.l.b16 %v6674
        %v6691 = vunpack.c.l.b16 %v6675
        %v6692 = vunpack.c.l.b16 %v6676
        %v6693 = vunpack.c.l.b16 %v6677
        %v6694 = vunpack.c.l.b16 %v6678
        %v6695 = vunpack.c.l.b16 %v6679
        %v6696 = vpack.c.b16 %v6689, %v6688
        %v6697 = vpack.c.b16 %v6691, %v6690
        %v6698 = vpack.c.b16 %v6693, %v6692
        %v6699 = vpack.c.b16 %v6695, %v6694
        %v6705 = vsel %vm6260, %v6667, 0
        %v6708 = vsel %vm6260, %v6668, 0
        %v6711 = vsel %vm6260, %v6669, 0
        %v6714 = vsel %vm6260, %v6670, 0
        %6716 = vmatpush.bf16.msra.mxu0 0
        %6717 = vmatpush.bf16.msra.mxu0 0
        %6718 = vmatpush.bf16.msra.mxu0 0
        %6719 = vmatpush.bf16.msra.mxu0 0
        %6720 = vmatpush.bf16.msra.mxu0 %v6699
        %6721 = vmatpush.bf16.msra.mxu0 %v6698
        %6722 = vmatpush.bf16.msra.mxu0 %v6697
        %6723 = vmatpush.bf16.msra.mxu0 %v6696
        %6724 = vmatmul.bf16.gmra.mxu0 %v6705
        %v6725 = vpop.f32.mrf.mxu0
        %v6726 = vadd.f32 0.0, %v6725
        %v6727 = vpop.f32.mrf.mxu0
        %v6728 = vadd.f32 0.0, %v6727
        %6729 = vmatmul.bf16.gmra.mxu0 %v6708
        %v6730 = vpop.f32.mrf.mxu0
        %v6731 = vadd.f32 0.0, %v6730
        %v6732 = vpop.f32.mrf.mxu0
        %v6733 = vadd.f32 0.0, %v6732
        %6734 = vmatmul.bf16.gmra.mxu0 %v6711
        %v6735 = vpop.f32.mrf.mxu0
        %v6736 = vadd.f32 0.0, %v6735
        %v6737 = vpop.f32.mrf.mxu0
        %v6738 = vadd.f32 0.0, %v6737
        %6739 = vmatmul.bf16.gmra.mxu0 %v6714
        %v6740 = vpop.f32.mrf.mxu0
        %v6741 = vadd.f32 0.0, %v6740
        %v6742 = vpop.f32.mrf.mxu0
        %v6743 = vadd.f32 0.0, %v6742
        %6744 = vdwg.mxu0
        %v6745 = vadd.f32 %v6552, %v6726
        %v6746 = vadd.f32 %v6553, %v6728
        %v6747 = vadd.f32 %v6554, %v6731
        %v6748 = vadd.f32 %v6555, %v6733
        %v6749 = vadd.f32 %v6556, %v6736
        %v6750 = vadd.f32 %v6557, %v6738
        %v6751 = vadd.f32 %v6558, %v6741
        %v6752 = vadd.f32 %v6559, %v6743
        %s6753 = scalar_lea.vmem [#allocation8], 256
        %v6754 = vld [vmem:[%s6753] sm:$0xff]
        %v6755 = vld [vmem:[%s6753 + $0x8] sm:$0xff]
        %v6756 = vld [vmem:[%s6753 + $0x10] sm:$0xff]
        %v6757 = vld [vmem:[%s6753 + $0x18] sm:$0xff]
        %v6758 = vld [vmem:[%s6753 + $0x20] sm:$0xff]
        %v6759 = vld [vmem:[%s6753 + $0x28] sm:$0xff]
        %v6760 = vld [vmem:[%s6753 + $0x30] sm:$0xff]
        %v6761 = vld [vmem:[%s6753 + $0x38] sm:$0xff]
        %v6770 = vunpack.c.l.b16 %v6754
        %v6771 = vunpack.c.h.b16 %v6754
        %v6772 = vunpack.c.l.b16 %v6755
        %v6773 = vunpack.c.h.b16 %v6755
        %v6774 = vunpack.c.l.b16 %v6756
        %v6775 = vunpack.c.h.b16 %v6756
        %v6776 = vunpack.c.l.b16 %v6757
        %v6777 = vunpack.c.h.b16 %v6757
        %v6778 = vunpack.c.l.b16 %v6758
        %v6779 = vunpack.c.h.b16 %v6758
        %v6780 = vunpack.c.l.b16 %v6759
        %v6781 = vunpack.c.h.b16 %v6759
        %v6782 = vunpack.c.l.b16 %v6760
        %v6783 = vunpack.c.h.b16 %v6760
        %v6784 = vunpack.c.l.b16 %v6761
        %v6785 = vunpack.c.h.b16 %v6761
        %v6786 = vpack.c.b16 %v6772, %v6770
        %v6787 = vpack.c.b16 %v6773, %v6771
        %v6788 = vpack.c.b16 %v6776, %v6774
        %v6789 = vpack.c.b16 %v6777, %v6775
        %v6790 = vpack.c.b16 %v6780, %v6778
        %v6791 = vpack.c.b16 %v6781, %v6779
        %v6792 = vpack.c.b16 %v6784, %v6782
        %v6793 = vpack.c.b16 %v6785, %v6783
        %6802 = vmatpush.bf16.msra.mxu0 %v5989
        %6803 = vmatpush.bf16.msra.mxu0 %v5988
        %6804 = vmatpush.bf16.msra.mxu0 %v5987
        %6805 = vmatpush.bf16.msra.mxu0 %v5986
        %6806 = vmatpush.bf16.msra.mxu0 %v5985
        %6807 = vmatpush.bf16.msra.mxu0 %v5984
        %6808 = vmatpush.bf16.msra.mxu0 %v5983
        %6809 = vmatpush.bf16.msra.mxu0 %v5982
        %6810 = vmatmul.bf16.gmra.mxu0 %v6786
        %v6811 = vpop.f32.mrf.mxu0
        %v6812 = vadd.f32 0.0, %v6811
        %v6813 = vpop.f32.mrf.mxu0
        %v6814 = vadd.f32 0.0, %v6813
        %6815 = vmatmul.bf16.gmra.mxu0 %v6788
        %v6816 = vpop.f32.mrf.mxu0
        %v6817 = vadd.f32 0.0, %v6816
        %v6818 = vpop.f32.mrf.mxu0
        %v6819 = vadd.f32 0.0, %v6818
        %6820 = vmatmul.bf16.gmra.mxu0 %v6790
        %v6821 = vpop.f32.mrf.mxu0
        %v6822 = vadd.f32 0.0, %v6821
        %v6823 = vpop.f32.mrf.mxu0
        %v6824 = vadd.f32 0.0, %v6823
        %6825 = vmatmul.bf16.gmra.mxu0 %v6792
        %v6826 = vpop.f32.mrf.mxu0
        %v6827 = vadd.f32 0.0, %v6826
        %v6828 = vpop.f32.mrf.mxu0
        %v6829 = vadd.f32 0.0, %v6828
        %6830 = vdwg.mxu0
        %6831 = vmatpush.bf16.msra.mxu0 %v5997
        %6832 = vmatpush.bf16.msra.mxu0 %v5996
        %6833 = vmatpush.bf16.msra.mxu0 %v5995
        %6834 = vmatpush.bf16.msra.mxu0 %v5994
        %6835 = vmatpush.bf16.msra.mxu0 %v5993
        %6836 = vmatpush.bf16.msra.mxu0 %v5992
        %6837 = vmatpush.bf16.msra.mxu0 %v5991
        %6838 = vmatpush.bf16.msra.mxu0 %v5990
        %6839 = vmatmul.bf16.gmra.mxu0 %v6787
        %v6840 = vpop.f32.mrf.mxu0
        %v6841 = vadd.f32 %v6812, %v6840
        %v6842 = vpop.f32.mrf.mxu0
        %v6843 = vadd.f32 %v6814, %v6842
        %6844 = vmatmul.bf16.gmra.mxu0 %v6789
        %v6845 = vpop.f32.mrf.mxu0
        %v6846 = vadd.f32 %v6817, %v6845
        %v6847 = vpop.f32.mrf.mxu0
        %v6848 = vadd.f32 %v6819, %v6847
        %6849 = vmatmul.bf16.gmra.mxu0 %v6791
        %v6850 = vpop.f32.mrf.mxu0
        %v6851 = vadd.f32 %v6822, %v6850
        %v6852 = vpop.f32.mrf.mxu0
        %v6853 = vadd.f32 %v6824, %v6852
        %6854 = vmatmul.bf16.gmra.mxu0 %v6793
        %v6855 = vpop.f32.mrf.mxu0
        %v6856 = vadd.f32 %v6827, %v6855
        %v6857 = vpop.f32.mrf.mxu0
        %v6858 = vadd.f32 %v6829, %v6857
        %6859 = vdwg.mxu0
        %v6860 = vpack.c.bf16 %v6843, %v6841
        %v6861 = vpack.c.bf16 %v6848, %v6846
        %v6862 = vpack.c.bf16 %v6853, %v6851
        %v6863 = vpack.c.bf16 %v6858, %v6856
        %s6864 = scalar_lea.vmem [#allocation10], 128
        %v6865 = vld [vmem:[%s6864] sm:$0xf]
        %v6866 = vld [vmem:[%s6864 + $0x4] sm:$0xf]
        %v6867 = vld [vmem:[%s6864 + $0x8] sm:$0xf]
        %v6868 = vld [vmem:[%s6864 + $0xc] sm:$0xf]
        %v6869 = vld [vmem:[%s6864 + $0x10] sm:$0xf]
        %v6870 = vld [vmem:[%s6864 + $0x14] sm:$0xf]
        %v6871 = vld [vmem:[%s6864 + $0x18] sm:$0xf]
        %v6872 = vld [vmem:[%s6864 + $0x1c] sm:$0xf]
        %v6881 = vunpack.c.l.b16 %v6865
        %v6882 = vunpack.c.l.b16 %v6866
        %v6883 = vunpack.c.l.b16 %v6867
        %v6884 = vunpack.c.l.b16 %v6868
        %v6885 = vunpack.c.l.b16 %v6869
        %v6886 = vunpack.c.l.b16 %v6870
        %v6887 = vunpack.c.l.b16 %v6871
        %v6888 = vunpack.c.l.b16 %v6872
        %v6889 = vpack.c.b16 %v6882, %v6881
        %v6890 = vpack.c.b16 %v6884, %v6883
        %v6891 = vpack.c.b16 %v6886, %v6885
        %v6892 = vpack.c.b16 %v6888, %v6887
        %v6898 = vsel %vm6260, %v6860, 0
        %v6901 = vsel %vm6260, %v6861, 0
        %v6904 = vsel %vm6260, %v6862, 0
        %v6907 = vsel %vm6260, %v6863, 0
        %6909 = vmatpush.bf16.msra.mxu0 0
        %6910 = vmatpush.bf16.msra.mxu0 0
        %6911 = vmatpush.bf16.msra.mxu0 0
        %6912 = vmatpush.bf16.msra.mxu0 0
        %6913 = vmatpush.bf16.msra.mxu0 %v6892
        %6914 = vmatpush.bf16.msra.mxu0 %v6891
        %6915 = vmatpush.bf16.msra.mxu0 %v6890
        %6916 = vmatpush.bf16.msra.mxu0 %v6889
        %6917 = vmatmul.bf16.gmra.mxu0 %v6898
        %v6918 = vpop.f32.mrf.mxu0
        %v6919 = vadd.f32 0.0, %v6918
        %v6920 = vpop.f32.mrf.mxu0
        %v6921 = vadd.f32 0.0, %v6920
        %6922 = vmatmul.bf16.gmra.mxu0 %v6901
        %v6923 = vpop.f32.mrf.mxu0
        %v6924 = vadd.f32 0.0, %v6923
        %v6925 = vpop.f32.mrf.mxu0
        %v6926 = vadd.f32 0.0, %v6925
        %6927 = vmatmul.bf16.gmra.mxu0 %v6904
        %v6928 = vpop.f32.mrf.mxu0
        %v6929 = vadd.f32 0.0, %v6928
        %v6930 = vpop.f32.mrf.mxu0
        %v6931 = vadd.f32 0.0, %v6930
        %6932 = vmatmul.bf16.gmra.mxu0 %v6907
        %v6933 = vpop.f32.mrf.mxu0
        %v6934 = vadd.f32 0.0, %v6933
        %v6935 = vpop.f32.mrf.mxu0
        %v6936 = vadd.f32 0.0, %v6935
        %6937 = vdwg.mxu0
        %v6938 = vadd.f32 %v6745, %v6919
        %v6939 = vadd.f32 %v6746, %v6921
        %v6940 = vadd.f32 %v6747, %v6924
        %v6941 = vadd.f32 %v6748, %v6926
        %v6942 = vadd.f32 %v6749, %v6929
        %v6943 = vadd.f32 %v6750, %v6931
        %v6944 = vadd.f32 %v6751, %v6934
        %v6945 = vadd.f32 %v6752, %v6936
        %s6946 = scalar_lea.vmem [#allocation8], 320
        %v6947 = vld [vmem:[%s6946] sm:$0xff]
        %v6948 = vld [vmem:[%s6946 + $0x8] sm:$0xff]
        %v6949 = vld [vmem:[%s6946 + $0x10] sm:$0xff]
        %v6950 = vld [vmem:[%s6946 + $0x18] sm:$0xff]
        %v6951 = vld [vmem:[%s6946 + $0x20] sm:$0xff]
        %v6952 = vld [vmem:[%s6946 + $0x28] sm:$0xff]
        %v6953 = vld [vmem:[%s6946 + $0x30] sm:$0xff]
        %v6954 = vld [vmem:[%s6946 + $0x38] sm:$0xff]
        %v6963 = vunpack.c.l.b16 %v6947
        %v6964 = vunpack.c.h.b16 %v6947
        %v6965 = vunpack.c.l.b16 %v6948
        %v6966 = vunpack.c.h.b16 %v6948
        %v6967 = vunpack.c.l.b16 %v6949
        %v6968 = vunpack.c.h.b16 %v6949
        %v6969 = vunpack.c.l.b16 %v6950
        %v6970 = vunpack.c.h.b16 %v6950
        %v6971 = vunpack.c.l.b16 %v6951
        %v6972 = vunpack.c.h.b16 %v6951
        %v6973 = vunpack.c.l.b16 %v6952
        %v6974 = vunpack.c.h.b16 %v6952
        %v6975 = vunpack.c.l.b16 %v6953
        %v6976 = vunpack.c.h.b16 %v6953
        %v6977 = vunpack.c.l.b16 %v6954
        %v6978 = vunpack.c.h.b16 %v6954
        %v6979 = vpack.c.b16 %v6965, %v6963
        %v6980 = vpack.c.b16 %v6966, %v6964
        %v6981 = vpack.c.b16 %v6969, %v6967
        %v6982 = vpack.c.b16 %v6970, %v6968
        %v6983 = vpack.c.b16 %v6973, %v6971
        %v6984 = vpack.c.b16 %v6974, %v6972
        %v6985 = vpack.c.b16 %v6977, %v6975
        %v6986 = vpack.c.b16 %v6978, %v6976
        %6995 = vmatpush.bf16.msra.mxu0 %v5989
        %6996 = vmatpush.bf16.msra.mxu0 %v5988
        %6997 = vmatpush.bf16.msra.mxu0 %v5987
        %6998 = vmatpush.bf16.msra.mxu0 %v5986
        %6999 = vmatpush.bf16.msra.mxu0 %v5985
        %7000 = vmatpush.bf16.msra.mxu0 %v5984
        %7001 = vmatpush.bf16.msra.mxu0 %v5983
        %7002 = vmatpush.bf16.msra.mxu0 %v5982
        %7003 = vmatmul.bf16.gmra.mxu0 %v6979
        %v7004 = vpop.f32.mrf.mxu0
        %v7005 = vadd.f32 0.0, %v7004
        %v7006 = vpop.f32.mrf.mxu0
        %v7007 = vadd.f32 0.0, %v7006
        %7008 = vmatmul.bf16.gmra.mxu0 %v6981
        %v7009 = vpop.f32.mrf.mxu0
        %v7010 = vadd.f32 0.0, %v7009
        %v7011 = vpop.f32.mrf.mxu0
        %v7012 = vadd.f32 0.0, %v7011
        %7013 = vmatmul.bf16.gmra.mxu0 %v6983
        %v7014 = vpop.f32.mrf.mxu0
        %v7015 = vadd.f32 0.0, %v7014
        %v7016 = vpop.f32.mrf.mxu0
        %v7017 = vadd.f32 0.0, %v7016
        %7018 = vmatmul.bf16.gmra.mxu0 %v6985
        %v7019 = vpop.f32.mrf.mxu0
        %v7020 = vadd.f32 0.0, %v7019
        %v7021 = vpop.f32.mrf.mxu0
        %v7022 = vadd.f32 0.0, %v7021
        %7023 = vdwg.mxu0
        %7024 = vmatpush.bf16.msra.mxu0 %v5997
        %7025 = vmatpush.bf16.msra.mxu0 %v5996
        %7026 = vmatpush.bf16.msra.mxu0 %v5995
        %7027 = vmatpush.bf16.msra.mxu0 %v5994
        %7028 = vmatpush.bf16.msra.mxu0 %v5993
        %7029 = vmatpush.bf16.msra.mxu0 %v5992
        %7030 = vmatpush.bf16.msra.mxu0 %v5991
        %7031 = vmatpush.bf16.msra.mxu0 %v5990
        %7032 = vmatmul.bf16.gmra.mxu0 %v6980
        %v7033 = vpop.f32.mrf.mxu0
        %v7034 = vadd.f32 %v7005, %v7033
        %v7035 = vpop.f32.mrf.mxu0
        %v7036 = vadd.f32 %v7007, %v7035
        %7037 = vmatmul.bf16.gmra.mxu0 %v6982
        %v7038 = vpop.f32.mrf.mxu0
        %v7039 = vadd.f32 %v7010, %v7038
        %v7040 = vpop.f32.mrf.mxu0
        %v7041 = vadd.f32 %v7012, %v7040
        %7042 = vmatmul.bf16.gmra.mxu0 %v6984
        %v7043 = vpop.f32.mrf.mxu0
        %v7044 = vadd.f32 %v7015, %v7043
        %v7045 = vpop.f32.mrf.mxu0
        %v7046 = vadd.f32 %v7017, %v7045
        %7047 = vmatmul.bf16.gmra.mxu0 %v6986
        %v7048 = vpop.f32.mrf.mxu0
        %v7049 = vadd.f32 %v7020, %v7048
        %v7050 = vpop.f32.mrf.mxu0
        %v7051 = vadd.f32 %v7022, %v7050
        %7052 = vdwg.mxu0
        %v7053 = vpack.c.bf16 %v7036, %v7034
        %v7054 = vpack.c.bf16 %v7041, %v7039
        %v7055 = vpack.c.bf16 %v7046, %v7044
        %v7056 = vpack.c.bf16 %v7051, %v7049
        %s7057 = scalar_lea.vmem [#allocation10], 160
        %v7058 = vld [vmem:[%s7057] sm:$0xf]
        %v7059 = vld [vmem:[%s7057 + $0x4] sm:$0xf]
        %v7060 = vld [vmem:[%s7057 + $0x8] sm:$0xf]
        %v7061 = vld [vmem:[%s7057 + $0xc] sm:$0xf]
        %v7062 = vld [vmem:[%s7057 + $0x10] sm:$0xf]
        %v7063 = vld [vmem:[%s7057 + $0x14] sm:$0xf]
        %v7064 = vld [vmem:[%s7057 + $0x18] sm:$0xf]
        %v7065 = vld [vmem:[%s7057 + $0x1c] sm:$0xf]
        %v7074 = vunpack.c.l.b16 %v7058
        %v7075 = vunpack.c.l.b16 %v7059
        %v7076 = vunpack.c.l.b16 %v7060
        %v7077 = vunpack.c.l.b16 %v7061
        %v7078 = vunpack.c.l.b16 %v7062
        %v7079 = vunpack.c.l.b16 %v7063
        %v7080 = vunpack.c.l.b16 %v7064
        %v7081 = vunpack.c.l.b16 %v7065
        %v7082 = vpack.c.b16 %v7075, %v7074
        %v7083 = vpack.c.b16 %v7077, %v7076
        %v7084 = vpack.c.b16 %v7079, %v7078
        %v7085 = vpack.c.b16 %v7081, %v7080
        %v7091 = vsel %vm6260, %v7053, 0
        %v7094 = vsel %vm6260, %v7054, 0
        %v7097 = vsel %vm6260, %v7055, 0
        %v7100 = vsel %vm6260, %v7056, 0
        %7102 = vmatpush.bf16.msra.mxu0 0
        %7103 = vmatpush.bf16.msra.mxu0 0
        %7104 = vmatpush.bf16.msra.mxu0 0
        %7105 = vmatpush.bf16.msra.mxu0 0
        %7106 = vmatpush.bf16.msra.mxu0 %v7085
        %7107 = vmatpush.bf16.msra.mxu0 %v7084
        %7108 = vmatpush.bf16.msra.mxu0 %v7083
        %7109 = vmatpush.bf16.msra.mxu0 %v7082
        %7110 = vmatmul.bf16.gmra.mxu0 %v7091
        %v7111 = vpop.f32.mrf.mxu0
        %v7112 = vadd.f32 0.0, %v7111
        %v7113 = vpop.f32.mrf.mxu0
        %v7114 = vadd.f32 0.0, %v7113
        %7115 = vmatmul.bf16.gmra.mxu0 %v7094
        %v7116 = vpop.f32.mrf.mxu0
        %v7117 = vadd.f32 0.0, %v7116
        %v7118 = vpop.f32.mrf.mxu0
        %v7119 = vadd.f32 0.0, %v7118
        %7120 = vmatmul.bf16.gmra.mxu0 %v7097
        %v7121 = vpop.f32.mrf.mxu0
        %v7122 = vadd.f32 0.0, %v7121
        %v7123 = vpop.f32.mrf.mxu0
        %v7124 = vadd.f32 0.0, %v7123
        %7125 = vmatmul.bf16.gmra.mxu0 %v7100
        %v7126 = vpop.f32.mrf.mxu0
        %v7127 = vadd.f32 0.0, %v7126
        %v7128 = vpop.f32.mrf.mxu0
        %v7129 = vadd.f32 0.0, %v7128
        %7130 = vdwg.mxu0
        %v7131 = vadd.f32 %v6938, %v7112
        %v7132 = vadd.f32 %v6939, %v7114
        %v7133 = vadd.f32 %v6940, %v7117
        %v7134 = vadd.f32 %v6941, %v7119
        %v7135 = vadd.f32 %v6942, %v7122
        %v7136 = vadd.f32 %v6943, %v7124
        %v7137 = vadd.f32 %v6944, %v7127
        %v7138 = vadd.f32 %v6945, %v7129
        %s7139 = scalar_lea.vmem [#allocation8], 384
        %v7140 = vld [vmem:[%s7139] sm:$0xff]
        %v7141 = vld [vmem:[%s7139 + $0x8] sm:$0xff]
        %v7142 = vld [vmem:[%s7139 + $0x10] sm:$0xff]
        %v7143 = vld [vmem:[%s7139 + $0x18] sm:$0xff]
        %v7144 = vld [vmem:[%s7139 + $0x20] sm:$0xff]
        %v7145 = vld [vmem:[%s7139 + $0x28] sm:$0xff]
        %v7146 = vld [vmem:[%s7139 + $0x30] sm:$0xff]
        %v7147 = vld [vmem:[%s7139 + $0x38] sm:$0xff]
        %v7156 = vunpack.c.l.b16 %v7140
        %v7157 = vunpack.c.h.b16 %v7140
        %v7158 = vunpack.c.l.b16 %v7141
        %v7159 = vunpack.c.h.b16 %v7141
        %v7160 = vunpack.c.l.b16 %v7142
        %v7161 = vunpack.c.h.b16 %v7142
        %v7162 = vunpack.c.l.b16 %v7143
        %v7163 = vunpack.c.h.b16 %v7143
        %v7164 = vunpack.c.l.b16 %v7144
        %v7165 = vunpack.c.h.b16 %v7144
        %v7166 = vunpack.c.l.b16 %v7145
        %v7167 = vunpack.c.h.b16 %v7145
        %v7168 = vunpack.c.l.b16 %v7146
        %v7169 = vunpack.c.h.b16 %v7146
        %v7170 = vunpack.c.l.b16 %v7147
        %v7171 = vunpack.c.h.b16 %v7147
        %v7172 = vpack.c.b16 %v7158, %v7156
        %v7173 = vpack.c.b16 %v7159, %v7157
        %v7174 = vpack.c.b16 %v7162, %v7160
        %v7175 = vpack.c.b16 %v7163, %v7161
        %v7176 = vpack.c.b16 %v7166, %v7164
        %v7177 = vpack.c.b16 %v7167, %v7165
        %v7178 = vpack.c.b16 %v7170, %v7168
        %v7179 = vpack.c.b16 %v7171, %v7169
        %7188 = vmatpush.bf16.msra.mxu0 %v5989
        %7189 = vmatpush.bf16.msra.mxu0 %v5988
        %7190 = vmatpush.bf16.msra.mxu0 %v5987
        %7191 = vmatpush.bf16.msra.mxu0 %v5986
        %7192 = vmatpush.bf16.msra.mxu0 %v5985
        %7193 = vmatpush.bf16.msra.mxu0 %v5984
        %7194 = vmatpush.bf16.msra.mxu0 %v5983
        %7195 = vmatpush.bf16.msra.mxu0 %v5982
        %7196 = vmatmul.bf16.gmra.mxu0 %v7172
        %v7197 = vpop.f32.mrf.mxu0
        %v7198 = vadd.f32 0.0, %v7197
        %v7199 = vpop.f32.mrf.mxu0
        %v7200 = vadd.f32 0.0, %v7199
        %7201 = vmatmul.bf16.gmra.mxu0 %v7174
        %v7202 = vpop.f32.mrf.mxu0
        %v7203 = vadd.f32 0.0, %v7202
        %v7204 = vpop.f32.mrf.mxu0
        %v7205 = vadd.f32 0.0, %v7204
        %7206 = vmatmul.bf16.gmra.mxu0 %v7176
        %v7207 = vpop.f32.mrf.mxu0
        %v7208 = vadd.f32 0.0, %v7207
        %v7209 = vpop.f32.mrf.mxu0
        %v7210 = vadd.f32 0.0, %v7209
        %7211 = vmatmul.bf16.gmra.mxu0 %v7178
        %v7212 = vpop.f32.mrf.mxu0
        %v7213 = vadd.f32 0.0, %v7212
        %v7214 = vpop.f32.mrf.mxu0
        %v7215 = vadd.f32 0.0, %v7214
        %7216 = vdwg.mxu0
        %7217 = vmatpush.bf16.msra.mxu0 %v5997
        %7218 = vmatpush.bf16.msra.mxu0 %v5996
        %7219 = vmatpush.bf16.msra.mxu0 %v5995
        %7220 = vmatpush.bf16.msra.mxu0 %v5994
        %7221 = vmatpush.bf16.msra.mxu0 %v5993
        %7222 = vmatpush.bf16.msra.mxu0 %v5992
        %7223 = vmatpush.bf16.msra.mxu0 %v5991
        %7224 = vmatpush.bf16.msra.mxu0 %v5990
        %7225 = vmatmul.bf16.gmra.mxu0 %v7173
        %v7226 = vpop.f32.mrf.mxu0
        %v7227 = vadd.f32 %v7198, %v7226
        %v7228 = vpop.f32.mrf.mxu0
        %v7229 = vadd.f32 %v7200, %v7228
        %7230 = vmatmul.bf16.gmra.mxu0 %v7175
        %v7231 = vpop.f32.mrf.mxu0
        %v7232 = vadd.f32 %v7203, %v7231
        %v7233 = vpop.f32.mrf.mxu0
        %v7234 = vadd.f32 %v7205, %v7233
        %7235 = vmatmul.bf16.gmra.mxu0 %v7177
        %v7236 = vpop.f32.mrf.mxu0
        %v7237 = vadd.f32 %v7208, %v7236
        %v7238 = vpop.f32.mrf.mxu0
        %v7239 = vadd.f32 %v7210, %v7238
        %7240 = vmatmul.bf16.gmra.mxu0 %v7179
        %v7241 = vpop.f32.mrf.mxu0
        %v7242 = vadd.f32 %v7213, %v7241
        %v7243 = vpop.f32.mrf.mxu0
        %v7244 = vadd.f32 %v7215, %v7243
        %7245 = vdwg.mxu0
        %v7246 = vpack.c.bf16 %v7229, %v7227
        %v7247 = vpack.c.bf16 %v7234, %v7232
        %v7248 = vpack.c.bf16 %v7239, %v7237
        %v7249 = vpack.c.bf16 %v7244, %v7242
        %s7250 = scalar_lea.vmem [#allocation10], 192
        %v7251 = vld [vmem:[%s7250] sm:$0xf]
        %v7252 = vld [vmem:[%s7250 + $0x4] sm:$0xf]
        %v7253 = vld [vmem:[%s7250 + $0x8] sm:$0xf]
        %v7254 = vld [vmem:[%s7250 + $0xc] sm:$0xf]
        %v7255 = vld [vmem:[%s7250 + $0x10] sm:$0xf]
        %v7256 = vld [vmem:[%s7250 + $0x14] sm:$0xf]
        %v7257 = vld [vmem:[%s7250 + $0x18] sm:$0xf]
        %v7258 = vld [vmem:[%s7250 + $0x1c] sm:$0xf]
        %v7267 = vunpack.c.l.b16 %v7251
        %v7268 = vunpack.c.l.b16 %v7252
        %v7269 = vunpack.c.l.b16 %v7253
        %v7270 = vunpack.c.l.b16 %v7254
        %v7271 = vunpack.c.l.b16 %v7255
        %v7272 = vunpack.c.l.b16 %v7256
        %v7273 = vunpack.c.l.b16 %v7257
        %v7274 = vunpack.c.l.b16 %v7258
        %v7275 = vpack.c.b16 %v7268, %v7267
        %v7276 = vpack.c.b16 %v7270, %v7269
        %v7277 = vpack.c.b16 %v7272, %v7271
        %v7278 = vpack.c.b16 %v7274, %v7273
        %v7284 = vsel %vm6260, %v7246, 0
        %v7287 = vsel %vm6260, %v7247, 0
        %v7290 = vsel %vm6260, %v7248, 0
        %v7293 = vsel %vm6260, %v7249, 0
        %7295 = vmatpush.bf16.msra.mxu0 0
        %7296 = vmatpush.bf16.msra.mxu0 0
        %7297 = vmatpush.bf16.msra.mxu0 0
        %7298 = vmatpush.bf16.msra.mxu0 0
        %7299 = vmatpush.bf16.msra.mxu0 %v7278
        %7300 = vmatpush.bf16.msra.mxu0 %v7277
        %7301 = vmatpush.bf16.msra.mxu0 %v7276
        %7302 = vmatpush.bf16.msra.mxu0 %v7275
        %7303 = vmatmul.bf16.gmra.mxu0 %v7284
        %v7304 = vpop.f32.mrf.mxu0
        %v7305 = vadd.f32 0.0, %v7304
        %v7306 = vpop.f32.mrf.mxu0
        %v7307 = vadd.f32 0.0, %v7306
        %7308 = vmatmul.bf16.gmra.mxu0 %v7287
        %v7309 = vpop.f32.mrf.mxu0
        %v7310 = vadd.f32 0.0, %v7309
        %v7311 = vpop.f32.mrf.mxu0
        %v7312 = vadd.f32 0.0, %v7311
        %7313 = vmatmul.bf16.gmra.mxu0 %v7290
        %v7314 = vpop.f32.mrf.mxu0
        %v7315 = vadd.f32 0.0, %v7314
        %v7316 = vpop.f32.mrf.mxu0
        %v7317 = vadd.f32 0.0, %v7316
        %7318 = vmatmul.bf16.gmra.mxu0 %v7293
        %v7319 = vpop.f32.mrf.mxu0
        %v7320 = vadd.f32 0.0, %v7319
        %v7321 = vpop.f32.mrf.mxu0
        %v7322 = vadd.f32 0.0, %v7321
        %7323 = vdwg.mxu0
        %v7324 = vadd.f32 %v7131, %v7305
        %v7325 = vadd.f32 %v7132, %v7307
        %v7326 = vadd.f32 %v7133, %v7310
        %v7327 = vadd.f32 %v7134, %v7312
        %v7328 = vadd.f32 %v7135, %v7315
        %v7329 = vadd.f32 %v7136, %v7317
        %v7330 = vadd.f32 %v7137, %v7320
        %v7331 = vadd.f32 %v7138, %v7322
        %s7332 = scalar_lea.vmem [#allocation8], 448
        %v7333 = vld [vmem:[%s7332] sm:$0xff]
        %v7334 = vld [vmem:[%s7332 + $0x8] sm:$0xff]
        %v7335 = vld [vmem:[%s7332 + $0x10] sm:$0xff]
        %v7336 = vld [vmem:[%s7332 + $0x18] sm:$0xff]
        %v7337 = vld [vmem:[%s7332 + $0x20] sm:$0xff]
        %v7338 = vld [vmem:[%s7332 + $0x28] sm:$0xff]
        %v7339 = vld [vmem:[%s7332 + $0x30] sm:$0xff]
        %v7340 = vld [vmem:[%s7332 + $0x38] sm:$0xff]
        %v7349 = vunpack.c.l.b16 %v7333
        %v7350 = vunpack.c.h.b16 %v7333
        %v7351 = vunpack.c.l.b16 %v7334
        %v7352 = vunpack.c.h.b16 %v7334
        %v7353 = vunpack.c.l.b16 %v7335
        %v7354 = vunpack.c.h.b16 %v7335
        %v7355 = vunpack.c.l.b16 %v7336
        %v7356 = vunpack.c.h.b16 %v7336
        %v7357 = vunpack.c.l.b16 %v7337
        %v7358 = vunpack.c.h.b16 %v7337
        %v7359 = vunpack.c.l.b16 %v7338
        %v7360 = vunpack.c.h.b16 %v7338
        %v7361 = vunpack.c.l.b16 %v7339
        %v7362 = vunpack.c.h.b16 %v7339
        %v7363 = vunpack.c.l.b16 %v7340
        %v7364 = vunpack.c.h.b16 %v7340
        %v7365 = vpack.c.b16 %v7351, %v7349
        %v7366 = vpack.c.b16 %v7352, %v7350
        %v7367 = vpack.c.b16 %v7355, %v7353
        %v7368 = vpack.c.b16 %v7356, %v7354
        %v7369 = vpack.c.b16 %v7359, %v7357
        %v7370 = vpack.c.b16 %v7360, %v7358
        %v7371 = vpack.c.b16 %v7363, %v7361
        %v7372 = vpack.c.b16 %v7364, %v7362
        %7381 = vmatpush.bf16.msra.mxu0 %v5989
        %7382 = vmatpush.bf16.msra.mxu0 %v5988
        %7383 = vmatpush.bf16.msra.mxu0 %v5987
        %7384 = vmatpush.bf16.msra.mxu0 %v5986
        %7385 = vmatpush.bf16.msra.mxu0 %v5985
        %7386 = vmatpush.bf16.msra.mxu0 %v5984
        %7387 = vmatpush.bf16.msra.mxu0 %v5983
        %7388 = vmatpush.bf16.msra.mxu0 %v5982
        %7389 = vmatmul.bf16.gmra.mxu0 %v7365
        %v7390 = vpop.f32.mrf.mxu0
        %v7391 = vadd.f32 0.0, %v7390
        %v7392 = vpop.f32.mrf.mxu0
        %v7393 = vadd.f32 0.0, %v7392
        %7394 = vmatmul.bf16.gmra.mxu0 %v7367
        %v7395 = vpop.f32.mrf.mxu0
        %v7396 = vadd.f32 0.0, %v7395
        %v7397 = vpop.f32.mrf.mxu0
        %v7398 = vadd.f32 0.0, %v7397
        %7399 = vmatmul.bf16.gmra.mxu0 %v7369
        %v7400 = vpop.f32.mrf.mxu0
        %v7401 = vadd.f32 0.0, %v7400
        %v7402 = vpop.f32.mrf.mxu0
        %v7403 = vadd.f32 0.0, %v7402
        %7404 = vmatmul.bf16.gmra.mxu0 %v7371
        %v7405 = vpop.f32.mrf.mxu0
        %v7406 = vadd.f32 0.0, %v7405
        %v7407 = vpop.f32.mrf.mxu0
        %v7408 = vadd.f32 0.0, %v7407
        %7409 = vdwg.mxu0
        %7410 = vmatpush.bf16.msra.mxu0 %v5997
        %7411 = vmatpush.bf16.msra.mxu0 %v5996
        %7412 = vmatpush.bf16.msra.mxu0 %v5995
        %7413 = vmatpush.bf16.msra.mxu0 %v5994
        %7414 = vmatpush.bf16.msra.mxu0 %v5993
        %7415 = vmatpush.bf16.msra.mxu0 %v5992
        %7416 = vmatpush.bf16.msra.mxu0 %v5991
        %7417 = vmatpush.bf16.msra.mxu0 %v5990
        %7418 = vmatmul.bf16.gmra.mxu0 %v7366
        %v7419 = vpop.f32.mrf.mxu0
        %v7420 = vadd.f32 %v7391, %v7419
        %v7421 = vpop.f32.mrf.mxu0
        %v7422 = vadd.f32 %v7393, %v7421
        %7423 = vmatmul.bf16.gmra.mxu0 %v7368
        %v7424 = vpop.f32.mrf.mxu0
        %v7425 = vadd.f32 %v7396, %v7424
        %v7426 = vpop.f32.mrf.mxu0
        %v7427 = vadd.f32 %v7398, %v7426
        %7428 = vmatmul.bf16.gmra.mxu0 %v7370
        %v7429 = vpop.f32.mrf.mxu0
        %v7430 = vadd.f32 %v7401, %v7429
        %v7431 = vpop.f32.mrf.mxu0
        %v7432 = vadd.f32 %v7403, %v7431
        %7433 = vmatmul.bf16.gmra.mxu0 %v7372
        %v7434 = vpop.f32.mrf.mxu0
        %v7435 = vadd.f32 %v7406, %v7434
        %v7436 = vpop.f32.mrf.mxu0
        %v7437 = vadd.f32 %v7408, %v7436
        %7438 = vdwg.mxu0
        %v7439 = vpack.c.bf16 %v7422, %v7420
        %v7440 = vpack.c.bf16 %v7427, %v7425
        %v7441 = vpack.c.bf16 %v7432, %v7430
        %v7442 = vpack.c.bf16 %v7437, %v7435
        %s7443 = scalar_lea.vmem [#allocation10], 224
        %v7444 = vld [vmem:[%s7443] sm:$0xf]
        %v7445 = vld [vmem:[%s7443 + $0x4] sm:$0xf]
        %v7446 = vld [vmem:[%s7443 + $0x8] sm:$0xf]
        %v7447 = vld [vmem:[%s7443 + $0xc] sm:$0xf]
        %v7448 = vld [vmem:[%s7443 + $0x10] sm:$0xf]
        %v7449 = vld [vmem:[%s7443 + $0x14] sm:$0xf]
        %v7450 = vld [vmem:[%s7443 + $0x18] sm:$0xf]
        %v7451 = vld [vmem:[%s7443 + $0x1c] sm:$0xf]
        %v7460 = vunpack.c.l.b16 %v7444
        %v7461 = vunpack.c.l.b16 %v7445
        %v7462 = vunpack.c.l.b16 %v7446
        %v7463 = vunpack.c.l.b16 %v7447
        %v7464 = vunpack.c.l.b16 %v7448
        %v7465 = vunpack.c.l.b16 %v7449
        %v7466 = vunpack.c.l.b16 %v7450
        %v7467 = vunpack.c.l.b16 %v7451
        %v7468 = vpack.c.b16 %v7461, %v7460
        %v7469 = vpack.c.b16 %v7463, %v7462
        %v7470 = vpack.c.b16 %v7465, %v7464
        %v7471 = vpack.c.b16 %v7467, %v7466
        %v7477 = vsel %vm6260, %v7439, 0
        %v7480 = vsel %vm6260, %v7440, 0
        %v7483 = vsel %vm6260, %v7441, 0
        %v7486 = vsel %vm6260, %v7442, 0
        %7488 = vmatpush.bf16.msra.mxu0 0
        %7489 = vmatpush.bf16.msra.mxu0 0
        %7490 = vmatpush.bf16.msra.mxu0 0
        %7491 = vmatpush.bf16.msra.mxu0 0
        %7492 = vmatpush.bf16.msra.mxu0 %v7471
        %7493 = vmatpush.bf16.msra.mxu0 %v7470
        %7494 = vmatpush.bf16.msra.mxu0 %v7469
        %7495 = vmatpush.bf16.msra.mxu0 %v7468
        %7496 = vmatmul.bf16.gmra.mxu0 %v7477
        %v7497 = vpop.f32.mrf.mxu0
        %v7498 = vadd.f32 0.0, %v7497
        %v7499 = vpop.f32.mrf.mxu0
        %v7500 = vadd.f32 0.0, %v7499
        %7501 = vmatmul.bf16.gmra.mxu0 %v7480
        %v7502 = vpop.f32.mrf.mxu0
        %v7503 = vadd.f32 0.0, %v7502
        %v7504 = vpop.f32.mrf.mxu0
        %v7505 = vadd.f32 0.0, %v7504
        %7506 = vmatmul.bf16.gmra.mxu0 %v7483
        %v7507 = vpop.f32.mrf.mxu0
        %v7508 = vadd.f32 0.0, %v7507
        %v7509 = vpop.f32.mrf.mxu0
        %v7510 = vadd.f32 0.0, %v7509
        %7511 = vmatmul.bf16.gmra.mxu0 %v7486
        %v7512 = vpop.f32.mrf.mxu0
        %v7513 = vadd.f32 0.0, %v7512
        %v7514 = vpop.f32.mrf.mxu0
        %v7515 = vadd.f32 0.0, %v7514
        %7516 = vdwg.mxu0
        %v7517 = vadd.f32 %v7324, %v7498
        %v7518 = vadd.f32 %v7325, %v7500
        %v7519 = vadd.f32 %v7326, %v7503
        %v7520 = vadd.f32 %v7327, %v7505
        %v7521 = vadd.f32 %v7328, %v7508
        %v7522 = vadd.f32 %v7329, %v7510
        %v7523 = vadd.f32 %v7330, %v7513
        %v7524 = vadd.f32 %v7331, %v7515
        %s7525 = scalar_lea.vmem [#allocation8], 512
        %v7526 = vld [vmem:[%s7525] sm:$0xff]
        %v7527 = vld [vmem:[%s7525 + $0x8] sm:$0xff]
        %v7528 = vld [vmem:[%s7525 + $0x10] sm:$0xff]
        %v7529 = vld [vmem:[%s7525 + $0x18] sm:$0xff]
        %v7530 = vld [vmem:[%s7525 + $0x20] sm:$0xff]
        %v7531 = vld [vmem:[%s7525 + $0x28] sm:$0xff]
        %v7532 = vld [vmem:[%s7525 + $0x30] sm:$0xff]
        %v7533 = vld [vmem:[%s7525 + $0x38] sm:$0xff]
        %v7542 = vunpack.c.l.b16 %v7526
        %v7543 = vunpack.c.h.b16 %v7526
        %v7544 = vunpack.c.l.b16 %v7527
        %v7545 = vunpack.c.h.b16 %v7527
        %v7546 = vunpack.c.l.b16 %v7528
        %v7547 = vunpack.c.h.b16 %v7528
        %v7548 = vunpack.c.l.b16 %v7529
        %v7549 = vunpack.c.h.b16 %v7529
        %v7550 = vunpack.c.l.b16 %v7530
        %v7551 = vunpack.c.h.b16 %v7530
        %v7552 = vunpack.c.l.b16 %v7531
        %v7553 = vunpack.c.h.b16 %v7531
        %v7554 = vunpack.c.l.b16 %v7532
        %v7555 = vunpack.c.h.b16 %v7532
        %v7556 = vunpack.c.l.b16 %v7533
        %v7557 = vunpack.c.h.b16 %v7533
        %v7558 = vpack.c.b16 %v7544, %v7542
        %v7559 = vpack.c.b16 %v7545, %v7543
        %v7560 = vpack.c.b16 %v7548, %v7546
        %v7561 = vpack.c.b16 %v7549, %v7547
        %v7562 = vpack.c.b16 %v7552, %v7550
        %v7563 = vpack.c.b16 %v7553, %v7551
        %v7564 = vpack.c.b16 %v7556, %v7554
        %v7565 = vpack.c.b16 %v7557, %v7555
        %7574 = vmatpush.bf16.msra.mxu0 %v5989
        %7575 = vmatpush.bf16.msra.mxu0 %v5988
        %7576 = vmatpush.bf16.msra.mxu0 %v5987
        %7577 = vmatpush.bf16.msra.mxu0 %v5986
        %7578 = vmatpush.bf16.msra.mxu0 %v5985
        %7579 = vmatpush.bf16.msra.mxu0 %v5984
        %7580 = vmatpush.bf16.msra.mxu0 %v5983
        %7581 = vmatpush.bf16.msra.mxu0 %v5982
        %7582 = vmatmul.bf16.gmra.mxu0 %v7558
        %v7583 = vpop.f32.mrf.mxu0
        %v7584 = vadd.f32 0.0, %v7583
        %v7585 = vpop.f32.mrf.mxu0
        %v7586 = vadd.f32 0.0, %v7585
        %7587 = vmatmul.bf16.gmra.mxu0 %v7560
        %v7588 = vpop.f32.mrf.mxu0
        %v7589 = vadd.f32 0.0, %v7588
        %v7590 = vpop.f32.mrf.mxu0
        %v7591 = vadd.f32 0.0, %v7590
        %7592 = vmatmul.bf16.gmra.mxu0 %v7562
        %v7593 = vpop.f32.mrf.mxu0
        %v7594 = vadd.f32 0.0, %v7593
        %v7595 = vpop.f32.mrf.mxu0
        %v7596 = vadd.f32 0.0, %v7595
        %7597 = vmatmul.bf16.gmra.mxu0 %v7564
        %v7598 = vpop.f32.mrf.mxu0
        %v7599 = vadd.f32 0.0, %v7598
        %v7600 = vpop.f32.mrf.mxu0
        %v7601 = vadd.f32 0.0, %v7600
        %7602 = vdwg.mxu0
        %7603 = vmatpush.bf16.msra.mxu0 %v5997
        %7604 = vmatpush.bf16.msra.mxu0 %v5996
        %7605 = vmatpush.bf16.msra.mxu0 %v5995
        %7606 = vmatpush.bf16.msra.mxu0 %v5994
        %7607 = vmatpush.bf16.msra.mxu0 %v5993
        %7608 = vmatpush.bf16.msra.mxu0 %v5992
        %7609 = vmatpush.bf16.msra.mxu0 %v5991
        %7610 = vmatpush.bf16.msra.mxu0 %v5990
        %7611 = vmatmul.bf16.gmra.mxu0 %v7559
        %v7612 = vpop.f32.mrf.mxu0
        %v7613 = vadd.f32 %v7584, %v7612
        %v7614 = vpop.f32.mrf.mxu0
        %v7615 = vadd.f32 %v7586, %v7614
        %7616 = vmatmul.bf16.gmra.mxu0 %v7561
        %v7617 = vpop.f32.mrf.mxu0
        %v7618 = vadd.f32 %v7589, %v7617
        %v7619 = vpop.f32.mrf.mxu0
        %v7620 = vadd.f32 %v7591, %v7619
        %7621 = vmatmul.bf16.gmra.mxu0 %v7563
        %v7622 = vpop.f32.mrf.mxu0
        %v7623 = vadd.f32 %v7594, %v7622
        %v7624 = vpop.f32.mrf.mxu0
        %v7625 = vadd.f32 %v7596, %v7624
        %7626 = vmatmul.bf16.gmra.mxu0 %v7565
        %v7627 = vpop.f32.mrf.mxu0
        %v7628 = vadd.f32 %v7599, %v7627
        %v7629 = vpop.f32.mrf.mxu0
        %v7630 = vadd.f32 %v7601, %v7629
        %7631 = vdwg.mxu0
        %v7632 = vpack.c.bf16 %v7615, %v7613
        %v7633 = vpack.c.bf16 %v7620, %v7618
        %v7634 = vpack.c.bf16 %v7625, %v7623
        %v7635 = vpack.c.bf16 %v7630, %v7628
        %s7636 = scalar_lea.vmem [#allocation10], 256
        %v7637 = vld [vmem:[%s7636] sm:$0xf]
        %v7638 = vld [vmem:[%s7636 + $0x4] sm:$0xf]
        %v7639 = vld [vmem:[%s7636 + $0x8] sm:$0xf]
        %v7640 = vld [vmem:[%s7636 + $0xc] sm:$0xf]
        %v7641 = vld [vmem:[%s7636 + $0x10] sm:$0xf]
        %v7642 = vld [vmem:[%s7636 + $0x14] sm:$0xf]
        %v7643 = vld [vmem:[%s7636 + $0x18] sm:$0xf]
        %v7644 = vld [vmem:[%s7636 + $0x1c] sm:$0xf]
        %v7653 = vunpack.c.l.b16 %v7637
        %v7654 = vunpack.c.l.b16 %v7638
        %v7655 = vunpack.c.l.b16 %v7639
        %v7656 = vunpack.c.l.b16 %v7640
        %v7657 = vunpack.c.l.b16 %v7641
        %v7658 = vunpack.c.l.b16 %v7642
        %v7659 = vunpack.c.l.b16 %v7643
        %v7660 = vunpack.c.l.b16 %v7644
        %v7661 = vpack.c.b16 %v7654, %v7653
        %v7662 = vpack.c.b16 %v7656, %v7655
        %v7663 = vpack.c.b16 %v7658, %v7657
        %v7664 = vpack.c.b16 %v7660, %v7659
        %v7670 = vsel %vm6260, %v7632, 0
        %v7673 = vsel %vm6260, %v7633, 0
        %v7676 = vsel %vm6260, %v7634, 0
        %v7679 = vsel %vm6260, %v7635, 0
        %7681 = vmatpush.bf16.msra.mxu0 0
        %7682 = vmatpush.bf16.msra.mxu0 0
        %7683 = vmatpush.bf16.msra.mxu0 0
        %7684 = vmatpush.bf16.msra.mxu0 0
        %7685 = vmatpush.bf16.msra.mxu0 %v7664
        %7686 = vmatpush.bf16.msra.mxu0 %v7663
        %7687 = vmatpush.bf16.msra.mxu0 %v7662
        %7688 = vmatpush.bf16.msra.mxu0 %v7661
        %7689 = vmatmul.bf16.gmra.mxu0 %v7670
        %v7690 = vpop.f32.mrf.mxu0
        %v7691 = vadd.f32 0.0, %v7690
        %v7692 = vpop.f32.mrf.mxu0
        %v7693 = vadd.f32 0.0, %v7692
        %7694 = vmatmul.bf16.gmra.mxu0 %v7673
        %v7695 = vpop.f32.mrf.mxu0
        %v7696 = vadd.f32 0.0, %v7695
        %v7697 = vpop.f32.mrf.mxu0
        %v7698 = vadd.f32 0.0, %v7697
        %7699 = vmatmul.bf16.gmra.mxu0 %v7676
        %v7700 = vpop.f32.mrf.mxu0
        %v7701 = vadd.f32 0.0, %v7700
        %v7702 = vpop.f32.mrf.mxu0
        %v7703 = vadd.f32 0.0, %v7702
        %7704 = vmatmul.bf16.gmra.mxu0 %v7679
        %v7705 = vpop.f32.mrf.mxu0
        %v7706 = vadd.f32 0.0, %v7705
        %v7707 = vpop.f32.mrf.mxu0
        %v7708 = vadd.f32 0.0, %v7707
        %7709 = vdwg.mxu0
        %v7710 = vadd.f32 %v7517, %v7691
        %v7711 = vadd.f32 %v7518, %v7693
        %v7712 = vadd.f32 %v7519, %v7696
        %v7713 = vadd.f32 %v7520, %v7698
        %v7714 = vadd.f32 %v7521, %v7701
        %v7715 = vadd.f32 %v7522, %v7703
        %v7716 = vadd.f32 %v7523, %v7706
        %v7717 = vadd.f32 %v7524, %v7708
        %v7718 = vld [vmem:[#allocation11] sm:$0x1]
        %v7720 = vperm.slane %v7718, 0
        %v7722 = vadd.f32 %v7710, %v7720
        %v7723 = vadd.f32 %v7711, %v7720
        %v7724 = vadd.f32 %v7712, %v7720
        %v7725 = vadd.f32 %v7713, %v7720
        %v7726 = vadd.f32 %v7714, %v7720
        %v7727 = vadd.f32 %v7715, %v7720
        %v7728 = vadd.f32 %v7716, %v7720
        %v7729 = vadd.f32 %v7717, %v7720
        %v7730 = vmax.f32 %v7722, 0.0
        %v7731 = vmax.f32 %v7723, 0.0
        %v7732 = vmax.f32 %v7724, 0.0
        %v7733 = vmax.f32 %v7725, 0.0
        %v7734 = vmax.f32 %v7726, 0.0
        %v7735 = vmax.f32 %v7727, 0.0
        %v7736 = vmax.f32 %v7728, 0.0
        %v7737 = vmax.f32 %v7729, 0.0
        %v7738 = vpack.c.bf16 %v7731, %v7730
        %v7739 = vpack.c.bf16 %v7733, %v7732
        %v7740 = vpack.c.bf16 %v7735, %v7734
        %v7741 = vpack.c.bf16 %v7737, %v7736
        %v7742 = vld [vmem:[#allocation13] sm:$0xf]
        %v7743 = vld [vmem:[#allocation13 + $0x4] sm:$0xf]
        %v7746 = vunpack.c.l.b16 %v7742
        %v7747 = vunpack.c.l.b16 %v7743
        %v7748 = vpack.c.b16 %v7747, %v7746
        %v7750 = vsel %vm6260, %v7748, 0
        %7752 = vmatpush.bf16.msra.mxu0 0
        %7753 = vmatpush.bf16.msra.mxu0 0
        %7754 = vmatpush.bf16.msra.mxu0 0
        %7755 = vmatpush.bf16.msra.mxu0 0
        %7756 = vmatpush.bf16.msra.mxu0 %v7741
        %7757 = vmatpush.bf16.msra.mxu0 %v7740
        %7758 = vmatpush.bf16.msra.mxu0 %v7739
        %7759 = vmatpush.bf16.msra.mxu0 %v7738
        %7760 = vmatmul.bf16.gmra.mxu0 %v7750
        %v7761 = vpop.f32.mrf.mxu0
        %v7762 = vadd.f32 0.0, %v7761
        %v7763 = vpop.f32.mrf.mxu0
        %v7764 = vadd.f32 0.0, %v7763
        %7765 = vdwg.mxu0
        %v7766 = vpack.c.bf16 %v7764, %v7762
        %v7767 = vld [vmem:[#allocation14] sm:$0xff]
        %v7768 = vld [vmem:[#allocation14 + $0x8] sm:$0xff]
        %v7769 = vld [vmem:[#allocation14 + $0x10] sm:$0xff]
        %v7770 = vld [vmem:[#allocation14 + $0x18] sm:$0xff]
        %v7771 = vld [vmem:[#allocation14 + $0x20] sm:$0xff]
        %v7772 = vld [vmem:[#allocation14 + $0x28] sm:$0xff]
        %v7773 = vld [vmem:[#allocation14 + $0x30] sm:$0xff]
        %v7774 = vld [vmem:[#allocation14 + $0x38] sm:$0xff]
        %v7775 = vld [vmem:[#allocation14 + $0x40] sm:$0xff]
        %v7776 = vld [vmem:[#allocation14 + $0x48] sm:$0xff]
        %v7777 = vld [vmem:[#allocation14 + $0x50] sm:$0xff]
        %v7778 = vld [vmem:[#allocation14 + $0x58] sm:$0xff]
        %v7779 = vld [vmem:[#allocation14 + $0x60] sm:$0xff]
        %v7780 = vld [vmem:[#allocation14 + $0x68] sm:$0xff]
        %v7781 = vld [vmem:[#allocation14 + $0x70] sm:$0xff]
        %v7782 = vld [vmem:[#allocation14 + $0x78] sm:$0xff]
        %s7783 = scalar_lea.vmem [#allocation13], 8
        %v7784 = vld [vmem:[%s7783] sm:$0xf]
        %v7785 = vld [vmem:[%s7783 + $0x4] sm:$0xf]
        %v7788 = vunpack.c.l.b16 %v7784
        %v7789 = vunpack.c.l.b16 %v7785
        %v7790 = vpack.c.b16 %v7789, %v7788
        %v7792 = vsel %vm6260, %v7790, 0
        %7794 = vmatpush.bf16.msra.mxu0 0
        %7795 = vmatpush.bf16.msra.mxu0 0
        %7796 = vmatpush.bf16.msra.mxu0 0
        %7797 = vmatpush.bf16.msra.mxu0 0
        %7798 = vmatpush.bf16.msra.mxu0 %v7741
        %7799 = vmatpush.bf16.msra.mxu0 %v7740
        %7800 = vmatpush.bf16.msra.mxu0 %v7739
        %7801 = vmatpush.bf16.msra.mxu0 %v7738
        %7802 = vmatmul.bf16.gmra.mxu0 %v7792
        %v7803 = vpop.f32.mrf.mxu0
        %v7804 = vadd.f32 0.0, %v7803
        %v7805 = vpop.f32.mrf.mxu0
        %v7806 = vadd.f32 0.0, %v7805
        %7807 = vdwg.mxu0
        %v7808 = vpack.c.bf16 %v7806, %v7804
        %s7809 = scalar_lea.vmem [#allocation14], 128
        %v7810 = vld [vmem:[%s7809] sm:$0xff]
        %v7811 = vld [vmem:[%s7809 + $0x8] sm:$0xff]
        %v7812 = vld [vmem:[%s7809 + $0x10] sm:$0xff]
        %v7813 = vld [vmem:[%s7809 + $0x18] sm:$0xff]
        %v7814 = vld [vmem:[%s7809 + $0x20] sm:$0xff]
        %v7815 = vld [vmem:[%s7809 + $0x28] sm:$0xff]
        %v7816 = vld [vmem:[%s7809 + $0x30] sm:$0xff]
        %v7817 = vld [vmem:[%s7809 + $0x38] sm:$0xff]
        %v7818 = vld [vmem:[%s7809 + $0x40] sm:$0xff]
        %v7819 = vld [vmem:[%s7809 + $0x48] sm:$0xff]
        %v7820 = vld [vmem:[%s7809 + $0x50] sm:$0xff]
        %v7821 = vld [vmem:[%s7809 + $0x58] sm:$0xff]
        %v7822 = vld [vmem:[%s7809 + $0x60] sm:$0xff]
        %v7823 = vld [vmem:[%s7809 + $0x68] sm:$0xff]
        %v7824 = vld [vmem:[%s7809 + $0x70] sm:$0xff]
        %v7825 = vld [vmem:[%s7809 + $0x78] sm:$0xff]
        %v7842 = vunpack.c.l.b16 %v7810
        %v7843 = vunpack.c.h.b16 %v7810
        %v7844 = vunpack.c.l.b16 %v7811
        %v7845 = vunpack.c.h.b16 %v7811
        %v7846 = vunpack.c.l.b16 %v7812
        %v7847 = vunpack.c.h.b16 %v7812
        %v7848 = vunpack.c.l.b16 %v7813
        %v7849 = vunpack.c.h.b16 %v7813
        %v7850 = vunpack.c.l.b16 %v7814
        %v7851 = vunpack.c.h.b16 %v7814
        %v7852 = vunpack.c.l.b16 %v7815
        %v7853 = vunpack.c.h.b16 %v7815
        %v7854 = vunpack.c.l.b16 %v7816
        %v7855 = vunpack.c.h.b16 %v7816
        %v7856 = vunpack.c.l.b16 %v7817
        %v7857 = vunpack.c.h.b16 %v7817
        %v7858 = vunpack.c.l.b16 %v7818
        %v7859 = vunpack.c.h.b16 %v7818
        %v7860 = vunpack.c.l.b16 %v7819
        %v7861 = vunpack.c.h.b16 %v7819
        %v7862 = vunpack.c.l.b16 %v7820
        %v7863 = vunpack.c.h.b16 %v7820
        %v7864 = vunpack.c.l.b16 %v7821
        %v7865 = vunpack.c.h.b16 %v7821
        %v7866 = vunpack.c.l.b16 %v7822
        %v7867 = vunpack.c.h.b16 %v7822
        %v7868 = vunpack.c.l.b16 %v7823
        %v7869 = vunpack.c.h.b16 %v7823
        %v7870 = vunpack.c.l.b16 %v7824
        %v7871 = vunpack.c.h.b16 %v7824
        %v7872 = vunpack.c.l.b16 %v7825
        %v7873 = vunpack.c.h.b16 %v7825
        %v7874 = vpack.c.b16 %v7844, %v7842
        %v7875 = vpack.c.b16 %v7845, %v7843
        %v7876 = vpack.c.b16 %v7848, %v7846
        %v7877 = vpack.c.b16 %v7849, %v7847
        %v7878 = vpack.c.b16 %v7852, %v7850
        %v7879 = vpack.c.b16 %v7853, %v7851
        %v7880 = vpack.c.b16 %v7856, %v7854
        %v7881 = vpack.c.b16 %v7857, %v7855
        %v7882 = vpack.c.b16 %v7860, %v7858
        %v7883 = vpack.c.b16 %v7861, %v7859
        %v7884 = vpack.c.b16 %v7864, %v7862
        %v7885 = vpack.c.b16 %v7865, %v7863
        %v7886 = vpack.c.b16 %v7868, %v7866
        %v7887 = vpack.c.b16 %v7869, %v7867
        %v7888 = vpack.c.b16 %v7872, %v7870
        %v7889 = vpack.c.b16 %v7873, %v7871
        %7906 = vmatpush.bf16.msra.mxu0 %v7888
        %7907 = vmatpush.bf16.msra.mxu0 %v7886
        %7908 = vmatpush.bf16.msra.mxu0 %v7884
        %7909 = vmatpush.bf16.msra.mxu0 %v7882
        %7910 = vmatpush.bf16.msra.mxu0 %v7880
        %7911 = vmatpush.bf16.msra.mxu0 %v7878
        %7912 = vmatpush.bf16.msra.mxu0 %v7876
        %7913 = vmatpush.bf16.msra.mxu0 %v7874
        %7914 = vmatmul.bf16.gmra.mxu0 %v7808
        %v7915 = vpop.f32.mrf.mxu0
        %v7916 = vadd.f32 0.0, %v7915
        %v7917 = vpop.f32.mrf.mxu0
        %v7918 = vadd.f32 0.0, %v7917
        %7919 = vdwg.mxu0
        %7920 = vmatpush.bf16.msra.mxu0 %v7889
        %7921 = vmatpush.bf16.msra.mxu0 %v7887
        %7922 = vmatpush.bf16.msra.mxu0 %v7885
        %7923 = vmatpush.bf16.msra.mxu0 %v7883
        %7924 = vmatpush.bf16.msra.mxu0 %v7881
        %7925 = vmatpush.bf16.msra.mxu0 %v7879
        %7926 = vmatpush.bf16.msra.mxu0 %v7877
        %7927 = vmatpush.bf16.msra.mxu0 %v7875
        %7928 = vmatmul.bf16.gmra.mxu0 %v7808
        %v7929 = vpop.f32.mrf.mxu0
        %v7930 = vadd.f32 0.0, %v7929
        %v7931 = vpop.f32.mrf.mxu0
        %v7932 = vadd.f32 0.0, %v7931
        %7933 = vdwg.mxu0
        %v7950 = vunpack.c.l.b16 %v7767
        %v7951 = vunpack.c.h.b16 %v7767
        %v7952 = vunpack.c.l.b16 %v7768
        %v7953 = vunpack.c.h.b16 %v7768
        %v7954 = vunpack.c.l.b16 %v7769
        %v7955 = vunpack.c.h.b16 %v7769
        %v7956 = vunpack.c.l.b16 %v7770
        %v7957 = vunpack.c.h.b16 %v7770
        %v7958 = vunpack.c.l.b16 %v7771
        %v7959 = vunpack.c.h.b16 %v7771
        %v7960 = vunpack.c.l.b16 %v7772
        %v7961 = vunpack.c.h.b16 %v7772
        %v7962 = vunpack.c.l.b16 %v7773
        %v7963 = vunpack.c.h.b16 %v7773
        %v7964 = vunpack.c.l.b16 %v7774
        %v7965 = vunpack.c.h.b16 %v7774
        %v7966 = vunpack.c.l.b16 %v7775
        %v7967 = vunpack.c.h.b16 %v7775
        %v7968 = vunpack.c.l.b16 %v7776
        %v7969 = vunpack.c.h.b16 %v7776
        %v7970 = vunpack.c.l.b16 %v7777
        %v7971 = vunpack.c.h.b16 %v7777
        %v7972 = vunpack.c.l.b16 %v7778
        %v7973 = vunpack.c.h.b16 %v7778
        %v7974 = vunpack.c.l.b16 %v7779
        %v7975 = vunpack.c.h.b16 %v7779
        %v7976 = vunpack.c.l.b16 %v7780
        %v7977 = vunpack.c.h.b16 %v7780
        %v7978 = vunpack.c.l.b16 %v7781
        %v7979 = vunpack.c.h.b16 %v7781
        %v7980 = vunpack.c.l.b16 %v7782
        %v7981 = vunpack.c.h.b16 %v7782
        %v7982 = vpack.c.b16 %v7952, %v7950
        %v7983 = vpack.c.b16 %v7953, %v7951
        %v7984 = vpack.c.b16 %v7956, %v7954
        %v7985 = vpack.c.b16 %v7957, %v7955
        %v7986 = vpack.c.b16 %v7960, %v7958
        %v7987 = vpack.c.b16 %v7961, %v7959
        %v7988 = vpack.c.b16 %v7964, %v7962
        %v7989 = vpack.c.b16 %v7965, %v7963
        %v7990 = vpack.c.b16 %v7968, %v7966
        %v7991 = vpack.c.b16 %v7969, %v7967
        %v7992 = vpack.c.b16 %v7972, %v7970
        %v7993 = vpack.c.b16 %v7973, %v7971
        %v7994 = vpack.c.b16 %v7976, %v7974
        %v7995 = vpack.c.b16 %v7977, %v7975
        %v7996 = vpack.c.b16 %v7980, %v7978
        %v7997 = vpack.c.b16 %v7981, %v7979
        %8014 = vmatpush.bf16.msra.mxu0 %v7996
        %8015 = vmatpush.bf16.msra.mxu0 %v7994
        %8016 = vmatpush.bf16.msra.mxu0 %v7992
        %8017 = vmatpush.bf16.msra.mxu0 %v7990
        %8018 = vmatpush.bf16.msra.mxu0 %v7988
        %8019 = vmatpush.bf16.msra.mxu0 %v7986
        %8020 = vmatpush.bf16.msra.mxu0 %v7984
        %8021 = vmatpush.bf16.msra.mxu0 %v7982
        %8022 = vmatmul.bf16.gmra.mxu0 %v7766
        %v8023 = vpop.f32.mrf.mxu0
        %v8024 = vadd.f32 %v7916, %v8023
        %v8025 = vpop.f32.mrf.mxu0
        %v8026 = vadd.f32 %v7918, %v8025
        %8027 = vdwg.mxu0
        %8028 = vmatpush.bf16.msra.mxu0 %v7997
        %8029 = vmatpush.bf16.msra.mxu0 %v7995
        %8030 = vmatpush.bf16.msra.mxu0 %v7993
        %8031 = vmatpush.bf16.msra.mxu0 %v7991
        %8032 = vmatpush.bf16.msra.mxu0 %v7989
        %8033 = vmatpush.bf16.msra.mxu0 %v7987
        %8034 = vmatpush.bf16.msra.mxu0 %v7985
        %8035 = vmatpush.bf16.msra.mxu0 %v7983
        %8036 = vmatmul.bf16.gmra.mxu0 %v7766
        %v8037 = vpop.f32.mrf.mxu0
        %v8038 = vadd.f32 %v7930, %v8037
        %v8039 = vpop.f32.mrf.mxu0
        %v8040 = vadd.f32 %v7932, %v8039
        %8041 = vdwg.mxu0
        %s8042 = scalar_lea.vmem [#allocation13], 16
        %v8043 = vld [vmem:[%s8042] sm:$0xf]
        %v8044 = vld [vmem:[%s8042 + $0x4] sm:$0xf]
        %v8047 = vunpack.c.l.b16 %v8043
        %v8048 = vunpack.c.l.b16 %v8044
        %v8049 = vpack.c.b16 %v8048, %v8047
        %v8051 = vsel %vm6260, %v8049, 0
        %8053 = vmatpush.bf16.msra.mxu0 0
        %8054 = vmatpush.bf16.msra.mxu0 0
        %8055 = vmatpush.bf16.msra.mxu0 0
        %8056 = vmatpush.bf16.msra.mxu0 0
        %8057 = vmatpush.bf16.msra.mxu0 %v7741
        %8058 = vmatpush.bf16.msra.mxu0 %v7740
        %8059 = vmatpush.bf16.msra.mxu0 %v7739
        %8060 = vmatpush.bf16.msra.mxu0 %v7738
        %8061 = vmatmul.bf16.gmra.mxu0 %v8051
        %v8062 = vpop.f32.mrf.mxu0
        %v8063 = vadd.f32 0.0, %v8062
        %v8064 = vpop.f32.mrf.mxu0
        %v8065 = vadd.f32 0.0, %v8064
        %8066 = vdwg.mxu0
        %v8067 = vpack.c.bf16 %v8065, %v8063
        %s8068 = scalar_lea.vmem [#allocation14], 256
        %v8069 = vld [vmem:[%s8068] sm:$0xff]
        %v8070 = vld [vmem:[%s8068 + $0x8] sm:$0xff]
        %v8071 = vld [vmem:[%s8068 + $0x10] sm:$0xff]
        %v8072 = vld [vmem:[%s8068 + $0x18] sm:$0xff]
        %v8073 = vld [vmem:[%s8068 + $0x20] sm:$0xff]
        %v8074 = vld [vmem:[%s8068 + $0x28] sm:$0xff]
        %v8075 = vld [vmem:[%s8068 + $0x30] sm:$0xff]
        %v8076 = vld [vmem:[%s8068 + $0x38] sm:$0xff]
        %v8077 = vld [vmem:[%s8068 + $0x40] sm:$0xff]
        %v8078 = vld [vmem:[%s8068 + $0x48] sm:$0xff]
        %v8079 = vld [vmem:[%s8068 + $0x50] sm:$0xff]
        %v8080 = vld [vmem:[%s8068 + $0x58] sm:$0xff]
        %v8081 = vld [vmem:[%s8068 + $0x60] sm:$0xff]
        %v8082 = vld [vmem:[%s8068 + $0x68] sm:$0xff]
        %v8083 = vld [vmem:[%s8068 + $0x70] sm:$0xff]
        %v8084 = vld [vmem:[%s8068 + $0x78] sm:$0xff]
        %v8101 = vunpack.c.l.b16 %v8069
        %v8102 = vunpack.c.h.b16 %v8069
        %v8103 = vunpack.c.l.b16 %v8070
        %v8104 = vunpack.c.h.b16 %v8070
        %v8105 = vunpack.c.l.b16 %v8071
        %v8106 = vunpack.c.h.b16 %v8071
        %v8107 = vunpack.c.l.b16 %v8072
        %v8108 = vunpack.c.h.b16 %v8072
        %v8109 = vunpack.c.l.b16 %v8073
        %v8110 = vunpack.c.h.b16 %v8073
        %v8111 = vunpack.c.l.b16 %v8074
        %v8112 = vunpack.c.h.b16 %v8074
        %v8113 = vunpack.c.l.b16 %v8075
        %v8114 = vunpack.c.h.b16 %v8075
        %v8115 = vunpack.c.l.b16 %v8076
        %v8116 = vunpack.c.h.b16 %v8076
        %v8117 = vunpack.c.l.b16 %v8077
        %v8118 = vunpack.c.h.b16 %v8077
        %v8119 = vunpack.c.l.b16 %v8078
        %v8120 = vunpack.c.h.b16 %v8078
        %v8121 = vunpack.c.l.b16 %v8079
        %v8122 = vunpack.c.h.b16 %v8079
        %v8123 = vunpack.c.l.b16 %v8080
        %v8124 = vunpack.c.h.b16 %v8080
        %v8125 = vunpack.c.l.b16 %v8081
        %v8126 = vunpack.c.h.b16 %v8081
        %v8127 = vunpack.c.l.b16 %v8082
        %v8128 = vunpack.c.h.b16 %v8082
        %v8129 = vunpack.c.l.b16 %v8083
        %v8130 = vunpack.c.h.b16 %v8083
        %v8131 = vunpack.c.l.b16 %v8084
        %v8132 = vunpack.c.h.b16 %v8084
        %v8133 = vpack.c.b16 %v8103, %v8101
        %v8134 = vpack.c.b16 %v8104, %v8102
        %v8135 = vpack.c.b16 %v8107, %v8105
        %v8136 = vpack.c.b16 %v8108, %v8106
        %v8137 = vpack.c.b16 %v8111, %v8109
        %v8138 = vpack.c.b16 %v8112, %v8110
        %v8139 = vpack.c.b16 %v8115, %v8113
        %v8140 = vpack.c.b16 %v8116, %v8114
        %v8141 = vpack.c.b16 %v8119, %v8117
        %v8142 = vpack.c.b16 %v8120, %v8118
        %v8143 = vpack.c.b16 %v8123, %v8121
        %v8144 = vpack.c.b16 %v8124, %v8122
        %v8145 = vpack.c.b16 %v8127, %v8125
        %v8146 = vpack.c.b16 %v8128, %v8126
        %v8147 = vpack.c.b16 %v8131, %v8129
        %v8148 = vpack.c.b16 %v8132, %v8130
        %8165 = vmatpush.bf16.msra.mxu0 %v8147
        %8166 = vmatpush.bf16.msra.mxu0 %v8145
        %8167 = vmatpush.bf16.msra.mxu0 %v8143
        %8168 = vmatpush.bf16.msra.mxu0 %v8141
        %8169 = vmatpush.bf16.msra.mxu0 %v8139
        %8170 = vmatpush.bf16.msra.mxu0 %v8137
        %8171 = vmatpush.bf16.msra.mxu0 %v8135
        %8172 = vmatpush.bf16.msra.mxu0 %v8133
        %8173 = vmatmul.bf16.gmra.mxu0 %v8067
        %v8174 = vpop.f32.mrf.mxu0
        %v8175 = vadd.f32 0.0, %v8174
        %v8176 = vpop.f32.mrf.mxu0
        %v8177 = vadd.f32 0.0, %v8176
        %8178 = vdwg.mxu0
        %8179 = vmatpush.bf16.msra.mxu0 %v8148
        %8180 = vmatpush.bf16.msra.mxu0 %v8146
        %8181 = vmatpush.bf16.msra.mxu0 %v8144
        %8182 = vmatpush.bf16.msra.mxu0 %v8142
        %8183 = vmatpush.bf16.msra.mxu0 %v8140
        %8184 = vmatpush.bf16.msra.mxu0 %v8138
        %8185 = vmatpush.bf16.msra.mxu0 %v8136
        %8186 = vmatpush.bf16.msra.mxu0 %v8134
        %8187 = vmatmul.bf16.gmra.mxu0 %v8067
        %v8188 = vpop.f32.mrf.mxu0
        %v8189 = vadd.f32 0.0, %v8188
        %v8190 = vpop.f32.mrf.mxu0
        %v8191 = vadd.f32 0.0, %v8190
        %8192 = vdwg.mxu0
        %v8193 = vadd.f32 %v8024, %v8175
        %v8194 = vadd.f32 %v8038, %v8189
        %v8195 = vadd.f32 %v8026, %v8177
        %v8196 = vadd.f32 %v8040, %v8191
        %s8197 = scalar_lea.vmem [#allocation13], 24
        %v8198 = vld [vmem:[%s8197] sm:$0xf]
        %v8199 = vld [vmem:[%s8197 + $0x4] sm:$0xf]
        %v8202 = vunpack.c.l.b16 %v8198
        %v8203 = vunpack.c.l.b16 %v8199
        %v8204 = vpack.c.b16 %v8203, %v8202
        %v8206 = vsel %vm6260, %v8204, 0
        %8208 = vmatpush.bf16.msra.mxu0 0
        %8209 = vmatpush.bf16.msra.mxu0 0
        %8210 = vmatpush.bf16.msra.mxu0 0
        %8211 = vmatpush.bf16.msra.mxu0 0
        %8212 = vmatpush.bf16.msra.mxu0 %v7741
        %8213 = vmatpush.bf16.msra.mxu0 %v7740
        %8214 = vmatpush.bf16.msra.mxu0 %v7739
        %8215 = vmatpush.bf16.msra.mxu0 %v7738
        %8216 = vmatmul.bf16.gmra.mxu0 %v8206
        %v8217 = vpop.f32.mrf.mxu0
        %v8218 = vadd.f32 0.0, %v8217
        %v8219 = vpop.f32.mrf.mxu0
        %v8220 = vadd.f32 0.0, %v8219
        %8221 = vdwg.mxu0
        %v8222 = vpack.c.bf16 %v8220, %v8218
        %s8223 = scalar_lea.vmem [#allocation14], 384
        %v8224 = vld [vmem:[%s8223] sm:$0xff]
        %v8225 = vld [vmem:[%s8223 + $0x8] sm:$0xff]
        %v8226 = vld [vmem:[%s8223 + $0x10] sm:$0xff]
        %v8227 = vld [vmem:[%s8223 + $0x18] sm:$0xff]
        %v8228 = vld [vmem:[%s8223 + $0x20] sm:$0xff]
        %v8229 = vld [vmem:[%s8223 + $0x28] sm:$0xff]
        %v8230 = vld [vmem:[%s8223 + $0x30] sm:$0xff]
        %v8231 = vld [vmem:[%s8223 + $0x38] sm:$0xff]
        %v8232 = vld [vmem:[%s8223 + $0x40] sm:$0xff]
        %v8233 = vld [vmem:[%s8223 + $0x48] sm:$0xff]
        %v8234 = vld [vmem:[%s8223 + $0x50] sm:$0xff]
        %v8235 = vld [vmem:[%s8223 + $0x58] sm:$0xff]
        %v8236 = vld [vmem:[%s8223 + $0x60] sm:$0xff]
        %v8237 = vld [vmem:[%s8223 + $0x68] sm:$0xff]
        %v8238 = vld [vmem:[%s8223 + $0x70] sm:$0xff]
        %v8239 = vld [vmem:[%s8223 + $0x78] sm:$0xff]
        %v8256 = vunpack.c.l.b16 %v8224
        %v8257 = vunpack.c.h.b16 %v8224
        %v8258 = vunpack.c.l.b16 %v8225
        %v8259 = vunpack.c.h.b16 %v8225
        %v8260 = vunpack.c.l.b16 %v8226
        %v8261 = vunpack.c.h.b16 %v8226
        %v8262 = vunpack.c.l.b16 %v8227
        %v8263 = vunpack.c.h.b16 %v8227
        %v8264 = vunpack.c.l.b16 %v8228
        %v8265 = vunpack.c.h.b16 %v8228
        %v8266 = vunpack.c.l.b16 %v8229
        %v8267 = vunpack.c.h.b16 %v8229
        %v8268 = vunpack.c.l.b16 %v8230
        %v8269 = vunpack.c.h.b16 %v8230
        %v8270 = vunpack.c.l.b16 %v8231
        %v8271 = vunpack.c.h.b16 %v8231
        %v8272 = vunpack.c.l.b16 %v8232
        %v8273 = vunpack.c.h.b16 %v8232
        %v8274 = vunpack.c.l.b16 %v8233
        %v8275 = vunpack.c.h.b16 %v8233
        %v8276 = vunpack.c.l.b16 %v8234
        %v8277 = vunpack.c.h.b16 %v8234
        %v8278 = vunpack.c.l.b16 %v8235
        %v8279 = vunpack.c.h.b16 %v8235
        %v8280 = vunpack.c.l.b16 %v8236
        %v8281 = vunpack.c.h.b16 %v8236
        %v8282 = vunpack.c.l.b16 %v8237
        %v8283 = vunpack.c.h.b16 %v8237
        %v8284 = vunpack.c.l.b16 %v8238
        %v8285 = vunpack.c.h.b16 %v8238
        %v8286 = vunpack.c.l.b16 %v8239
        %v8287 = vunpack.c.h.b16 %v8239
        %v8288 = vpack.c.b16 %v8258, %v8256
        %v8289 = vpack.c.b16 %v8259, %v8257
        %v8290 = vpack.c.b16 %v8262, %v8260
        %v8291 = vpack.c.b16 %v8263, %v8261
        %v8292 = vpack.c.b16 %v8266, %v8264
        %v8293 = vpack.c.b16 %v8267, %v8265
        %v8294 = vpack.c.b16 %v8270, %v8268
        %v8295 = vpack.c.b16 %v8271, %v8269
        %v8296 = vpack.c.b16 %v8274, %v8272
        %v8297 = vpack.c.b16 %v8275, %v8273
        %v8298 = vpack.c.b16 %v8278, %v8276
        %v8299 = vpack.c.b16 %v8279, %v8277
        %v8300 = vpack.c.b16 %v8282, %v8280
        %v8301 = vpack.c.b16 %v8283, %v8281
        %v8302 = vpack.c.b16 %v8286, %v8284
        %v8303 = vpack.c.b16 %v8287, %v8285
        %8320 = vmatpush.bf16.msra.mxu0 %v8302
        %8321 = vmatpush.bf16.msra.mxu0 %v8300
        %8322 = vmatpush.bf16.msra.mxu0 %v8298
        %8323 = vmatpush.bf16.msra.mxu0 %v8296
        %8324 = vmatpush.bf16.msra.mxu0 %v8294
        %8325 = vmatpush.bf16.msra.mxu0 %v8292
        %8326 = vmatpush.bf16.msra.mxu0 %v8290
        %8327 = vmatpush.bf16.msra.mxu0 %v8288
        %8328 = vmatmul.bf16.gmra.mxu0 %v8222
        %v8329 = vpop.f32.mrf.mxu0
        %v8330 = vadd.f32 0.0, %v8329
        %v8331 = vpop.f32.mrf.mxu0
        %v8332 = vadd.f32 0.0, %v8331
        %8333 = vdwg.mxu0
        %8334 = vmatpush.bf16.msra.mxu0 %v8303
        %8335 = vmatpush.bf16.msra.mxu0 %v8301
        %8336 = vmatpush.bf16.msra.mxu0 %v8299
        %8337 = vmatpush.bf16.msra.mxu0 %v8297
        %8338 = vmatpush.bf16.msra.mxu0 %v8295
        %8339 = vmatpush.bf16.msra.mxu0 %v8293
        %8340 = vmatpush.bf16.msra.mxu0 %v8291
        %8341 = vmatpush.bf16.msra.mxu0 %v8289
        %8342 = vmatmul.bf16.gmra.mxu0 %v8222
        %v8343 = vpop.f32.mrf.mxu0
        %v8344 = vadd.f32 0.0, %v8343
        %v8345 = vpop.f32.mrf.mxu0
        %v8346 = vadd.f32 0.0, %v8345
        %8347 = vdwg.mxu0
        %v8348 = vadd.f32 %v8193, %v8330
        %v8349 = vadd.f32 %v8194, %v8344
        %v8350 = vadd.f32 %v8195, %v8332
        %v8351 = vadd.f32 %v8196, %v8346
        %s8352 = scalar_lea.vmem [#allocation13], 32
        %v8353 = vld [vmem:[%s8352] sm:$0xf]
        %v8354 = vld [vmem:[%s8352 + $0x4] sm:$0xf]
        %v8357 = vunpack.c.l.b16 %v8353
        %v8358 = vunpack.c.l.b16 %v8354
        %v8359 = vpack.c.b16 %v8358, %v8357
        %v8361 = vsel %vm6260, %v8359, 0
        %8363 = vmatpush.bf16.msra.mxu0 0
        %8364 = vmatpush.bf16.msra.mxu0 0
        %8365 = vmatpush.bf16.msra.mxu0 0
        %8366 = vmatpush.bf16.msra.mxu0 0
        %8367 = vmatpush.bf16.msra.mxu0 %v7741
        %8368 = vmatpush.bf16.msra.mxu0 %v7740
        %8369 = vmatpush.bf16.msra.mxu0 %v7739
        %8370 = vmatpush.bf16.msra.mxu0 %v7738
        %8371 = vmatmul.bf16.gmra.mxu0 %v8361
        %v8372 = vpop.f32.mrf.mxu0
        %v8373 = vadd.f32 0.0, %v8372
        %v8374 = vpop.f32.mrf.mxu0
        %v8375 = vadd.f32 0.0, %v8374
        %8376 = vdwg.mxu0
        %v8377 = vpack.c.bf16 %v8375, %v8373
        %s8378 = scalar_lea.vmem [#allocation14], 512
        %v8379 = vld [vmem:[%s8378] sm:$0xff]
        %v8380 = vld [vmem:[%s8378 + $0x8] sm:$0xff]
        %v8381 = vld [vmem:[%s8378 + $0x10] sm:$0xff]
        %v8382 = vld [vmem:[%s8378 + $0x18] sm:$0xff]
        %v8383 = vld [vmem:[%s8378 + $0x20] sm:$0xff]
        %v8384 = vld [vmem:[%s8378 + $0x28] sm:$0xff]
        %v8385 = vld [vmem:[%s8378 + $0x30] sm:$0xff]
        %v8386 = vld [vmem:[%s8378 + $0x38] sm:$0xff]
        %v8387 = vld [vmem:[%s8378 + $0x40] sm:$0xff]
        %v8388 = vld [vmem:[%s8378 + $0x48] sm:$0xff]
        %v8389 = vld [vmem:[%s8378 + $0x50] sm:$0xff]
        %v8390 = vld [vmem:[%s8378 + $0x58] sm:$0xff]
        %v8391 = vld [vmem:[%s8378 + $0x60] sm:$0xff]
        %v8392 = vld [vmem:[%s8378 + $0x68] sm:$0xff]
        %v8393 = vld [vmem:[%s8378 + $0x70] sm:$0xff]
        %v8394 = vld [vmem:[%s8378 + $0x78] sm:$0xff]
        %v8411 = vunpack.c.l.b16 %v8379
        %v8412 = vunpack.c.h.b16 %v8379
        %v8413 = vunpack.c.l.b16 %v8380
        %v8414 = vunpack.c.h.b16 %v8380
        %v8415 = vunpack.c.l.b16 %v8381
        %v8416 = vunpack.c.h.b16 %v8381
        %v8417 = vunpack.c.l.b16 %v8382
        %v8418 = vunpack.c.h.b16 %v8382
        %v8419 = vunpack.c.l.b16 %v8383
        %v8420 = vunpack.c.h.b16 %v8383
        %v8421 = vunpack.c.l.b16 %v8384
        %v8422 = vunpack.c.h.b16 %v8384
        %v8423 = vunpack.c.l.b16 %v8385
        %v8424 = vunpack.c.h.b16 %v8385
        %v8425 = vunpack.c.l.b16 %v8386
        %v8426 = vunpack.c.h.b16 %v8386
        %v8427 = vunpack.c.l.b16 %v8387
        %v8428 = vunpack.c.h.b16 %v8387
        %v8429 = vunpack.c.l.b16 %v8388
        %v8430 = vunpack.c.h.b16 %v8388
        %v8431 = vunpack.c.l.b16 %v8389
        %v8432 = vunpack.c.h.b16 %v8389
        %v8433 = vunpack.c.l.b16 %v8390
        %v8434 = vunpack.c.h.b16 %v8390
        %v8435 = vunpack.c.l.b16 %v8391
        %v8436 = vunpack.c.h.b16 %v8391
        %v8437 = vunpack.c.l.b16 %v8392
        %v8438 = vunpack.c.h.b16 %v8392
        %v8439 = vunpack.c.l.b16 %v8393
        %v8440 = vunpack.c.h.b16 %v8393
        %v8441 = vunpack.c.l.b16 %v8394
        %v8442 = vunpack.c.h.b16 %v8394
        %v8443 = vpack.c.b16 %v8413, %v8411
        %v8444 = vpack.c.b16 %v8414, %v8412
        %v8445 = vpack.c.b16 %v8417, %v8415
        %v8446 = vpack.c.b16 %v8418, %v8416
        %v8447 = vpack.c.b16 %v8421, %v8419
        %v8448 = vpack.c.b16 %v8422, %v8420
        %v8449 = vpack.c.b16 %v8425, %v8423
        %v8450 = vpack.c.b16 %v8426, %v8424
        %v8451 = vpack.c.b16 %v8429, %v8427
        %v8452 = vpack.c.b16 %v8430, %v8428
        %v8453 = vpack.c.b16 %v8433, %v8431
        %v8454 = vpack.c.b16 %v8434, %v8432
        %v8455 = vpack.c.b16 %v8437, %v8435
        %v8456 = vpack.c.b16 %v8438, %v8436
        %v8457 = vpack.c.b16 %v8441, %v8439
        %v8458 = vpack.c.b16 %v8442, %v8440
        %8475 = vmatpush.bf16.msra.mxu0 %v8457
        %8476 = vmatpush.bf16.msra.mxu0 %v8455
        %8477 = vmatpush.bf16.msra.mxu0 %v8453
        %8478 = vmatpush.bf16.msra.mxu0 %v8451
        %8479 = vmatpush.bf16.msra.mxu0 %v8449
        %8480 = vmatpush.bf16.msra.mxu0 %v8447
        %8481 = vmatpush.bf16.msra.mxu0 %v8445
        %8482 = vmatpush.bf16.msra.mxu0 %v8443
        %8483 = vmatmul.bf16.gmra.mxu0 %v8377
        %v8484 = vpop.f32.mrf.mxu0
        %v8485 = vadd.f32 0.0, %v8484
        %v8486 = vpop.f32.mrf.mxu0
        %v8487 = vadd.f32 0.0, %v8486
        %8488 = vdwg.mxu0
        %8489 = vmatpush.bf16.msra.mxu0 %v8458
        %8490 = vmatpush.bf16.msra.mxu0 %v8456
        %8491 = vmatpush.bf16.msra.mxu0 %v8454
        %8492 = vmatpush.bf16.msra.mxu0 %v8452
        %8493 = vmatpush.bf16.msra.mxu0 %v8450
        %8494 = vmatpush.bf16.msra.mxu0 %v8448
        %8495 = vmatpush.bf16.msra.mxu0 %v8446
        %8496 = vmatpush.bf16.msra.mxu0 %v8444
        %8497 = vmatmul.bf16.gmra.mxu0 %v8377
        %v8498 = vpop.f32.mrf.mxu0
        %v8499 = vadd.f32 0.0, %v8498
        %v8500 = vpop.f32.mrf.mxu0
        %v8501 = vadd.f32 0.0, %v8500
        %8502 = vdwg.mxu0
        %v8503 = vadd.f32 %v8348, %v8485
        %v8504 = vadd.f32 %v8349, %v8499
        %v8505 = vadd.f32 %v8350, %v8487
        %v8506 = vadd.f32 %v8351, %v8501
        %s8507 = scalar_lea.vmem [#allocation13], 40
        %v8508 = vld [vmem:[%s8507] sm:$0xf]
        %v8509 = vld [vmem:[%s8507 + $0x4] sm:$0xf]
        %v8512 = vunpack.c.l.b16 %v8508
        %v8513 = vunpack.c.l.b16 %v8509
        %v8514 = vpack.c.b16 %v8513, %v8512
        %v8516 = vsel %vm6260, %v8514, 0
        %8518 = vmatpush.bf16.msra.mxu0 0
        %8519 = vmatpush.bf16.msra.mxu0 0
        %8520 = vmatpush.bf16.msra.mxu0 0
        %8521 = vmatpush.bf16.msra.mxu0 0
        %8522 = vmatpush.bf16.msra.mxu0 %v7741
        %8523 = vmatpush.bf16.msra.mxu0 %v7740
        %8524 = vmatpush.bf16.msra.mxu0 %v7739
        %8525 = vmatpush.bf16.msra.mxu0 %v7738
        %8526 = vmatmul.bf16.gmra.mxu0 %v8516
        %v8527 = vpop.f32.mrf.mxu0
        %v8528 = vadd.f32 0.0, %v8527
        %v8529 = vpop.f32.mrf.mxu0
        %v8530 = vadd.f32 0.0, %v8529
        %8531 = vdwg.mxu0
        %v8532 = vpack.c.bf16 %v8530, %v8528
        %s8533 = scalar_lea.vmem [#allocation14], 640
        %v8534 = vld [vmem:[%s8533] sm:$0xff]
        %v8535 = vld [vmem:[%s8533 + $0x8] sm:$0xff]
        %v8536 = vld [vmem:[%s8533 + $0x10] sm:$0xff]
        %v8537 = vld [vmem:[%s8533 + $0x18] sm:$0xff]
        %v8538 = vld [vmem:[%s8533 + $0x20] sm:$0xff]
        %v8539 = vld [vmem:[%s8533 + $0x28] sm:$0xff]
        %v8540 = vld [vmem:[%s8533 + $0x30] sm:$0xff]
        %v8541 = vld [vmem:[%s8533 + $0x38] sm:$0xff]
        %v8542 = vld [vmem:[%s8533 + $0x40] sm:$0xff]
        %v8543 = vld [vmem:[%s8533 + $0x48] sm:$0xff]
        %v8544 = vld [vmem:[%s8533 + $0x50] sm:$0xff]
        %v8545 = vld [vmem:[%s8533 + $0x58] sm:$0xff]
        %v8546 = vld [vmem:[%s8533 + $0x60] sm:$0xff]
        %v8547 = vld [vmem:[%s8533 + $0x68] sm:$0xff]
        %v8548 = vld [vmem:[%s8533 + $0x70] sm:$0xff]
        %v8549 = vld [vmem:[%s8533 + $0x78] sm:$0xff]
        %v8566 = vunpack.c.l.b16 %v8534
        %v8567 = vunpack.c.h.b16 %v8534
        %v8568 = vunpack.c.l.b16 %v8535
        %v8569 = vunpack.c.h.b16 %v8535
        %v8570 = vunpack.c.l.b16 %v8536
        %v8571 = vunpack.c.h.b16 %v8536
        %v8572 = vunpack.c.l.b16 %v8537
        %v8573 = vunpack.c.h.b16 %v8537
        %v8574 = vunpack.c.l.b16 %v8538
        %v8575 = vunpack.c.h.b16 %v8538
        %v8576 = vunpack.c.l.b16 %v8539
        %v8577 = vunpack.c.h.b16 %v8539
        %v8578 = vunpack.c.l.b16 %v8540
        %v8579 = vunpack.c.h.b16 %v8540
        %v8580 = vunpack.c.l.b16 %v8541
        %v8581 = vunpack.c.h.b16 %v8541
        %v8582 = vunpack.c.l.b16 %v8542
        %v8583 = vunpack.c.h.b16 %v8542
        %v8584 = vunpack.c.l.b16 %v8543
        %v8585 = vunpack.c.h.b16 %v8543
        %v8586 = vunpack.c.l.b16 %v8544
        %v8587 = vunpack.c.h.b16 %v8544
        %v8588 = vunpack.c.l.b16 %v8545
        %v8589 = vunpack.c.h.b16 %v8545
        %v8590 = vunpack.c.l.b16 %v8546
        %v8591 = vunpack.c.h.b16 %v8546
        %v8592 = vunpack.c.l.b16 %v8547
        %v8593 = vunpack.c.h.b16 %v8547
        %v8594 = vunpack.c.l.b16 %v8548
        %v8595 = vunpack.c.h.b16 %v8548
        %v8596 = vunpack.c.l.b16 %v8549
        %v8597 = vunpack.c.h.b16 %v8549
        %v8598 = vpack.c.b16 %v8568, %v8566
        %v8599 = vpack.c.b16 %v8569, %v8567
        %v8600 = vpack.c.b16 %v8572, %v8570
        %v8601 = vpack.c.b16 %v8573, %v8571
        %v8602 = vpack.c.b16 %v8576, %v8574
        %v8603 = vpack.c.b16 %v8577, %v8575
        %v8604 = vpack.c.b16 %v8580, %v8578
        %v8605 = vpack.c.b16 %v8581, %v8579
        %v8606 = vpack.c.b16 %v8584, %v8582
        %v8607 = vpack.c.b16 %v8585, %v8583
        %v8608 = vpack.c.b16 %v8588, %v8586
        %v8609 = vpack.c.b16 %v8589, %v8587
        %v8610 = vpack.c.b16 %v8592, %v8590
        %v8611 = vpack.c.b16 %v8593, %v8591
        %v8612 = vpack.c.b16 %v8596, %v8594
        %v8613 = vpack.c.b16 %v8597, %v8595
        %8630 = vmatpush.bf16.msra.mxu0 %v8612
        %8631 = vmatpush.bf16.msra.mxu0 %v8610
        %8632 = vmatpush.bf16.msra.mxu0 %v8608
        %8633 = vmatpush.bf16.msra.mxu0 %v8606
        %8634 = vmatpush.bf16.msra.mxu0 %v8604
        %8635 = vmatpush.bf16.msra.mxu0 %v8602
        %8636 = vmatpush.bf16.msra.mxu0 %v8600
        %8637 = vmatpush.bf16.msra.mxu0 %v8598
        %8638 = vmatmul.bf16.gmra.mxu0 %v8532
        %v8639 = vpop.f32.mrf.mxu0
        %v8640 = vadd.f32 0.0, %v8639
        %v8641 = vpop.f32.mrf.mxu0
        %v8642 = vadd.f32 0.0, %v8641
        %8643 = vdwg.mxu0
        %8644 = vmatpush.bf16.msra.mxu0 %v8613
        %8645 = vmatpush.bf16.msra.mxu0 %v8611
        %8646 = vmatpush.bf16.msra.mxu0 %v8609
        %8647 = vmatpush.bf16.msra.mxu0 %v8607
        %8648 = vmatpush.bf16.msra.mxu0 %v8605
        %8649 = vmatpush.bf16.msra.mxu0 %v8603
        %8650 = vmatpush.bf16.msra.mxu0 %v8601
        %8651 = vmatpush.bf16.msra.mxu0 %v8599
        %8652 = vmatmul.bf16.gmra.mxu0 %v8532
        %v8653 = vpop.f32.mrf.mxu0
        %v8654 = vadd.f32 0.0, %v8653
        %v8655 = vpop.f32.mrf.mxu0
        %v8656 = vadd.f32 0.0, %v8655
        %8657 = vdwg.mxu0
        %v8658 = vadd.f32 %v8503, %v8640
        %v8659 = vadd.f32 %v8504, %v8654
        %v8660 = vadd.f32 %v8505, %v8642
        %v8661 = vadd.f32 %v8506, %v8656
        %s8662 = scalar_lea.vmem [#allocation13], 48
        %v8663 = vld [vmem:[%s8662] sm:$0xf]
        %v8664 = vld [vmem:[%s8662 + $0x4] sm:$0xf]
        %v8667 = vunpack.c.l.b16 %v8663
        %v8668 = vunpack.c.l.b16 %v8664
        %v8669 = vpack.c.b16 %v8668, %v8667
        %v8671 = vsel %vm6260, %v8669, 0
        %8673 = vmatpush.bf16.msra.mxu0 0
        %8674 = vmatpush.bf16.msra.mxu0 0
        %8675 = vmatpush.bf16.msra.mxu0 0
        %8676 = vmatpush.bf16.msra.mxu0 0
        %8677 = vmatpush.bf16.msra.mxu0 %v7741
        %8678 = vmatpush.bf16.msra.mxu0 %v7740
        %8679 = vmatpush.bf16.msra.mxu0 %v7739
        %8680 = vmatpush.bf16.msra.mxu0 %v7738
        %8681 = vmatmul.bf16.gmra.mxu0 %v8671
        %v8682 = vpop.f32.mrf.mxu0
        %v8683 = vadd.f32 0.0, %v8682
        %v8684 = vpop.f32.mrf.mxu0
        %v8685 = vadd.f32 0.0, %v8684
        %8686 = vdwg.mxu0
        %v8687 = vpack.c.bf16 %v8685, %v8683
        %s8688 = scalar_lea.vmem [#allocation14], 768
        %v8689 = vld [vmem:[%s8688] sm:$0xff]
        %v8690 = vld [vmem:[%s8688 + $0x8] sm:$0xff]
        %v8691 = vld [vmem:[%s8688 + $0x10] sm:$0xff]
        %v8692 = vld [vmem:[%s8688 + $0x18] sm:$0xff]
        %v8693 = vld [vmem:[%s8688 + $0x20] sm:$0xff]
        %v8694 = vld [vmem:[%s8688 + $0x28] sm:$0xff]
        %v8695 = vld [vmem:[%s8688 + $0x30] sm:$0xff]
        %v8696 = vld [vmem:[%s8688 + $0x38] sm:$0xff]
        %v8697 = vld [vmem:[%s8688 + $0x40] sm:$0xff]
        %v8698 = vld [vmem:[%s8688 + $0x48] sm:$0xff]
        %v8699 = vld [vmem:[%s8688 + $0x50] sm:$0xff]
        %v8700 = vld [vmem:[%s8688 + $0x58] sm:$0xff]
        %v8701 = vld [vmem:[%s8688 + $0x60] sm:$0xff]
        %v8702 = vld [vmem:[%s8688 + $0x68] sm:$0xff]
        %v8703 = vld [vmem:[%s8688 + $0x70] sm:$0xff]
        %v8704 = vld [vmem:[%s8688 + $0x78] sm:$0xff]
        %v8721 = vunpack.c.l.b16 %v8689
        %v8722 = vunpack.c.h.b16 %v8689
        %v8723 = vunpack.c.l.b16 %v8690
        %v8724 = vunpack.c.h.b16 %v8690
        %v8725 = vunpack.c.l.b16 %v8691
        %v8726 = vunpack.c.h.b16 %v8691
        %v8727 = vunpack.c.l.b16 %v8692
        %v8728 = vunpack.c.h.b16 %v8692
        %v8729 = vunpack.c.l.b16 %v8693
        %v8730 = vunpack.c.h.b16 %v8693
        %v8731 = vunpack.c.l.b16 %v8694
        %v8732 = vunpack.c.h.b16 %v8694
        %v8733 = vunpack.c.l.b16 %v8695
        %v8734 = vunpack.c.h.b16 %v8695
        %v8735 = vunpack.c.l.b16 %v8696
        %v8736 = vunpack.c.h.b16 %v8696
        %v8737 = vunpack.c.l.b16 %v8697
        %v8738 = vunpack.c.h.b16 %v8697
        %v8739 = vunpack.c.l.b16 %v8698
        %v8740 = vunpack.c.h.b16 %v8698
        %v8741 = vunpack.c.l.b16 %v8699
        %v8742 = vunpack.c.h.b16 %v8699
        %v8743 = vunpack.c.l.b16 %v8700
        %v8744 = vunpack.c.h.b16 %v8700
        %v8745 = vunpack.c.l.b16 %v8701
        %v8746 = vunpack.c.h.b16 %v8701
        %v8747 = vunpack.c.l.b16 %v8702
        %v8748 = vunpack.c.h.b16 %v8702
        %v8749 = vunpack.c.l.b16 %v8703
        %v8750 = vunpack.c.h.b16 %v8703
        %v8751 = vunpack.c.l.b16 %v8704
        %v8752 = vunpack.c.h.b16 %v8704
        %v8753 = vpack.c.b16 %v8723, %v8721
        %v8754 = vpack.c.b16 %v8724, %v8722
        %v8755 = vpack.c.b16 %v8727, %v8725
        %v8756 = vpack.c.b16 %v8728, %v8726
        %v8757 = vpack.c.b16 %v8731, %v8729
        %v8758 = vpack.c.b16 %v8732, %v8730
        %v8759 = vpack.c.b16 %v8735, %v8733
        %v8760 = vpack.c.b16 %v8736, %v8734
        %v8761 = vpack.c.b16 %v8739, %v8737
        %v8762 = vpack.c.b16 %v8740, %v8738
        %v8763 = vpack.c.b16 %v8743, %v8741
        %v8764 = vpack.c.b16 %v8744, %v8742
        %v8765 = vpack.c.b16 %v8747, %v8745
        %v8766 = vpack.c.b16 %v8748, %v8746
        %v8767 = vpack.c.b16 %v8751, %v8749
        %v8768 = vpack.c.b16 %v8752, %v8750
        %8785 = vmatpush.bf16.msra.mxu0 %v8767
        %8786 = vmatpush.bf16.msra.mxu0 %v8765
        %8787 = vmatpush.bf16.msra.mxu0 %v8763
        %8788 = vmatpush.bf16.msra.mxu0 %v8761
        %8789 = vmatpush.bf16.msra.mxu0 %v8759
        %8790 = vmatpush.bf16.msra.mxu0 %v8757
        %8791 = vmatpush.bf16.msra.mxu0 %v8755
        %8792 = vmatpush.bf16.msra.mxu0 %v8753
        %8793 = vmatmul.bf16.gmra.mxu0 %v8687
        %v8794 = vpop.f32.mrf.mxu0
        %v8795 = vadd.f32 0.0, %v8794
        %v8796 = vpop.f32.mrf.mxu0
        %v8797 = vadd.f32 0.0, %v8796
        %8798 = vdwg.mxu0
        %8799 = vmatpush.bf16.msra.mxu0 %v8768
        %8800 = vmatpush.bf16.msra.mxu0 %v8766
        %8801 = vmatpush.bf16.msra.mxu0 %v8764
        %8802 = vmatpush.bf16.msra.mxu0 %v8762
        %8803 = vmatpush.bf16.msra.mxu0 %v8760
        %8804 = vmatpush.bf16.msra.mxu0 %v8758
        %8805 = vmatpush.bf16.msra.mxu0 %v8756
        %8806 = vmatpush.bf16.msra.mxu0 %v8754
        %8807 = vmatmul.bf16.gmra.mxu0 %v8687
        %v8808 = vpop.f32.mrf.mxu0
        %v8809 = vadd.f32 0.0, %v8808
        %v8810 = vpop.f32.mrf.mxu0
        %v8811 = vadd.f32 0.0, %v8810
        %8812 = vdwg.mxu0
        %v8813 = vadd.f32 %v8658, %v8795
        %v8814 = vadd.f32 %v8659, %v8809
        %v8815 = vadd.f32 %v8660, %v8797
        %v8816 = vadd.f32 %v8661, %v8811
        %s8817 = scalar_lea.vmem [#allocation13], 56
        %v8818 = vld [vmem:[%s8817] sm:$0xf]
        %v8819 = vld [vmem:[%s8817 + $0x4] sm:$0xf]
        %v8822 = vunpack.c.l.b16 %v8818
        %v8823 = vunpack.c.l.b16 %v8819
        %v8824 = vpack.c.b16 %v8823, %v8822
        %v8826 = vsel %vm6260, %v8824, 0
        %8828 = vmatpush.bf16.msra.mxu0 0
        %8829 = vmatpush.bf16.msra.mxu0 0
        %8830 = vmatpush.bf16.msra.mxu0 0
        %8831 = vmatpush.bf16.msra.mxu0 0
        %8832 = vmatpush.bf16.msra.mxu0 %v7741
        %8833 = vmatpush.bf16.msra.mxu0 %v7740
        %8834 = vmatpush.bf16.msra.mxu0 %v7739
        %8835 = vmatpush.bf16.msra.mxu0 %v7738
        %8836 = vmatmul.bf16.gmra.mxu0 %v8826
        %v8837 = vpop.f32.mrf.mxu0
        %v8838 = vadd.f32 0.0, %v8837
        %v8839 = vpop.f32.mrf.mxu0
        %v8840 = vadd.f32 0.0, %v8839
        %8841 = vdwg.mxu0
        %v8842 = vpack.c.bf16 %v8840, %v8838
        %s8843 = scalar_lea.vmem [#allocation14], 896
        %v8844 = vld [vmem:[%s8843] sm:$0xff]
        %v8845 = vld [vmem:[%s8843 + $0x8] sm:$0xff]
        %v8846 = vld [vmem:[%s8843 + $0x10] sm:$0xff]
        %v8847 = vld [vmem:[%s8843 + $0x18] sm:$0xff]
        %v8848 = vld [vmem:[%s8843 + $0x20] sm:$0xff]
        %v8849 = vld [vmem:[%s8843 + $0x28] sm:$0xff]
        %v8850 = vld [vmem:[%s8843 + $0x30] sm:$0xff]
        %v8851 = vld [vmem:[%s8843 + $0x38] sm:$0xff]
        %v8852 = vld [vmem:[%s8843 + $0x40] sm:$0xff]
        %v8853 = vld [vmem:[%s8843 + $0x48] sm:$0xff]
        %v8854 = vld [vmem:[%s8843 + $0x50] sm:$0xff]
        %v8855 = vld [vmem:[%s8843 + $0x58] sm:$0xff]
        %v8856 = vld [vmem:[%s8843 + $0x60] sm:$0xff]
        %v8857 = vld [vmem:[%s8843 + $0x68] sm:$0xff]
        %v8858 = vld [vmem:[%s8843 + $0x70] sm:$0xff]
        %v8859 = vld [vmem:[%s8843 + $0x78] sm:$0xff]
        %v8876 = vunpack.c.l.b16 %v8844
        %v8877 = vunpack.c.h.b16 %v8844
        %v8878 = vunpack.c.l.b16 %v8845
        %v8879 = vunpack.c.h.b16 %v8845
        %v8880 = vunpack.c.l.b16 %v8846
        %v8881 = vunpack.c.h.b16 %v8846
        %v8882 = vunpack.c.l.b16 %v8847
        %v8883 = vunpack.c.h.b16 %v8847
        %v8884 = vunpack.c.l.b16 %v8848
        %v8885 = vunpack.c.h.b16 %v8848
        %v8886 = vunpack.c.l.b16 %v8849
        %v8887 = vunpack.c.h.b16 %v8849
        %v8888 = vunpack.c.l.b16 %v8850
        %v8889 = vunpack.c.h.b16 %v8850
        %v8890 = vunpack.c.l.b16 %v8851
        %v8891 = vunpack.c.h.b16 %v8851
        %v8892 = vunpack.c.l.b16 %v8852
        %v8893 = vunpack.c.h.b16 %v8852
        %v8894 = vunpack.c.l.b16 %v8853
        %v8895 = vunpack.c.h.b16 %v8853
        %v8896 = vunpack.c.l.b16 %v8854
        %v8897 = vunpack.c.h.b16 %v8854
        %v8898 = vunpack.c.l.b16 %v8855
        %v8899 = vunpack.c.h.b16 %v8855
        %v8900 = vunpack.c.l.b16 %v8856
        %v8901 = vunpack.c.h.b16 %v8856
        %v8902 = vunpack.c.l.b16 %v8857
        %v8903 = vunpack.c.h.b16 %v8857
        %v8904 = vunpack.c.l.b16 %v8858
        %v8905 = vunpack.c.h.b16 %v8858
        %v8906 = vunpack.c.l.b16 %v8859
        %v8907 = vunpack.c.h.b16 %v8859
        %v8908 = vpack.c.b16 %v8878, %v8876
        %v8909 = vpack.c.b16 %v8879, %v8877
        %v8910 = vpack.c.b16 %v8882, %v8880
        %v8911 = vpack.c.b16 %v8883, %v8881
        %v8912 = vpack.c.b16 %v8886, %v8884
        %v8913 = vpack.c.b16 %v8887, %v8885
        %v8914 = vpack.c.b16 %v8890, %v8888
        %v8915 = vpack.c.b16 %v8891, %v8889
        %v8916 = vpack.c.b16 %v8894, %v8892
        %v8917 = vpack.c.b16 %v8895, %v8893
        %v8918 = vpack.c.b16 %v8898, %v8896
        %v8919 = vpack.c.b16 %v8899, %v8897
        %v8920 = vpack.c.b16 %v8902, %v8900
        %v8921 = vpack.c.b16 %v8903, %v8901
        %v8922 = vpack.c.b16 %v8906, %v8904
        %v8923 = vpack.c.b16 %v8907, %v8905
        %8940 = vmatpush.bf16.msra.mxu0 %v8922
        %8941 = vmatpush.bf16.msra.mxu0 %v8920
        %8942 = vmatpush.bf16.msra.mxu0 %v8918
        %8943 = vmatpush.bf16.msra.mxu0 %v8916
        %8944 = vmatpush.bf16.msra.mxu0 %v8914
        %8945 = vmatpush.bf16.msra.mxu0 %v8912
        %8946 = vmatpush.bf16.msra.mxu0 %v8910
        %8947 = vmatpush.bf16.msra.mxu0 %v8908
        %8948 = vmatmul.bf16.gmra.mxu0 %v8842
        %v8949 = vpop.f32.mrf.mxu0
        %v8950 = vadd.f32 0.0, %v8949
        %v8951 = vpop.f32.mrf.mxu0
        %v8952 = vadd.f32 0.0, %v8951
        %8953 = vdwg.mxu0
        %8954 = vmatpush.bf16.msra.mxu0 %v8923
        %8955 = vmatpush.bf16.msra.mxu0 %v8921
        %8956 = vmatpush.bf16.msra.mxu0 %v8919
        %8957 = vmatpush.bf16.msra.mxu0 %v8917
        %8958 = vmatpush.bf16.msra.mxu0 %v8915
        %8959 = vmatpush.bf16.msra.mxu0 %v8913
        %8960 = vmatpush.bf16.msra.mxu0 %v8911
        %8961 = vmatpush.bf16.msra.mxu0 %v8909
        %8962 = vmatmul.bf16.gmra.mxu0 %v8842
        %v8963 = vpop.f32.mrf.mxu0
        %v8964 = vadd.f32 0.0, %v8963
        %v8965 = vpop.f32.mrf.mxu0
        %v8966 = vadd.f32 0.0, %v8965
        %8967 = vdwg.mxu0
        %v8968 = vadd.f32 %v8813, %v8950
        %v8969 = vadd.f32 %v8814, %v8964
        %v8970 = vadd.f32 %v8815, %v8952
        %v8971 = vadd.f32 %v8816, %v8966
        %s8972 = scalar_lea.vmem [#allocation13], 64
        %v8973 = vld [vmem:[%s8972] sm:$0xf]
        %v8974 = vld [vmem:[%s8972 + $0x4] sm:$0xf]
        %v8977 = vunpack.c.l.b16 %v8973
        %v8978 = vunpack.c.l.b16 %v8974
        %v8979 = vpack.c.b16 %v8978, %v8977
        %v8981 = vsel %vm6260, %v8979, 0
        %8983 = vmatpush.bf16.msra.mxu0 0
        %8984 = vmatpush.bf16.msra.mxu0 0
        %8985 = vmatpush.bf16.msra.mxu0 0
        %8986 = vmatpush.bf16.msra.mxu0 0
        %8987 = vmatpush.bf16.msra.mxu0 %v7741
        %8988 = vmatpush.bf16.msra.mxu0 %v7740
        %8989 = vmatpush.bf16.msra.mxu0 %v7739
        %8990 = vmatpush.bf16.msra.mxu0 %v7738
        %8991 = vmatmul.bf16.gmra.mxu0 %v8981
        %v8992 = vpop.f32.mrf.mxu0
        %v8993 = vadd.f32 0.0, %v8992
        %v8994 = vpop.f32.mrf.mxu0
        %v8995 = vadd.f32 0.0, %v8994
        %8996 = vdwg.mxu0
        %v8997 = vpack.c.bf16 %v8995, %v8993
        %s8998 = scalar_lea.vmem [#allocation14], 1024
        %v8999 = vld [vmem:[%s8998] sm:$0xff]
        %v9000 = vld [vmem:[%s8998 + $0x8] sm:$0xff]
        %v9001 = vld [vmem:[%s8998 + $0x10] sm:$0xff]
        %v9002 = vld [vmem:[%s8998 + $0x18] sm:$0xff]
        %v9003 = vld [vmem:[%s8998 + $0x20] sm:$0xff]
        %v9004 = vld [vmem:[%s8998 + $0x28] sm:$0xff]
        %v9005 = vld [vmem:[%s8998 + $0x30] sm:$0xff]
        %v9006 = vld [vmem:[%s8998 + $0x38] sm:$0xff]
        %v9007 = vld [vmem:[%s8998 + $0x40] sm:$0xff]
        %v9008 = vld [vmem:[%s8998 + $0x48] sm:$0xff]
        %v9009 = vld [vmem:[%s8998 + $0x50] sm:$0xff]
        %v9010 = vld [vmem:[%s8998 + $0x58] sm:$0xff]
        %v9011 = vld [vmem:[%s8998 + $0x60] sm:$0xff]
        %v9012 = vld [vmem:[%s8998 + $0x68] sm:$0xff]
        %v9013 = vld [vmem:[%s8998 + $0x70] sm:$0xff]
        %v9014 = vld [vmem:[%s8998 + $0x78] sm:$0xff]
        %v9031 = vunpack.c.l.b16 %v8999
        %v9032 = vunpack.c.h.b16 %v8999
        %v9033 = vunpack.c.l.b16 %v9000
        %v9034 = vunpack.c.h.b16 %v9000
        %v9035 = vunpack.c.l.b16 %v9001
        %v9036 = vunpack.c.h.b16 %v9001
        %v9037 = vunpack.c.l.b16 %v9002
        %v9038 = vunpack.c.h.b16 %v9002
        %v9039 = vunpack.c.l.b16 %v9003
        %v9040 = vunpack.c.h.b16 %v9003
        %v9041 = vunpack.c.l.b16 %v9004
        %v9042 = vunpack.c.h.b16 %v9004
        %v9043 = vunpack.c.l.b16 %v9005
        %v9044 = vunpack.c.h.b16 %v9005
        %v9045 = vunpack.c.l.b16 %v9006
        %v9046 = vunpack.c.h.b16 %v9006
        %v9047 = vunpack.c.l.b16 %v9007
        %v9048 = vunpack.c.h.b16 %v9007
        %v9049 = vunpack.c.l.b16 %v9008
        %v9050 = vunpack.c.h.b16 %v9008
        %v9051 = vunpack.c.l.b16 %v9009
        %v9052 = vunpack.c.h.b16 %v9009
        %v9053 = vunpack.c.l.b16 %v9010
        %v9054 = vunpack.c.h.b16 %v9010
        %v9055 = vunpack.c.l.b16 %v9011
        %v9056 = vunpack.c.h.b16 %v9011
        %v9057 = vunpack.c.l.b16 %v9012
        %v9058 = vunpack.c.h.b16 %v9012
        %v9059 = vunpack.c.l.b16 %v9013
        %v9060 = vunpack.c.h.b16 %v9013
        %v9061 = vunpack.c.l.b16 %v9014
        %v9062 = vunpack.c.h.b16 %v9014
        %v9063 = vpack.c.b16 %v9033, %v9031
        %v9064 = vpack.c.b16 %v9034, %v9032
        %v9065 = vpack.c.b16 %v9037, %v9035
        %v9066 = vpack.c.b16 %v9038, %v9036
        %v9067 = vpack.c.b16 %v9041, %v9039
        %v9068 = vpack.c.b16 %v9042, %v9040
        %v9069 = vpack.c.b16 %v9045, %v9043
        %v9070 = vpack.c.b16 %v9046, %v9044
        %v9071 = vpack.c.b16 %v9049, %v9047
        %v9072 = vpack.c.b16 %v9050, %v9048
        %v9073 = vpack.c.b16 %v9053, %v9051
        %v9074 = vpack.c.b16 %v9054, %v9052
        %v9075 = vpack.c.b16 %v9057, %v9055
        %v9076 = vpack.c.b16 %v9058, %v9056
        %v9077 = vpack.c.b16 %v9061, %v9059
        %v9078 = vpack.c.b16 %v9062, %v9060
        %9095 = vmatpush.bf16.msra.mxu0 %v9077
        %9096 = vmatpush.bf16.msra.mxu0 %v9075
        %9097 = vmatpush.bf16.msra.mxu0 %v9073
        %9098 = vmatpush.bf16.msra.mxu0 %v9071
        %9099 = vmatpush.bf16.msra.mxu0 %v9069
        %9100 = vmatpush.bf16.msra.mxu0 %v9067
        %9101 = vmatpush.bf16.msra.mxu0 %v9065
        %9102 = vmatpush.bf16.msra.mxu0 %v9063
        %9103 = vmatmul.bf16.gmra.mxu0 %v8997
        %v9104 = vpop.f32.mrf.mxu0
        %v9105 = vadd.f32 0.0, %v9104
        %v9106 = vpop.f32.mrf.mxu0
        %v9107 = vadd.f32 0.0, %v9106
        %9108 = vdwg.mxu0
        %9109 = vmatpush.bf16.msra.mxu0 %v9078
        %9110 = vmatpush.bf16.msra.mxu0 %v9076
        %9111 = vmatpush.bf16.msra.mxu0 %v9074
        %9112 = vmatpush.bf16.msra.mxu0 %v9072
        %9113 = vmatpush.bf16.msra.mxu0 %v9070
        %9114 = vmatpush.bf16.msra.mxu0 %v9068
        %9115 = vmatpush.bf16.msra.mxu0 %v9066
        %9116 = vmatpush.bf16.msra.mxu0 %v9064
        %9117 = vmatmul.bf16.gmra.mxu0 %v8997
        %v9118 = vpop.f32.mrf.mxu0
        %v9119 = vadd.f32 0.0, %v9118
        %v9120 = vpop.f32.mrf.mxu0
        %v9121 = vadd.f32 0.0, %v9120
        %9122 = vdwg.mxu0
        %v9123 = vadd.f32 %v8968, %v9105
        %v9124 = vadd.f32 %v8969, %v9119
        %v9125 = vadd.f32 %v8970, %v9107
        %v9126 = vadd.f32 %v8971, %v9121
        %v9127 = vld [vmem:[#allocation16] sm:$0x3]
        %v9129 = vperm.slane %v9127, 0
        %v9130 = vperm.slane %v9127, 1
        %v9133 = vadd.f32 %v9123, %v9129
        %v9134 = vadd.f32 %v9124, %v9130
        %v9135 = vadd.f32 %v9125, %v9129
        %v9136 = vadd.f32 %v9126, %v9130
        %v9137 = vmax.f32 %v9133, 0.0
        %v9138 = vmax.f32 %v9134, 0.0
        %v9139 = vmax.f32 %v9135, 0.0
        %v9140 = vmax.f32 %v9136, 0.0
        %v9141 = vpack.c.bf16 %v9139, %v9137
        %v9142 = vpack.c.bf16 %v9140, %v9138
        %v9143 = vld [vmem:[#allocation17] sm:$0x3]
        %vm9144 = vcmask 130048
        %v9146 = vsel %vm9144, %v9143, 0
        %9148 = vmatpush.bf16.msra.mxu0 0
        %9149 = vmatpush.bf16.msra.mxu0 0
        %9150 = vmatpush.bf16.msra.mxu0 0
        %9151 = vmatpush.bf16.msra.mxu0 0
        %9152 = vmatpush.bf16.msra.mxu0 0
        %9153 = vmatpush.bf16.msra.mxu0 0
        %9154 = vmatpush.bf16.msra.mxu0 0
        %9155 = vmatpush.bf16.msra.mxu0 %v9141
        %9156 = vmatmul.bf16.gmra.mxu0 %v9146
        %v9157 = vpop.f32.mrf.mxu0
        %v9158 = vadd.f32 0.0, %v9157
        %v9159 = vpop.f32.mrf.mxu0
        %9160 = vdwg.mxu0
        %9161 = vmatpush.bf16.msra.mxu0 0
        %9162 = vmatpush.bf16.msra.mxu0 0
        %9163 = vmatpush.bf16.msra.mxu0 0
        %9164 = vmatpush.bf16.msra.mxu0 0
        %9165 = vmatpush.bf16.msra.mxu0 0
        %9166 = vmatpush.bf16.msra.mxu0 0
        %9167 = vmatpush.bf16.msra.mxu0 0
        %9168 = vmatpush.bf16.msra.mxu0 %v9142
        %9169 = vmatmul.bf16.gmra.mxu0 %v9146
        %v9170 = vpop.f32.mrf.mxu0
        %v9171 = vadd.f32 0.0, %v9170
        %v9172 = vpop.f32.mrf.mxu0
        %9173 = vdwg.mxu0
        %v9174 = vpack.c.bf16 %v9171, %v9158
        %v9175 = vld [vmem:[#allocation19] sm:$0xf]
        %v9176 = vld [vmem:[#allocation19 + $0x4] sm:$0xf]
        %v9177 = vld [vmem:[#allocation19 + $0x8] sm:$0xf]
        %v9178 = vld [vmem:[#allocation19 + $0xc] sm:$0xf]
        %v9179 = vld [vmem:[#allocation19 + $0x10] sm:$0xf]
        %v9180 = vld [vmem:[#allocation19 + $0x14] sm:$0xf]
        %v9181 = vld [vmem:[#allocation19 + $0x18] sm:$0xf]
        %v9182 = vld [vmem:[#allocation19 + $0x1c] sm:$0xf]
        %v9183 = vld [vmem:[#allocation19 + $0x20] sm:$0xf]
        %v9184 = vld [vmem:[#allocation19 + $0x24] sm:$0xf]
        %v9185 = vld [vmem:[#allocation19 + $0x28] sm:$0xf]
        %v9186 = vld [vmem:[#allocation19 + $0x2c] sm:$0xf]
        %v9187 = vld [vmem:[#allocation19 + $0x30] sm:$0xf]
        %v9188 = vld [vmem:[#allocation19 + $0x34] sm:$0xf]
        %v9189 = vld [vmem:[#allocation19 + $0x38] sm:$0xf]
        %v9190 = vld [vmem:[#allocation19 + $0x3c] sm:$0xf]
        %v9191 = vld [vmem:[#allocation19 + $0x40] sm:$0xf]
        %v9192 = vld [vmem:[#allocation19 + $0x44] sm:$0xf]
        %v9193 = vld [vmem:[#allocation19 + $0x48] sm:$0xf]
        %v9194 = vld [vmem:[#allocation19 + $0x4c] sm:$0xf]
        %v9195 = vld [vmem:[#allocation19 + $0x50] sm:$0xf]
        %v9196 = vld [vmem:[#allocation19 + $0x54] sm:$0xf]
        %v9197 = vld [vmem:[#allocation19 + $0x58] sm:$0xf]
        %v9198 = vld [vmem:[#allocation19 + $0x5c] sm:$0xf]
        %v9199 = vld [vmem:[#allocation19 + $0x60] sm:$0xf]
        %v9200 = vld [vmem:[#allocation19 + $0x64] sm:$0xf]
        %v9201 = vld [vmem:[#allocation19 + $0x68] sm:$0xf]
        %v9202 = vld [vmem:[#allocation19 + $0x6c] sm:$0xf]
        %v9203 = vld [vmem:[#allocation19 + $0x70] sm:$0xf]
        %v9204 = vld [vmem:[#allocation19 + $0x74] sm:$0xf]
        %v9205 = vld [vmem:[#allocation19 + $0x78] sm:$0xf]
        %v9206 = vld [vmem:[#allocation19 + $0x7c] sm:$0xf]
        %s9207 = scalar_lea.vmem [#allocation19], 128
        %v9208 = vld [vmem:[%s9207] sm:$0xf]
        %v9209 = vld [vmem:[%s9207 + $0x4] sm:$0xf]
        %v9210 = vld [vmem:[%s9207 + $0x8] sm:$0xf]
        %v9211 = vld [vmem:[%s9207 + $0xc] sm:$0xf]
        %v9212 = vld [vmem:[%s9207 + $0x10] sm:$0xf]
        %v9213 = vld [vmem:[%s9207 + $0x14] sm:$0xf]
        %v9214 = vld [vmem:[%s9207 + $0x18] sm:$0xf]
        %v9215 = vld [vmem:[%s9207 + $0x1c] sm:$0xf]
        %v9216 = vld [vmem:[%s9207 + $0x20] sm:$0xf]
        %v9217 = vld [vmem:[%s9207 + $0x24] sm:$0xf]
        %v9218 = vld [vmem:[%s9207 + $0x28] sm:$0xf]
        %v9219 = vld [vmem:[%s9207 + $0x2c] sm:$0xf]
        %v9220 = vld [vmem:[%s9207 + $0x30] sm:$0xf]
        %v9221 = vld [vmem:[%s9207 + $0x34] sm:$0xf]
        %v9222 = vld [vmem:[%s9207 + $0x38] sm:$0xf]
        %v9223 = vld [vmem:[%s9207 + $0x3c] sm:$0xf]
        %v9224 = vld [vmem:[%s9207 + $0x40] sm:$0xf]
        %v9225 = vld [vmem:[%s9207 + $0x44] sm:$0xf]
        %v9226 = vld [vmem:[%s9207 + $0x48] sm:$0xf]
        %v9227 = vld [vmem:[%s9207 + $0x4c] sm:$0xf]
        %v9228 = vld [vmem:[%s9207 + $0x50] sm:$0xf]
        %v9229 = vld [vmem:[%s9207 + $0x54] sm:$0xf]
        %v9230 = vld [vmem:[%s9207 + $0x58] sm:$0xf]
        %v9231 = vld [vmem:[%s9207 + $0x5c] sm:$0xf]
        %v9232 = vld [vmem:[%s9207 + $0x60] sm:$0xf]
        %v9233 = vld [vmem:[%s9207 + $0x64] sm:$0xf]
        %v9234 = vld [vmem:[%s9207 + $0x68] sm:$0xf]
        %v9235 = vld [vmem:[%s9207 + $0x6c] sm:$0xf]
        %v9236 = vld [vmem:[%s9207 + $0x70] sm:$0xf]
        %v9237 = vld [vmem:[%s9207 + $0x74] sm:$0xf]
        %v9238 = vld [vmem:[%s9207 + $0x78] sm:$0xf]
        %v9239 = vld [vmem:[%s9207 + $0x7c] sm:$0xf]
        %v9241 = vunpack.c.l.b16 %v9174
        %v9242 = vunpack.c.h.b16 %v9174
        %v9243 = vpack.c.b16 %v9241, %v9241
        %v9244 = vpack.c.b16 %v9242, %v9242
        %v9246 = vshrl.u32 %v9243, 16
        %v9249 = vshrl.u32 %v9244, 16
        %v9285 = vunpack.c.l.b16 %v9208
        %v9286 = vunpack.c.l.b16 %v9209
        %v9287 = vunpack.c.l.b16 %v9210
        %v9288 = vunpack.c.l.b16 %v9211
        %v9289 = vunpack.c.l.b16 %v9212
        %v9290 = vunpack.c.l.b16 %v9213
        %v9291 = vunpack.c.l.b16 %v9214
        %v9292 = vunpack.c.l.b16 %v9215
        %v9293 = vunpack.c.l.b16 %v9216
        %v9294 = vunpack.c.l.b16 %v9217
        %v9295 = vunpack.c.l.b16 %v9218
        %v9296 = vunpack.c.l.b16 %v9219
        %v9297 = vunpack.c.l.b16 %v9220
        %v9298 = vunpack.c.l.b16 %v9221
        %v9299 = vunpack.c.l.b16 %v9222
        %v9300 = vunpack.c.l.b16 %v9223
        %v9301 = vunpack.c.l.b16 %v9224
        %v9302 = vunpack.c.l.b16 %v9225
        %v9303 = vunpack.c.l.b16 %v9226
        %v9304 = vunpack.c.l.b16 %v9227
        %v9305 = vunpack.c.l.b16 %v9228
        %v9306 = vunpack.c.l.b16 %v9229
        %v9307 = vunpack.c.l.b16 %v9230
        %v9308 = vunpack.c.l.b16 %v9231
        %v9309 = vunpack.c.l.b16 %v9232
        %v9310 = vunpack.c.l.b16 %v9233
        %v9311 = vunpack.c.l.b16 %v9234
        %v9312 = vunpack.c.l.b16 %v9235
        %v9313 = vunpack.c.l.b16 %v9236
        %v9314 = vunpack.c.l.b16 %v9237
        %v9315 = vunpack.c.l.b16 %v9238
        %v9316 = vunpack.c.l.b16 %v9239
        %v9317 = vpack.c.b16 %v9286, %v9285
        %v9318 = vpack.c.b16 %v9288, %v9287
        %v9319 = vpack.c.b16 %v9290, %v9289
        %v9320 = vpack.c.b16 %v9292, %v9291
        %v9321 = vpack.c.b16 %v9294, %v9293
        %v9322 = vpack.c.b16 %v9296, %v9295
        %v9323 = vpack.c.b16 %v9298, %v9297
        %v9324 = vpack.c.b16 %v9300, %v9299
        %v9325 = vpack.c.b16 %v9302, %v9301
        %v9326 = vpack.c.b16 %v9304, %v9303
        %v9327 = vpack.c.b16 %v9306, %v9305
        %v9328 = vpack.c.b16 %v9308, %v9307
        %v9329 = vpack.c.b16 %v9310, %v9309
        %v9330 = vpack.c.b16 %v9312, %v9311
        %v9331 = vpack.c.b16 %v9314, %v9313
        %v9332 = vpack.c.b16 %v9316, %v9315
        %9349 = vmatpush.bf16.msra.mxu0 %v9324
        %9350 = vmatpush.bf16.msra.mxu0 %v9323
        %9351 = vmatpush.bf16.msra.mxu0 %v9322
        %9352 = vmatpush.bf16.msra.mxu0 %v9321
        %9353 = vmatpush.bf16.msra.mxu0 %v9320
        %9354 = vmatpush.bf16.msra.mxu0 %v9319
        %9355 = vmatpush.bf16.msra.mxu0 %v9318
        %9356 = vmatpush.bf16.msra.mxu0 %v9317
        %9357 = vmatmul.bf16.gmra.mxu0 %v9246
        %v9358 = vpop.f32.mrf.mxu0
        %v9359 = vadd.f32 0.0, %v9358
        %v9360 = vpop.f32.mrf.mxu0
        %9361 = vdwg.mxu0
        %9362 = vmatpush.bf16.msra.mxu0 %v9332
        %9363 = vmatpush.bf16.msra.mxu0 %v9331
        %9364 = vmatpush.bf16.msra.mxu0 %v9330
        %9365 = vmatpush.bf16.msra.mxu0 %v9329
        %9366 = vmatpush.bf16.msra.mxu0 %v9328
        %9367 = vmatpush.bf16.msra.mxu0 %v9327
        %9368 = vmatpush.bf16.msra.mxu0 %v9326
        %9369 = vmatpush.bf16.msra.mxu0 %v9325
        %9370 = vmatmul.bf16.gmra.mxu0 %v9249
        %v9371 = vpop.f32.mrf.mxu0
        %v9372 = vadd.f32 %v9359, %v9371
        %v9373 = vpop.f32.mrf.mxu0
        %9374 = vdwg.mxu0
        %v9409 = vunpack.c.l.b16 %v9175
        %v9410 = vunpack.c.l.b16 %v9176
        %v9411 = vunpack.c.l.b16 %v9177
        %v9412 = vunpack.c.l.b16 %v9178
        %v9413 = vunpack.c.l.b16 %v9179
        %v9414 = vunpack.c.l.b16 %v9180
        %v9415 = vunpack.c.l.b16 %v9181
        %v9416 = vunpack.c.l.b16 %v9182
        %v9417 = vunpack.c.l.b16 %v9183
        %v9418 = vunpack.c.l.b16 %v9184
        %v9419 = vunpack.c.l.b16 %v9185
        %v9420 = vunpack.c.l.b16 %v9186
        %v9421 = vunpack.c.l.b16 %v9187
        %v9422 = vunpack.c.l.b16 %v9188
        %v9423 = vunpack.c.l.b16 %v9189
        %v9424 = vunpack.c.l.b16 %v9190
        %v9425 = vunpack.c.l.b16 %v9191
        %v9426 = vunpack.c.l.b16 %v9192
        %v9427 = vunpack.c.l.b16 %v9193
        %v9428 = vunpack.c.l.b16 %v9194
        %v9429 = vunpack.c.l.b16 %v9195
        %v9430 = vunpack.c.l.b16 %v9196
        %v9431 = vunpack.c.l.b16 %v9197
        %v9432 = vunpack.c.l.b16 %v9198
        %v9433 = vunpack.c.l.b16 %v9199
        %v9434 = vunpack.c.l.b16 %v9200
        %v9435 = vunpack.c.l.b16 %v9201
        %v9436 = vunpack.c.l.b16 %v9202
        %v9437 = vunpack.c.l.b16 %v9203
        %v9438 = vunpack.c.l.b16 %v9204
        %v9439 = vunpack.c.l.b16 %v9205
        %v9440 = vunpack.c.l.b16 %v9206
        %v9441 = vpack.c.b16 %v9410, %v9409
        %v9442 = vpack.c.b16 %v9412, %v9411
        %v9443 = vpack.c.b16 %v9414, %v9413
        %v9444 = vpack.c.b16 %v9416, %v9415
        %v9445 = vpack.c.b16 %v9418, %v9417
        %v9446 = vpack.c.b16 %v9420, %v9419
        %v9447 = vpack.c.b16 %v9422, %v9421
        %v9448 = vpack.c.b16 %v9424, %v9423
        %v9449 = vpack.c.b16 %v9426, %v9425
        %v9450 = vpack.c.b16 %v9428, %v9427
        %v9451 = vpack.c.b16 %v9430, %v9429
        %v9452 = vpack.c.b16 %v9432, %v9431
        %v9453 = vpack.c.b16 %v9434, %v9433
        %v9454 = vpack.c.b16 %v9436, %v9435
        %v9455 = vpack.c.b16 %v9438, %v9437
        %v9456 = vpack.c.b16 %v9440, %v9439
        %9473 = vmatpush.bf16.msra.mxu0 %v9448
        %9474 = vmatpush.bf16.msra.mxu0 %v9447
        %9475 = vmatpush.bf16.msra.mxu0 %v9446
        %9476 = vmatpush.bf16.msra.mxu0 %v9445
        %9477 = vmatpush.bf16.msra.mxu0 %v9444
        %9478 = vmatpush.bf16.msra.mxu0 %v9443
        %9479 = vmatpush.bf16.msra.mxu0 %v9442
        %9480 = vmatpush.bf16.msra.mxu0 %v9441
        %9481 = vmatmul.bf16.gmra.mxu0 %v9243
        %v9482 = vpop.f32.mrf.mxu0
        %v9483 = vadd.f32 %v9372, %v9482
        %v9484 = vpop.f32.mrf.mxu0
        %9485 = vdwg.mxu0
        %9486 = vmatpush.bf16.msra.mxu0 %v9456
        %9487 = vmatpush.bf16.msra.mxu0 %v9455
        %9488 = vmatpush.bf16.msra.mxu0 %v9454
        %9489 = vmatpush.bf16.msra.mxu0 %v9453
        %9490 = vmatpush.bf16.msra.mxu0 %v9452
        %9491 = vmatpush.bf16.msra.mxu0 %v9451
        %9492 = vmatpush.bf16.msra.mxu0 %v9450
        %9493 = vmatpush.bf16.msra.mxu0 %v9449
        %9494 = vmatmul.bf16.gmra.mxu0 %v9244
        %v9495 = vpop.f32.mrf.mxu0
        %v9496 = vadd.f32 %v9483, %v9495
        %v9497 = vpop.f32.mrf.mxu0
        %9498 = vdwg.mxu0
        %s9499 = scalar_lea.vmem [#allocation19], 256
        %v9500 = vld [vmem:[%s9499] sm:$0xf]
        %v9501 = vld [vmem:[%s9499 + $0x4] sm:$0xf]
        %v9502 = vld [vmem:[%s9499 + $0x8] sm:$0xf]
        %v9503 = vld [vmem:[%s9499 + $0xc] sm:$0xf]
        %v9504 = vld [vmem:[%s9499 + $0x10] sm:$0xf]
        %v9505 = vld [vmem:[%s9499 + $0x14] sm:$0xf]
        %v9506 = vld [vmem:[%s9499 + $0x18] sm:$0xf]
        %v9507 = vld [vmem:[%s9499 + $0x1c] sm:$0xf]
        %v9508 = vld [vmem:[%s9499 + $0x20] sm:$0xf]
        %v9509 = vld [vmem:[%s9499 + $0x24] sm:$0xf]
        %v9510 = vld [vmem:[%s9499 + $0x28] sm:$0xf]
        %v9511 = vld [vmem:[%s9499 + $0x2c] sm:$0xf]
        %v9512 = vld [vmem:[%s9499 + $0x30] sm:$0xf]
        %v9513 = vld [vmem:[%s9499 + $0x34] sm:$0xf]
        %v9514 = vld [vmem:[%s9499 + $0x38] sm:$0xf]
        %v9515 = vld [vmem:[%s9499 + $0x3c] sm:$0xf]
        %v9516 = vld [vmem:[%s9499 + $0x40] sm:$0xf]
        %v9517 = vld [vmem:[%s9499 + $0x44] sm:$0xf]
        %v9518 = vld [vmem:[%s9499 + $0x48] sm:$0xf]
        %v9519 = vld [vmem:[%s9499 + $0x4c] sm:$0xf]
        %v9520 = vld [vmem:[%s9499 + $0x50] sm:$0xf]
        %v9521 = vld [vmem:[%s9499 + $0x54] sm:$0xf]
        %v9522 = vld [vmem:[%s9499 + $0x58] sm:$0xf]
        %v9523 = vld [vmem:[%s9499 + $0x5c] sm:$0xf]
        %v9524 = vld [vmem:[%s9499 + $0x60] sm:$0xf]
        %v9525 = vld [vmem:[%s9499 + $0x64] sm:$0xf]
        %v9526 = vld [vmem:[%s9499 + $0x68] sm:$0xf]
        %v9527 = vld [vmem:[%s9499 + $0x6c] sm:$0xf]
        %v9528 = vld [vmem:[%s9499 + $0x70] sm:$0xf]
        %v9529 = vld [vmem:[%s9499 + $0x74] sm:$0xf]
        %v9530 = vld [vmem:[%s9499 + $0x78] sm:$0xf]
        %v9531 = vld [vmem:[%s9499 + $0x7c] sm:$0xf]
        %v9532 = vrot.slane %v9243, 1
        %v9533 = vrot.slane %v9244, 1
        %v9568 = vunpack.c.l.b16 %v9500
        %v9569 = vunpack.c.l.b16 %v9501
        %v9570 = vunpack.c.l.b16 %v9502
        %v9571 = vunpack.c.l.b16 %v9503
        %v9572 = vunpack.c.l.b16 %v9504
        %v9573 = vunpack.c.l.b16 %v9505
        %v9574 = vunpack.c.l.b16 %v9506
        %v9575 = vunpack.c.l.b16 %v9507
        %v9576 = vunpack.c.l.b16 %v9508
        %v9577 = vunpack.c.l.b16 %v9509
        %v9578 = vunpack.c.l.b16 %v9510
        %v9579 = vunpack.c.l.b16 %v9511
        %v9580 = vunpack.c.l.b16 %v9512
        %v9581 = vunpack.c.l.b16 %v9513
        %v9582 = vunpack.c.l.b16 %v9514
        %v9583 = vunpack.c.l.b16 %v9515
        %v9584 = vunpack.c.l.b16 %v9516
        %v9585 = vunpack.c.l.b16 %v9517
        %v9586 = vunpack.c.l.b16 %v9518
        %v9587 = vunpack.c.l.b16 %v9519
        %v9588 = vunpack.c.l.b16 %v9520
        %v9589 = vunpack.c.l.b16 %v9521
        %v9590 = vunpack.c.l.b16 %v9522
        %v9591 = vunpack.c.l.b16 %v9523
        %v9592 = vunpack.c.l.b16 %v9524
        %v9593 = vunpack.c.l.b16 %v9525
        %v9594 = vunpack.c.l.b16 %v9526
        %v9595 = vunpack.c.l.b16 %v9527
        %v9596 = vunpack.c.l.b16 %v9528
        %v9597 = vunpack.c.l.b16 %v9529
        %v9598 = vunpack.c.l.b16 %v9530
        %v9599 = vunpack.c.l.b16 %v9531
        %v9600 = vpack.c.b16 %v9569, %v9568
        %v9601 = vpack.c.b16 %v9571, %v9570
        %v9602 = vpack.c.b16 %v9573, %v9572
        %v9603 = vpack.c.b16 %v9575, %v9574
        %v9604 = vpack.c.b16 %v9577, %v9576
        %v9605 = vpack.c.b16 %v9579, %v9578
        %v9606 = vpack.c.b16 %v9581, %v9580
        %v9607 = vpack.c.b16 %v9583, %v9582
        %v9608 = vpack.c.b16 %v9585, %v9584
        %v9609 = vpack.c.b16 %v9587, %v9586
        %v9610 = vpack.c.b16 %v9589, %v9588
        %v9611 = vpack.c.b16 %v9591, %v9590
        %v9612 = vpack.c.b16 %v9593, %v9592
        %v9613 = vpack.c.b16 %v9595, %v9594
        %v9614 = vpack.c.b16 %v9597, %v9596
        %v9615 = vpack.c.b16 %v9599, %v9598
        %9632 = vmatpush.bf16.msra.mxu0 %v9607
        %9633 = vmatpush.bf16.msra.mxu0 %v9606
        %9634 = vmatpush.bf16.msra.mxu0 %v9605
        %9635 = vmatpush.bf16.msra.mxu0 %v9604
        %9636 = vmatpush.bf16.msra.mxu0 %v9603
        %9637 = vmatpush.bf16.msra.mxu0 %v9602
        %9638 = vmatpush.bf16.msra.mxu0 %v9601
        %9639 = vmatpush.bf16.msra.mxu0 %v9600
        %9640 = vmatmul.bf16.gmra.mxu0 %v9532
        %v9641 = vpop.f32.mrf.mxu0
        %v9642 = vadd.f32 0.0, %v9641
        %v9643 = vpop.f32.mrf.mxu0
        %9644 = vdwg.mxu0
        %9645 = vmatpush.bf16.msra.mxu0 %v9615
        %9646 = vmatpush.bf16.msra.mxu0 %v9614
        %9647 = vmatpush.bf16.msra.mxu0 %v9613
        %9648 = vmatpush.bf16.msra.mxu0 %v9612
        %9649 = vmatpush.bf16.msra.mxu0 %v9611
        %9650 = vmatpush.bf16.msra.mxu0 %v9610
        %9651 = vmatpush.bf16.msra.mxu0 %v9609
        %9652 = vmatpush.bf16.msra.mxu0 %v9608
        %9653 = vmatmul.bf16.gmra.mxu0 %v9533
        %v9654 = vpop.f32.mrf.mxu0
        %v9655 = vadd.f32 %v9642, %v9654
        %v9656 = vpop.f32.mrf.mxu0
        %9657 = vdwg.mxu0
        %v9658 = vadd.f32 %v9496, %v9655
        %s9659 = scalar_lea.vmem [#allocation19], 384
        %v9660 = vld [vmem:[%s9659] sm:$0xf]
        %v9661 = vld [vmem:[%s9659 + $0x4] sm:$0xf]
        %v9662 = vld [vmem:[%s9659 + $0x8] sm:$0xf]
        %v9663 = vld [vmem:[%s9659 + $0xc] sm:$0xf]
        %v9664 = vld [vmem:[%s9659 + $0x10] sm:$0xf]
        %v9665 = vld [vmem:[%s9659 + $0x14] sm:$0xf]
        %v9666 = vld [vmem:[%s9659 + $0x18] sm:$0xf]
        %v9667 = vld [vmem:[%s9659 + $0x1c] sm:$0xf]
        %v9668 = vld [vmem:[%s9659 + $0x20] sm:$0xf]
        %v9669 = vld [vmem:[%s9659 + $0x24] sm:$0xf]
        %v9670 = vld [vmem:[%s9659 + $0x28] sm:$0xf]
        %v9671 = vld [vmem:[%s9659 + $0x2c] sm:$0xf]
        %v9672 = vld [vmem:[%s9659 + $0x30] sm:$0xf]
        %v9673 = vld [vmem:[%s9659 + $0x34] sm:$0xf]
        %v9674 = vld [vmem:[%s9659 + $0x38] sm:$0xf]
        %v9675 = vld [vmem:[%s9659 + $0x3c] sm:$0xf]
        %v9676 = vld [vmem:[%s9659 + $0x40] sm:$0xf]
        %v9677 = vld [vmem:[%s9659 + $0x44] sm:$0xf]
        %v9678 = vld [vmem:[%s9659 + $0x48] sm:$0xf]
        %v9679 = vld [vmem:[%s9659 + $0x4c] sm:$0xf]
        %v9680 = vld [vmem:[%s9659 + $0x50] sm:$0xf]
        %v9681 = vld [vmem:[%s9659 + $0x54] sm:$0xf]
        %v9682 = vld [vmem:[%s9659 + $0x58] sm:$0xf]
        %v9683 = vld [vmem:[%s9659 + $0x5c] sm:$0xf]
        %v9684 = vld [vmem:[%s9659 + $0x60] sm:$0xf]
        %v9685 = vld [vmem:[%s9659 + $0x64] sm:$0xf]
        %v9686 = vld [vmem:[%s9659 + $0x68] sm:$0xf]
        %v9687 = vld [vmem:[%s9659 + $0x6c] sm:$0xf]
        %v9688 = vld [vmem:[%s9659 + $0x70] sm:$0xf]
        %v9689 = vld [vmem:[%s9659 + $0x74] sm:$0xf]
        %v9690 = vld [vmem:[%s9659 + $0x78] sm:$0xf]
        %v9691 = vld [vmem:[%s9659 + $0x7c] sm:$0xf]
        %v9692 = vrot.slane %v9246, 1
        %v9693 = vrot.slane %v9249, 1
        %v9728 = vunpack.c.l.b16 %v9660
        %v9729 = vunpack.c.l.b16 %v9661
        %v9730 = vunpack.c.l.b16 %v9662
        %v9731 = vunpack.c.l.b16 %v9663
        %v9732 = vunpack.c.l.b16 %v9664
        %v9733 = vunpack.c.l.b16 %v9665
        %v9734 = vunpack.c.l.b16 %v9666
        %v9735 = vunpack.c.l.b16 %v9667
        %v9736 = vunpack.c.l.b16 %v9668
        %v9737 = vunpack.c.l.b16 %v9669
        %v9738 = vunpack.c.l.b16 %v9670
        %v9739 = vunpack.c.l.b16 %v9671
        %v9740 = vunpack.c.l.b16 %v9672
        %v9741 = vunpack.c.l.b16 %v9673
        %v9742 = vunpack.c.l.b16 %v9674
        %v9743 = vunpack.c.l.b16 %v9675
        %v9744 = vunpack.c.l.b16 %v9676
        %v9745 = vunpack.c.l.b16 %v9677
        %v9746 = vunpack.c.l.b16 %v9678
        %v9747 = vunpack.c.l.b16 %v9679
        %v9748 = vunpack.c.l.b16 %v9680
        %v9749 = vunpack.c.l.b16 %v9681
        %v9750 = vunpack.c.l.b16 %v9682
        %v9751 = vunpack.c.l.b16 %v9683
        %v9752 = vunpack.c.l.b16 %v9684
        %v9753 = vunpack.c.l.b16 %v9685
        %v9754 = vunpack.c.l.b16 %v9686
        %v9755 = vunpack.c.l.b16 %v9687
        %v9756 = vunpack.c.l.b16 %v9688
        %v9757 = vunpack.c.l.b16 %v9689
        %v9758 = vunpack.c.l.b16 %v9690
        %v9759 = vunpack.c.l.b16 %v9691
        %v9760 = vpack.c.b16 %v9729, %v9728
        %v9761 = vpack.c.b16 %v9731, %v9730
        %v9762 = vpack.c.b16 %v9733, %v9732
        %v9763 = vpack.c.b16 %v9735, %v9734
        %v9764 = vpack.c.b16 %v9737, %v9736
        %v9765 = vpack.c.b16 %v9739, %v9738
        %v9766 = vpack.c.b16 %v9741, %v9740
        %v9767 = vpack.c.b16 %v9743, %v9742
        %v9768 = vpack.c.b16 %v9745, %v9744
        %v9769 = vpack.c.b16 %v9747, %v9746
        %v9770 = vpack.c.b16 %v9749, %v9748
        %v9771 = vpack.c.b16 %v9751, %v9750
        %v9772 = vpack.c.b16 %v9753, %v9752
        %v9773 = vpack.c.b16 %v9755, %v9754
        %v9774 = vpack.c.b16 %v9757, %v9756
        %v9775 = vpack.c.b16 %v9759, %v9758
        %9792 = vmatpush.bf16.msra.mxu0 %v9767
        %9793 = vmatpush.bf16.msra.mxu0 %v9766
        %9794 = vmatpush.bf16.msra.mxu0 %v9765
        %9795 = vmatpush.bf16.msra.mxu0 %v9764
        %9796 = vmatpush.bf16.msra.mxu0 %v9763
        %9797 = vmatpush.bf16.msra.mxu0 %v9762
        %9798 = vmatpush.bf16.msra.mxu0 %v9761
        %9799 = vmatpush.bf16.msra.mxu0 %v9760
        %9800 = vmatmul.bf16.gmra.mxu0 %v9692
        %v9801 = vpop.f32.mrf.mxu0
        %v9802 = vadd.f32 0.0, %v9801
        %v9803 = vpop.f32.mrf.mxu0
        %9804 = vdwg.mxu0
        %9805 = vmatpush.bf16.msra.mxu0 %v9775
        %9806 = vmatpush.bf16.msra.mxu0 %v9774
        %9807 = vmatpush.bf16.msra.mxu0 %v9773
        %9808 = vmatpush.bf16.msra.mxu0 %v9772
        %9809 = vmatpush.bf16.msra.mxu0 %v9771
        %9810 = vmatpush.bf16.msra.mxu0 %v9770
        %9811 = vmatpush.bf16.msra.mxu0 %v9769
        %9812 = vmatpush.bf16.msra.mxu0 %v9768
        %9813 = vmatmul.bf16.gmra.mxu0 %v9693
        %v9814 = vpop.f32.mrf.mxu0
        %v9815 = vadd.f32 %v9802, %v9814
        %v9816 = vpop.f32.mrf.mxu0
        %9817 = vdwg.mxu0
        %v9818 = vadd.f32 %v9658, %v9815
        %v9819 = vld [vmem:[#allocation20] sm:$0x1]
        %v9820 = vadd.f32 %v9818, %v9819
        %v9821 = vmax.f32 %v9820, 0.0
        %v9822 = vpack.c.bf16 %v9821, %v9821
        %v9823 = vld [vmem:[#allocation22] sm:$0xf]
        %v9824 = vld [vmem:[#allocation22 + $0x4] sm:$0xf]
        %v9825 = vld [vmem:[#allocation22 + $0x8] sm:$0xf]
        %v9826 = vld [vmem:[#allocation22 + $0xc] sm:$0xf]
        %v9827 = vld [vmem:[#allocation22 + $0x10] sm:$0xf]
        %v9828 = vld [vmem:[#allocation22 + $0x14] sm:$0xf]
        %v9829 = vld [vmem:[#allocation22 + $0x18] sm:$0xf]
        %v9830 = vld [vmem:[#allocation22 + $0x1c] sm:$0xf]
        %v9831 = vld [vmem:[#allocation22 + $0x20] sm:$0xf]
        %v9832 = vld [vmem:[#allocation22 + $0x24] sm:$0xf]
        %v9833 = vld [vmem:[#allocation22 + $0x28] sm:$0xf]
        %v9834 = vld [vmem:[#allocation22 + $0x2c] sm:$0xf]
        %v9835 = vld [vmem:[#allocation22 + $0x30] sm:$0xf]
        %v9836 = vld [vmem:[#allocation22 + $0x34] sm:$0xf]
        %v9837 = vld [vmem:[#allocation22 + $0x38] sm:$0xf]
        %v9838 = vld [vmem:[#allocation22 + $0x3c] sm:$0xf]
        %v9839 = vld [vmem:[#allocation23] sm:$0x1]
        %v9856 = vunpack.c.l.b16 %v9823
        %v9857 = vunpack.c.l.b16 %v9824
        %v9858 = vunpack.c.l.b16 %v9825
        %v9859 = vunpack.c.l.b16 %v9826
        %v9860 = vunpack.c.l.b16 %v9827
        %v9861 = vunpack.c.l.b16 %v9828
        %v9862 = vunpack.c.l.b16 %v9829
        %v9863 = vunpack.c.l.b16 %v9830
        %v9864 = vunpack.c.l.b16 %v9831
        %v9865 = vunpack.c.l.b16 %v9832
        %v9866 = vunpack.c.l.b16 %v9833
        %v9867 = vunpack.c.l.b16 %v9834
        %v9868 = vunpack.c.l.b16 %v9835
        %v9869 = vunpack.c.l.b16 %v9836
        %v9870 = vunpack.c.l.b16 %v9837
        %v9871 = vunpack.c.l.b16 %v9838
        %v9872 = vpack.c.b16 %v9857, %v9856
        %v9873 = vpack.c.b16 %v9859, %v9858
        %v9874 = vpack.c.b16 %v9861, %v9860
        %v9875 = vpack.c.b16 %v9863, %v9862
        %v9876 = vpack.c.b16 %v9865, %v9864
        %v9877 = vpack.c.b16 %v9867, %v9866
        %v9878 = vpack.c.b16 %v9869, %v9868
        %v9879 = vpack.c.b16 %v9871, %v9870
        %9888 = vmatpush.bf16.msra.mxu0 %v9879
        %9889 = vmatpush.bf16.msra.mxu0 %v9878
        %9890 = vmatpush.bf16.msra.mxu0 %v9877
        %9891 = vmatpush.bf16.msra.mxu0 %v9876
        %9892 = vmatpush.bf16.msra.mxu0 %v9875
        %9893 = vmatpush.bf16.msra.mxu0 %v9874
        %9894 = vmatpush.bf16.msra.mxu0 %v9873
        %9895 = vmatpush.bf16.msra.mxu0 %v9872
        %9896 = vmatmul.bf16.gmra.mxu0 %v9822
        %v9897 = vpop.f32.mrf.mxu0
        %v9898 = vadd.f32 %v9839, %v9897
        %v9899 = vpop.f32.mrf.mxu0
        %9900 = vdwg.mxu0
        %v9901 = vmax.f32 %v9898, 0.0
        %v9902 = vpack.c.bf16 %v9901, %v9901
        %v9903 = vld [vmem:[#allocation25] sm:$0xf]
        %v9904 = vld [vmem:[#allocation25 + $0x4] sm:$0xf]
        %v9905 = vld [vmem:[#allocation25 + $0x8] sm:$0xf]
        %v9906 = vld [vmem:[#allocation25 + $0xc] sm:$0xf]
        %v9907 = vld [vmem:[#allocation25 + $0x10] sm:$0xf]
        %v9908 = vld [vmem:[#allocation25 + $0x14] sm:$0xf]
        %v9909 = vld [vmem:[#allocation25 + $0x18] sm:$0xf]
        %v9910 = vld [vmem:[#allocation25 + $0x1c] sm:$0xf]
        %v9911 = vld [vmem:[#allocation25 + $0x20] sm:$0xf]
        %v9912 = vld [vmem:[#allocation25 + $0x24] sm:$0xf]
        %v9913 = vld [vmem:[#allocation25 + $0x28] sm:$0xf]
        %v9914 = vld [vmem:[#allocation25 + $0x2c] sm:$0xf]
        %v9915 = vld [vmem:[#allocation25 + $0x30] sm:$0xf]
        %v9916 = vld [vmem:[#allocation25 + $0x34] sm:$0xf]
        %v9917 = vld [vmem:[#allocation25 + $0x38] sm:$0xf]
        %v9918 = vld [vmem:[#allocation25 + $0x3c] sm:$0xf]
        %v9919 = vld [vmem:[#allocation26] sm:$0x1]
        %v9936 = vunpack.c.l.b16 %v9903
        %v9937 = vunpack.c.l.b16 %v9904
        %v9938 = vunpack.c.l.b16 %v9905
        %v9939 = vunpack.c.l.b16 %v9906
        %v9940 = vunpack.c.l.b16 %v9907
        %v9941 = vunpack.c.l.b16 %v9908
        %v9942 = vunpack.c.l.b16 %v9909
        %v9943 = vunpack.c.l.b16 %v9910
        %v9944 = vunpack.c.l.b16 %v9911
        %v9945 = vunpack.c.l.b16 %v9912
        %v9946 = vunpack.c.l.b16 %v9913
        %v9947 = vunpack.c.l.b16 %v9914
        %v9948 = vunpack.c.l.b16 %v9915
        %v9949 = vunpack.c.l.b16 %v9916
        %v9950 = vunpack.c.l.b16 %v9917
        %v9951 = vunpack.c.l.b16 %v9918
        %v9952 = vpack.c.b16 %v9937, %v9936
        %v9953 = vpack.c.b16 %v9939, %v9938
        %v9954 = vpack.c.b16 %v9941, %v9940
        %v9955 = vpack.c.b16 %v9943, %v9942
        %v9956 = vpack.c.b16 %v9945, %v9944
        %v9957 = vpack.c.b16 %v9947, %v9946
        %v9958 = vpack.c.b16 %v9949, %v9948
        %v9959 = vpack.c.b16 %v9951, %v9950
        %9968 = vmatpush.bf16.msra.mxu0 %v9959
        %9969 = vmatpush.bf16.msra.mxu0 %v9958
        %9970 = vmatpush.bf16.msra.mxu0 %v9957
        %9971 = vmatpush.bf16.msra.mxu0 %v9956
        %9972 = vmatpush.bf16.msra.mxu0 %v9955
        %9973 = vmatpush.bf16.msra.mxu0 %v9954
        %9974 = vmatpush.bf16.msra.mxu0 %v9953
        %9975 = vmatpush.bf16.msra.mxu0 %v9952
        %9976 = vmatmul.bf16.gmra.mxu0 %v9902
        %v9977 = vpop.f32.mrf.mxu0
        %v9978 = vadd.f32 %v9919, %v9977
        %v9979 = vpop.f32.mrf.mxu0
        %9980 = vdwg.mxu0
        %v9981 = vmax.f32 %v9978, 0.0
        %9982 = vst [vmem:[%s791] sm:$0x1] %v9981
        %s9983 = sand.u32 %s410, 1
        %s9984 = scalar_lea.sflag [#allocation4], %s9983
        %s9985 = sand.u32 %s410, 1
        %s9986 = scalar_lea.vmem [#allocation28], %s9985
        // Predicated region
        $region153: #{dqn_forward.1} parent=87 // pred_check
          %p9987 = pneg %p420
        $region154: #{dqn_forward.1} parent=87 // pred_check_branch
          %9989 = sbr.rel (%p9987) target = $region156
        $region155: #{dqn_forward.1} parent=87 // pred_region
          %9991 = vsyncadd %s9984, 0
          %s9992 = scalar_lea.hbm %s17, %s40
          %s9994 = sshll.u32 %s9986, 4
          %s9995 = int_to_ptr.vmem [resolvable:$true] %s9994
          %s9996 = sshll.u32 %s9992, 4
          %s9997 = int_to_ptr.hbm [resolvable:$true] %s9996
          %9999 = dma.vmem_to_hbm [thread:$0]  %s9995, 16, %s9997, %s9984
        $region156: #{dqn_forward.1} parent=87 // pred_fallthru
          _
      $region88: #{dqn_forward.1} parent=5 // pred_fallthru
        _
      %p10000 = scmp.le.s32.totalorder 2, %s35
      // Predicated region
      $region157: #{dqn_forward.1} parent=5 // pred_check
        %p10001 = pneg %p10000
      $region158: #{dqn_forward.1} parent=5 // pred_check_branch
        %10003 = sbr.rel (%p10001) target = $region160
      $region159: #{dqn_forward.1} parent=5 // pred_region
        %s10004 = ssub.s32 %s35, 2
        // Predicated region
        $region161: #{dqn_forward.1} parent=159 // pred_check
          %p10005 = pneg %p426
        $region162: #{dqn_forward.1} parent=159 // pred_check_branch
          %10007 = sbr.rel (%p10005) target = $region164
        $region163: #{dqn_forward.1} parent=159 // pred_region
          %s10008 = sand.u32 %s411, 1
          %s10009 = scalar_lea.sflag [#allocation4], %s10008
          %s10010 = sand.u32 %s411, 1
          %s10011 = scalar_lea.vmem [#allocation28], %s10010
          %10013 = dma.done %s10009, 16
        $region164: #{dqn_forward.1} parent=159 // pred_fallthru
          _
      $region160: #{dqn_forward.1} parent=5 // pred_fallthru
        _
    $region6: #{dqn_forward.1} parent=1 // loop_footer
      %s39 = sadd.s32 1, %s35
    $region7: #{dqn_forward.1} parent=1 // loop_footer_branch
      %34 = sbr.rel target = $region3
    $region8: #{dqn_forward.1} parent=1 // loop_exit
      _
    %10014 = vsyncpa [#allocation3], 1
    %s10015 = scalar_lea.sflag [#allocation3], 1
    %10016 = vsyncpa %s10015, 1
    %10017 = vsyncpa [#allocation6], 1
    %10018 = vsyncpa [#allocation9], 1
    %10019 = vsyncpa [#allocation12], 1
    %10020 = vsyncpa [#allocation15], 1
    %10021 = vsyncpa [#allocation18], 1
    %10022 = vsyncpa [#allocation21], 1
    %10023 = vsyncpa [#allocation24], 1
    %10024 = vsyncpa [#allocation27], 1
    %10025 = vsyncpa [#allocation4], 1
    %s10026 = scalar_lea.sflag [#allocation4], 1
    %10027 = vsyncpa %s10026, 1

</llo_original>
